<compile_context>
chip_gen: v7x
topology: tpu7x:2x2x1
jax: 0.10.0
libtpu: 0.0.40
codegen_flags: <defaults>
</compile_context>

<pallas_src>
import numpy as np

import jax
import jax.numpy as jnp
from jax import lax
from jax.experimental import pallas as pl
from jax.experimental.pallas import tpu as pltpu


_VMEM = pl.BlockSpec(memory_space=pltpu.MemorySpace.VMEM)


# ----------------------------------------------------------------------------
# In-kernel helper (traced inside the Pallas kernel)
# ----------------------------------------------------------------------------

def _bn_relu(y, sel, exp, gamma, beta, n):
    """Training-mode BatchNorm (biased var, eps=1e-5) + ReLU.

    y:     (R, N) f32 conv output, lane n belongs to channel ch(n)
    sel:   (N, C) 0/1 fold matrix   (lane -> channel)
    exp:   (C, N) 0/1 expand matrix (channel -> lane)
    gamma, beta: (1, C)
    n:     element count per channel (B * H * W)
    """
    f32 = jnp.float32
    inv_n = 1.0 / n
    s = jnp.sum(y, axis=0, keepdims=True)                       # (1, N)
    ss = jnp.sum(y * y, axis=0, keepdims=True)                  # (1, N)
    s_c = jnp.dot(s, sel, preferred_element_type=f32)           # (1, C)
    ss_c = jnp.dot(ss, sel, preferred_element_type=f32)         # (1, C)
    mean = s_c * inv_n
    var = jnp.maximum(ss_c * inv_n - mean * mean, 0.0)          # one-pass, clamped
    scale_c = gamma * lax.rsqrt(var + 1e-5)
    shift_c = beta - mean * scale_c
    scale = jnp.dot(scale_c, exp, preferred_element_type=f32)   # (1, N)
    shift = jnp.dot(shift_c, exp, preferred_element_type=f32)   # (1, N)
    return jnp.maximum(y * scale + shift, 0.0)


# ----------------------------------------------------------------------------
# The fused kernel
# ----------------------------------------------------------------------------

def _cnn_mnist_kernel(x_ref, b1_ref, g1_ref, be1_ref, s1_ref, e1_ref,
                      b2_ref, g2_ref, be2_ref, s2_ref, e2_ref,
                      wfc_ref, bfc_ref,
                      out_ref,
                      r1_ref, p1h_ref, r2_ref, fcin_ref):
    f32 = jnp.float32
    bf16 = jnp.bfloat16
    b = x_ref.shape[0]

    # ---------------- layer 1: Conv(1->16,5x5,p=2) + BN + ReLU + pool --------
    # x_ref: (b, 32, 28) bf16, rows h-padded by 2.  im2row: tap kh occupies
    # lanes [kh*28, (kh+1)*28) of the K axis.  kw is folded into b1.
    for kh in range(5):
        r1_ref[:, :, kh * 28:(kh + 1) * 28] = x_ref[:, kh:kh + 28, :]
    r1 = r1_ref[...].reshape(b * 28, 140)
    y1 = jnp.dot(r1, b1_ref[...], preferred_element_type=f32)     # (b*28, 448)
    # lane layout of y1: n = dw*224 + c*14 + w2  (output col w = 2*w2 + dw)

    y1 = _bn_relu(y1, s1_ref[...], e1_ref[...],
                  g1_ref[...], be1_ref[...], float(b * 28 * 28))

    wp = jnp.maximum(y1[:, :224], y1[:, 224:])                    # pool over dw
    t = wp.reshape(b, 14, 2, 224)
    p1 = jnp.maximum(t[:, :, 0, :], t[:, :, 1, :])                # pool over dh
    # p1: (b, 14, 224) f32, lane = c*14 + w2

    # ---------------- layer 2: Conv(16->32,5x5,p=2) + BN + ReLU + pool -------
    # Pad only the 2-row halo (w-padding is folded into the banded weight b2).
    p1h_ref[:, 0:2, :] = jnp.zeros((b, 2, 224), bf16)
    p1h_ref[:, 16:18, :] = jnp.zeros((b, 2, 224), bf16)
    p1h_ref[:, 2:16, :] = p1.astype(bf16)
    for kh in range(5):
        r2_ref[:, :, kh * 224:(kh + 1) * 224] = p1h_ref[:, kh:kh + 14, :]
    r2 = r2_ref[...].reshape(b * 14, 1120)
    y2 = jnp.dot(r2, b2_ref[...], preferred_element_type=f32)     # (b*14, 448)
    # lane layout of y2: n = dw*224 + c*7 + w3  (output col w = 2*w3 + dw)

    y2 = _bn_relu(y2, s2_ref[...], e2_ref[...],
                  g2_ref[...], be2_ref[...], float(b * 14 * 14))

    wp2 = jnp.maximum(y2[:, :224], y2[:, 224:])                   # pool over dw
    t2 = wp2.reshape(b, 7, 2, 224)
    p2 = jnp.maximum(t2[:, :, 0, :], t2[:, :, 1, :])              # (b, 7, 224)

    # ---------------- fc: single (b, 1568) @ (1568, 128) MXU matmul ----------
    p2b = p2.astype(bf16)
    for h3 in range(7):
        fcin_ref[:, h3 * 224:(h3 + 1) * 224] = p2b[:, h3, :]
    out_ref[...] = (jnp.dot(fcin_ref[...], wfc_ref[...],
                            preferred_element_type=f32)
                    + bfc_ref[...])                                # (b, 128)


# ----------------------------------------------------------------------------
# Wrapper
# ----------------------------------------------------------------------------

def cnn_mnist_forward(x_nchw, params):
    b, c, h, w = x_nchw.shape
    assert (c, h, w) == (1, 28, 28), "CNNMnist expects (B, 1, 28, 28) input"
    x = x_nchw.reshape(b, 28, 28).astype(jnp.float32)
    # Pad only the rows (h) by 2; width padding is folded into the banded
    # conv weights.  bf16 is only ever an MXU operand dtype.
    xh = jnp.pad(x, ((0, 0), (2, 2), (0, 0))).astype(jnp.bfloat16)   # (b,32,28)

    out_pad = pl.pallas_call(
        _cnn_mnist_kernel,
        out_shape=jax.ShapeDtypeStruct((b, 128), jnp.float32),
        in_specs=[_VMEM] * 13,
        out_specs=_VMEM,
        scratch_shapes=[
            pltpu.VMEM((b, 28, 140), jnp.bfloat16),   # layer-1 im2row slab
            pltpu.VMEM((b, 18, 224), jnp.bfloat16),   # layer-1 pooled, h-padded
            pltpu.VMEM((b, 14, 1120), jnp.bfloat16),  # layer-2 im2row slab
            pltpu.VMEM((b, 1568), jnp.bfloat16),      # flattened fc input
        ],
        compiler_params=pltpu.CompilerParams(
            vmem_limit_bytes=32 * 1024 * 1024),
    )(xh,
      params["b1"], params["g1"], params["be1"], params["s1"], params["e1"],
      params["b2"], params["g2"], params["be2"], params["s2"], params["e2"],
      params["wfc"], params["bfc"])

    return out_pad[:, :10]                             # drop lane padding


# ----------------------------------------------------------------------------
# Deterministic synthetic parameters (shapes per CNNMnist.__init__), converted
# from the PyTorch layouts into the kernel's banded / lane-permuted layouts.
# ----------------------------------------------------------------------------

def make_params(key):
    ks = jax.random.split(key, 8)
    f32 = jnp.float32

    # ---- torch-layout tensors (as the nn.Module would hold them) ----
    w1_t = jax.random.normal(ks[0], (16, 1, 5, 5), f32) / 5.0     # Conv2d(1,16,5)
    w2_t = jax.random.normal(ks[1], (32, 16, 5, 5), f32) / 20.0   # Conv2d(16,32,5)
    wfc_t = jax.random.normal(ks[2], (10, 1568), f32) / 40.0      # Linear(1568,10)
    bfc_t = jax.random.normal(ks[3], (10,), f32) * 0.1
    g1 = 1.0 + 0.1 * jax.random.normal(ks[4], (16,), f32)         # BN weight
    g2 = 1.0 + 0.1 * jax.random.normal(ks[5], (32,), f32)
    be1 = 0.1 * jax.random.normal(ks[6], (16,), f32)              # BN bias
    be2 = 0.1 * jax.random.normal(ks[7], (32,), f32)
    # Conv2d biases exist in the module but are exactly cancelled by the
    # following BatchNorm mean subtraction, so they are not materialised.

    w1 = np.asarray(w1_t)
    w2 = np.asarray(w2_t)
    wfc = np.asarray(wfc_t)

    # ---- conv1 banded weight: rows k = kh*28 + j (j = padded-w'less column),
    #      cols n = dw*224 + co*14 + w2,  output col w = 2*w2 + dw --------------
    B1 = np.zeros((5, 28, 2, 16, 14), np.float32)
    for kh in range(5):
        for kw in range(5):
            for dw in range(2):
                for w2i in range(14):
                    j = 2 * w2i + dw + kw - 2
                    if 0 <= j < 28:
                        B1[kh, j, dw, :, w2i] = w1[:, 0, kh, kw]
    B1 = B1.reshape(140, 448)

    # ---- conv2 banded weight: rows k = kh*224 + ci*14 + j,
    #      cols n = dw*224 + co*7 + w3,  output col w = 2*w3 + dw ---------------
    B2 = np.zeros((5, 16, 14, 2, 32, 7), np.float32)
    for kh in range(5):
        for kw in range(5):
            for dw in range(2):
                for w3 in range(7):
                    j = 2 * w3 + dw + kw - 2
                    if 0 <= j < 14:
                        B2[kh, :, j, dw, :, w3] = w2[:, :, kh, kw].T   # (ci, co)
    B2 = B2.reshape(1120, 448)

    # ---- BN channel fold / expand 0/1 matrices for the lane layouts above ----
    S1 = np.zeros((2, 16, 14, 16), np.float32)
    for ch in range(16):
        S1[:, ch, :, ch] = 1.0
    S1 = S1.reshape(448, 16)
    S2 = np.zeros((2, 32, 7, 32), np.float32)
    for ch in range(32):
        S2[:, ch, :, ch] = 1.0
    S2 = S2.reshape(448, 32)

    # ---- fc weight: kernel flatten index f_k = h3*224 + ci*7 + w3 maps to
    #      PyTorch's NCHW flatten index f_t = ci*49 + h3*7 + w3; pad out to 128.
    Wfc = np.zeros((7, 32, 7, 128), np.float32)
    wt = wfc.reshape(10, 32, 7, 7)                    # (o, ci, h3, w3)
    for o in range(10):
        Wfc[:, :, :, o] = np.transpose(wt[o], (1, 0, 2))   # (h3, ci, w3)
    Wfc = Wfc.reshape(1568, 128)
    bfc = np.zeros((1, 128), np.float32)
    bfc[0, :10] = np.asarray(bfc_t)

    return dict(
        b1=jnp.asarray(B1, jnp.bfloat16),
        b2=jnp.asarray(B2, jnp.bfloat16),
        s1=jnp.asarray(S1), e1=jnp.asarray(np.ascontiguousarray(S1.T)),
        s2=jnp.asarray(S2), e2=jnp.asarray(np.ascontiguousarray(S2.T)),
        g1=g1.reshape(1, 16), be1=be1.reshape(1, 16),
        g2=g2.reshape(1, 32), be2=be2.reshape(1, 32),
        wfc=jnp.asarray(Wfc, jnp.bfloat16),
        bfc=jnp.asarray(bfc),
    )


if __name__ == "__main__":
    key = jax.random.PRNGKey(0)
    k_x, k_p = jax.random.split(key)
    # MNIST-shaped input (28x28 is required by the 7*7*32 fc), small batch.
    x = jax.random.normal(k_x, (2, 1, 28, 28), jnp.float32)
    params = make_params(k_p)

    fwd = jax.jit(cnn_mnist_forward)
    out = jax.block_until_ready(fwd(x, params))

    assert out.shape == (2, 10) and out.dtype == jnp.float32
    assert bool(jnp.all(jnp.isfinite(out)))
    print("KERNEL_OK")
</pallas_src>

<mosaic_0001>
module attributes {stable_mosaic.version = 11 : i64} {
  func.func @_cnn_mnist_kernel(%arg0: memref<2x32x28xbf16, #tpu.memory_space<vmem>>, %arg1: memref<140x448xbf16, #tpu.memory_space<vmem>>, %arg2: memref<1x16xf32, #tpu.memory_space<vmem>>, %arg3: memref<1x16xf32, #tpu.memory_space<vmem>>, %arg4: memref<448x16xf32, #tpu.memory_space<vmem>>, %arg5: memref<16x448xf32, #tpu.memory_space<vmem>>, %arg6: memref<1120x448xbf16, #tpu.memory_space<vmem>>, %arg7: memref<1x32xf32, #tpu.memory_space<vmem>>, %arg8: memref<1x32xf32, #tpu.memory_space<vmem>>, %arg9: memref<448x32xf32, #tpu.memory_space<vmem>>, %arg10: memref<32x448xf32, #tpu.memory_space<vmem>>, %arg11: memref<1568x128xbf16, #tpu.memory_space<vmem>>, %arg12: memref<1x128xf32, #tpu.memory_space<vmem>>, %arg13: memref<2x128xf32, #tpu.memory_space<vmem>>, %arg14: memref<2x28x140xbf16, #tpu.memory_space<vmem>>, %arg15: memref<2x18x224xbf16, #tpu.memory_space<vmem>>, %arg16: memref<2x14x1120xbf16, #tpu.memory_space<vmem>>, %arg17: memref<2x1568xbf16, #tpu.memory_space<vmem>>) attributes {dimension_semantics = [], scalar_prefetch = 0 : i64, scratch_operands = 4 : i64, tpu.core_type = #tpu.core_type<tc>} {
    %c0 = arith.constant 0 : index
    %c0_0 = arith.constant 0 : index
    %c0_1 = arith.constant 0 : index
    %0 = vector.load %arg0[%c0, %c0_0, %c0_1] : memref<2x32x28xbf16, #tpu.memory_space<vmem>>, vector<2x28x28xbf16>
    %c0_2 = arith.constant 0 : index
    %c0_3 = arith.constant 0 : index
    %c0_4 = arith.constant 0 : index
    %1 = vector.load %arg14[%c0_2, %c0_3, %c0_4] : memref<2x28x140xbf16, #tpu.memory_space<vmem>>, vector<2x28x28xbf16>
    tpu.vector_store %arg14[%c0_2, %c0_3, %c0_4], %0 {strides = array<i32>} : memref<2x28x140xbf16, #tpu.memory_space<vmem>>, vector<2x28x28xbf16>,
    %c0_5 = arith.constant 0 : index
    %c1 = arith.constant 1 : index
    %c0_6 = arith.constant 0 : index
    %2 = vector.load %arg0[%c0_5, %c1, %c0_6] : memref<2x32x28xbf16, #tpu.memory_space<vmem>>, vector<2x28x28xbf16>
    %c0_7 = arith.constant 0 : index
    %c0_8 = arith.constant 0 : index
    %c28 = arith.constant 28 : index
    %3 = vector.load %arg14[%c0_7, %c0_8, %c28] : memref<2x28x140xbf16, #tpu.memory_space<vmem>>, vector<2x28x28xbf16>
    tpu.vector_store %arg14[%c0_7, %c0_8, %c28], %2 {strides = array<i32>} : memref<2x28x140xbf16, #tpu.memory_space<vmem>>, vector<2x28x28xbf16>,
    %c0_9 = arith.constant 0 : index
    %c2 = arith.constant 2 : index
    %c0_10 = arith.constant 0 : index
    %4 = vector.load %arg0[%c0_9, %c2, %c0_10] : memref<2x32x28xbf16, #tpu.memory_space<vmem>>, vector<2x28x28xbf16>
    %c0_11 = arith.constant 0 : index
    %c0_12 = arith.constant 0 : index
    %c56 = arith.constant 56 : index
    %5 = vector.load %arg14[%c0_11, %c0_12, %c56] : memref<2x28x140xbf16, #tpu.memory_space<vmem>>, vector<2x28x28xbf16>
    tpu.vector_store %arg14[%c0_11, %c0_12, %c56], %4 {strides = array<i32>} : memref<2x28x140xbf16, #tpu.memory_space<vmem>>, vector<2x28x28xbf16>,
    %c0_13 = arith.constant 0 : index
    %c3 = arith.constant 3 : index
    %c0_14 = arith.constant 0 : index
    %6 = vector.load %arg0[%c0_13, %c3, %c0_14] : memref<2x32x28xbf16, #tpu.memory_space<vmem>>, vector<2x28x28xbf16>
    %c0_15 = arith.constant 0 : index
    %c0_16 = arith.constant 0 : index
    %c84 = arith.constant 84 : index
    %7 = vector.load %arg14[%c0_15, %c0_16, %c84] : memref<2x28x140xbf16, #tpu.memory_space<vmem>>, vector<2x28x28xbf16>
    tpu.vector_store %arg14[%c0_15, %c0_16, %c84], %6 {strides = array<i32>} : memref<2x28x140xbf16, #tpu.memory_space<vmem>>, vector<2x28x28xbf16>,
    %c0_17 = arith.constant 0 : index
    %c4 = arith.constant 4 : index
    %c0_18 = arith.constant 0 : index
    %8 = vector.load %arg0[%c0_17, %c4, %c0_18] : memref<2x32x28xbf16, #tpu.memory_space<vmem>>, vector<2x28x28xbf16>
    %c0_19 = arith.constant 0 : index
    %c0_20 = arith.constant 0 : index
    %c112 = arith.constant 112 : index
    %9 = vector.load %arg14[%c0_19, %c0_20, %c112] : memref<2x28x140xbf16, #tpu.memory_space<vmem>>, vector<2x28x28xbf16>
    tpu.vector_store %arg14[%c0_19, %c0_20, %c112], %8 {strides = array<i32>} : memref<2x28x140xbf16, #tpu.memory_space<vmem>>, vector<2x28x28xbf16>,
    %c0_21 = arith.constant 0 : index
    %c0_22 = arith.constant 0 : index
    %c0_23 = arith.constant 0 : index
    %10 = vector.load %arg14[%c0_21, %c0_22, %c0_23] : memref<2x28x140xbf16, #tpu.memory_space<vmem>>, vector<2x28x140xbf16>
    %11 = vector.shape_cast %10 : vector<2x28x140xbf16> to vector<56x140xbf16>
    %c0_24 = arith.constant 0 : index
    %c0_25 = arith.constant 0 : index
    %12 = vector.load %arg1[%c0_24, %c0_25] : memref<140x448xbf16, #tpu.memory_space<vmem>>, vector<140x448xbf16>
    %cst = arith.constant dense<0.000000e+00> : vector<56x448xf32>
    %13 = tpu.matmul %11, %12, %cst {dimension_numbers = #tpu.dot_dimension_numbers<[1], [0], [0], [1], [0, 0, 1, 1], [], []>} : vector<56x140xbf16>, vector<140x448xbf16>, vector<56x448xf32> -> vector<56x448xf32>
    %c0_26 = arith.constant 0 : index
    %c0_27 = arith.constant 0 : index
    %14 = vector.load %arg4[%c0_26, %c0_27] : memref<448x16xf32, #tpu.memory_space<vmem>>, vector<448x16xf32>
    %c0_28 = arith.constant 0 : index
    %c0_29 = arith.constant 0 : index
    %15 = vector.load %arg5[%c0_28, %c0_29] : memref<16x448xf32, #tpu.memory_space<vmem>>, vector<16x448xf32>
    %c0_30 = arith.constant 0 : index
    %c0_31 = arith.constant 0 : index
    %16 = vector.load %arg2[%c0_30, %c0_31] : memref<1x16xf32, #tpu.memory_space<vmem>>, vector<1x16xf32>
    %c0_32 = arith.constant 0 : index
    %c0_33 = arith.constant 0 : index
    %17 = vector.load %arg3[%c0_32, %c0_33] : memref<1x16xf32, #tpu.memory_space<vmem>>, vector<1x16xf32>
    %cst_34 = arith.constant dense<0.000000e+00> : vector<448xf32>
    %18 = vector.multi_reduction <add>, %13, %cst_34 [0] : vector<56x448xf32> to vector<448xf32>
    %19 = vector.shape_cast %18 : vector<448xf32> to vector<1x448xf32>
    %20 = arith.mulf %13, %13 : vector<56x448xf32>
    %cst_35 = arith.constant dense<0.000000e+00> : vector<448xf32>
    %21 = vector.multi_reduction <add>, %20, %cst_35 [0] : vector<56x448xf32> to vector<448xf32>
    %22 = vector.shape_cast %21 : vector<448xf32> to vector<1x448xf32>
    %cst_36 = arith.constant dense<0.000000e+00> : vector<1x16xf32>
    %23 = tpu.matmul %19, %14, %cst_36 {dimension_numbers = #tpu.dot_dimension_numbers<[1], [0], [0], [1], [0, 0, 1, 1], [], []>} : vector<1x448xf32>, vector<448x16xf32>, vector<1x16xf32> -> vector<1x16xf32>
    %cst_37 = arith.constant dense<0.000000e+00> : vector<1x16xf32>
    %24 = tpu.matmul %22, %14, %cst_37 {dimension_numbers = #tpu.dot_dimension_numbers<[1], [0], [0], [1], [0, 0, 1, 1], [], []>} : vector<1x448xf32>, vector<448x16xf32>, vector<1x16xf32> -> vector<1x16xf32>
    %cst_38 = arith.constant 6.37755089E-4 : f32
    %25 = vector.broadcast %cst_38 : f32 to vector<1x16xf32>
    %26 = arith.mulf %23, %25 : vector<1x16xf32>
    %cst_39 = arith.constant 6.37755089E-4 : f32
    %27 = vector.broadcast %cst_39 : f32 to vector<1x16xf32>
    %28 = arith.mulf %24, %27 : vector<1x16xf32>
    %29 = arith.mulf %26, %26 : vector<1x16xf32>
    %30 = arith.subf %28, %29 : vector<1x16xf32>
    %cst_40 = arith.constant 0.000000e+00 : f32
    %31 = vector.broadcast %cst_40 : f32 to vector<1x16xf32>
    %32 = arith.maximumf %30, %31 : vector<1x16xf32>
    %cst_41 = arith.constant 9.99999974E-6 : f32
    %33 = vector.broadcast %cst_41 : f32 to vector<1x16xf32>
    %34 = arith.addf %32, %33 : vector<1x16xf32>
    %35 = math.rsqrt %34 : vector<1x16xf32>
    %36 = arith.mulf %16, %35 : vector<1x16xf32>
    %37 = arith.mulf %26, %36 : vector<1x16xf32>
    %38 = arith.subf %17, %37 : vector<1x16xf32>
    %cst_42 = arith.constant dense<0.000000e+00> : vector<1x448xf32>
    %39 = tpu.matmul %36, %15, %cst_42 {dimension_numbers = #tpu.dot_dimension_numbers<[1], [0], [0], [1], [0, 0, 1, 1], [], []>} : vector<1x16xf32>, vector<16x448xf32>, vector<1x448xf32> -> vector<1x448xf32>
    %cst_43 = arith.constant dense<0.000000e+00> : vector<1x448xf32>
    %40 = tpu.matmul %38, %15, %cst_43 {dimension_numbers = #tpu.dot_dimension_numbers<[1], [0], [0], [1], [0, 0, 1, 1], [], []>} : vector<1x16xf32>, vector<16x448xf32>, vector<1x448xf32> -> vector<1x448xf32>
    %41 = vector.broadcast %39 : vector<1x448xf32> to vector<56x448xf32>
    %42 = arith.mulf %13, %41 : vector<56x448xf32>
    %43 = vector.broadcast %40 : vector<1x448xf32> to vector<56x448xf32>
    %44 = arith.addf %42, %43 : vector<56x448xf32>
    %cst_44 = arith.constant 0.000000e+00 : f32
    %45 = vector.broadcast %cst_44 : f32 to vector<56x448xf32>
    %46 = arith.maximumf %44, %45 : vector<56x448xf32>
    %47 = vector.extract_strided_slice %46 {offsets = [0, 0], sizes = [56, 224], strides = [1, 1]} : vector<56x448xf32> to vector<56x224xf32>
    %48 = vector.extract_strided_slice %46 {offsets = [0, 224], sizes = [56, 224], strides = [1, 1]} : vector<56x448xf32> to vector<56x224xf32>
    %49 = arith.maximumf %47, %48 : vector<56x224xf32>
    %50 = vector.shape_cast %49 : vector<56x224xf32> to vector<2x14x2x224xf32>
    %51 = vector.extract_strided_slice %50 {offsets = [0, 0, 0, 0], sizes = [2, 14, 1, 224], strides = [1, 1, 1, 1]} : vector<2x14x2x224xf32> to vector<2x14x1x224xf32>
    %52 = vector.shape_cast %51 : vector<2x14x1x224xf32> to vector<2x14x224xf32>
    %53 = vector.extract_strided_slice %50 {offsets = [0, 0, 1, 0], sizes = [2, 14, 1, 224], strides = [1, 1, 1, 1]} : vector<2x14x2x224xf32> to vector<2x14x1x224xf32>
    %54 = vector.shape_cast %53 : vector<2x14x1x224xf32> to vector<2x14x224xf32>
    %55 = arith.maximumf %52, %54 : vector<2x14x224xf32>
    %cst_45 = arith.constant 0.000000e+00 : bf16
    %56 = vector.broadcast %cst_45 : bf16 to vector<2x2x224xbf16>
    %c0_46 = arith.constant 0 : index
    %c0_47 = arith.constant 0 : index
    %c0_48 = arith.constant 0 : index
    %57 = vector.load %arg15[%c0_46, %c0_47, %c0_48] : memref<2x18x224xbf16, #tpu.memory_space<vmem>>, vector<2x2x224xbf16>
    tpu.vector_store %arg15[%c0_46, %c0_47, %c0_48], %56 {strides = array<i32>} : memref<2x18x224xbf16, #tpu.memory_space<vmem>>, vector<2x2x224xbf16>,
    %cst_49 = arith.constant 0.000000e+00 : bf16
    %58 = vector.broadcast %cst_49 : bf16 to vector<2x2x224xbf16>
    %c0_50 = arith.constant 0 : index
    %c16 = arith.constant 16 : index
    %c0_51 = arith.constant 0 : index
    %59 = vector.load %arg15[%c0_50, %c16, %c0_51] : memref<2x18x224xbf16, #tpu.memory_space<vmem>>, vector<2x2x224xbf16>
    tpu.vector_store %arg15[%c0_50, %c16, %c0_51], %58 {strides = array<i32>} : memref<2x18x224xbf16, #tpu.memory_space<vmem>>, vector<2x2x224xbf16>,
    %60 = arith.truncf %55 : vector<2x14x224xf32> to vector<2x14x224xbf16>
    %c0_52 = arith.constant 0 : index
    %c2_53 = arith.constant 2 : index
    %c0_54 = arith.constant 0 : index
    %61 = vector.load %arg15[%c0_52, %c2_53, %c0_54] : memref<2x18x224xbf16, #tpu.memory_space<vmem>>, vector<2x14x224xbf16>
    tpu.vector_store %arg15[%c0_52, %c2_53, %c0_54], %60 {strides = array<i32>} : memref<2x18x224xbf16, #tpu.memory_space<vmem>>, vector<2x14x224xbf16>,
    %c0_55 = arith.constant 0 : index
    %c0_56 = arith.constant 0 : index
    %c0_57 = arith.constant 0 : index
    %62 = vector.load %arg15[%c0_55, %c0_56, %c0_57] : memref<2x18x224xbf16, #tpu.memory_space<vmem>>, vector<2x14x224xbf16>
    %c0_58 = arith.constant 0 : index
    %c0_59 = arith.constant 0 : index
    %c0_60 = arith.constant 0 : index
    %63 = vector.load %arg16[%c0_58, %c0_59, %c0_60] : memref<2x14x1120xbf16, #tpu.memory_space<vmem>>, vector<2x14x224xbf16>
    tpu.vector_store %arg16[%c0_58, %c0_59, %c0_60], %62 {strides = array<i32>} : memref<2x14x1120xbf16, #tpu.memory_space<vmem>>, vector<2x14x224xbf16>,
    %c0_61 = arith.constant 0 : index
    %c1_62 = arith.constant 1 : index
    %c0_63 = arith.constant 0 : index
    %64 = vector.load %arg15[%c0_61, %c1_62, %c0_63] : memref<2x18x224xbf16, #tpu.memory_space<vmem>>, vector<2x14x224xbf16>
    %c0_64 = arith.constant 0 : index
    %c0_65 = arith.constant 0 : index
    %c224 = arith.constant 224 : index
    %65 = vector.load %arg16[%c0_64, %c0_65, %c224] : memref<2x14x1120xbf16, #tpu.memory_space<vmem>>, vector<2x14x224xbf16>
    tpu.vector_store %arg16[%c0_64, %c0_65, %c224], %64 {strides = array<i32>} : memref<2x14x1120xbf16, #tpu.memory_space<vmem>>, vector<2x14x224xbf16>,
    %c0_66 = arith.constant 0 : index
    %c2_67 = arith.constant 2 : index
    %c0_68 = arith.constant 0 : index
    %66 = vector.load %arg15[%c0_66, %c2_67, %c0_68] : memref<2x18x224xbf16, #tpu.memory_space<vmem>>, vector<2x14x224xbf16>
    %c0_69 = arith.constant 0 : index
    %c0_70 = arith.constant 0 : index
    %c448 = arith.constant 448 : index
    %67 = vector.load %arg16[%c0_69, %c0_70, %c448] : memref<2x14x1120xbf16, #tpu.memory_space<vmem>>, vector<2x14x224xbf16>
    tpu.vector_store %arg16[%c0_69, %c0_70, %c448], %66 {strides = array<i32>} : memref<2x14x1120xbf16, #tpu.memory_space<vmem>>, vector<2x14x224xbf16>,
    %c0_71 = arith.constant 0 : index
    %c3_72 = arith.constant 3 : index
    %c0_73 = arith.constant 0 : index
    %68 = vector.load %arg15[%c0_71, %c3_72, %c0_73] : memref<2x18x224xbf16, #tpu.memory_space<vmem>>, vector<2x14x224xbf16>
    %c0_74 = arith.constant 0 : index
    %c0_75 = arith.constant 0 : index
    %c672 = arith.constant 672 : index
    %69 = vector.load %arg16[%c0_74, %c0_75, %c672] : memref<2x14x1120xbf16, #tpu.memory_space<vmem>>, vector<2x14x224xbf16>
    tpu.vector_store %arg16[%c0_74, %c0_75, %c672], %68 {strides = array<i32>} : memref<2x14x1120xbf16, #tpu.memory_space<vmem>>, vector<2x14x224xbf16>,
    %c0_76 = arith.constant 0 : index
    %c4_77 = arith.constant 4 : index
    %c0_78 = arith.constant 0 : index
    %70 = vector.load %arg15[%c0_76, %c4_77, %c0_78] : memref<2x18x224xbf16, #tpu.memory_space<vmem>>, vector<2x14x224xbf16>
    %c0_79 = arith.constant 0 : index
    %c0_80 = arith.constant 0 : index
    %c896 = arith.constant 896 : index
    %71 = vector.load %arg16[%c0_79, %c0_80, %c896] : memref<2x14x1120xbf16, #tpu.memory_space<vmem>>, vector<2x14x224xbf16>
    tpu.vector_store %arg16[%c0_79, %c0_80, %c896], %70 {strides = array<i32>} : memref<2x14x1120xbf16, #tpu.memory_space<vmem>>, vector<2x14x224xbf16>,
    %c0_81 = arith.constant 0 : index
    %c0_82 = arith.constant 0 : index
    %c0_83 = arith.constant 0 : index
    %72 = vector.load %arg16[%c0_81, %c0_82, %c0_83] : memref<2x14x1120xbf16, #tpu.memory_space<vmem>>, vector<2x14x1120xbf16>
    %73 = vector.shape_cast %72 : vector<2x14x1120xbf16> to vector<28x1120xbf16>
    %c0_84 = arith.constant 0 : index
    %c0_85 = arith.constant 0 : index
    %74 = vector.load %arg6[%c0_84, %c0_85] : memref<1120x448xbf16, #tpu.memory_space<vmem>>, vector<1120x448xbf16>
    %cst_86 = arith.constant dense<0.000000e+00> : vector<28x448xf32>
    %75 = tpu.matmul %73, %74, %cst_86 {dimension_numbers = #tpu.dot_dimension_numbers<[1], [0], [0], [1], [0, 0, 1, 1], [], []>} : vector<28x1120xbf16>, vector<1120x448xbf16>, vector<28x448xf32> -> vector<28x448xf32>
    %c0_87 = arith.constant 0 : index
    %c0_88 = arith.constant 0 : index
    %76 = vector.load %arg9[%c0_87, %c0_88] : memref<448x32xf32, #tpu.memory_space<vmem>>, vector<448x32xf32>
    %c0_89 = arith.constant 0 : index
    %c0_90 = arith.constant 0 : index
    %77 = vector.load %arg10[%c0_89, %c0_90] : memref<32x448xf32, #tpu.memory_space<vmem>>, vector<32x448xf32>
    %c0_91 = arith.constant 0 : index
    %c0_92 = arith.constant 0 : index
    %78 = vector.load %arg7[%c0_91, %c0_92] : memref<1x32xf32, #tpu.memory_space<vmem>>, vector<1x32xf32>
    %c0_93 = arith.constant 0 : index
    %c0_94 = arith.constant 0 : index
    %79 = vector.load %arg8[%c0_93, %c0_94] : memref<1x32xf32, #tpu.memory_space<vmem>>, vector<1x32xf32>
    %cst_95 = arith.constant dense<0.000000e+00> : vector<448xf32>
    %80 = vector.multi_reduction <add>, %75, %cst_95 [0] : vector<28x448xf32> to vector<448xf32>
    %81 = vector.shape_cast %80 : vector<448xf32> to vector<1x448xf32>
    %82 = arith.mulf %75, %75 : vector<28x448xf32>
    %cst_96 = arith.constant dense<0.000000e+00> : vector<448xf32>
    %83 = vector.multi_reduction <add>, %82, %cst_96 [0] : vector<28x448xf32> to vector<448xf32>
    %84 = vector.shape_cast %83 : vector<448xf32> to vector<1x448xf32>
    %cst_97 = arith.constant dense<0.000000e+00> : vector<1x32xf32>
    %85 = tpu.matmul %81, %76, %cst_97 {dimension_numbers = #tpu.dot_dimension_numbers<[1], [0], [0], [1], [0, 0, 1, 1], [], []>} : vector<1x448xf32>, vector<448x32xf32>, vector<1x32xf32> -> vector<1x32xf32>
    %cst_98 = arith.constant dense<0.000000e+00> : vector<1x32xf32>
    %86 = tpu.matmul %84, %76, %cst_98 {dimension_numbers = #tpu.dot_dimension_numbers<[1], [0], [0], [1], [0, 0, 1, 1], [], []>} : vector<1x448xf32>, vector<448x32xf32>, vector<1x32xf32> -> vector<1x32xf32>
    %cst_99 = arith.constant 0.00255102036 : f32
    %87 = vector.broadcast %cst_99 : f32 to vector<1x32xf32>
    %88 = arith.mulf %85, %87 : vector<1x32xf32>
    %cst_100 = arith.constant 0.00255102036 : f32
    %89 = vector.broadcast %cst_100 : f32 to vector<1x32xf32>
    %90 = arith.mulf %86, %89 : vector<1x32xf32>
    %91 = arith.mulf %88, %88 : vector<1x32xf32>
    %92 = arith.subf %90, %91 : vector<1x32xf32>
    %cst_101 = arith.constant 0.000000e+00 : f32
    %93 = vector.broadcast %cst_101 : f32 to vector<1x32xf32>
    %94 = arith.maximumf %92, %93 : vector<1x32xf32>
    %cst_102 = arith.constant 9.99999974E-6 : f32
    %95 = vector.broadcast %cst_102 : f32 to vector<1x32xf32>
    %96 = arith.addf %94, %95 : vector<1x32xf32>
    %97 = math.rsqrt %96 : vector<1x32xf32>
    %98 = arith.mulf %78, %97 : vector<1x32xf32>
    %99 = arith.mulf %88, %98 : vector<1x32xf32>
    %100 = arith.subf %79, %99 : vector<1x32xf32>
    %cst_103 = arith.constant dense<0.000000e+00> : vector<1x448xf32>
    %101 = tpu.matmul %98, %77, %cst_103 {dimension_numbers = #tpu.dot_dimension_numbers<[1], [0], [0], [1], [0, 0, 1, 1], [], []>} : vector<1x32xf32>, vector<32x448xf32>, vector<1x448xf32> -> vector<1x448xf32>
    %cst_104 = arith.constant dense<0.000000e+00> : vector<1x448xf32>
    %102 = tpu.matmul %100, %77, %cst_104 {dimension_numbers = #tpu.dot_dimension_numbers<[1], [0], [0], [1], [0, 0, 1, 1], [], []>} : vector<1x32xf32>, vector<32x448xf32>, vector<1x448xf32> -> vector<1x448xf32>
    %103 = vector.broadcast %101 : vector<1x448xf32> to vector<28x448xf32>
    %104 = arith.mulf %75, %103 : vector<28x448xf32>
    %105 = vector.broadcast %102 : vector<1x448xf32> to vector<28x448xf32>
    %106 = arith.addf %104, %105 : vector<28x448xf32>
    %cst_105 = arith.constant 0.000000e+00 : f32
    %107 = vector.broadcast %cst_105 : f32 to vector<28x448xf32>
    %108 = arith.maximumf %106, %107 : vector<28x448xf32>
    %109 = vector.extract_strided_slice %108 {offsets = [0, 0], sizes = [28, 224], strides = [1, 1]} : vector<28x448xf32> to vector<28x224xf32>
    %110 = vector.extract_strided_slice %108 {offsets = [0, 224], sizes = [28, 224], strides = [1, 1]} : vector<28x448xf32> to vector<28x224xf32>
    %111 = arith.maximumf %109, %110 : vector<28x224xf32>
    %112 = vector.shape_cast %111 : vector<28x224xf32> to vector<2x7x2x224xf32>
    %113 = vector.extract_strided_slice %112 {offsets = [0, 0, 0, 0], sizes = [2, 7, 1, 224], strides = [1, 1, 1, 1]} : vector<2x7x2x224xf32> to vector<2x7x1x224xf32>
    %114 = vector.shape_cast %113 : vector<2x7x1x224xf32> to vector<2x7x224xf32>
    %115 = vector.extract_strided_slice %112 {offsets = [0, 0, 1, 0], sizes = [2, 7, 1, 224], strides = [1, 1, 1, 1]} : vector<2x7x2x224xf32> to vector<2x7x1x224xf32>
    %116 = vector.shape_cast %115 : vector<2x7x1x224xf32> to vector<2x7x224xf32>
    %117 = arith.maximumf %114, %116 : vector<2x7x224xf32>
    %118 = arith.truncf %117 : vector<2x7x224xf32> to vector<2x7x224xbf16>
    %119 = vector.extract_strided_slice %118 {offsets = [0, 0, 0], sizes = [2, 1, 224], strides = [1, 1, 1]} : vector<2x7x224xbf16> to vector<2x1x224xbf16>
    %120 = vector.shape_cast %119 : vector<2x1x224xbf16> to vector<2x224xbf16>
    %c0_106 = arith.constant 0 : index
    %c0_107 = arith.constant 0 : index
    %121 = vector.load %arg17[%c0_106, %c0_107] : memref<2x1568xbf16, #tpu.memory_space<vmem>>, vector<2x224xbf16>
    tpu.vector_store %arg17[%c0_106, %c0_107], %120 {strides = array<i32>} : memref<2x1568xbf16, #tpu.memory_space<vmem>>, vector<2x224xbf16>,
    %122 = vector.extract_strided_slice %118 {offsets = [0, 1, 0], sizes = [2, 1, 224], strides = [1, 1, 1]} : vector<2x7x224xbf16> to vector<2x1x224xbf16>
    %123 = vector.shape_cast %122 : vector<2x1x224xbf16> to vector<2x224xbf16>
    %c0_108 = arith.constant 0 : index
    %c224_109 = arith.constant 224 : index
    %124 = vector.load %arg17[%c0_108, %c224_109] : memref<2x1568xbf16, #tpu.memory_space<vmem>>, vector<2x224xbf16>
    tpu.vector_store %arg17[%c0_108, %c224_109], %123 {strides = array<i32>} : memref<2x1568xbf16, #tpu.memory_space<vmem>>, vector<2x224xbf16>,
    %125 = vector.extract_strided_slice %118 {offsets = [0, 2, 0], sizes = [2, 1, 224], strides = [1, 1, 1]} : vector<2x7x224xbf16> to vector<2x1x224xbf16>
    %126 = vector.shape_cast %125 : vector<2x1x224xbf16> to vector<2x224xbf16>
    %c0_110 = arith.constant 0 : index
    %c448_111 = arith.constant 448 : index
    %127 = vector.load %arg17[%c0_110, %c448_111] : memref<2x1568xbf16, #tpu.memory_space<vmem>>, vector<2x224xbf16>
    tpu.vector_store %arg17[%c0_110, %c448_111], %126 {strides = array<i32>} : memref<2x1568xbf16, #tpu.memory_space<vmem>>, vector<2x224xbf16>,
    %128 = vector.extract_strided_slice %118 {offsets = [0, 3, 0], sizes = [2, 1, 224], strides = [1, 1, 1]} : vector<2x7x224xbf16> to vector<2x1x224xbf16>
    %129 = vector.shape_cast %128 : vector<2x1x224xbf16> to vector<2x224xbf16>
    %c0_112 = arith.constant 0 : index
    %c672_113 = arith.constant 672 : index
    %130 = vector.load %arg17[%c0_112, %c672_113] : memref<2x1568xbf16, #tpu.memory_space<vmem>>, vector<2x224xbf16>
    tpu.vector_store %arg17[%c0_112, %c672_113], %129 {strides = array<i32>} : memref<2x1568xbf16, #tpu.memory_space<vmem>>, vector<2x224xbf16>,
    %131 = vector.extract_strided_slice %118 {offsets = [0, 4, 0], sizes = [2, 1, 224], strides = [1, 1, 1]} : vector<2x7x224xbf16> to vector<2x1x224xbf16>
    %132 = vector.shape_cast %131 : vector<2x1x224xbf16> to vector<2x224xbf16>
    %c0_114 = arith.constant 0 : index
    %c896_115 = arith.constant 896 : index
    %133 = vector.load %arg17[%c0_114, %c896_115] : memref<2x1568xbf16, #tpu.memory_space<vmem>>, vector<2x224xbf16>
    tpu.vector_store %arg17[%c0_114, %c896_115], %132 {strides = array<i32>} : memref<2x1568xbf16, #tpu.memory_space<vmem>>, vector<2x224xbf16>,
    %134 = vector.extract_strided_slice %118 {offsets = [0, 5, 0], sizes = [2, 1, 224], strides = [1, 1, 1]} : vector<2x7x224xbf16> to vector<2x1x224xbf16>
    %135 = vector.shape_cast %134 : vector<2x1x224xbf16> to vector<2x224xbf16>
    %c0_116 = arith.constant 0 : index
    %c1120 = arith.constant 1120 : index
    %136 = vector.load %arg17[%c0_116, %c1120] : memref<2x1568xbf16, #tpu.memory_space<vmem>>, vector<2x224xbf16>
    tpu.vector_store %arg17[%c0_116, %c1120], %135 {strides = array<i32>} : memref<2x1568xbf16, #tpu.memory_space<vmem>>, vector<2x224xbf16>,
    %137 = vector.extract_strided_slice %118 {offsets = [0, 6, 0], sizes = [2, 1, 224], strides = [1, 1, 1]} : vector<2x7x224xbf16> to vector<2x1x224xbf16>
    %138 = vector.shape_cast %137 : vector<2x1x224xbf16> to vector<2x224xbf16>
    %c0_117 = arith.constant 0 : index
    %c1344 = arith.constant 1344 : index
    %139 = vector.load %arg17[%c0_117, %c1344] : memref<2x1568xbf16, #tpu.memory_space<vmem>>, vector<2x224xbf16>
    tpu.vector_store %arg17[%c0_117, %c1344], %138 {strides = array<i32>} : memref<2x1568xbf16, #tpu.memory_space<vmem>>, vector<2x224xbf16>,
    %c0_118 = arith.constant 0 : index
    %c0_119 = arith.constant 0 : index
    %140 = vector.load %arg17[%c0_118, %c0_119] : memref<2x1568xbf16, #tpu.memory_space<vmem>>, vector<2x1568xbf16>
    %c0_120 = arith.constant 0 : index
    %c0_121 = arith.constant 0 : index
    %141 = vector.load %arg11[%c0_120, %c0_121] : memref<1568x128xbf16, #tpu.memory_space<vmem>>, vector<1568x128xbf16>
    %cst_122 = arith.constant dense<0.000000e+00> : vector<2x128xf32>
    %142 = tpu.matmul %140, %141, %cst_122 {dimension_numbers = #tpu.dot_dimension_numbers<[1], [0], [0], [1], [0, 0, 1, 1], [], []>} : vector<2x1568xbf16>, vector<1568x128xbf16>, vector<2x128xf32> -> vector<2x128xf32>
    %c0_123 = arith.constant 0 : index
    %c0_124 = arith.constant 0 : index
    %143 = vector.load %arg12[%c0_123, %c0_124] : memref<1x128xf32, #tpu.memory_space<vmem>>, vector<1x128xf32>
    %144 = vector.broadcast %143 : vector<1x128xf32> to vector<2x128xf32>
    %145 = arith.addf %142, %144 : vector<2x128xf32>
    %c0_125 = arith.constant 0 : index
    %c0_126 = arith.constant 0 : index
    %146 = vector.load %arg13[%c0_125, %c0_126] : memref<2x128xf32, #tpu.memory_space<vmem>>, vector<2x128xf32>
    tpu.vector_store %arg13[%c0_125, %c0_126], %145 {strides = array<i32>} : memref<2x128xf32, #tpu.memory_space<vmem>>, vector<2x128xf32>,
    return
  }
}

</mosaic_0001>

<llo_original>
// kernel: cnn_mnist_forward.1
$region0: #{cnn_mnist_forward.1}
  #allocation0 [shape = 'u32[]', space=smem, size = 0x4, offset = 0x4, fixed_abs, tag = 'smem constant byte address 0x4 - core index']
  #allocation1 [shape = 'u32[144,128]{1,0:T(1,128)}', space=vmem, size = 0x12000, scoped, tag = 'internal scratch']
  #allocation2 [shape = 'bf16[2,28,140]{2,1,0:T(8,128)(2,1)}', space=vmem, size = 0x8000, scoped, tag = 'scratch operand']
  #allocation3 [shape = 'bf16[2,18,224]{2,1,0:T(8,128)(2,1)}', space=vmem, size = 0x6000, scoped, tag = 'scratch operand']
  #allocation4 [shape = 'bf16[2,14,1120]{2,1,0:T(8,128)(2,1)}', space=vmem, size = 0x12000, scoped, tag = 'scratch operand']
  #allocation5 [shape = 'bf16[2,1568]{1,0:T(2,128)(2,1)}', space=vmem, size = 0x1a00, scoped, tag = 'scratch operand']
  %s0 = inlined_call_operand.vmem [shape: bf16[2,32,28], index: 0, kind: input, shape index: {}]
  %s1 = inlined_call_operand.vmem [shape: bf16[140,448], index: 1, kind: input, shape index: {}]
  %s2 = inlined_call_operand.vmem [shape: f32[1,16], index: 2, kind: input, shape index: {}]
  %s3 = inlined_call_operand.vmem [shape: f32[1,16], index: 3, kind: input, shape index: {}]
  %s4 = inlined_call_operand.vmem [shape: f32[448,16], index: 4, kind: input, shape index: {}]
  %s5 = inlined_call_operand.vmem [shape: f32[16,448], index: 5, kind: input, shape index: {}]
  %s6 = inlined_call_operand.vmem [shape: bf16[1120,448], index: 6, kind: input, shape index: {}]
  %s7 = inlined_call_operand.vmem [shape: f32[1,32], index: 7, kind: input, shape index: {}]
  %s8 = inlined_call_operand.vmem [shape: f32[1,32], index: 8, kind: input, shape index: {}]
  %s9 = inlined_call_operand.vmem [shape: f32[448,32], index: 9, kind: input, shape index: {}]
  %s10 = inlined_call_operand.vmem [shape: f32[32,448], index: 10, kind: input, shape index: {}]
  %s11 = inlined_call_operand.vmem [shape: bf16[1568,128], index: 11, kind: input, shape index: {}]
  %s12 = inlined_call_operand.vmem [shape: f32[1,128], index: 12, kind: input, shape index: {}]
  %s13 = inlined_call_operand.hbm [shape: f32[2,128], index: 13, kind: output, shape index: {}]
  %s14 = sld [smem:[#allocation0]]
  $region62: #{cnn_mnist_forward.1} parent=0
    _
  %s16 = ssub.s32 1, %s14
  %s17 = scalar_select 0, %s16, %s14
  $region1: #{cnn_mnist_forward.1} parent=0
    #allocation6 [shape = 'u8[1024]{0}', space=vmem, size = 0x400, scoped, tag = 'output window, operand 0, single buffered']
    #allocation7 [shape = 's32[1]{0}', space=sflag, size = 0x4, scoped, tag = 'scoped memory for cnn_mnist_forward.1']
    %18 = vsyncpa [#allocation7], 0
    // Predicated region
    $region2: #{cnn_mnist_forward.1} parent=1 // pred_check
      _
    $region3: #{cnn_mnist_forward.1} parent=1 // pred_check_branch
      %20 = sbr.rel (0) target = $region5
    $region4: #{cnn_mnist_forward.1} parent=1 // pred_region
      _
    $region5: #{cnn_mnist_forward.1} parent=1 // pred_fallthru
      _
    // Predicated region
    $region6: #{cnn_mnist_forward.1} parent=1 // pred_check
      _
    $region7: #{cnn_mnist_forward.1} parent=1 // pred_check_branch
      %22 = sbr.rel (0) target = $region9
    $region8: #{cnn_mnist_forward.1} parent=1 // pred_region
      _
    $region9: #{cnn_mnist_forward.1} parent=1 // pred_fallthru
      _
    // Predicated region
    $region10: #{cnn_mnist_forward.1} parent=1 // pred_check
      _
    $region11: #{cnn_mnist_forward.1} parent=1 // pred_check_branch
      %24 = sbr.rel (0) target = $region13
    $region12: #{cnn_mnist_forward.1} parent=1 // pred_region
      _
    $region13: #{cnn_mnist_forward.1} parent=1 // pred_fallthru
      _
    // Predicated region
    $region14: #{cnn_mnist_forward.1} parent=1 // pred_check
      _
    $region15: #{cnn_mnist_forward.1} parent=1 // pred_check_branch
      %26 = sbr.rel (0) target = $region17
    $region16: #{cnn_mnist_forward.1} parent=1 // pred_region
      _
    $region17: #{cnn_mnist_forward.1} parent=1 // pred_fallthru
      _
    // Predicated region
    $region18: #{cnn_mnist_forward.1} parent=1 // pred_check
      _
    $region19: #{cnn_mnist_forward.1} parent=1 // pred_check_branch
      %28 = sbr.rel (0) target = $region21
    $region20: #{cnn_mnist_forward.1} parent=1 // pred_region
      _
    $region21: #{cnn_mnist_forward.1} parent=1 // pred_fallthru
      _
    // Predicated region
    $region22: #{cnn_mnist_forward.1} parent=1 // pred_check
      _
    $region23: #{cnn_mnist_forward.1} parent=1 // pred_check_branch
      %30 = sbr.rel (0) target = $region25
    $region24: #{cnn_mnist_forward.1} parent=1 // pred_region
      _
    $region25: #{cnn_mnist_forward.1} parent=1 // pred_fallthru
      _
    // Predicated region
    $region26: #{cnn_mnist_forward.1} parent=1 // pred_check
      _
    $region27: #{cnn_mnist_forward.1} parent=1 // pred_check_branch
      %32 = sbr.rel (0) target = $region29
    $region28: #{cnn_mnist_forward.1} parent=1 // pred_region
      _
    $region29: #{cnn_mnist_forward.1} parent=1 // pred_fallthru
      _
    // Predicated region
    $region30: #{cnn_mnist_forward.1} parent=1 // pred_check
      _
    $region31: #{cnn_mnist_forward.1} parent=1 // pred_check_branch
      %34 = sbr.rel (0) target = $region33
    $region32: #{cnn_mnist_forward.1} parent=1 // pred_region
      _
    $region33: #{cnn_mnist_forward.1} parent=1 // pred_fallthru
      _
    // Predicated region
    $region34: #{cnn_mnist_forward.1} parent=1 // pred_check
      _
    $region35: #{cnn_mnist_forward.1} parent=1 // pred_check_branch
      %36 = sbr.rel (0) target = $region37
    $region36: #{cnn_mnist_forward.1} parent=1 // pred_region
      _
    $region37: #{cnn_mnist_forward.1} parent=1 // pred_fallthru
      _
    // Predicated region
    $region38: #{cnn_mnist_forward.1} parent=1 // pred_check
      _
    $region39: #{cnn_mnist_forward.1} parent=1 // pred_check_branch
      %38 = sbr.rel (0) target = $region41
    $region40: #{cnn_mnist_forward.1} parent=1 // pred_region
      _
    $region41: #{cnn_mnist_forward.1} parent=1 // pred_fallthru
      _
    // Predicated region
    $region42: #{cnn_mnist_forward.1} parent=1 // pred_check
      _
    $region43: #{cnn_mnist_forward.1} parent=1 // pred_check_branch
      %40 = sbr.rel (0) target = $region45
    $region44: #{cnn_mnist_forward.1} parent=1 // pred_region
      _
    $region45: #{cnn_mnist_forward.1} parent=1 // pred_fallthru
      _
    // Predicated region
    $region46: #{cnn_mnist_forward.1} parent=1 // pred_check
      _
    $region47: #{cnn_mnist_forward.1} parent=1 // pred_check_branch
      %42 = sbr.rel (0) target = $region49
    $region48: #{cnn_mnist_forward.1} parent=1 // pred_region
      _
    $region49: #{cnn_mnist_forward.1} parent=1 // pred_fallthru
      _
    // Predicated region
    $region50: #{cnn_mnist_forward.1} parent=1 // pred_check
      _
    $region51: #{cnn_mnist_forward.1} parent=1 // pred_check_branch
      %44 = sbr.rel (0) target = $region53
    $region52: #{cnn_mnist_forward.1} parent=1 // pred_region
      _
    $region53: #{cnn_mnist_forward.1} parent=1 // pred_fallthru
      _
    %v46 = vld [vmem:[%s0] sm:$0xf]
    %v47 = vld [vmem:[%s0 + $0x4] sm:$0xf]
    %v48 = vld [vmem:[%s0 + $0x8] sm:$0xf]
    %v49 = vld [vmem:[%s0 + $0xc] sm:$0x3]
    %v50 = vld [vmem:[%s0 + $0x10] sm:$0xf]
    %v51 = vld [vmem:[%s0 + $0x14] sm:$0xf]
    %v52 = vld [vmem:[%s0 + $0x18] sm:$0xf]
    %v53 = vld [vmem:[%s0 + $0x1c] sm:$0x3]
    %vm54 = vcmask 224256
    %55 = vst.msk [vmem:[#allocation2] sm:$0xf] %vm54, %v46
    %56 = vst.msk [vmem:[#allocation2 + $0x8] sm:$0xf] %vm54, %v47
    %57 = vst.msk [vmem:[#allocation2 + $0x10] sm:$0xf] %vm54, %v48
    %vm58 = vcmask 222208
    %59 = vst.msk [vmem:[#allocation2 + $0x18] sm:$0x3] %vm58, %v49
    %60 = vst.msk [vmem:[#allocation2 + $0x20] sm:$0xf] %vm54, %v50
    %61 = vst.msk [vmem:[#allocation2 + $0x28] sm:$0xf] %vm54, %v51
    %62 = vst.msk [vmem:[#allocation2 + $0x30] sm:$0xf] %vm54, %v52
    %63 = vst.msk [vmem:[#allocation2 + $0x38] sm:$0x3] %vm58, %v53
    %v64 = vld [vmem:[%s0] sm:$0xf]
    %v65 = vld [vmem:[%s0 + $0x4] sm:$0xf]
    %v66 = vld [vmem:[%s0 + $0x8] sm:$0xf]
    %v67 = vld [vmem:[%s0 + $0xc] sm:$0x7]
    %v68 = vld [vmem:[%s0 + $0x10] sm:$0xf]
    %v69 = vld [vmem:[%s0 + $0x14] sm:$0xf]
    %v70 = vld [vmem:[%s0 + $0x18] sm:$0xf]
    %v71 = vld [vmem:[%s0 + $0x1c] sm:$0x7]
    %vm72 = vsmask.f32 3328
    %vm73 = vsmask.f32 7440
    %vm74 = vmor %vm72, %vm73
    %v76 = vshrl.u32 %v64, 16
    %v78 = vrot.slane %v76, 4
    %v79 = vshll.u32 %v64, 16
    %v81 = vrot.slane %v79, 5
    %v82 = vor.u32 %v78, %v81
    %v83 = vrot.slane %v82, 4
    %v85 = vshll.u32 %v65, 16
    %v87 = vrot.slane %v85, 5
    %v88 = vsel %vm74, %v83, %v87
    %v89 = vshrl.u32 %v65, 16
    %v91 = vrot.slane %v89, 4
    %v92 = vor.u32 %v91, %v87
    %v93 = vrot.slane %v92, 4
    %v95 = vshll.u32 %v66, 16
    %v97 = vrot.slane %v95, 5
    %v98 = vsel %vm74, %v93, %v97
    %v99 = vshrl.u32 %v66, 16
    %v101 = vrot.slane %v99, 4
    %v102 = vor.u32 %v101, %v97
    %v103 = vrot.slane %v102, 4
    %v105 = vshll.u32 %v67, 16
    %v107 = vrot.slane %v105, 5
    %v108 = vsel %vm74, %v103, %v107
    %v109 = vshrl.u32 %v67, 16
    %v111 = vrot.slane %v109, 4
    %v112 = vor.u32 %v111, %v107
    %v113 = vrot.slane %v112, 4
    %v115 = vshrl.u32 %v68, 16
    %v117 = vrot.slane %v115, 4
    %v118 = vshll.u32 %v68, 16
    %v120 = vrot.slane %v118, 5
    %v121 = vor.u32 %v117, %v120
    %v122 = vrot.slane %v121, 4
    %v124 = vshll.u32 %v69, 16
    %v126 = vrot.slane %v124, 5
    %v127 = vsel %vm74, %v122, %v126
    %v128 = vshrl.u32 %v69, 16
    %v130 = vrot.slane %v128, 4
    %v131 = vor.u32 %v130, %v126
    %v132 = vrot.slane %v131, 4
    %v134 = vshll.u32 %v70, 16
    %v136 = vrot.slane %v134, 5
    %v137 = vsel %vm74, %v132, %v136
    %v138 = vshrl.u32 %v70, 16
    %v140 = vrot.slane %v138, 4
    %v141 = vor.u32 %v140, %v136
    %v142 = vrot.slane %v141, 4
    %v144 = vshll.u32 %v71, 16
    %v146 = vrot.slane %v144, 5
    %v147 = vsel %vm74, %v142, %v146
    %v148 = vshrl.u32 %v71, 16
    %v150 = vrot.slane %v148, 4
    %v151 = vor.u32 %v150, %v146
    %v152 = vrot.slane %v151, 4
    %153 = vrot.lane.b32.xlu0 %v88, 28
    %v154 = vpop.permute.xlu0 %153
    %155 = vrot.lane.b32.xlu0 %v98, 28
    %v156 = vpop.permute.xlu0 %155
    %157 = vrot.lane.b32.xlu0 %v108, 28
    %v158 = vpop.permute.xlu0 %157
    %159 = vrot.lane.b32.xlu0 %v113, 28
    %v160 = vpop.permute.xlu0 %159
    %161 = vrot.lane.b32.xlu0 %v127, 28
    %v162 = vpop.permute.xlu0 %161
    %163 = vrot.lane.b32.xlu0 %v137, 28
    %v164 = vpop.permute.xlu0 %163
    %165 = vrot.lane.b32.xlu0 %v147, 28
    %v166 = vpop.permute.xlu0 %165
    %167 = vrot.lane.b32.xlu0 %v152, 28
    %v168 = vpop.permute.xlu0 %167
    %vm177 = vcmask 453856
    %178 = vst.msk [vmem:[#allocation2] sm:$0xf] %vm177, %v154
    %179 = vst.msk [vmem:[#allocation2 + $0x8] sm:$0xf] %vm177, %v156
    %180 = vst.msk [vmem:[#allocation2 + $0x10] sm:$0xf] %vm177, %v158
    %vm181 = vcmask 451808
    %182 = vst.msk [vmem:[#allocation2 + $0x18] sm:$0x3] %vm181, %v160
    %183 = vst.msk [vmem:[#allocation2 + $0x20] sm:$0xf] %vm177, %v162
    %184 = vst.msk [vmem:[#allocation2 + $0x28] sm:$0xf] %vm177, %v164
    %185 = vst.msk [vmem:[#allocation2 + $0x30] sm:$0xf] %vm177, %v166
    %186 = vst.msk [vmem:[#allocation2 + $0x38] sm:$0x3] %vm181, %v168
    %v187 = vld [vmem:[%s0] sm:$0xe]
    %v188 = vld [vmem:[%s0 + $0x4] sm:$0xf]
    %v189 = vld [vmem:[%s0 + $0x8] sm:$0xf]
    %v190 = vld [vmem:[%s0 + $0xc] sm:$0x7]
    %v191 = vld [vmem:[%s0 + $0x10] sm:$0xe]
    %v192 = vld [vmem:[%s0 + $0x14] sm:$0xf]
    %v193 = vld [vmem:[%s0 + $0x18] sm:$0xf]
    %v194 = vld [vmem:[%s0 + $0x1c] sm:$0x7]
    %vm203 = vcmask 1042432
    %vm204 = vcmask 1046532
    %vm205 = vmor %vm203, %vm204
    %v206 = vrot.slane %v187, 5
    %v207 = vrot.slane %v206, 4
    %v208 = vrot.slane %v188, 5
    %v209 = vsel %vm205, %v207, %v208
    %v210 = vrot.slane %v208, 4
    %v211 = vrot.slane %v189, 5
    %v212 = vsel %vm205, %v210, %v211
    %v213 = vrot.slane %v211, 4
    %v214 = vrot.slane %v190, 5
    %v215 = vsel %vm205, %v213, %v214
    %v216 = vrot.slane %v214, 4
    %v217 = vrot.slane %v191, 5
    %v218 = vrot.slane %v217, 4
    %v219 = vrot.slane %v192, 5
    %v220 = vsel %vm205, %v218, %v219
    %v221 = vrot.slane %v219, 4
    %v222 = vrot.slane %v193, 5
    %v223 = vsel %vm205, %v221, %v222
    %v224 = vrot.slane %v222, 4
    %v225 = vrot.slane %v194, 5
    %v226 = vsel %vm205, %v224, %v225
    %v227 = vrot.slane %v225, 4
    %228 = vrot.lane.b32.xlu0 %v209, 56
    %v229 = vpop.permute.xlu0 %228
    %230 = vrot.lane.b32.xlu0 %v212, 56
    %v231 = vpop.permute.xlu0 %230
    %232 = vrot.lane.b32.xlu0 %v215, 56
    %v233 = vpop.permute.xlu0 %232
    %234 = vrot.lane.b32.xlu0 %v216, 56
    %v235 = vpop.permute.xlu0 %234
    %236 = vrot.lane.b32.xlu0 %v220, 56
    %v237 = vpop.permute.xlu0 %236
    %238 = vrot.lane.b32.xlu0 %v223, 56
    %v239 = vpop.permute.xlu0 %238
    %240 = vrot.lane.b32.xlu0 %v226, 56
    %v241 = vpop.permute.xlu0 %240
    %242 = vrot.lane.b32.xlu0 %v227, 56
    %v243 = vpop.permute.xlu0 %242
    %vm252 = vcmask 683456
    %253 = vst.msk [vmem:[#allocation2] sm:$0xf] %vm252, %v229
    %254 = vst.msk [vmem:[#allocation2 + $0x8] sm:$0xf] %vm252, %v231
    %255 = vst.msk [vmem:[#allocation2 + $0x10] sm:$0xf] %vm252, %v233
    %vm256 = vcmask 681408
    %257 = vst.msk [vmem:[#allocation2 + $0x18] sm:$0x3] %vm256, %v235
    %258 = vst.msk [vmem:[#allocation2 + $0x20] sm:$0xf] %vm252, %v237
    %259 = vst.msk [vmem:[#allocation2 + $0x28] sm:$0xf] %vm252, %v239
    %260 = vst.msk [vmem:[#allocation2 + $0x30] sm:$0xf] %vm252, %v241
    %261 = vst.msk [vmem:[#allocation2 + $0x38] sm:$0x3] %vm256, %v243
    %v262 = vld [vmem:[%s0] sm:$0xe]
    %v263 = vld [vmem:[%s0 + $0x4] sm:$0xf]
    %v264 = vld [vmem:[%s0 + $0x8] sm:$0xf]
    %v265 = vld [vmem:[%s0 + $0xc] sm:$0xf]
    %v266 = vld [vmem:[%s0 + $0x10] sm:$0xe]
    %v267 = vld [vmem:[%s0 + $0x14] sm:$0xf]
    %v268 = vld [vmem:[%s0 + $0x18] sm:$0xf]
    %v269 = vld [vmem:[%s0 + $0x1c] sm:$0xf]
    %vm270 = vsmask.f32 2304
    %vm271 = vsmask.f32 6416
    %vm272 = vmor %vm270, %vm271
    %v274 = vshrl.u32 %v262, 16
    %v276 = vrot.slane %v274, 5
    %v277 = vshll.u32 %v262, 16
    %v279 = vrot.slane %v277, 6
    %v280 = vor.u32 %v276, %v279
    %v281 = vrot.slane %v280, 4
    %v283 = vshrl.u32 %v263, 16
    %v285 = vrot.slane %v283, 5
    %v286 = vshll.u32 %v263, 16
    %v288 = vrot.slane %v286, 6
    %v289 = vor.u32 %v285, %v288
    %v290 = vsel %vm272, %v281, %v289
    %v291 = vrot.slane %v289, 4
    %v293 = vshrl.u32 %v264, 16
    %v295 = vrot.slane %v293, 5
    %v296 = vshll.u32 %v264, 16
    %v298 = vrot.slane %v296, 6
    %v299 = vor.u32 %v295, %v298
    %v300 = vsel %vm272, %v291, %v299
    %v301 = vrot.slane %v299, 4
    %v303 = vshrl.u32 %v265, 16
    %v305 = vrot.slane %v303, 5
    %v306 = vshll.u32 %v265, 16
    %v308 = vrot.slane %v306, 6
    %v309 = vor.u32 %v305, %v308
    %v310 = vsel %vm272, %v301, %v309
    %v311 = vrot.slane %v309, 4
    %v313 = vshrl.u32 %v266, 16
    %v315 = vrot.slane %v313, 5
    %v316 = vshll.u32 %v266, 16
    %v318 = vrot.slane %v316, 6
    %v319 = vor.u32 %v315, %v318
    %v320 = vrot.slane %v319, 4
    %v322 = vshrl.u32 %v267, 16
    %v324 = vrot.slane %v322, 5
    %v325 = vshll.u32 %v267, 16
    %v327 = vrot.slane %v325, 6
    %v328 = vor.u32 %v324, %v327
    %v329 = vsel %vm272, %v320, %v328
    %v330 = vrot.slane %v328, 4
    %v332 = vshrl.u32 %v268, 16
    %v334 = vrot.slane %v332, 5
    %v335 = vshll.u32 %v268, 16
    %v337 = vrot.slane %v335, 6
    %v338 = vor.u32 %v334, %v337
    %v339 = vsel %vm272, %v330, %v338
    %v340 = vrot.slane %v338, 4
    %v342 = vshrl.u32 %v269, 16
    %v344 = vrot.slane %v342, 5
    %v345 = vshll.u32 %v269, 16
    %v347 = vrot.slane %v345, 6
    %v348 = vor.u32 %v344, %v347
    %v349 = vsel %vm272, %v340, %v348
    %v350 = vrot.slane %v348, 4
    %351 = vrot.lane.b32.xlu0 %v290, 84
    %v352 = vpop.permute.xlu0 %351
    %353 = vrot.lane.b32.xlu0 %v300, 84
    %v354 = vpop.permute.xlu0 %353
    %355 = vrot.lane.b32.xlu0 %v310, 84
    %v356 = vpop.permute.xlu0 %355
    %357 = vrot.lane.b32.xlu0 %v311, 84
    %v358 = vpop.permute.xlu0 %357
    %359 = vrot.lane.b32.xlu0 %v329, 84
    %v360 = vpop.permute.xlu0 %359
    %361 = vrot.lane.b32.xlu0 %v339, 84
    %v362 = vpop.permute.xlu0 %361
    %363 = vrot.lane.b32.xlu0 %v349, 84
    %v364 = vpop.permute.xlu0 %363
    %365 = vrot.lane.b32.xlu0 %v350, 84
    %v366 = vpop.permute.xlu0 %365
    %vm375 = vcmask 913056
    %376 = vst.msk [vmem:[#allocation2] sm:$0xf] %vm375, %v352
    %377 = vst.msk [vmem:[#allocation2 + $0x8] sm:$0xf] %vm375, %v354
    %378 = vst.msk [vmem:[#allocation2 + $0x10] sm:$0xf] %vm375, %v356
    %vm379 = vcmask 911008
    %380 = vst.msk [vmem:[#allocation2 + $0x18] sm:$0x3] %vm379, %v358
    %381 = vst.msk [vmem:[#allocation2 + $0x20] sm:$0xf] %vm375, %v360
    %382 = vst.msk [vmem:[#allocation2 + $0x28] sm:$0xf] %vm375, %v362
    %383 = vst.msk [vmem:[#allocation2 + $0x30] sm:$0xf] %vm375, %v364
    %384 = vst.msk [vmem:[#allocation2 + $0x38] sm:$0x3] %vm379, %v366
    %v385 = vld [vmem:[%s0] sm:$0xc]
    %v386 = vld [vmem:[%s0 + $0x4] sm:$0xf]
    %v387 = vld [vmem:[%s0 + $0x8] sm:$0xf]
    %v388 = vld [vmem:[%s0 + $0xc] sm:$0xf]
    %v389 = vld [vmem:[%s0 + $0x10] sm:$0xc]
    %v390 = vld [vmem:[%s0 + $0x14] sm:$0xf]
    %v391 = vld [vmem:[%s0 + $0x18] sm:$0xf]
    %v392 = vld [vmem:[%s0 + $0x1c] sm:$0xf]
    %vm401 = vcmask 1041408
    %vm402 = vcmask 1045508
    %vm403 = vmor %vm401, %vm402
    %v404 = vrot.slane %v385, 6
    %v405 = vrot.slane %v404, 4
    %v406 = vrot.slane %v386, 6
    %v407 = vsel %vm403, %v405, %v406
    %v408 = vrot.slane %v406, 4
    %v409 = vrot.slane %v387, 6
    %v410 = vsel %vm403, %v408, %v409
    %v411 = vrot.slane %v409, 4
    %v412 = vrot.slane %v388, 6
    %v413 = vsel %vm403, %v411, %v412
    %v414 = vrot.slane %v412, 4
    %v415 = vrot.slane %v389, 6
    %v416 = vrot.slane %v415, 4
    %v417 = vrot.slane %v390, 6
    %v418 = vsel %vm403, %v416, %v417
    %v419 = vrot.slane %v417, 4
    %v420 = vrot.slane %v391, 6
    %v421 = vsel %vm403, %v419, %v420
    %v422 = vrot.slane %v420, 4
    %v423 = vrot.slane %v392, 6
    %v424 = vsel %vm403, %v422, %v423
    %v425 = vrot.slane %v423, 4
    %426 = vrot.lane.b32.xlu0 %v407, 112
    %v427 = vpop.permute.xlu0 %426
    %428 = vrot.lane.b32.xlu0 %v410, 112
    %v429 = vpop.permute.xlu0 %428
    %430 = vrot.lane.b32.xlu0 %v413, 112
    %v431 = vpop.permute.xlu0 %430
    %432 = vrot.lane.b32.xlu0 %v414, 112
    %v433 = vpop.permute.xlu0 %432
    %434 = vrot.lane.b32.xlu0 %v418, 112
    %v435 = vpop.permute.xlu0 %434
    %436 = vrot.lane.b32.xlu0 %v421, 112
    %v437 = vpop.permute.xlu0 %436
    %438 = vrot.lane.b32.xlu0 %v424, 112
    %v439 = vpop.permute.xlu0 %438
    %440 = vrot.lane.b32.xlu0 %v425, 112
    %v441 = vpop.permute.xlu0 %440
    %v442 = vrot.slane %v427, 4
    %v443 = vrot.slane %v429, 4
    %v444 = vrot.slane %v431, 4
    %v445 = vrot.slane %v433, 4
    %v446 = vrot.slane %v435, 4
    %v447 = vrot.slane %v437, 4
    %v448 = vrot.slane %v439, 4
    %v449 = vrot.slane %v441, 4
    %vm450 = vcmask 916480
    %v451 = vsel %vm450, %v442, %v427
    %v452 = vsel %vm450, %v443, %v429
    %v453 = vsel %vm450, %v444, %v431
    %v454 = vsel %vm450, %v445, %v433
    %v455 = vsel %vm450, %v446, %v435
    %v456 = vsel %vm450, %v447, %v437
    %v457 = vsel %vm450, %v448, %v439
    %v458 = vsel %vm450, %v449, %v441
    %vm467 = vcmask 1044352
    %vm468 = vcmask 97284
    %vm469 = vmor %vm468, %vm467
    %470 = vst.msk [vmem:[#allocation2] sm:$0xff] %vm469, %v451
    %471 = vst.msk [vmem:[#allocation2 + $0x8] sm:$0xff] %vm469, %v452
    %472 = vst.msk [vmem:[#allocation2 + $0x10] sm:$0xff] %vm469, %v453
    %vm473 = vcmask 1042304
    %vm474 = vcmask 95236
    %vm475 = vmor %vm474, %vm473
    %476 = vst.msk [vmem:[#allocation2 + $0x18] sm:$0x33] %vm475, %v454
    %477 = vst.msk [vmem:[#allocation2 + $0x20] sm:$0xff] %vm469, %v455
    %478 = vst.msk [vmem:[#allocation2 + $0x28] sm:$0xff] %vm469, %v456
    %479 = vst.msk [vmem:[#allocation2 + $0x30] sm:$0xff] %vm469, %v457
    %480 = vst.msk [vmem:[#allocation2 + $0x38] sm:$0x33] %vm475, %v458
    %v481 = vld [vmem:[#allocation2] sm:$0xff]
    %v482 = vld [vmem:[#allocation2 + $0x8] sm:$0xff]
    %v483 = vld [vmem:[#allocation2 + $0x10] sm:$0xff]
    %v484 = vld [vmem:[#allocation2 + $0x18] sm:$0x33]
    %v485 = vld [vmem:[#allocation2 + $0x20] sm:$0xff]
    %v486 = vld [vmem:[#allocation2 + $0x28] sm:$0xff]
    %v487 = vld [vmem:[#allocation2 + $0x30] sm:$0xff]
    %v488 = vld [vmem:[#allocation2 + $0x38] sm:$0x33]
    %v498 = vunpack.c.l.s4 1983009808
    %v499 = vunpack.c.0.s8 %v498
    %v500 = vlaneseq
    %v501 = vshrl.u32 %v500, 7
    %v502 = vsub.s32 %v499, %v501
    %v503 = vrot.slane %v481, %v502
    %v504 = vcombine.high %v503, %v503
    %v506 = vunpack.c.l.s4 1983009808
    %v507 = vunpack.c.0.s8 %v506
    %v508 = vlaneseq
    %v509 = vshrl.u32 %v508, 7
    %v510 = vsub.s32 %v507, %v509
    %v511 = vrot.slane %v482, %v510
    %v512 = vcombine.high %v511, %v511
    %v514 = vunpack.c.l.s4 1983009808
    %v515 = vunpack.c.0.s8 %v514
    %v516 = vlaneseq
    %v517 = vshrl.u32 %v516, 7
    %v518 = vsub.s32 %v515, %v517
    %v519 = vrot.slane %v483, %v518
    %v520 = vcombine.high %v519, %v519
    %v522 = vunpack.c.l.s4 1983009808
    %v523 = vunpack.c.0.s8 %v522
    %v524 = vlaneseq
    %v525 = vshrl.u32 %v524, 7
    %v526 = vsub.s32 %v523, %v525
    %v527 = vrot.slane %v484, %v526
    %v529 = vunpack.c.l.s4 1983009808
    %v530 = vunpack.c.0.s8 %v529
    %v531 = vlaneseq
    %v532 = vshrl.u32 %v531, 7
    %v533 = vsub.s32 %v530, %v532
    %v534 = vrot.slane %v485, %v533
    %v535 = vcombine.high %v534, %v534
    %v537 = vunpack.c.l.s4 1983009808
    %v538 = vunpack.c.0.s8 %v537
    %v539 = vlaneseq
    %v540 = vshrl.u32 %v539, 7
    %v541 = vsub.s32 %v538, %v540
    %v542 = vrot.slane %v486, %v541
    %v543 = vcombine.high %v542, %v542
    %v545 = vunpack.c.l.s4 1983009808
    %v546 = vunpack.c.0.s8 %v545
    %v547 = vlaneseq
    %v548 = vshrl.u32 %v547, 7
    %v549 = vsub.s32 %v546, %v548
    %v550 = vrot.slane %v487, %v549
    %v551 = vcombine.high %v550, %v550
    %v553 = vunpack.c.l.s4 1983009808
    %v554 = vunpack.c.0.s8 %v553
    %v555 = vlaneseq
    %v556 = vshrl.u32 %v555, 7
    %v557 = vsub.s32 %v554, %v556
    %v558 = vrot.slane %v488, %v557
    %v559 = vld [vmem:[%s1] sm:$0xff]
    %v560 = vld [vmem:[%s1 + $0x8] sm:$0xff]
    %v561 = vld [vmem:[%s1 + $0x10] sm:$0xff]
    %v562 = vld [vmem:[%s1 + $0x18] sm:$0xff]
    %v563 = vld [vmem:[%s1 + $0x20] sm:$0xff]
    %v564 = vld [vmem:[%s1 + $0x28] sm:$0xff]
    %v565 = vld [vmem:[%s1 + $0x30] sm:$0xff]
    %v566 = vld [vmem:[%s1 + $0x38] sm:$0xff]
    %v567 = vld [vmem:[%s1 + $0x40] sm:$0xff]
    %v568 = vld [vmem:[%s1 + $0x48] sm:$0xff]
    %v569 = vld [vmem:[%s1 + $0x50] sm:$0xff]
    %v570 = vld [vmem:[%s1 + $0x58] sm:$0xff]
    %v571 = vld [vmem:[%s1 + $0x60] sm:$0xff]
    %v572 = vld [vmem:[%s1 + $0x68] sm:$0xff]
    %v573 = vld [vmem:[%s1 + $0x70] sm:$0xff]
    %v574 = vld [vmem:[%s1 + $0x78] sm:$0xff]
    %v575 = vld [vmem:[%s1 + $0x80] sm:$0xff]
    %v576 = vld [vmem:[%s1 + $0x88] sm:$0xff]
    %v577 = vld [vmem:[%s1 + $0x90] sm:$0xff]
    %v578 = vld [vmem:[%s1 + $0x98] sm:$0xff]
    %v579 = vld [vmem:[%s1 + $0xa0] sm:$0xff]
    %v580 = vld [vmem:[%s1 + $0xa8] sm:$0xff]
    %v581 = vld [vmem:[%s1 + $0xb0] sm:$0xff]
    %v582 = vld [vmem:[%s1 + $0xb8] sm:$0xff]
    %v583 = vld [vmem:[%s1 + $0xc0] sm:$0xff]
    %v584 = vld [vmem:[%s1 + $0xc8] sm:$0xff]
    %v585 = vld [vmem:[%s1 + $0xd0] sm:$0xff]
    %v586 = vld [vmem:[%s1 + $0xd8] sm:$0xff]
    %v587 = vld [vmem:[%s1 + $0xe0] sm:$0xff]
    %v588 = vld [vmem:[%s1 + $0xe8] sm:$0xff]
    %v589 = vld [vmem:[%s1 + $0xf0] sm:$0xff]
    %v590 = vld [vmem:[%s1 + $0xf8] sm:$0xff]
    %v591 = vld [vmem:[%s1 + $0x100] sm:$0xff]
    %v592 = vld [vmem:[%s1 + $0x108] sm:$0xff]
    %v593 = vld [vmem:[%s1 + $0x110] sm:$0x33]
    %v594 = vld [vmem:[%s1 + $0x118] sm:$0x33]
    %v595 = vcombine.low %v503, %v504
    %v596 = vcombine.low %v511, %v512
    %v598 = vunpack.c.l.s4 1983009808
    %v599 = vunpack.c.0.s8 %v598
    %v600 = vlaneseq
    %v601 = vshrl.u32 %v600, 7
    %v602 = vsub.s32 %v599, %v601
    %v603 = vrot.slane %v595, %v602
    %v605 = vunpack.c.l.s4 1983009808
    %v606 = vunpack.c.0.s8 %v605
    %v607 = vlaneseq
    %v608 = vshrl.u32 %v607, 7
    %v609 = vsub.s32 %v606, %v608
    %v610 = vrot.slane %v596, %v609
    %v611 = vcombine.low %v603, %v610
    %v612 = vcombine.high %v603, %v610
    %v613 = vcombine.low %v519, %v520
    %v614 = vcombine.low %v527, %v534
    %v616 = vunpack.c.l.s4 1983009808
    %v617 = vunpack.c.0.s8 %v616
    %v618 = vlaneseq
    %v619 = vshrl.u32 %v618, 7
    %v620 = vsub.s32 %v617, %v619
    %v621 = vrot.slane %v613, %v620
    %v623 = vunpack.c.l.s4 1983009808
    %v624 = vunpack.c.0.s8 %v623
    %v625 = vlaneseq
    %v626 = vshrl.u32 %v625, 7
    %v627 = vsub.s32 %v624, %v626
    %v628 = vrot.slane %v614, %v627
    %v629 = vcombine.low %v621, %v628
    %v630 = vcombine.high %v621, %v628
    %v631 = vcombine.low %v535, %v542
    %v632 = vcombine.low %v543, %v550
    %v634 = vunpack.c.l.s4 1983009808
    %v635 = vunpack.c.0.s8 %v634
    %v636 = vlaneseq
    %v637 = vshrl.u32 %v636, 7
    %v638 = vsub.s32 %v635, %v637
    %v639 = vrot.slane %v631, %v638
    %v641 = vunpack.c.l.s4 1983009808
    %v642 = vunpack.c.0.s8 %v641
    %v643 = vlaneseq
    %v644 = vshrl.u32 %v643, 7
    %v645 = vsub.s32 %v642, %v644
    %v646 = vrot.slane %v632, %v645
    %v647 = vcombine.low %v639, %v646
    %v648 = vcombine.high %v639, %v646
    %v649 = vcombine.low %v551, %v558
    %v651 = vunpack.c.l.s4 1983009808
    %v652 = vunpack.c.0.s8 %v651
    %v653 = vlaneseq
    %v654 = vshrl.u32 %v653, 7
    %v655 = vsub.s32 %v652, %v654
    %v656 = vrot.slane %v649, %v655
    %v657 = vcombine.high %v656, %v656
    %v698 = vunpack.c.l.b16 %v559
    %v699 = vunpack.c.h.b16 %v559
    %v700 = vunpack.c.l.b16 %v560
    %v701 = vunpack.c.h.b16 %v560
    %v702 = vunpack.c.l.b16 %v561
    %v703 = vunpack.c.h.b16 %v561
    %v704 = vunpack.c.l.b16 %v562
    %v705 = vunpack.c.h.b16 %v562
    %v706 = vunpack.c.l.b16 %v563
    %v707 = vunpack.c.h.b16 %v563
    %v708 = vunpack.c.l.b16 %v564
    %v709 = vunpack.c.h.b16 %v564
    %v710 = vunpack.c.l.b16 %v565
    %v711 = vunpack.c.h.b16 %v565
    %v712 = vunpack.c.l.b16 %v566
    %v713 = vunpack.c.h.b16 %v566
    %v714 = vunpack.c.l.b16 %v567
    %v715 = vunpack.c.h.b16 %v567
    %v716 = vunpack.c.l.b16 %v568
    %v717 = vunpack.c.h.b16 %v568
    %v718 = vunpack.c.l.b16 %v569
    %v719 = vunpack.c.h.b16 %v569
    %v720 = vunpack.c.l.b16 %v570
    %v721 = vunpack.c.h.b16 %v570
    %v722 = vunpack.c.l.b16 %v571
    %v723 = vunpack.c.h.b16 %v571
    %v724 = vunpack.c.l.b16 %v572
    %v725 = vunpack.c.h.b16 %v572
    %v726 = vunpack.c.l.b16 %v573
    %v727 = vunpack.c.h.b16 %v573
    %v728 = vunpack.c.l.b16 %v574
    %v729 = vunpack.c.h.b16 %v574
    %v730 = vunpack.c.l.b16 %v575
    %v731 = vunpack.c.h.b16 %v575
    %v732 = vunpack.c.l.b16 %v576
    %v733 = vunpack.c.h.b16 %v576
    %v734 = vunpack.c.l.b16 %v577
    %v735 = vunpack.c.h.b16 %v577
    %v736 = vunpack.c.l.b16 %v578
    %v737 = vunpack.c.h.b16 %v578
    %v738 = vunpack.c.l.b16 %v579
    %v739 = vunpack.c.h.b16 %v579
    %v740 = vunpack.c.l.b16 %v580
    %v741 = vunpack.c.h.b16 %v580
    %v742 = vunpack.c.l.b16 %v581
    %v743 = vunpack.c.h.b16 %v581
    %v744 = vunpack.c.l.b16 %v582
    %v745 = vunpack.c.h.b16 %v582
    %v746 = vunpack.c.l.b16 %v583
    %v747 = vunpack.c.h.b16 %v583
    %v748 = vunpack.c.l.b16 %v584
    %v749 = vunpack.c.h.b16 %v584
    %v750 = vunpack.c.l.b16 %v585
    %v751 = vunpack.c.h.b16 %v585
    %v752 = vunpack.c.l.b16 %v586
    %v753 = vunpack.c.h.b16 %v586
    %v754 = vunpack.c.l.b16 %v587
    %v755 = vunpack.c.h.b16 %v587
    %v756 = vunpack.c.l.b16 %v588
    %v757 = vunpack.c.h.b16 %v588
    %v758 = vunpack.c.l.b16 %v589
    %v759 = vunpack.c.h.b16 %v589
    %v760 = vunpack.c.l.b16 %v590
    %v761 = vunpack.c.h.b16 %v590
    %v762 = vunpack.c.l.b16 %v591
    %v763 = vunpack.c.h.b16 %v591
    %v764 = vunpack.c.l.b16 %v592
    %v765 = vunpack.c.h.b16 %v592
    %v766 = vunpack.c.l.b16 %v593
    %v767 = vunpack.c.h.b16 %v593
    %v768 = vunpack.c.l.b16 %v594
    %v769 = vunpack.c.h.b16 %v594
    %v770 = vpack.c.b16 %v702, %v698
    %v771 = vpack.c.b16 %v703, %v699
    %v772 = vpack.c.b16 %v704, %v700
    %v773 = vpack.c.b16 %v705, %v701
    %v774 = vpack.c.b16 %v710, %v706
    %v775 = vpack.c.b16 %v711, %v707
    %v776 = vpack.c.b16 %v712, %v708
    %v777 = vpack.c.b16 %v713, %v709
    %v778 = vpack.c.b16 %v718, %v714
    %v779 = vpack.c.b16 %v719, %v715
    %v780 = vpack.c.b16 %v720, %v716
    %v781 = vpack.c.b16 %v721, %v717
    %v782 = vpack.c.b16 %v726, %v722
    %v783 = vpack.c.b16 %v727, %v723
    %v784 = vpack.c.b16 %v728, %v724
    %v785 = vpack.c.b16 %v729, %v725
    %v786 = vpack.c.b16 %v734, %v730
    %v787 = vpack.c.b16 %v735, %v731
    %v788 = vpack.c.b16 %v736, %v732
    %v789 = vpack.c.b16 %v737, %v733
    %v790 = vpack.c.b16 %v742, %v738
    %v791 = vpack.c.b16 %v743, %v739
    %v792 = vpack.c.b16 %v744, %v740
    %v793 = vpack.c.b16 %v745, %v741
    %v794 = vpack.c.b16 %v750, %v746
    %v795 = vpack.c.b16 %v751, %v747
    %v796 = vpack.c.b16 %v752, %v748
    %v797 = vpack.c.b16 %v753, %v749
    %v798 = vpack.c.b16 %v758, %v754
    %v799 = vpack.c.b16 %v759, %v755
    %v800 = vpack.c.b16 %v760, %v756
    %v801 = vpack.c.b16 %v761, %v757
    %v802 = vpack.c.b16 %v766, %v762
    %v803 = vpack.c.b16 %v767, %v763
    %v804 = vpack.c.b16 %v768, %v764
    %v805 = vpack.c.b16 %v769, %v765
    %vm838 = vcmask 97280
    %v840 = vsel %vm838, %v612, 0
    %v843 = vsel %vm838, %v630, 0
    %v846 = vsel %vm838, %v648, 0
    %v849 = vsel %vm838, %v657, 0
    %vm851 = vcmask 1045504
    %v853 = vsel %vm851, %v802, 0
    %v856 = vsel %vm851, %v803, 0
    %v859 = vsel %vm851, %v804, 0
    %v862 = vsel %vm851, %v805, 0
    %864 = vmatprep.subr.bf16.mxu0 %v771
    %865 = vmatpush1.bf16.msra.mxu0 %v770
    %866 = vmatprep.subr.bf16.mxu0 %v775
    %867 = vmatpush1.bf16.msra.mxu0 %v774
    %868 = vmatprep.subr.bf16.mxu0 %v779
    %869 = vmatpush1.bf16.msra.mxu0 %v778
    %870 = vmatprep.subr.bf16.mxu0 %v783
    %871 = vmatpush1.bf16.msra.mxu0 %v782
    %872 = vmatprep.subr.bf16.mxu0 %v787
    %873 = vmatpush1.bf16.msra.mxu0 %v786
    %874 = vmatprep.subr.bf16.mxu0 %v791
    %875 = vmatpush1.bf16.msra.mxu0 %v790
    %876 = vmatprep.subr.bf16.mxu0 %v795
    %877 = vmatpush1.bf16.msra.mxu0 %v794
    %878 = vmatprep.subr.bf16.mxu0 %v799
    %879 = vmatpush1.bf16.msra.mxu0 %v798
    %880 = vmatprep.subr.bf16.mxu0 %v856
    %881 = vmatpush1.bf16.msra.mxu0 %v853
    %882 = vmatprep.subr.bf16.mxu0 0
    %883 = vmatpush1.bf16.msra.mxu0 0
    %884 = vmatprep.subr.bf16.mxu0 0
    %885 = vmatpush1.bf16.msra.mxu0 0
    %886 = vmatprep.subr.bf16.mxu0 0
    %887 = vmatpush1.bf16.msra.mxu0 0
    %888 = vmatprep.subr.bf16.mxu0 0
    %889 = vmatpush1.bf16.msra.mxu0 0
    %890 = vmatprep.subr.bf16.mxu0 0
    %891 = vmatpush1.bf16.msra.mxu0 0
    %892 = vmatprep.subr.bf16.mxu0 0
    %893 = vmatpush1.bf16.msra.mxu0 0
    %894 = vmatprep.subr.bf16.mxu0 0
    %895 = vmatpush1.bf16.msra.mxu0 0
    %896 = vmatprep.mubr.bf16.mxu0 %v840
    %897 = vmatmul.mubr.bf16.gmra.mrb[0].mxu0 %v611
    %v898 = vpop.f32.mrb[0].mxu0
    %v899 = vadd.f32 0.0, %v898
    %v900 = vpop.f32.mrb[0].mxu0
    %v901 = vadd.f32 0.0, %v900
    %v902 = vpop.f32.mrb[0].mxu0
    %v903 = vadd.f32 0.0, %v902
    %v904 = vpop.f32.mrb[0].mxu0
    %v905 = vadd.f32 0.0, %v904
    %906 = vmatprep.mubr.bf16.mxu0 %v843
    %907 = vmatmul.mubr.bf16.gmra.mrb[0].mxu0 %v629
    %v908 = vpop.f32.mrb[0].mxu0
    %v909 = vadd.f32 0.0, %v908
    %v910 = vpop.f32.mrb[0].mxu0
    %v911 = vadd.f32 0.0, %v910
    %v912 = vpop.f32.mrb[0].mxu0
    %v913 = vadd.f32 0.0, %v912
    %v914 = vpop.f32.mrb[0].mxu0
    %v915 = vadd.f32 0.0, %v914
    %916 = vmatprep.mubr.bf16.mxu0 %v846
    %917 = vmatmul.mubr.bf16.gmra.mrb[0].mxu0 %v647
    %v918 = vpop.f32.mrb[0].mxu0
    %v919 = vadd.f32 0.0, %v918
    %v920 = vpop.f32.mrb[0].mxu0
    %v921 = vadd.f32 0.0, %v920
    %v922 = vpop.f32.mrb[0].mxu0
    %v923 = vadd.f32 0.0, %v922
    %v924 = vpop.f32.mrb[0].mxu0
    %v925 = vadd.f32 0.0, %v924
    %926 = vmatprep.mubr.bf16.mxu0 %v849
    %927 = vmatmul.mubr.bf16.gmra.mrb[0].mxu0 %v656
    %v928 = vpop.f32.mrb[0].mxu0
    %v929 = vadd.f32 0.0, %v928
    %v930 = vpop.f32.mrb[0].mxu0
    %v931 = vadd.f32 0.0, %v930
    %v932 = vpop.f32.mrb[0].mxu0
    %v933 = vpop.f32.mrb[0].mxu0
    %934 = vdwg.mxu0
    %935 = vmatprep.subr.bf16.mxu0 %v773
    %936 = vmatpush1.bf16.msra.mxu0 %v772
    %937 = vmatprep.subr.bf16.mxu0 %v777
    %938 = vmatpush1.bf16.msra.mxu0 %v776
    %939 = vmatprep.subr.bf16.mxu0 %v781
    %940 = vmatpush1.bf16.msra.mxu0 %v780
    %941 = vmatprep.subr.bf16.mxu0 %v785
    %942 = vmatpush1.bf16.msra.mxu0 %v784
    %943 = vmatprep.subr.bf16.mxu0 %v789
    %944 = vmatpush1.bf16.msra.mxu0 %v788
    %945 = vmatprep.subr.bf16.mxu0 %v793
    %946 = vmatpush1.bf16.msra.mxu0 %v792
    %947 = vmatprep.subr.bf16.mxu0 %v797
    %948 = vmatpush1.bf16.msra.mxu0 %v796
    %949 = vmatprep.subr.bf16.mxu0 %v801
    %950 = vmatpush1.bf16.msra.mxu0 %v800
    %951 = vmatprep.subr.bf16.mxu0 %v862
    %952 = vmatpush1.bf16.msra.mxu0 %v859
    %953 = vmatprep.subr.bf16.mxu0 0
    %954 = vmatpush1.bf16.msra.mxu0 0
    %955 = vmatprep.subr.bf16.mxu0 0
    %956 = vmatpush1.bf16.msra.mxu0 0
    %957 = vmatprep.subr.bf16.mxu0 0
    %958 = vmatpush1.bf16.msra.mxu0 0
    %959 = vmatprep.subr.bf16.mxu0 0
    %960 = vmatpush1.bf16.msra.mxu0 0
    %961 = vmatprep.subr.bf16.mxu0 0
    %962 = vmatpush1.bf16.msra.mxu0 0
    %963 = vmatprep.subr.bf16.mxu0 0
    %964 = vmatpush1.bf16.msra.mxu0 0
    %965 = vmatprep.subr.bf16.mxu0 0
    %966 = vmatpush1.bf16.msra.mxu0 0
    %967 = vmatprep.mubr.bf16.mxu0 %v840
    %968 = vmatmul.mubr.bf16.gmra.mrb[0].mxu0 %v611
    %v969 = vpop.f32.mrb[0].mxu0
    %v970 = vadd.f32 0.0, %v969
    %v971 = vpop.f32.mrb[0].mxu0
    %v972 = vadd.f32 0.0, %v971
    %v973 = vpop.f32.mrb[0].mxu0
    %v974 = vadd.f32 0.0, %v973
    %v975 = vpop.f32.mrb[0].mxu0
    %v976 = vadd.f32 0.0, %v975
    %977 = vmatprep.mubr.bf16.mxu0 %v843
    %978 = vmatmul.mubr.bf16.gmra.mrb[0].mxu0 %v629
    %v979 = vpop.f32.mrb[0].mxu0
    %v980 = vadd.f32 0.0, %v979
    %v981 = vpop.f32.mrb[0].mxu0
    %v982 = vadd.f32 0.0, %v981
    %v983 = vpop.f32.mrb[0].mxu0
    %v984 = vadd.f32 0.0, %v983
    %v985 = vpop.f32.mrb[0].mxu0
    %v986 = vadd.f32 0.0, %v985
    %987 = vmatprep.mubr.bf16.mxu0 %v846
    %988 = vmatmul.mubr.bf16.gmra.mrb[0].mxu0 %v647
    %v989 = vpop.f32.mrb[0].mxu0
    %v990 = vadd.f32 0.0, %v989
    %v991 = vpop.f32.mrb[0].mxu0
    %v992 = vadd.f32 0.0, %v991
    %v993 = vpop.f32.mrb[0].mxu0
    %v994 = vadd.f32 0.0, %v993
    %v995 = vpop.f32.mrb[0].mxu0
    %v996 = vadd.f32 0.0, %v995
    %997 = vmatprep.mubr.bf16.mxu0 %v849
    %998 = vmatmul.mubr.bf16.gmra.mrb[0].mxu0 %v656
    %v999 = vpop.f32.mrb[0].mxu0
    %v1000 = vadd.f32 0.0, %v999
    %v1001 = vpop.f32.mrb[0].mxu0
    %v1002 = vadd.f32 0.0, %v1001
    %v1003 = vpop.f32.mrb[0].mxu0
    %v1004 = vpop.f32.mrb[0].mxu0
    %1005 = vdwg.mxu0
    %v1006 = vld [vmem:[%s4] sm:$0xff]
    %v1007 = vld [vmem:[%s4 + $0x8] sm:$0xff]
    %v1008 = vld [vmem:[%s4 + $0x10] sm:$0xff]
    %v1009 = vld [vmem:[%s4 + $0x18] sm:$0xff]
    %v1010 = vld [vmem:[%s4 + $0x20] sm:$0xff]
    %v1011 = vld [vmem:[%s4 + $0x28] sm:$0xff]
    %v1012 = vld [vmem:[%s4 + $0x30] sm:$0xff]
    %v1013 = vld [vmem:[%s4 + $0x38] sm:$0xff]
    %v1014 = vld [vmem:[%s4 + $0x40] sm:$0xff]
    %v1015 = vld [vmem:[%s4 + $0x48] sm:$0xff]
    %v1016 = vld [vmem:[%s4 + $0x50] sm:$0xff]
    %v1017 = vld [vmem:[%s4 + $0x58] sm:$0xff]
    %v1018 = vld [vmem:[%s4 + $0x60] sm:$0xff]
    %v1019 = vld [vmem:[%s4 + $0x68] sm:$0xff]
    %v1020 = vld [vmem:[%s4 + $0x70] sm:$0xff]
    %v1021 = vld [vmem:[%s4 + $0x78] sm:$0xff]
    %v1022 = vld [vmem:[%s4 + $0x80] sm:$0xff]
    %v1023 = vld [vmem:[%s4 + $0x88] sm:$0xff]
    %v1024 = vld [vmem:[%s4 + $0x90] sm:$0xff]
    %v1025 = vld [vmem:[%s4 + $0x98] sm:$0xff]
    %v1026 = vld [vmem:[%s4 + $0xa0] sm:$0xff]
    %v1027 = vld [vmem:[%s4 + $0xa8] sm:$0xff]
    %v1028 = vld [vmem:[%s4 + $0xb0] sm:$0xff]
    %v1029 = vld [vmem:[%s4 + $0xb8] sm:$0xff]
    %v1030 = vld [vmem:[%s4 + $0xc0] sm:$0xff]
    %v1031 = vld [vmem:[%s4 + $0xc8] sm:$0xff]
    %v1032 = vld [vmem:[%s4 + $0xd0] sm:$0xff]
    %v1033 = vld [vmem:[%s4 + $0xd8] sm:$0xff]
    %v1034 = vld [vmem:[%s4 + $0xe0] sm:$0xff]
    %v1035 = vld [vmem:[%s4 + $0xe8] sm:$0xff]
    %v1036 = vld [vmem:[%s4 + $0xf0] sm:$0xff]
    %v1037 = vld [vmem:[%s4 + $0xf8] sm:$0xff]
    %v1038 = vld [vmem:[%s4 + $0x100] sm:$0xff]
    %v1039 = vld [vmem:[%s4 + $0x108] sm:$0xff]
    %v1040 = vld [vmem:[%s4 + $0x110] sm:$0xff]
    %v1041 = vld [vmem:[%s4 + $0x118] sm:$0xff]
    %v1042 = vld [vmem:[%s4 + $0x120] sm:$0xff]
    %v1043 = vld [vmem:[%s4 + $0x128] sm:$0xff]
    %v1044 = vld [vmem:[%s4 + $0x130] sm:$0xff]
    %v1045 = vld [vmem:[%s4 + $0x138] sm:$0xff]
    %v1046 = vld [vmem:[%s4 + $0x140] sm:$0xff]
    %v1047 = vld [vmem:[%s4 + $0x148] sm:$0xff]
    %v1048 = vld [vmem:[%s4 + $0x150] sm:$0xff]
    %v1049 = vld [vmem:[%s4 + $0x158] sm:$0xff]
    %v1050 = vld [vmem:[%s4 + $0x160] sm:$0xff]
    %v1051 = vld [vmem:[%s4 + $0x168] sm:$0xff]
    %v1052 = vld [vmem:[%s4 + $0x170] sm:$0xff]
    %v1053 = vld [vmem:[%s4 + $0x178] sm:$0xff]
    %v1054 = vld [vmem:[%s4 + $0x180] sm:$0xff]
    %v1055 = vld [vmem:[%s4 + $0x188] sm:$0xff]
    %v1056 = vld [vmem:[%s4 + $0x190] sm:$0xff]
    %v1057 = vld [vmem:[%s4 + $0x198] sm:$0xff]
    %v1058 = vld [vmem:[%s4 + $0x1a0] sm:$0xff]
    %v1059 = vld [vmem:[%s4 + $0x1a8] sm:$0xff]
    %v1060 = vld [vmem:[%s4 + $0x1b0] sm:$0xff]
    %v1061 = vld [vmem:[%s4 + $0x1b8] sm:$0xff]
    %v1062 = vld [vmem:[%s5] sm:$0xff]
    %v1063 = vld [vmem:[%s5 + $0x8] sm:$0xff]
    %v1064 = vld [vmem:[%s5 + $0x10] sm:$0xff]
    %v1065 = vld [vmem:[%s5 + $0x18] sm:$0xff]
    %v1066 = vld [vmem:[%s5 + $0x20] sm:$0xff]
    %v1067 = vld [vmem:[%s5 + $0x28] sm:$0xff]
    %v1068 = vld [vmem:[%s5 + $0x30] sm:$0xff]
    %v1069 = vld [vmem:[%s5 + $0x38] sm:$0xff]
    %v1070 = vld [vmem:[%s2] sm:$0x1]
    %v1071 = vld [vmem:[%s3] sm:$0x1]
    %v1072 = vadd.f32 %v899, %v903
    %v1073 = vadd.f32 %v1072, %v909
    %v1074 = vadd.f32 %v1073, %v913
    %v1075 = vadd.f32 %v1074, %v919
    %v1076 = vadd.f32 %v1075, %v923
    %v1077 = vadd.f32 %v1076, %v929
    %v1078 = vrot.slane %v1077, 4
    %v1079 = vadd.f32 %v1077, %v1078
    %v1080 = vrot.slane %v1079, 2
    %v1081 = vadd.f32 %v1079, %v1080
    %v1082 = vrot.slane %v1081, 1
    %v1083 = vadd.f32 %v1081, %v1082
    %v1084 = vadd.f32 %v901, %v905
    %v1085 = vadd.f32 %v1084, %v911
    %v1086 = vadd.f32 %v1085, %v915
    %v1087 = vadd.f32 %v1086, %v921
    %v1088 = vadd.f32 %v1087, %v925
    %v1089 = vadd.f32 %v1088, %v931
    %v1090 = vrot.slane %v1089, 4
    %v1091 = vadd.f32 %v1089, %v1090
    %v1092 = vrot.slane %v1091, 2
    %v1093 = vadd.f32 %v1091, %v1092
    %v1094 = vrot.slane %v1093, 1
    %v1095 = vadd.f32 %v1093, %v1094
    %v1096 = vadd.f32 %v970, %v974
    %v1097 = vadd.f32 %v1096, %v980
    %v1098 = vadd.f32 %v1097, %v984
    %v1099 = vadd.f32 %v1098, %v990
    %v1100 = vadd.f32 %v1099, %v994
    %v1101 = vadd.f32 %v1100, %v1000
    %v1102 = vrot.slane %v1101, 4
    %v1103 = vadd.f32 %v1101, %v1102
    %v1104 = vrot.slane %v1103, 2
    %v1105 = vadd.f32 %v1103, %v1104
    %v1106 = vrot.slane %v1105, 1
    %v1107 = vadd.f32 %v1105, %v1106
    %vm1108 = vcmask 523264
    %v1109 = vsel %vm1108, %v972, 0.0
    %v1110 = vsel %vm1108, %v976, 0.0
    %v1111 = vadd.f32 %v1109, %v1110
    %v1112 = vsel %vm1108, %v982, 0.0
    %v1113 = vadd.f32 %v1111, %v1112
    %v1114 = vsel %vm1108, %v986, 0.0
    %v1115 = vadd.f32 %v1113, %v1114
    %v1116 = vsel %vm1108, %v992, 0.0
    %v1117 = vadd.f32 %v1115, %v1116
    %v1118 = vsel %vm1108, %v996, 0.0
    %v1119 = vadd.f32 %v1117, %v1118
    %v1120 = vsel %vm1108, %v1002, 0.0
    %v1121 = vadd.f32 %v1119, %v1120
    %v1122 = vrot.slane %v1121, 4
    %v1123 = vadd.f32 %v1121, %v1122
    %v1124 = vrot.slane %v1123, 2
    %v1125 = vadd.f32 %v1123, %v1124
    %v1126 = vrot.slane %v1125, 1
    %v1127 = vadd.f32 %v1125, %v1126
    %v1128 = vmul.f32 %v899, %v899
    %v1129 = vmul.f32 %v901, %v901
    %v1130 = vmul.f32 %v970, %v970
    %v1131 = vmul.f32 %v972, %v972
    %v1132 = vmul.f32 %v903, %v903
    %v1133 = vmul.f32 %v905, %v905
    %v1134 = vmul.f32 %v974, %v974
    %v1135 = vmul.f32 %v976, %v976
    %v1136 = vmul.f32 %v909, %v909
    %v1137 = vmul.f32 %v911, %v911
    %v1138 = vmul.f32 %v980, %v980
    %v1139 = vmul.f32 %v982, %v982
    %v1140 = vmul.f32 %v913, %v913
    %v1141 = vmul.f32 %v915, %v915
    %v1142 = vmul.f32 %v984, %v984
    %v1143 = vmul.f32 %v986, %v986
    %v1144 = vmul.f32 %v919, %v919
    %v1145 = vmul.f32 %v921, %v921
    %v1146 = vmul.f32 %v990, %v990
    %v1147 = vmul.f32 %v992, %v992
    %v1148 = vmul.f32 %v923, %v923
    %v1149 = vmul.f32 %v925, %v925
    %v1150 = vmul.f32 %v994, %v994
    %v1151 = vmul.f32 %v996, %v996
    %v1152 = vmul.f32 %v929, %v929
    %v1153 = vmul.f32 %v931, %v931
    %v1154 = vmul.f32 %v1000, %v1000
    %v1155 = vmul.f32 %v1002, %v1002
    %v1156 = vadd.f32 %v1128, %v1132
    %v1157 = vadd.f32 %v1156, %v1136
    %v1158 = vadd.f32 %v1157, %v1140
    %v1159 = vadd.f32 %v1158, %v1144
    %v1160 = vadd.f32 %v1159, %v1148
    %v1161 = vadd.f32 %v1160, %v1152
    %v1162 = vrot.slane %v1161, 4
    %v1163 = vadd.f32 %v1161, %v1162
    %v1164 = vrot.slane %v1163, 2
    %v1165 = vadd.f32 %v1163, %v1164
    %v1166 = vrot.slane %v1165, 1
    %v1167 = vadd.f32 %v1165, %v1166
    %v1168 = vadd.f32 %v1129, %v1133
    %v1169 = vadd.f32 %v1168, %v1137
    %v1170 = vadd.f32 %v1169, %v1141
    %v1171 = vadd.f32 %v1170, %v1145
    %v1172 = vadd.f32 %v1171, %v1149
    %v1173 = vadd.f32 %v1172, %v1153
    %v1174 = vrot.slane %v1173, 4
    %v1175 = vadd.f32 %v1173, %v1174
    %v1176 = vrot.slane %v1175, 2
    %v1177 = vadd.f32 %v1175, %v1176
    %v1178 = vrot.slane %v1177, 1
    %v1179 = vadd.f32 %v1177, %v1178
    %v1180 = vadd.f32 %v1130, %v1134
    %v1181 = vadd.f32 %v1180, %v1138
    %v1182 = vadd.f32 %v1181, %v1142
    %v1183 = vadd.f32 %v1182, %v1146
    %v1184 = vadd.f32 %v1183, %v1150
    %v1185 = vadd.f32 %v1184, %v1154
    %v1186 = vrot.slane %v1185, 4
    %v1187 = vadd.f32 %v1185, %v1186
    %v1188 = vrot.slane %v1187, 2
    %v1189 = vadd.f32 %v1187, %v1188
    %v1190 = vrot.slane %v1189, 1
    %v1191 = vadd.f32 %v1189, %v1190
    %v1192 = vsel %vm1108, %v1131, 0.0
    %v1193 = vsel %vm1108, %v1135, 0.0
    %v1194 = vadd.f32 %v1192, %v1193
    %v1195 = vsel %vm1108, %v1139, 0.0
    %v1196 = vadd.f32 %v1194, %v1195
    %v1197 = vsel %vm1108, %v1143, 0.0
    %v1198 = vadd.f32 %v1196, %v1197
    %v1199 = vsel %vm1108, %v1147, 0.0
    %v1200 = vadd.f32 %v1198, %v1199
    %v1201 = vsel %vm1108, %v1151, 0.0
    %v1202 = vadd.f32 %v1200, %v1201
    %v1203 = vsel %vm1108, %v1155, 0.0
    %v1204 = vadd.f32 %v1202, %v1203
    %v1205 = vrot.slane %v1204, 4
    %v1206 = vadd.f32 %v1204, %v1205
    %v1207 = vrot.slane %v1206, 2
    %v1208 = vadd.f32 %v1206, %v1207
    %v1209 = vrot.slane %v1208, 1
    %v1210 = vadd.f32 %v1208, %v1209
    %v1212 = vsel %vm1108, %v1127, 0
    %1214 = vmatprep.subr.mxu0 0.0
    %1215 = vmatpush1.msra.mxu0 %v1006
    %1216 = vmatprep.subr.mxu0 0.0
    %1217 = vmatpush1.msra.mxu0 %v1007
    %1218 = vmatprep.subr.mxu0 0.0
    %1219 = vmatpush1.msra.mxu0 %v1008
    %1220 = vmatprep.subr.mxu0 0.0
    %1221 = vmatpush1.msra.mxu0 %v1009
    %1222 = vmatprep.subr.mxu0 0.0
    %1223 = vmatpush1.msra.mxu0 %v1010
    %1224 = vmatprep.subr.mxu0 0.0
    %1225 = vmatpush1.msra.mxu0 %v1011
    %1226 = vmatprep.subr.mxu0 0.0
    %1227 = vmatpush1.msra.mxu0 %v1012
    %1228 = vmatprep.subr.mxu0 0.0
    %1229 = vmatpush1.msra.mxu0 %v1013
    %1230 = vmatprep.subr.mxu0 0.0
    %1231 = vmatpush1.msra.mxu0 %v1014
    %1232 = vmatprep.subr.mxu0 0.0
    %1233 = vmatpush1.msra.mxu0 %v1015
    %1234 = vmatprep.subr.mxu0 0.0
    %1235 = vmatpush1.msra.mxu0 %v1016
    %1236 = vmatprep.subr.mxu0 0.0
    %1237 = vmatpush1.msra.mxu0 %v1017
    %1238 = vmatprep.subr.mxu0 0.0
    %1239 = vmatpush1.msra.mxu0 %v1018
    %1240 = vmatprep.subr.mxu0 0.0
    %1241 = vmatpush1.msra.mxu0 %v1019
    %1242 = vmatprep.subr.mxu0 0.0
    %1243 = vmatpush1.msra.mxu0 %v1020
    %1244 = vmatprep.subr.mxu0 0.0
    %1245 = vmatpush1.msra.mxu0 %v1021
    %1246 = vmatprep.subr.mxu0 0.0
    %1247 = vmatpush1.msra.mxu0 %v1022
    %1248 = vmatprep.subr.mxu0 0.0
    %1249 = vmatpush1.msra.mxu0 %v1023
    %1250 = vmatprep.subr.mxu0 0.0
    %1251 = vmatpush1.msra.mxu0 %v1024
    %1252 = vmatprep.subr.mxu0 0.0
    %1253 = vmatpush1.msra.mxu0 %v1025
    %1254 = vmatprep.subr.mxu0 0.0
    %1255 = vmatpush1.msra.mxu0 %v1026
    %1256 = vmatprep.subr.mxu0 0.0
    %1257 = vmatpush1.msra.mxu0 %v1027
    %1258 = vmatprep.subr.mxu0 0.0
    %1259 = vmatpush1.msra.mxu0 %v1028
    %1260 = vmatprep.subr.mxu0 0.0
    %1261 = vmatpush1.msra.mxu0 %v1029
    %1262 = vmatprep.subr.mxu0 0.0
    %1263 = vmatpush1.msra.mxu0 %v1030
    %1264 = vmatprep.subr.mxu0 0.0
    %1265 = vmatpush1.msra.mxu0 %v1031
    %1266 = vmatprep.subr.mxu0 0.0
    %1267 = vmatpush1.msra.mxu0 %v1032
    %1268 = vmatprep.subr.mxu0 0.0
    %1269 = vmatpush1.msra.mxu0 %v1033
    %1270 = vmatprep.subr.mxu0 0.0
    %1271 = vmatpush1.msra.mxu0 %v1034
    %1272 = vmatprep.subr.mxu0 0.0
    %1273 = vmatpush1.msra.mxu0 %v1035
    %1274 = vmatprep.subr.mxu0 0.0
    %1275 = vmatpush1.msra.mxu0 %v1036
    %1276 = vmatprep.subr.mxu0 0.0
    %1277 = vmatpush1.msra.mxu0 %v1037
    %1278 = vmatprep.mubr.f32.mxu0 %v1095
    %1279 = vmatmul.mubr.f32.gmra.mrb[0].mxu0 %v1083
    %v1280 = vpop.f32.mrb[0].mxu0
    %v1281 = vadd.f32 0.0, %v1280
    %v1282 = vpop.f32.mrb[0].mxu0
    %1283 = vdwg.mxu0
    %1284 = vmatprep.subr.mxu0 0.0
    %1285 = vmatpush1.msra.mxu0 %v1038
    %1286 = vmatprep.subr.mxu0 0.0
    %1287 = vmatpush1.msra.mxu0 %v1039
    %1288 = vmatprep.subr.mxu0 0.0
    %1289 = vmatpush1.msra.mxu0 %v1040
    %1290 = vmatprep.subr.mxu0 0.0
    %1291 = vmatpush1.msra.mxu0 %v1041
    %1292 = vmatprep.subr.mxu0 0.0
    %1293 = vmatpush1.msra.mxu0 %v1042
    %1294 = vmatprep.subr.mxu0 0.0
    %1295 = vmatpush1.msra.mxu0 %v1043
    %1296 = vmatprep.subr.mxu0 0.0
    %1297 = vmatpush1.msra.mxu0 %v1044
    %1298 = vmatprep.subr.mxu0 0.0
    %1299 = vmatpush1.msra.mxu0 %v1045
    %1300 = vmatprep.subr.mxu0 0.0
    %1301 = vmatpush1.msra.mxu0 %v1046
    %1302 = vmatprep.subr.mxu0 0.0
    %1303 = vmatpush1.msra.mxu0 %v1047
    %1304 = vmatprep.subr.mxu0 0.0
    %1305 = vmatpush1.msra.mxu0 %v1048
    %1306 = vmatprep.subr.mxu0 0.0
    %1307 = vmatpush1.msra.mxu0 %v1049
    %1308 = vmatprep.subr.mxu0 0.0
    %1309 = vmatpush1.msra.mxu0 %v1050
    %1310 = vmatprep.subr.mxu0 0.0
    %1311 = vmatpush1.msra.mxu0 %v1051
    %1312 = vmatprep.subr.mxu0 0.0
    %1313 = vmatpush1.msra.mxu0 %v1052
    %1314 = vmatprep.subr.mxu0 0.0
    %1315 = vmatpush1.msra.mxu0 %v1053
    %1316 = vmatprep.subr.mxu0 0.0
    %1317 = vmatpush1.msra.mxu0 %v1054
    %1318 = vmatprep.subr.mxu0 0.0
    %1319 = vmatpush1.msra.mxu0 %v1055
    %1320 = vmatprep.subr.mxu0 0.0
    %1321 = vmatpush1.msra.mxu0 %v1056
    %1322 = vmatprep.subr.mxu0 0.0
    %1323 = vmatpush1.msra.mxu0 %v1057
    %1324 = vmatprep.subr.mxu0 0.0
    %1325 = vmatpush1.msra.mxu0 %v1058
    %1326 = vmatprep.subr.mxu0 0.0
    %1327 = vmatpush1.msra.mxu0 %v1059
    %1328 = vmatprep.subr.mxu0 0.0
    %1329 = vmatpush1.msra.mxu0 %v1060
    %1330 = vmatprep.subr.mxu0 0.0
    %1331 = vmatpush1.msra.mxu0 %v1061
    %1332 = vmatprep.subr.mxu0 0.0
    %1333 = vmatpush1.msra.mxu0 0.0
    %1334 = vmatprep.subr.mxu0 0.0
    %1335 = vmatpush1.msra.mxu0 0.0
    %1336 = vmatprep.subr.mxu0 0.0
    %1337 = vmatpush1.msra.mxu0 0.0
    %1338 = vmatprep.subr.mxu0 0.0
    %1339 = vmatpush1.msra.mxu0 0.0
    %1340 = vmatprep.subr.mxu0 0.0
    %1341 = vmatpush1.msra.mxu0 0.0
    %1342 = vmatprep.subr.mxu0 0.0
    %1343 = vmatpush1.msra.mxu0 0.0
    %1344 = vmatprep.subr.mxu0 0.0
    %1345 = vmatpush1.msra.mxu0 0.0
    %1346 = vmatprep.subr.mxu0 0.0
    %1347 = vmatpush1.msra.mxu0 0.0
    %1348 = vmatprep.mubr.f32.mxu0 %v1212
    %1349 = vmatmul.mubr.f32.gmra.mrb[0].mxu0 %v1107
    %v1350 = vpop.f32.mrb[0].mxu0
    %v1351 = vadd.f32 %v1281, %v1350
    %v1352 = vpop.f32.mrb[0].mxu0
    %1353 = vdwg.mxu0
    %v1355 = vsel %vm1108, %v1210, 0
    %1357 = vmatprep.subr.mxu0 0.0
    %1358 = vmatpush1.msra.mxu0 %v1006
    %1359 = vmatprep.subr.mxu0 0.0
    %1360 = vmatpush1.msra.mxu0 %v1007
    %1361 = vmatprep.subr.mxu0 0.0
    %1362 = vmatpush1.msra.mxu0 %v1008
    %1363 = vmatprep.subr.mxu0 0.0
    %1364 = vmatpush1.msra.mxu0 %v1009
    %1365 = vmatprep.subr.mxu0 0.0
    %1366 = vmatpush1.msra.mxu0 %v1010
    %1367 = vmatprep.subr.mxu0 0.0
    %1368 = vmatpush1.msra.mxu0 %v1011
    %1369 = vmatprep.subr.mxu0 0.0
    %1370 = vmatpush1.msra.mxu0 %v1012
    %1371 = vmatprep.subr.mxu0 0.0
    %1372 = vmatpush1.msra.mxu0 %v1013
    %1373 = vmatprep.subr.mxu0 0.0
    %1374 = vmatpush1.msra.mxu0 %v1014
    %1375 = vmatprep.subr.mxu0 0.0
    %1376 = vmatpush1.msra.mxu0 %v1015
    %1377 = vmatprep.subr.mxu0 0.0
    %1378 = vmatpush1.msra.mxu0 %v1016
    %1379 = vmatprep.subr.mxu0 0.0
    %1380 = vmatpush1.msra.mxu0 %v1017
    %1381 = vmatprep.subr.mxu0 0.0
    %1382 = vmatpush1.msra.mxu0 %v1018
    %1383 = vmatprep.subr.mxu0 0.0
    %1384 = vmatpush1.msra.mxu0 %v1019
    %1385 = vmatprep.subr.mxu0 0.0
    %1386 = vmatpush1.msra.mxu0 %v1020
    %1387 = vmatprep.subr.mxu0 0.0
    %1388 = vmatpush1.msra.mxu0 %v1021
    %1389 = vmatprep.subr.mxu0 0.0
    %1390 = vmatpush1.msra.mxu0 %v1022
    %1391 = vmatprep.subr.mxu0 0.0
    %1392 = vmatpush1.msra.mxu0 %v1023
    %1393 = vmatprep.subr.mxu0 0.0
    %1394 = vmatpush1.msra.mxu0 %v1024
    %1395 = vmatprep.subr.mxu0 0.0
    %1396 = vmatpush1.msra.mxu0 %v1025
    %1397 = vmatprep.subr.mxu0 0.0
    %1398 = vmatpush1.msra.mxu0 %v1026
    %1399 = vmatprep.subr.mxu0 0.0
    %1400 = vmatpush1.msra.mxu0 %v1027
    %1401 = vmatprep.subr.mxu0 0.0
    %1402 = vmatpush1.msra.mxu0 %v1028
    %1403 = vmatprep.subr.mxu0 0.0
    %1404 = vmatpush1.msra.mxu0 %v1029
    %1405 = vmatprep.subr.mxu0 0.0
    %1406 = vmatpush1.msra.mxu0 %v1030
    %1407 = vmatprep.subr.mxu0 0.0
    %1408 = vmatpush1.msra.mxu0 %v1031
    %1409 = vmatprep.subr.mxu0 0.0
    %1410 = vmatpush1.msra.mxu0 %v1032
    %1411 = vmatprep.subr.mxu0 0.0
    %1412 = vmatpush1.msra.mxu0 %v1033
    %1413 = vmatprep.subr.mxu0 0.0
    %1414 = vmatpush1.msra.mxu0 %v1034
    %1415 = vmatprep.subr.mxu0 0.0
    %1416 = vmatpush1.msra.mxu0 %v1035
    %1417 = vmatprep.subr.mxu0 0.0
    %1418 = vmatpush1.msra.mxu0 %v1036
    %1419 = vmatprep.subr.mxu0 0.0
    %1420 = vmatpush1.msra.mxu0 %v1037
    %1421 = vmatprep.mubr.f32.mxu0 %v1179
    %1422 = vmatmul.mubr.f32.gmra.mrb[0].mxu0 %v1167
    %v1423 = vpop.f32.mrb[0].mxu0
    %v1424 = vadd.f32 0.0, %v1423
    %v1425 = vpop.f32.mrb[0].mxu0
    %1426 = vdwg.mxu0
    %1427 = vmatprep.subr.mxu0 0.0
    %1428 = vmatpush1.msra.mxu0 %v1038
    %1429 = vmatprep.subr.mxu0 0.0
    %1430 = vmatpush1.msra.mxu0 %v1039
    %1431 = vmatprep.subr.mxu0 0.0
    %1432 = vmatpush1.msra.mxu0 %v1040
    %1433 = vmatprep.subr.mxu0 0.0
    %1434 = vmatpush1.msra.mxu0 %v1041
    %1435 = vmatprep.subr.mxu0 0.0
    %1436 = vmatpush1.msra.mxu0 %v1042
    %1437 = vmatprep.subr.mxu0 0.0
    %1438 = vmatpush1.msra.mxu0 %v1043
    %1439 = vmatprep.subr.mxu0 0.0
    %1440 = vmatpush1.msra.mxu0 %v1044
    %1441 = vmatprep.subr.mxu0 0.0
    %1442 = vmatpush1.msra.mxu0 %v1045
    %1443 = vmatprep.subr.mxu0 0.0
    %1444 = vmatpush1.msra.mxu0 %v1046
    %1445 = vmatprep.subr.mxu0 0.0
    %1446 = vmatpush1.msra.mxu0 %v1047
    %1447 = vmatprep.subr.mxu0 0.0
    %1448 = vmatpush1.msra.mxu0 %v1048
    %1449 = vmatprep.subr.mxu0 0.0
    %1450 = vmatpush1.msra.mxu0 %v1049
    %1451 = vmatprep.subr.mxu0 0.0
    %1452 = vmatpush1.msra.mxu0 %v1050
    %1453 = vmatprep.subr.mxu0 0.0
    %1454 = vmatpush1.msra.mxu0 %v1051
    %1455 = vmatprep.subr.mxu0 0.0
    %1456 = vmatpush1.msra.mxu0 %v1052
    %1457 = vmatprep.subr.mxu0 0.0
    %1458 = vmatpush1.msra.mxu0 %v1053
    %1459 = vmatprep.subr.mxu0 0.0
    %1460 = vmatpush1.msra.mxu0 %v1054
    %1461 = vmatprep.subr.mxu0 0.0
    %1462 = vmatpush1.msra.mxu0 %v1055
    %1463 = vmatprep.subr.mxu0 0.0
    %1464 = vmatpush1.msra.mxu0 %v1056
    %1465 = vmatprep.subr.mxu0 0.0
    %1466 = vmatpush1.msra.mxu0 %v1057
    %1467 = vmatprep.subr.mxu0 0.0
    %1468 = vmatpush1.msra.mxu0 %v1058
    %1469 = vmatprep.subr.mxu0 0.0
    %1470 = vmatpush1.msra.mxu0 %v1059
    %1471 = vmatprep.subr.mxu0 0.0
    %1472 = vmatpush1.msra.mxu0 %v1060
    %1473 = vmatprep.subr.mxu0 0.0
    %1474 = vmatpush1.msra.mxu0 %v1061
    %1475 = vmatprep.subr.mxu0 0.0
    %1476 = vmatpush1.msra.mxu0 0.0
    %1477 = vmatprep.subr.mxu0 0.0
    %1478 = vmatpush1.msra.mxu0 0.0
    %1479 = vmatprep.subr.mxu0 0.0
    %1480 = vmatpush1.msra.mxu0 0.0
    %1481 = vmatprep.subr.mxu0 0.0
    %1482 = vmatpush1.msra.mxu0 0.0
    %1483 = vmatprep.subr.mxu0 0.0
    %1484 = vmatpush1.msra.mxu0 0.0
    %1485 = vmatprep.subr.mxu0 0.0
    %1486 = vmatpush1.msra.mxu0 0.0
    %1487 = vmatprep.subr.mxu0 0.0
    %1488 = vmatpush1.msra.mxu0 0.0
    %1489 = vmatprep.subr.mxu0 0.0
    %1490 = vmatpush1.msra.mxu0 0.0
    %1491 = vmatprep.mubr.f32.mxu0 %v1355
    %1492 = vmatmul.mubr.f32.gmra.mrb[0].mxu0 %v1191
    %v1493 = vpop.f32.mrb[0].mxu0
    %v1494 = vadd.f32 %v1424, %v1493
    %v1495 = vpop.f32.mrb[0].mxu0
    %1496 = vdwg.mxu0
    %v1497 = vmul.f32 %v1351, 0.0006377551
    %v1498 = vmul.f32 %v1494, 0.0006377551
    %v1499 = vmul.f32 %v1497, %v1497
    %v1500 = vsub.f32 %v1498, %v1499
    %v1501 = vmax.f32 %v1500, 0.0
    %v1502 = vadd.f32 %v1501, 1e-05
    %v1503 = vrsqrt.pop %v1502
    %v1504 = vmul.f32 %v1070, %v1503
    %v1505 = vmul.f32 %v1497, %v1504
    %v1506 = vsub.f32 %v1071, %v1505
    %vm1507 = vcmask 130048
    %v1509 = vsel %vm1507, %v1504, 0
    %1511 = vmatprep.subr.mxu0 %v1063
    %1512 = vmatpush1.msra.mxu0 %v1062
    %1513 = vmatprep.subr.mxu0 %v1067
    %1514 = vmatpush1.msra.mxu0 %v1066
    %1515 = vmatprep.subr.mxu0 0.0
    %1516 = vmatpush1.msra.mxu0 0.0
    %1517 = vmatprep.subr.mxu0 0.0
    %1518 = vmatpush1.msra.mxu0 0.0
    %1519 = vmatprep.subr.mxu0 0.0
    %1520 = vmatpush1.msra.mxu0 0.0
    %1521 = vmatprep.subr.mxu0 0.0
    %1522 = vmatpush1.msra.mxu0 0.0
    %1523 = vmatprep.subr.mxu0 0.0
    %1524 = vmatpush1.msra.mxu0 0.0
    %1525 = vmatprep.subr.mxu0 0.0
    %1526 = vmatpush1.msra.mxu0 0.0
    %1527 = vmatprep.subr.mxu0 0.0
    %1528 = vmatpush1.msra.mxu0 0.0
    %1529 = vmatprep.subr.mxu0 0.0
    %1530 = vmatpush1.msra.mxu0 0.0
    %1531 = vmatprep.subr.mxu0 0.0
    %1532 = vmatpush1.msra.mxu0 0.0
    %1533 = vmatprep.subr.mxu0 0.0
    %1534 = vmatpush1.msra.mxu0 0.0
    %1535 = vmatprep.subr.mxu0 0.0
    %1536 = vmatpush1.msra.mxu0 0.0
    %1537 = vmatprep.subr.mxu0 0.0
    %1538 = vmatpush1.msra.mxu0 0.0
    %1539 = vmatprep.subr.mxu0 0.0
    %1540 = vmatpush1.msra.mxu0 0.0
    %1541 = vmatprep.subr.mxu0 0.0
    %1542 = vmatpush1.msra.mxu0 0.0
    %1543 = vmatprep.subr.mxu0 0.0
    %1544 = vmatpush1.msra.mxu0 0.0
    %1545 = vmatprep.subr.mxu0 0.0
    %1546 = vmatpush1.msra.mxu0 0.0
    %1547 = vmatprep.subr.mxu0 0.0
    %1548 = vmatpush1.msra.mxu0 0.0
    %1549 = vmatprep.subr.mxu0 0.0
    %1550 = vmatpush1.msra.mxu0 0.0
    %1551 = vmatprep.subr.mxu0 0.0
    %1552 = vmatpush1.msra.mxu0 0.0
    %1553 = vmatprep.subr.mxu0 0.0
    %1554 = vmatpush1.msra.mxu0 0.0
    %1555 = vmatprep.subr.mxu0 0.0
    %1556 = vmatpush1.msra.mxu0 0.0
    %1557 = vmatprep.subr.mxu0 0.0
    %1558 = vmatpush1.msra.mxu0 0.0
    %1559 = vmatprep.subr.mxu0 0.0
    %1560 = vmatpush1.msra.mxu0 0.0
    %1561 = vmatprep.subr.mxu0 0.0
    %1562 = vmatpush1.msra.mxu0 0.0
    %1563 = vmatprep.subr.mxu0 0.0
    %1564 = vmatpush1.msra.mxu0 0.0
    %1565 = vmatprep.subr.mxu0 0.0
    %1566 = vmatpush1.msra.mxu0 0.0
    %1567 = vmatprep.subr.mxu0 0.0
    %1568 = vmatpush1.msra.mxu0 0.0
    %1569 = vmatprep.subr.mxu0 0.0
    %1570 = vmatpush1.msra.mxu0 0.0
    %1571 = vmatprep.subr.mxu0 0.0
    %1572 = vmatpush1.msra.mxu0 0.0
    %1573 = vmatprep.subr.mxu0 0.0
    %1574 = vmatpush1.msra.mxu0 0.0
    %1575 = vmatprep.mubr.f32.mxu0 0.0
    %1576 = vmatmul.mubr.f32.gmra.mrb[0].mxu0 %v1509
    %v1577 = vpop.f32.mrb[0].mxu0
    %v1578 = vadd.f32 0.0, %v1577
    %v1579 = vpop.f32.mrb[0].mxu0
    %v1580 = vadd.f32 0.0, %v1579
    %1581 = vdwg.mxu0
    %1582 = vmatprep.subr.mxu0 %v1065
    %1583 = vmatpush1.msra.mxu0 %v1064
    %1584 = vmatprep.subr.mxu0 %v1069
    %1585 = vmatpush1.msra.mxu0 %v1068
    %1586 = vmatprep.subr.mxu0 0.0
    %1587 = vmatpush1.msra.mxu0 0.0
    %1588 = vmatprep.subr.mxu0 0.0
    %1589 = vmatpush1.msra.mxu0 0.0
    %1590 = vmatprep.subr.mxu0 0.0
    %1591 = vmatpush1.msra.mxu0 0.0
    %1592 = vmatprep.subr.mxu0 0.0
    %1593 = vmatpush1.msra.mxu0 0.0
    %1594 = vmatprep.subr.mxu0 0.0
    %1595 = vmatpush1.msra.mxu0 0.0
    %1596 = vmatprep.subr.mxu0 0.0
    %1597 = vmatpush1.msra.mxu0 0.0
    %1598 = vmatprep.subr.mxu0 0.0
    %1599 = vmatpush1.msra.mxu0 0.0
    %1600 = vmatprep.subr.mxu0 0.0
    %1601 = vmatpush1.msra.mxu0 0.0
    %1602 = vmatprep.subr.mxu0 0.0
    %1603 = vmatpush1.msra.mxu0 0.0
    %1604 = vmatprep.subr.mxu0 0.0
    %1605 = vmatpush1.msra.mxu0 0.0
    %1606 = vmatprep.subr.mxu0 0.0
    %1607 = vmatpush1.msra.mxu0 0.0
    %1608 = vmatprep.subr.mxu0 0.0
    %1609 = vmatpush1.msra.mxu0 0.0
    %1610 = vmatprep.subr.mxu0 0.0
    %1611 = vmatpush1.msra.mxu0 0.0
    %1612 = vmatprep.subr.mxu0 0.0
    %1613 = vmatpush1.msra.mxu0 0.0
    %1614 = vmatprep.subr.mxu0 0.0
    %1615 = vmatpush1.msra.mxu0 0.0
    %1616 = vmatprep.subr.mxu0 0.0
    %1617 = vmatpush1.msra.mxu0 0.0
    %1618 = vmatprep.subr.mxu0 0.0
    %1619 = vmatpush1.msra.mxu0 0.0
    %1620 = vmatprep.subr.mxu0 0.0
    %1621 = vmatpush1.msra.mxu0 0.0
    %1622 = vmatprep.subr.mxu0 0.0
    %1623 = vmatpush1.msra.mxu0 0.0
    %1624 = vmatprep.subr.mxu0 0.0
    %1625 = vmatpush1.msra.mxu0 0.0
    %1626 = vmatprep.subr.mxu0 0.0
    %1627 = vmatpush1.msra.mxu0 0.0
    %1628 = vmatprep.subr.mxu0 0.0
    %1629 = vmatpush1.msra.mxu0 0.0
    %1630 = vmatprep.subr.mxu0 0.0
    %1631 = vmatpush1.msra.mxu0 0.0
    %1632 = vmatprep.subr.mxu0 0.0
    %1633 = vmatpush1.msra.mxu0 0.0
    %1634 = vmatprep.subr.mxu0 0.0
    %1635 = vmatpush1.msra.mxu0 0.0
    %1636 = vmatprep.subr.mxu0 0.0
    %1637 = vmatpush1.msra.mxu0 0.0
    %1638 = vmatprep.subr.mxu0 0.0
    %1639 = vmatpush1.msra.mxu0 0.0
    %1640 = vmatprep.subr.mxu0 0.0
    %1641 = vmatpush1.msra.mxu0 0.0
    %1642 = vmatprep.subr.mxu0 0.0
    %1643 = vmatpush1.msra.mxu0 0.0
    %1644 = vmatprep.subr.mxu0 0.0
    %1645 = vmatpush1.msra.mxu0 0.0
    %1646 = vmatprep.mubr.f32.mxu0 0.0
    %1647 = vmatmul.mubr.f32.gmra.mrb[0].mxu0 %v1509
    %v1648 = vpop.f32.mrb[0].mxu0
    %v1649 = vadd.f32 0.0, %v1648
    %v1650 = vpop.f32.mrb[0].mxu0
    %v1651 = vadd.f32 0.0, %v1650
    %1652 = vdwg.mxu0
    %v1654 = vsel %vm1507, %v1506, 0
    %1656 = vmatprep.subr.mxu0 %v1063
    %1657 = vmatpush1.msra.mxu0 %v1062
    %1658 = vmatprep.subr.mxu0 %v1067
    %1659 = vmatpush1.msra.mxu0 %v1066
    %1660 = vmatprep.subr.mxu0 0.0
    %1661 = vmatpush1.msra.mxu0 0.0
    %1662 = vmatprep.subr.mxu0 0.0
    %1663 = vmatpush1.msra.mxu0 0.0
    %1664 = vmatprep.subr.mxu0 0.0
    %1665 = vmatpush1.msra.mxu0 0.0
    %1666 = vmatprep.subr.mxu0 0.0
    %1667 = vmatpush1.msra.mxu0 0.0
    %1668 = vmatprep.subr.mxu0 0.0
    %1669 = vmatpush1.msra.mxu0 0.0
    %1670 = vmatprep.subr.mxu0 0.0
    %1671 = vmatpush1.msra.mxu0 0.0
    %1672 = vmatprep.subr.mxu0 0.0
    %1673 = vmatpush1.msra.mxu0 0.0
    %1674 = vmatprep.subr.mxu0 0.0
    %1675 = vmatpush1.msra.mxu0 0.0
    %1676 = vmatprep.subr.mxu0 0.0
    %1677 = vmatpush1.msra.mxu0 0.0
    %1678 = vmatprep.subr.mxu0 0.0
    %1679 = vmatpush1.msra.mxu0 0.0
    %1680 = vmatprep.subr.mxu0 0.0
    %1681 = vmatpush1.msra.mxu0 0.0
    %1682 = vmatprep.subr.mxu0 0.0
    %1683 = vmatpush1.msra.mxu0 0.0
    %1684 = vmatprep.subr.mxu0 0.0
    %1685 = vmatpush1.msra.mxu0 0.0
    %1686 = vmatprep.subr.mxu0 0.0
    %1687 = vmatpush1.msra.mxu0 0.0
    %1688 = vmatprep.subr.mxu0 0.0
    %1689 = vmatpush1.msra.mxu0 0.0
    %1690 = vmatprep.subr.mxu0 0.0
    %1691 = vmatpush1.msra.mxu0 0.0
    %1692 = vmatprep.subr.mxu0 0.0
    %1693 = vmatpush1.msra.mxu0 0.0
    %1694 = vmatprep.subr.mxu0 0.0
    %1695 = vmatpush1.msra.mxu0 0.0
    %1696 = vmatprep.subr.mxu0 0.0
    %1697 = vmatpush1.msra.mxu0 0.0
    %1698 = vmatprep.subr.mxu0 0.0
    %1699 = vmatpush1.msra.mxu0 0.0
    %1700 = vmatprep.subr.mxu0 0.0
    %1701 = vmatpush1.msra.mxu0 0.0
    %1702 = vmatprep.subr.mxu0 0.0
    %1703 = vmatpush1.msra.mxu0 0.0
    %1704 = vmatprep.subr.mxu0 0.0
    %1705 = vmatpush1.msra.mxu0 0.0
    %1706 = vmatprep.subr.mxu0 0.0
    %1707 = vmatpush1.msra.mxu0 0.0
    %1708 = vmatprep.subr.mxu0 0.0
    %1709 = vmatpush1.msra.mxu0 0.0
    %1710 = vmatprep.subr.mxu0 0.0
    %1711 = vmatpush1.msra.mxu0 0.0
    %1712 = vmatprep.subr.mxu0 0.0
    %1713 = vmatpush1.msra.mxu0 0.0
    %1714 = vmatprep.subr.mxu0 0.0
    %1715 = vmatpush1.msra.mxu0 0.0
    %1716 = vmatprep.subr.mxu0 0.0
    %1717 = vmatpush1.msra.mxu0 0.0
    %1718 = vmatprep.subr.mxu0 0.0
    %1719 = vmatpush1.msra.mxu0 0.0
    %1720 = vmatprep.mubr.f32.mxu0 0.0
    %1721 = vmatmul.mubr.f32.gmra.mrb[0].mxu0 %v1654
    %v1722 = vpop.f32.mrb[0].mxu0
    %v1723 = vadd.f32 0.0, %v1722
    %v1724 = vpop.f32.mrb[0].mxu0
    %v1725 = vadd.f32 0.0, %v1724
    %1726 = vdwg.mxu0
    %1727 = vmatprep.subr.mxu0 %v1065
    %1728 = vmatpush1.msra.mxu0 %v1064
    %1729 = vmatprep.subr.mxu0 %v1069
    %1730 = vmatpush1.msra.mxu0 %v1068
    %1731 = vmatprep.subr.mxu0 0.0
    %1732 = vmatpush1.msra.mxu0 0.0
    %1733 = vmatprep.subr.mxu0 0.0
    %1734 = vmatpush1.msra.mxu0 0.0
    %1735 = vmatprep.subr.mxu0 0.0
    %1736 = vmatpush1.msra.mxu0 0.0
    %1737 = vmatprep.subr.mxu0 0.0
    %1738 = vmatpush1.msra.mxu0 0.0
    %1739 = vmatprep.subr.mxu0 0.0
    %1740 = vmatpush1.msra.mxu0 0.0
    %1741 = vmatprep.subr.mxu0 0.0
    %1742 = vmatpush1.msra.mxu0 0.0
    %1743 = vmatprep.subr.mxu0 0.0
    %1744 = vmatpush1.msra.mxu0 0.0
    %1745 = vmatprep.subr.mxu0 0.0
    %1746 = vmatpush1.msra.mxu0 0.0
    %1747 = vmatprep.subr.mxu0 0.0
    %1748 = vmatpush1.msra.mxu0 0.0
    %1749 = vmatprep.subr.mxu0 0.0
    %1750 = vmatpush1.msra.mxu0 0.0
    %1751 = vmatprep.subr.mxu0 0.0
    %1752 = vmatpush1.msra.mxu0 0.0
    %1753 = vmatprep.subr.mxu0 0.0
    %1754 = vmatpush1.msra.mxu0 0.0
    %1755 = vmatprep.subr.mxu0 0.0
    %1756 = vmatpush1.msra.mxu0 0.0
    %1757 = vmatprep.subr.mxu0 0.0
    %1758 = vmatpush1.msra.mxu0 0.0
    %1759 = vmatprep.subr.mxu0 0.0
    %1760 = vmatpush1.msra.mxu0 0.0
    %1761 = vmatprep.subr.mxu0 0.0
    %1762 = vmatpush1.msra.mxu0 0.0
    %1763 = vmatprep.subr.mxu0 0.0
    %1764 = vmatpush1.msra.mxu0 0.0
    %1765 = vmatprep.subr.mxu0 0.0
    %1766 = vmatpush1.msra.mxu0 0.0
    %1767 = vmatprep.subr.mxu0 0.0
    %1768 = vmatpush1.msra.mxu0 0.0
    %1769 = vmatprep.subr.mxu0 0.0
    %1770 = vmatpush1.msra.mxu0 0.0
    %1771 = vmatprep.subr.mxu0 0.0
    %1772 = vmatpush1.msra.mxu0 0.0
    %1773 = vmatprep.subr.mxu0 0.0
    %1774 = vmatpush1.msra.mxu0 0.0
    %1775 = vmatprep.subr.mxu0 0.0
    %1776 = vmatpush1.msra.mxu0 0.0
    %1777 = vmatprep.subr.mxu0 0.0
    %1778 = vmatpush1.msra.mxu0 0.0
    %1779 = vmatprep.subr.mxu0 0.0
    %1780 = vmatpush1.msra.mxu0 0.0
    %1781 = vmatprep.subr.mxu0 0.0
    %1782 = vmatpush1.msra.mxu0 0.0
    %1783 = vmatprep.subr.mxu0 0.0
    %1784 = vmatpush1.msra.mxu0 0.0
    %1785 = vmatprep.subr.mxu0 0.0
    %1786 = vmatpush1.msra.mxu0 0.0
    %1787 = vmatprep.subr.mxu0 0.0
    %1788 = vmatpush1.msra.mxu0 0.0
    %1789 = vmatprep.subr.mxu0 0.0
    %1790 = vmatpush1.msra.mxu0 0.0
    %1791 = vmatprep.mubr.f32.mxu0 0.0
    %1792 = vmatmul.mubr.f32.gmra.mrb[0].mxu0 %v1654
    %v1793 = vpop.f32.mrb[0].mxu0
    %v1794 = vadd.f32 0.0, %v1793
    %v1795 = vpop.f32.mrb[0].mxu0
    %v1796 = vadd.f32 0.0, %v1795
    %1797 = vdwg.mxu0
    %v1798 = vlaneseq
    %v1799 = vshrl.u32 %v1798, 7
    %v1800 = vsub.s32 0, %v1799
    %v1801 = vrot.slane %v1578, %v1800
    %v1802 = vlaneseq
    %v1803 = vshrl.u32 %v1802, 7
    %v1804 = vsub.s32 0, %v1803
    %v1805 = vrot.slane %v1580, %v1804
    %v1806 = vlaneseq
    %v1807 = vshrl.u32 %v1806, 7
    %v1808 = vsub.s32 0, %v1807
    %v1809 = vrot.slane %v1649, %v1808
    %v1810 = vlaneseq
    %v1811 = vshrl.u32 %v1810, 7
    %v1812 = vsub.s32 0, %v1811
    %v1813 = vrot.slane %v1651, %v1812
    %v1814 = vmul.f32 %v899, %v1801
    %v1815 = vmul.f32 %v901, %v1805
    %v1816 = vmul.f32 %v970, %v1809
    %v1817 = vmul.f32 %v972, %v1813
    %v1818 = vmul.f32 %v903, %v1801
    %v1819 = vmul.f32 %v905, %v1805
    %v1820 = vmul.f32 %v974, %v1809
    %v1821 = vmul.f32 %v976, %v1813
    %v1822 = vmul.f32 %v909, %v1801
    %v1823 = vmul.f32 %v911, %v1805
    %v1824 = vmul.f32 %v980, %v1809
    %v1825 = vmul.f32 %v982, %v1813
    %v1826 = vmul.f32 %v913, %v1801
    %v1827 = vmul.f32 %v915, %v1805
    %v1828 = vmul.f32 %v984, %v1809
    %v1829 = vmul.f32 %v986, %v1813
    %v1830 = vmul.f32 %v919, %v1801
    %v1831 = vmul.f32 %v921, %v1805
    %v1832 = vmul.f32 %v990, %v1809
    %v1833 = vmul.f32 %v992, %v1813
    %v1834 = vmul.f32 %v923, %v1801
    %v1835 = vmul.f32 %v925, %v1805
    %v1836 = vmul.f32 %v994, %v1809
    %v1837 = vmul.f32 %v996, %v1813
    %v1838 = vmul.f32 %v929, %v1801
    %v1839 = vmul.f32 %v931, %v1805
    %v1840 = vmul.f32 %v1000, %v1809
    %v1841 = vmul.f32 %v1002, %v1813
    %v1842 = vlaneseq
    %v1843 = vshrl.u32 %v1842, 7
    %v1844 = vsub.s32 0, %v1843
    %v1845 = vrot.slane %v1723, %v1844
    %v1846 = vlaneseq
    %v1847 = vshrl.u32 %v1846, 7
    %v1848 = vsub.s32 0, %v1847
    %v1849 = vrot.slane %v1725, %v1848
    %v1850 = vlaneseq
    %v1851 = vshrl.u32 %v1850, 7
    %v1852 = vsub.s32 0, %v1851
    %v1853 = vrot.slane %v1794, %v1852
    %v1854 = vlaneseq
    %v1855 = vshrl.u32 %v1854, 7
    %v1856 = vsub.s32 0, %v1855
    %v1857 = vrot.slane %v1796, %v1856
    %v1858 = vadd.f32 %v1814, %v1845
    %v1859 = vadd.f32 %v1815, %v1849
    %v1860 = vadd.f32 %v1816, %v1853
    %v1861 = vadd.f32 %v1817, %v1857
    %v1862 = vadd.f32 %v1818, %v1845
    %v1863 = vadd.f32 %v1819, %v1849
    %v1864 = vadd.f32 %v1820, %v1853
    %v1865 = vadd.f32 %v1821, %v1857
    %v1866 = vadd.f32 %v1822, %v1845
    %v1867 = vadd.f32 %v1823, %v1849
    %v1868 = vadd.f32 %v1824, %v1853
    %v1869 = vadd.f32 %v1825, %v1857
    %v1870 = vadd.f32 %v1826, %v1845
    %v1871 = vadd.f32 %v1827, %v1849
    %v1872 = vadd.f32 %v1828, %v1853
    %v1873 = vadd.f32 %v1829, %v1857
    %v1874 = vadd.f32 %v1830, %v1845
    %v1875 = vadd.f32 %v1831, %v1849
    %v1876 = vadd.f32 %v1832, %v1853
    %v1877 = vadd.f32 %v1833, %v1857
    %v1878 = vadd.f32 %v1834, %v1845
    %v1879 = vadd.f32 %v1835, %v1849
    %v1880 = vadd.f32 %v1836, %v1853
    %v1881 = vadd.f32 %v1837, %v1857
    %v1882 = vadd.f32 %v1838, %v1845
    %v1883 = vadd.f32 %v1839, %v1849
    %v1884 = vadd.f32 %v1840, %v1853
    %v1885 = vadd.f32 %v1841, %v1857
    %v1886 = vmax.f32 %v1858, 0.0
    %v1887 = vmax.f32 %v1859, 0.0
    %v1888 = vmax.f32 %v1860, 0.0
    %v1889 = vmax.f32 %v1861, 0.0
    %v1890 = vmax.f32 %v1862, 0.0
    %v1891 = vmax.f32 %v1863, 0.0
    %v1892 = vmax.f32 %v1864, 0.0
    %v1893 = vmax.f32 %v1865, 0.0
    %v1894 = vmax.f32 %v1866, 0.0
    %v1895 = vmax.f32 %v1867, 0.0
    %v1896 = vmax.f32 %v1868, 0.0
    %v1897 = vmax.f32 %v1869, 0.0
    %v1898 = vmax.f32 %v1870, 0.0
    %v1899 = vmax.f32 %v1871, 0.0
    %v1900 = vmax.f32 %v1872, 0.0
    %v1901 = vmax.f32 %v1873, 0.0
    %v1902 = vmax.f32 %v1874, 0.0
    %v1903 = vmax.f32 %v1875, 0.0
    %v1904 = vmax.f32 %v1876, 0.0
    %v1905 = vmax.f32 %v1877, 0.0
    %v1906 = vmax.f32 %v1878, 0.0
    %v1907 = vmax.f32 %v1879, 0.0
    %v1908 = vmax.f32 %v1880, 0.0
    %v1909 = vmax.f32 %v1881, 0.0
    %v1910 = vmax.f32 %v1882, 0.0
    %v1911 = vmax.f32 %v1883, 0.0
    %v1912 = vmax.f32 %v1884, 0.0
    %v1913 = vmax.f32 %v1885, 0.0
    %1935 = vrot.lane.b32.xlu0 %v1887, 32
    %v1936 = vpop.permute.xlu0 %1935
    %1937 = vrot.lane.b32.xlu0 %v1888, 32
    %v1938 = vpop.permute.xlu0 %1937
    %1939 = vrot.lane.b32.xlu0 %v1889, 32
    %v1940 = vpop.permute.xlu0 %1939
    %1941 = vrot.lane.b32.xlu0 %v1891, 32
    %v1942 = vpop.permute.xlu0 %1941
    %1943 = vrot.lane.b32.xlu0 %v1892, 32
    %v1944 = vpop.permute.xlu0 %1943
    %1945 = vrot.lane.b32.xlu0 %v1893, 32
    %v1946 = vpop.permute.xlu0 %1945
    %1947 = vrot.lane.b32.xlu0 %v1895, 32
    %v1948 = vpop.permute.xlu0 %1947
    %1949 = vrot.lane.b32.xlu0 %v1896, 32
    %v1950 = vpop.permute.xlu0 %1949
    %1951 = vrot.lane.b32.xlu0 %v1897, 32
    %v1952 = vpop.permute.xlu0 %1951
    %1953 = vrot.lane.b32.xlu0 %v1899, 32
    %v1954 = vpop.permute.xlu0 %1953
    %1955 = vrot.lane.b32.xlu0 %v1900, 32
    %v1956 = vpop.permute.xlu0 %1955
    %1957 = vrot.lane.b32.xlu0 %v1901, 32
    %v1958 = vpop.permute.xlu0 %1957
    %1959 = vrot.lane.b32.xlu0 %v1903, 32
    %v1960 = vpop.permute.xlu0 %1959
    %1961 = vrot.lane.b32.xlu0 %v1904, 32
    %v1962 = vpop.permute.xlu0 %1961
    %1963 = vrot.lane.b32.xlu0 %v1905, 32
    %v1964 = vpop.permute.xlu0 %1963
    %1965 = vrot.lane.b32.xlu0 %v1907, 32
    %v1966 = vpop.permute.xlu0 %1965
    %1967 = vrot.lane.b32.xlu0 %v1908, 32
    %v1968 = vpop.permute.xlu0 %1967
    %1969 = vrot.lane.b32.xlu0 %v1909, 32
    %v1970 = vpop.permute.xlu0 %1969
    %1971 = vrot.lane.b32.xlu0 %v1911, 32
    %v1972 = vpop.permute.xlu0 %1971
    %1973 = vrot.lane.b32.xlu0 %v1912, 32
    %v1974 = vpop.permute.xlu0 %1973
    %1975 = vrot.lane.b32.xlu0 %v1913, 32
    %v1976 = vpop.permute.xlu0 %1975
    %vm1977 = vcmask 261120
    %v1978 = vsel %vm1977, %v1936, %v1938
    %v1979 = vsel %vm1977, %v1938, %v1940
    %v1980 = vsel %vm1977, %v1942, %v1944
    %v1981 = vsel %vm1977, %v1944, %v1946
    %v1982 = vsel %vm1977, %v1948, %v1950
    %v1983 = vsel %vm1977, %v1950, %v1952
    %v1984 = vsel %vm1977, %v1954, %v1956
    %v1985 = vsel %vm1977, %v1956, %v1958
    %v1986 = vsel %vm1977, %v1960, %v1962
    %v1987 = vsel %vm1977, %v1962, %v1964
    %v1988 = vsel %vm1977, %v1966, %v1968
    %v1989 = vsel %vm1977, %v1968, %v1970
    %v1990 = vsel %vm1977, %v1972, %v1974
    %v1991 = vsel %vm1977, %v1974, %v1976
    %v2006 = vmax.f32 %v1886, %v1978
    %v2007 = vmax.f32 %v1887, %v1979
    %v2008 = vmax.f32 %v1890, %v1980
    %v2009 = vmax.f32 %v1891, %v1981
    %v2010 = vmax.f32 %v1894, %v1982
    %v2011 = vmax.f32 %v1895, %v1983
    %v2012 = vmax.f32 %v1898, %v1984
    %v2013 = vmax.f32 %v1899, %v1985
    %v2014 = vmax.f32 %v1902, %v1986
    %v2015 = vmax.f32 %v1903, %v1987
    %v2016 = vmax.f32 %v1906, %v1988
    %v2017 = vmax.f32 %v1907, %v1989
    %v2018 = vmax.f32 %v1910, %v1990
    %v2019 = vmax.f32 %v1911, %v1991
    %v2034 = vcombine.low %v2006, %v2007
    %v2035 = vcombine.high %v2006, %v2007
    %v2037 = vunpack.c.l.s4 1983009808
    %v2038 = vunpack.c.0.s8 %v2037
    %v2039 = vlaneseq
    %v2040 = vshrl.u32 %v2039, 7
    %v2041 = vsub.s32 %v2038, %v2040
    %v2042 = vrot.slane %v2034, %v2041
    %v2044 = vunpack.c.l.s4 1983009808
    %v2045 = vunpack.c.0.s8 %v2044
    %v2046 = vlaneseq
    %v2047 = vshrl.u32 %v2046, 7
    %v2048 = vsub.s32 %v2045, %v2047
    %v2049 = vrot.slane %v2035, %v2048
    %v2050 = vcombine.high %v2042, %v2042
    %v2051 = vcombine.high %v2049, %v2049
    %v2052 = vcombine.low %v2008, %v2009
    %v2053 = vcombine.high %v2008, %v2009
    %v2055 = vunpack.c.l.s4 1983009808
    %v2056 = vunpack.c.0.s8 %v2055
    %v2057 = vlaneseq
    %v2058 = vshrl.u32 %v2057, 7
    %v2059 = vsub.s32 %v2056, %v2058
    %v2060 = vrot.slane %v2052, %v2059
    %v2062 = vunpack.c.l.s4 1983009808
    %v2063 = vunpack.c.0.s8 %v2062
    %v2064 = vlaneseq
    %v2065 = vshrl.u32 %v2064, 7
    %v2066 = vsub.s32 %v2063, %v2065
    %v2067 = vrot.slane %v2053, %v2066
    %v2068 = vcombine.high %v2060, %v2060
    %v2069 = vcombine.high %v2067, %v2067
    %v2070 = vcombine.low %v2010, %v2011
    %v2071 = vcombine.high %v2010, %v2011
    %v2073 = vunpack.c.l.s4 1983009808
    %v2074 = vunpack.c.0.s8 %v2073
    %v2075 = vlaneseq
    %v2076 = vshrl.u32 %v2075, 7
    %v2077 = vsub.s32 %v2074, %v2076
    %v2078 = vrot.slane %v2070, %v2077
    %v2080 = vunpack.c.l.s4 1983009808
    %v2081 = vunpack.c.0.s8 %v2080
    %v2082 = vlaneseq
    %v2083 = vshrl.u32 %v2082, 7
    %v2084 = vsub.s32 %v2081, %v2083
    %v2085 = vrot.slane %v2071, %v2084
    %v2086 = vcombine.high %v2078, %v2078
    %v2087 = vcombine.high %v2085, %v2085
    %v2088 = vcombine.low %v2012, %v2013
    %v2089 = vcombine.high %v2012, %v2013
    %v2091 = vunpack.c.l.s4 1983009808
    %v2092 = vunpack.c.0.s8 %v2091
    %v2093 = vlaneseq
    %v2094 = vshrl.u32 %v2093, 7
    %v2095 = vsub.s32 %v2092, %v2094
    %v2096 = vrot.slane %v2088, %v2095
    %v2098 = vunpack.c.l.s4 1983009808
    %v2099 = vunpack.c.0.s8 %v2098
    %v2100 = vlaneseq
    %v2101 = vshrl.u32 %v2100, 7
    %v2102 = vsub.s32 %v2099, %v2101
    %v2103 = vrot.slane %v2089, %v2102
    %v2104 = vcombine.high %v2096, %v2096
    %v2105 = vcombine.high %v2103, %v2103
    %v2106 = vcombine.low %v2014, %v2015
    %v2107 = vcombine.high %v2014, %v2015
    %v2109 = vunpack.c.l.s4 1983009808
    %v2110 = vunpack.c.0.s8 %v2109
    %v2111 = vlaneseq
    %v2112 = vshrl.u32 %v2111, 7
    %v2113 = vsub.s32 %v2110, %v2112
    %v2114 = vrot.slane %v2106, %v2113
    %v2116 = vunpack.c.l.s4 1983009808
    %v2117 = vunpack.c.0.s8 %v2116
    %v2118 = vlaneseq
    %v2119 = vshrl.u32 %v2118, 7
    %v2120 = vsub.s32 %v2117, %v2119
    %v2121 = vrot.slane %v2107, %v2120
    %v2122 = vcombine.high %v2114, %v2114
    %v2123 = vcombine.high %v2121, %v2121
    %v2124 = vcombine.low %v2016, %v2017
    %v2125 = vcombine.high %v2016, %v2017
    %v2127 = vunpack.c.l.s4 1983009808
    %v2128 = vunpack.c.0.s8 %v2127
    %v2129 = vlaneseq
    %v2130 = vshrl.u32 %v2129, 7
    %v2131 = vsub.s32 %v2128, %v2130
    %v2132 = vrot.slane %v2124, %v2131
    %v2134 = vunpack.c.l.s4 1983009808
    %v2135 = vunpack.c.0.s8 %v2134
    %v2136 = vlaneseq
    %v2137 = vshrl.u32 %v2136, 7
    %v2138 = vsub.s32 %v2135, %v2137
    %v2139 = vrot.slane %v2125, %v2138
    %v2140 = vcombine.high %v2132, %v2132
    %v2141 = vcombine.high %v2139, %v2139
    %v2142 = vcombine.low %v2018, %v2019
    %v2143 = vcombine.high %v2018, %v2019
    %v2145 = vunpack.c.l.s4 1983009808
    %v2146 = vunpack.c.0.s8 %v2145
    %v2147 = vlaneseq
    %v2148 = vshrl.u32 %v2147, 7
    %v2149 = vsub.s32 %v2146, %v2148
    %v2150 = vrot.slane %v2142, %v2149
    %v2152 = vunpack.c.l.s4 1983009808
    %v2153 = vunpack.c.0.s8 %v2152
    %v2154 = vlaneseq
    %v2155 = vshrl.u32 %v2154, 7
    %v2156 = vsub.s32 %v2153, %v2155
    %v2157 = vrot.slane %v2143, %v2156
    %v2158 = vcombine.high %v2150, %v2150
    %v2159 = vcombine.high %v2157, %v2157
    %v2188 = vrot.slane %v2042, 7
    %v2189 = vrot.slane %v2188, 2
    %v2190 = vrot.slane %v2050, 7
    %v2191 = vrot.slane %v2190, 2
    %v2192 = vrot.slane %v2049, 7
    %v2193 = vrot.slane %v2192, 2
    %v2194 = vrot.slane %v2051, 7
    %v2195 = vrot.slane %v2194, 2
    %v2196 = vrot.slane %v2060, 7
    %v2197 = vrot.slane %v2196, 2
    %v2198 = vrot.slane %v2068, 7
    %v2199 = vrot.slane %v2198, 2
    %v2200 = vrot.slane %v2067, 7
    %v2201 = vrot.slane %v2200, 2
    %v2202 = vrot.slane %v2069, 7
    %v2203 = vrot.slane %v2202, 2
    %v2204 = vrot.slane %v2078, 7
    %v2205 = vrot.slane %v2204, 2
    %v2206 = vrot.slane %v2086, 7
    %v2207 = vrot.slane %v2206, 2
    %v2208 = vrot.slane %v2085, 7
    %v2209 = vrot.slane %v2208, 2
    %v2210 = vrot.slane %v2087, 7
    %v2211 = vrot.slane %v2210, 2
    %v2212 = vrot.slane %v2096, 7
    %v2213 = vrot.slane %v2212, 2
    %v2214 = vrot.slane %v2104, 7
    %v2215 = vrot.slane %v2214, 2
    %v2216 = vrot.slane %v2103, 7
    %v2217 = vrot.slane %v2216, 2
    %v2218 = vrot.slane %v2105, 7
    %v2219 = vrot.slane %v2218, 2
    %v2220 = vrot.slane %v2114, 7
    %v2221 = vrot.slane %v2220, 2
    %v2222 = vrot.slane %v2122, 7
    %v2223 = vrot.slane %v2222, 2
    %v2224 = vrot.slane %v2121, 7
    %v2225 = vrot.slane %v2224, 2
    %v2226 = vrot.slane %v2123, 7
    %v2227 = vrot.slane %v2226, 2
    %v2228 = vrot.slane %v2132, 7
    %v2229 = vrot.slane %v2228, 2
    %v2230 = vrot.slane %v2140, 7
    %v2231 = vrot.slane %v2230, 2
    %v2232 = vrot.slane %v2139, 7
    %v2233 = vrot.slane %v2232, 2
    %v2234 = vrot.slane %v2141, 7
    %v2235 = vrot.slane %v2234, 2
    %v2236 = vrot.slane %v2150, 7
    %v2237 = vrot.slane %v2236, 2
    %v2238 = vrot.slane %v2158, 7
    %v2239 = vrot.slane %v2238, 2
    %v2240 = vrot.slane %v2157, 7
    %v2241 = vrot.slane %v2240, 2
    %v2242 = vrot.slane %v2159, 7
    %v2243 = vrot.slane %v2242, 2
    %v2272 = vmax.f32 %v2042, %v2189
    %v2273 = vmax.f32 %v2050, %v2191
    %v2274 = vmax.f32 %v2049, %v2193
    %v2275 = vmax.f32 %v2051, %v2195
    %v2276 = vmax.f32 %v2060, %v2197
    %v2277 = vmax.f32 %v2068, %v2199
    %v2278 = vmax.f32 %v2067, %v2201
    %v2279 = vmax.f32 %v2069, %v2203
    %v2280 = vmax.f32 %v2078, %v2205
    %v2281 = vmax.f32 %v2086, %v2207
    %v2282 = vmax.f32 %v2085, %v2209
    %v2283 = vmax.f32 %v2087, %v2211
    %v2284 = vmax.f32 %v2096, %v2213
    %v2285 = vmax.f32 %v2104, %v2215
    %v2286 = vmax.f32 %v2103, %v2217
    %v2287 = vmax.f32 %v2105, %v2219
    %v2288 = vmax.f32 %v2114, %v2221
    %v2289 = vmax.f32 %v2122, %v2223
    %v2290 = vmax.f32 %v2121, %v2225
    %v2291 = vmax.f32 %v2123, %v2227
    %v2292 = vmax.f32 %v2132, %v2229
    %v2293 = vmax.f32 %v2140, %v2231
    %v2294 = vmax.f32 %v2139, %v2233
    %v2295 = vmax.f32 %v2141, %v2235
    %v2296 = vmax.f32 %v2150, %v2237
    %v2297 = vmax.f32 %v2158, %v2239
    %v2298 = vmax.f32 %v2157, %v2241
    %v2299 = vmax.f32 %v2159, %v2243
    %vm2300 = vcmask 1040384
    %vm2301 = vcmask 782340
    %vm2302 = vmor %vm2301, %vm2300
    %2303 = vst.msk [vmem:[#allocation3] sm:$0x11] %vm2302, 0
    %2304 = vst.msk [vmem:[#allocation3 + $0x18] sm:$0x11] %vm2302, 0
    %2305 = vst.msk [vmem:[#allocation3 + $0x10] sm:$0x11] %vm2302, 0
    %2306 = vst.msk [vmem:[#allocation3 + $0x28] sm:$0x11] %vm2302, 0
    %v2335 = vlaneseq
    %v2336 = vshrl.u32 %v2335, 7
    %v2337 = vsub.s32 0, %v2336
    %v2338 = vrot.slane %v2272, %v2337
    %v2339 = vlaneseq
    %v2340 = vshrl.u32 %v2339, 7
    %v2341 = vsub.s32 2, %v2340
    %v2342 = vrot.slane %v2272, %v2341
    %v2343 = vlaneseq
    %v2344 = vshrl.u32 %v2343, 7
    %v2345 = vsub.s32 0, %v2344
    %v2346 = vrot.slane %v2273, %v2345
    %v2347 = vlaneseq
    %v2348 = vshrl.u32 %v2347, 7
    %v2349 = vsub.s32 2, %v2348
    %v2350 = vrot.slane %v2273, %v2349
    %v2351 = vlaneseq
    %v2352 = vshrl.u32 %v2351, 7
    %v2353 = vsub.s32 0, %v2352
    %v2354 = vrot.slane %v2274, %v2353
    %v2355 = vlaneseq
    %v2356 = vshrl.u32 %v2355, 7
    %v2357 = vsub.s32 2, %v2356
    %v2358 = vrot.slane %v2274, %v2357
    %v2359 = vlaneseq
    %v2360 = vshrl.u32 %v2359, 7
    %v2361 = vsub.s32 0, %v2360
    %v2362 = vrot.slane %v2275, %v2361
    %v2363 = vlaneseq
    %v2364 = vshrl.u32 %v2363, 7
    %v2365 = vsub.s32 2, %v2364
    %v2366 = vrot.slane %v2275, %v2365
    %v2367 = vlaneseq
    %v2368 = vshrl.u32 %v2367, 7
    %v2369 = vsub.s32 0, %v2368
    %v2370 = vrot.slane %v2276, %v2369
    %v2371 = vlaneseq
    %v2372 = vshrl.u32 %v2371, 7
    %v2373 = vsub.s32 2, %v2372
    %v2374 = vrot.slane %v2276, %v2373
    %v2375 = vlaneseq
    %v2376 = vshrl.u32 %v2375, 7
    %v2377 = vsub.s32 0, %v2376
    %v2378 = vrot.slane %v2277, %v2377
    %v2379 = vlaneseq
    %v2380 = vshrl.u32 %v2379, 7
    %v2381 = vsub.s32 2, %v2380
    %v2382 = vrot.slane %v2277, %v2381
    %v2383 = vlaneseq
    %v2384 = vshrl.u32 %v2383, 7
    %v2385 = vsub.s32 0, %v2384
    %v2386 = vrot.slane %v2278, %v2385
    %v2387 = vlaneseq
    %v2388 = vshrl.u32 %v2387, 7
    %v2389 = vsub.s32 2, %v2388
    %v2390 = vrot.slane %v2278, %v2389
    %v2391 = vlaneseq
    %v2392 = vshrl.u32 %v2391, 7
    %v2393 = vsub.s32 0, %v2392
    %v2394 = vrot.slane %v2279, %v2393
    %v2395 = vlaneseq
    %v2396 = vshrl.u32 %v2395, 7
    %v2397 = vsub.s32 2, %v2396
    %v2398 = vrot.slane %v2279, %v2397
    %v2399 = vlaneseq
    %v2400 = vshrl.u32 %v2399, 7
    %v2401 = vsub.s32 0, %v2400
    %v2402 = vrot.slane %v2280, %v2401
    %v2403 = vlaneseq
    %v2404 = vshrl.u32 %v2403, 7
    %v2405 = vsub.s32 2, %v2404
    %v2406 = vrot.slane %v2280, %v2405
    %v2407 = vlaneseq
    %v2408 = vshrl.u32 %v2407, 7
    %v2409 = vsub.s32 0, %v2408
    %v2410 = vrot.slane %v2281, %v2409
    %v2411 = vlaneseq
    %v2412 = vshrl.u32 %v2411, 7
    %v2413 = vsub.s32 2, %v2412
    %v2414 = vrot.slane %v2281, %v2413
    %v2415 = vlaneseq
    %v2416 = vshrl.u32 %v2415, 7
    %v2417 = vsub.s32 0, %v2416
    %v2418 = vrot.slane %v2282, %v2417
    %v2419 = vlaneseq
    %v2420 = vshrl.u32 %v2419, 7
    %v2421 = vsub.s32 2, %v2420
    %v2422 = vrot.slane %v2282, %v2421
    %v2423 = vlaneseq
    %v2424 = vshrl.u32 %v2423, 7
    %v2425 = vsub.s32 0, %v2424
    %v2426 = vrot.slane %v2283, %v2425
    %v2427 = vlaneseq
    %v2428 = vshrl.u32 %v2427, 7
    %v2429 = vsub.s32 2, %v2428
    %v2430 = vrot.slane %v2283, %v2429
    %v2431 = vlaneseq
    %v2432 = vshrl.u32 %v2431, 7
    %v2433 = vsub.s32 0, %v2432
    %v2434 = vrot.slane %v2284, %v2433
    %v2435 = vlaneseq
    %v2436 = vshrl.u32 %v2435, 7
    %v2437 = vsub.s32 2, %v2436
    %v2438 = vrot.slane %v2284, %v2437
    %v2439 = vlaneseq
    %v2440 = vshrl.u32 %v2439, 7
    %v2441 = vsub.s32 0, %v2440
    %v2442 = vrot.slane %v2285, %v2441
    %v2443 = vlaneseq
    %v2444 = vshrl.u32 %v2443, 7
    %v2445 = vsub.s32 2, %v2444
    %v2446 = vrot.slane %v2285, %v2445
    %v2447 = vlaneseq
    %v2448 = vshrl.u32 %v2447, 7
    %v2449 = vsub.s32 0, %v2448
    %v2450 = vrot.slane %v2286, %v2449
    %v2451 = vlaneseq
    %v2452 = vshrl.u32 %v2451, 7
    %v2453 = vsub.s32 2, %v2452
    %v2454 = vrot.slane %v2286, %v2453
    %v2455 = vlaneseq
    %v2456 = vshrl.u32 %v2455, 7
    %v2457 = vsub.s32 0, %v2456
    %v2458 = vrot.slane %v2287, %v2457
    %v2459 = vlaneseq
    %v2460 = vshrl.u32 %v2459, 7
    %v2461 = vsub.s32 2, %v2460
    %v2462 = vrot.slane %v2287, %v2461
    %v2463 = vlaneseq
    %v2464 = vshrl.u32 %v2463, 7
    %v2465 = vsub.s32 0, %v2464
    %v2466 = vrot.slane %v2288, %v2465
    %v2467 = vlaneseq
    %v2468 = vshrl.u32 %v2467, 7
    %v2469 = vsub.s32 2, %v2468
    %v2470 = vrot.slane %v2288, %v2469
    %v2471 = vlaneseq
    %v2472 = vshrl.u32 %v2471, 7
    %v2473 = vsub.s32 0, %v2472
    %v2474 = vrot.slane %v2289, %v2473
    %v2475 = vlaneseq
    %v2476 = vshrl.u32 %v2475, 7
    %v2477 = vsub.s32 2, %v2476
    %v2478 = vrot.slane %v2289, %v2477
    %v2479 = vlaneseq
    %v2480 = vshrl.u32 %v2479, 7
    %v2481 = vsub.s32 0, %v2480
    %v2482 = vrot.slane %v2290, %v2481
    %v2483 = vlaneseq
    %v2484 = vshrl.u32 %v2483, 7
    %v2485 = vsub.s32 2, %v2484
    %v2486 = vrot.slane %v2290, %v2485
    %v2487 = vlaneseq
    %v2488 = vshrl.u32 %v2487, 7
    %v2489 = vsub.s32 0, %v2488
    %v2490 = vrot.slane %v2291, %v2489
    %v2491 = vlaneseq
    %v2492 = vshrl.u32 %v2491, 7
    %v2493 = vsub.s32 2, %v2492
    %v2494 = vrot.slane %v2291, %v2493
    %v2495 = vlaneseq
    %v2496 = vshrl.u32 %v2495, 7
    %v2497 = vsub.s32 0, %v2496
    %v2498 = vrot.slane %v2292, %v2497
    %v2499 = vlaneseq
    %v2500 = vshrl.u32 %v2499, 7
    %v2501 = vsub.s32 2, %v2500
    %v2502 = vrot.slane %v2292, %v2501
    %v2503 = vlaneseq
    %v2504 = vshrl.u32 %v2503, 7
    %v2505 = vsub.s32 0, %v2504
    %v2506 = vrot.slane %v2293, %v2505
    %v2507 = vlaneseq
    %v2508 = vshrl.u32 %v2507, 7
    %v2509 = vsub.s32 2, %v2508
    %v2510 = vrot.slane %v2293, %v2509
    %v2511 = vlaneseq
    %v2512 = vshrl.u32 %v2511, 7
    %v2513 = vsub.s32 0, %v2512
    %v2514 = vrot.slane %v2294, %v2513
    %v2515 = vlaneseq
    %v2516 = vshrl.u32 %v2515, 7
    %v2517 = vsub.s32 2, %v2516
    %v2518 = vrot.slane %v2294, %v2517
    %v2519 = vlaneseq
    %v2520 = vshrl.u32 %v2519, 7
    %v2521 = vsub.s32 0, %v2520
    %v2522 = vrot.slane %v2295, %v2521
    %v2523 = vlaneseq
    %v2524 = vshrl.u32 %v2523, 7
    %v2525 = vsub.s32 2, %v2524
    %v2526 = vrot.slane %v2295, %v2525
    %v2527 = vlaneseq
    %v2528 = vshrl.u32 %v2527, 7
    %v2529 = vsub.s32 0, %v2528
    %v2530 = vrot.slane %v2296, %v2529
    %v2531 = vlaneseq
    %v2532 = vshrl.u32 %v2531, 7
    %v2533 = vsub.s32 2, %v2532
    %v2534 = vrot.slane %v2296, %v2533
    %v2535 = vlaneseq
    %v2536 = vshrl.u32 %v2535, 7
    %v2537 = vsub.s32 0, %v2536
    %v2538 = vrot.slane %v2297, %v2537
    %v2539 = vlaneseq
    %v2540 = vshrl.u32 %v2539, 7
    %v2541 = vsub.s32 2, %v2540
    %v2542 = vrot.slane %v2297, %v2541
    %v2543 = vlaneseq
    %v2544 = vshrl.u32 %v2543, 7
    %v2545 = vsub.s32 0, %v2544
    %v2546 = vrot.slane %v2298, %v2545
    %v2547 = vlaneseq
    %v2548 = vshrl.u32 %v2547, 7
    %v2549 = vsub.s32 2, %v2548
    %v2550 = vrot.slane %v2298, %v2549
    %v2551 = vlaneseq
    %v2552 = vshrl.u32 %v2551, 7
    %v2553 = vsub.s32 0, %v2552
    %v2554 = vrot.slane %v2299, %v2553
    %v2555 = vlaneseq
    %v2556 = vshrl.u32 %v2555, 7
    %v2557 = vsub.s32 2, %v2556
    %v2558 = vrot.slane %v2299, %v2557
    %v2615 = vpack.c.bf16 %v2338, %v2338
    %v2616 = vpack.c.bf16 %v2342, %v2342
    %v2617 = vpack.c.bf16 %v2346, %v2346
    %v2618 = vpack.c.bf16 %v2350, %v2350
    %v2619 = vpack.c.bf16 %v2354, %v2354
    %v2620 = vpack.c.bf16 %v2358, %v2358
    %v2621 = vpack.c.bf16 %v2362, %v2362
    %v2622 = vpack.c.bf16 %v2366, %v2366
    %v2623 = vpack.c.bf16 %v2370, %v2370
    %v2624 = vpack.c.bf16 %v2374, %v2374
    %v2625 = vpack.c.bf16 %v2378, %v2378
    %v2626 = vpack.c.bf16 %v2382, %v2382
    %v2627 = vpack.c.bf16 %v2386, %v2386
    %v2628 = vpack.c.bf16 %v2390, %v2390
    %v2629 = vpack.c.bf16 %v2394, %v2394
    %v2630 = vpack.c.bf16 %v2398, %v2398
    %v2631 = vpack.c.bf16 %v2402, %v2402
    %v2632 = vpack.c.bf16 %v2406, %v2406
    %v2633 = vpack.c.bf16 %v2410, %v2410
    %v2634 = vpack.c.bf16 %v2414, %v2414
    %v2635 = vpack.c.bf16 %v2418, %v2418
    %v2636 = vpack.c.bf16 %v2422, %v2422
    %v2637 = vpack.c.bf16 %v2426, %v2426
    %v2638 = vpack.c.bf16 %v2430, %v2430
    %v2639 = vpack.c.bf16 %v2434, %v2434
    %v2640 = vpack.c.bf16 %v2438, %v2438
    %v2641 = vpack.c.bf16 %v2442, %v2442
    %v2642 = vpack.c.bf16 %v2446, %v2446
    %v2643 = vpack.c.bf16 %v2450, %v2450
    %v2644 = vpack.c.bf16 %v2454, %v2454
    %v2645 = vpack.c.bf16 %v2458, %v2458
    %v2646 = vpack.c.bf16 %v2462, %v2462
    %v2647 = vpack.c.bf16 %v2466, %v2466
    %v2648 = vpack.c.bf16 %v2470, %v2470
    %v2649 = vpack.c.bf16 %v2474, %v2474
    %v2650 = vpack.c.bf16 %v2478, %v2478
    %v2651 = vpack.c.bf16 %v2482, %v2482
    %v2652 = vpack.c.bf16 %v2486, %v2486
    %v2653 = vpack.c.bf16 %v2490, %v2490
    %v2654 = vpack.c.bf16 %v2494, %v2494
    %v2655 = vpack.c.bf16 %v2498, %v2498
    %v2656 = vpack.c.bf16 %v2502, %v2502
    %v2657 = vpack.c.bf16 %v2506, %v2506
    %v2658 = vpack.c.bf16 %v2510, %v2510
    %v2659 = vpack.c.bf16 %v2514, %v2514
    %v2660 = vpack.c.bf16 %v2518, %v2518
    %v2661 = vpack.c.bf16 %v2522, %v2522
    %v2662 = vpack.c.bf16 %v2526, %v2526
    %v2663 = vpack.c.bf16 %v2530, %v2530
    %v2664 = vpack.c.bf16 %v2534, %v2534
    %v2665 = vpack.c.bf16 %v2538, %v2538
    %v2666 = vpack.c.bf16 %v2542, %v2542
    %v2667 = vpack.c.bf16 %v2546, %v2546
    %v2668 = vpack.c.bf16 %v2550, %v2550
    %v2669 = vpack.c.bf16 %v2554, %v2554
    %v2670 = vpack.c.bf16 %v2558, %v2558
    %v2727 = vunpack.c.l.b16 %v2615
    %v2728 = vunpack.c.l.b16 %v2616
    %v2729 = vunpack.c.l.b16 %v2617
    %v2730 = vunpack.c.l.b16 %v2618
    %v2731 = vunpack.c.l.b16 %v2619
    %v2732 = vunpack.c.l.b16 %v2620
    %v2733 = vunpack.c.l.b16 %v2621
    %v2734 = vunpack.c.l.b16 %v2622
    %v2735 = vunpack.c.l.b16 %v2623
    %v2736 = vunpack.c.l.b16 %v2624
    %v2737 = vunpack.c.l.b16 %v2625
    %v2738 = vunpack.c.l.b16 %v2626
    %v2739 = vunpack.c.l.b16 %v2627
    %v2740 = vunpack.c.l.b16 %v2628
    %v2741 = vunpack.c.l.b16 %v2629
    %v2742 = vunpack.c.l.b16 %v2630
    %v2743 = vunpack.c.l.b16 %v2631
    %v2744 = vunpack.c.l.b16 %v2632
    %v2745 = vunpack.c.l.b16 %v2633
    %v2746 = vunpack.c.l.b16 %v2634
    %v2747 = vunpack.c.l.b16 %v2635
    %v2748 = vunpack.c.l.b16 %v2636
    %v2749 = vunpack.c.l.b16 %v2637
    %v2750 = vunpack.c.l.b16 %v2638
    %v2751 = vunpack.c.l.b16 %v2639
    %v2752 = vunpack.c.l.b16 %v2640
    %v2753 = vunpack.c.l.b16 %v2641
    %v2754 = vunpack.c.l.b16 %v2642
    %v2755 = vunpack.c.l.b16 %v2643
    %v2756 = vunpack.c.l.b16 %v2644
    %v2757 = vunpack.c.l.b16 %v2645
    %v2758 = vunpack.c.l.b16 %v2646
    %v2759 = vunpack.c.l.b16 %v2647
    %v2760 = vunpack.c.l.b16 %v2648
    %v2761 = vunpack.c.l.b16 %v2649
    %v2762 = vunpack.c.l.b16 %v2650
    %v2763 = vunpack.c.l.b16 %v2651
    %v2764 = vunpack.c.l.b16 %v2652
    %v2765 = vunpack.c.l.b16 %v2653
    %v2766 = vunpack.c.l.b16 %v2654
    %v2767 = vunpack.c.l.b16 %v2655
    %v2768 = vunpack.c.l.b16 %v2656
    %v2769 = vunpack.c.l.b16 %v2657
    %v2770 = vunpack.c.l.b16 %v2658
    %v2771 = vunpack.c.l.b16 %v2659
    %v2772 = vunpack.c.l.b16 %v2660
    %v2773 = vunpack.c.l.b16 %v2661
    %v2774 = vunpack.c.l.b16 %v2662
    %v2775 = vunpack.c.l.b16 %v2663
    %v2776 = vunpack.c.l.b16 %v2664
    %v2777 = vunpack.c.l.b16 %v2665
    %v2778 = vunpack.c.l.b16 %v2666
    %v2779 = vunpack.c.l.b16 %v2667
    %v2780 = vunpack.c.l.b16 %v2668
    %v2781 = vunpack.c.l.b16 %v2669
    %v2782 = vunpack.c.l.b16 %v2670
    %v2783 = vpack.c.b16 %v2728, %v2727
    %v2784 = vpack.c.b16 %v2730, %v2729
    %v2785 = vpack.c.b16 %v2732, %v2731
    %v2786 = vpack.c.b16 %v2734, %v2733
    %v2787 = vpack.c.b16 %v2736, %v2735
    %v2788 = vpack.c.b16 %v2738, %v2737
    %v2789 = vpack.c.b16 %v2740, %v2739
    %v2790 = vpack.c.b16 %v2742, %v2741
    %v2791 = vpack.c.b16 %v2744, %v2743
    %v2792 = vpack.c.b16 %v2746, %v2745
    %v2793 = vpack.c.b16 %v2748, %v2747
    %v2794 = vpack.c.b16 %v2750, %v2749
    %v2795 = vpack.c.b16 %v2752, %v2751
    %v2796 = vpack.c.b16 %v2754, %v2753
    %v2797 = vpack.c.b16 %v2756, %v2755
    %v2798 = vpack.c.b16 %v2758, %v2757
    %v2799 = vpack.c.b16 %v2760, %v2759
    %v2800 = vpack.c.b16 %v2762, %v2761
    %v2801 = vpack.c.b16 %v2764, %v2763
    %v2802 = vpack.c.b16 %v2766, %v2765
    %v2803 = vpack.c.b16 %v2768, %v2767
    %v2804 = vpack.c.b16 %v2770, %v2769
    %v2805 = vpack.c.b16 %v2772, %v2771
    %v2806 = vpack.c.b16 %v2774, %v2773
    %v2807 = vpack.c.b16 %v2776, %v2775
    %v2808 = vpack.c.b16 %v2778, %v2777
    %v2809 = vpack.c.b16 %v2780, %v2779
    %v2810 = vpack.c.b16 %v2782, %v2781
    %v2811 = vunpack.c.l.b16 %v2783
    %v2812 = vunpack.c.h.b16 %v2783
    %v2813 = vunpack.c.l.b16 %v2784
    %v2814 = vunpack.c.h.b16 %v2784
    %v2815 = vunpack.c.l.b16 %v2785
    %v2816 = vunpack.c.h.b16 %v2785
    %v2817 = vunpack.c.l.b16 %v2786
    %v2818 = vunpack.c.h.b16 %v2786
    %v2819 = vunpack.c.l.b16 %v2787
    %v2820 = vunpack.c.h.b16 %v2787
    %v2821 = vunpack.c.l.b16 %v2788
    %v2822 = vunpack.c.h.b16 %v2788
    %v2823 = vunpack.c.l.b16 %v2789
    %v2824 = vunpack.c.h.b16 %v2789
    %v2825 = vunpack.c.l.b16 %v2790
    %v2826 = vunpack.c.h.b16 %v2790
    %v2827 = vunpack.c.l.b16 %v2791
    %v2828 = vunpack.c.h.b16 %v2791
    %v2829 = vunpack.c.l.b16 %v2792
    %v2830 = vunpack.c.h.b16 %v2792
    %v2831 = vunpack.c.l.b16 %v2793
    %v2832 = vunpack.c.h.b16 %v2793
    %v2833 = vunpack.c.l.b16 %v2794
    %v2834 = vunpack.c.h.b16 %v2794
    %v2835 = vunpack.c.l.b16 %v2795
    %v2836 = vunpack.c.h.b16 %v2795
    %v2837 = vunpack.c.l.b16 %v2796
    %v2838 = vunpack.c.h.b16 %v2796
    %v2839 = vunpack.c.l.b16 %v2797
    %v2840 = vunpack.c.h.b16 %v2797
    %v2841 = vunpack.c.l.b16 %v2798
    %v2842 = vunpack.c.h.b16 %v2798
    %v2843 = vunpack.c.l.b16 %v2799
    %v2844 = vunpack.c.h.b16 %v2799
    %v2845 = vunpack.c.l.b16 %v2800
    %v2846 = vunpack.c.h.b16 %v2800
    %v2847 = vunpack.c.l.b16 %v2801
    %v2848 = vunpack.c.h.b16 %v2801
    %v2849 = vunpack.c.l.b16 %v2802
    %v2850 = vunpack.c.h.b16 %v2802
    %v2851 = vunpack.c.l.b16 %v2803
    %v2852 = vunpack.c.h.b16 %v2803
    %v2853 = vunpack.c.l.b16 %v2804
    %v2854 = vunpack.c.h.b16 %v2804
    %v2855 = vunpack.c.l.b16 %v2805
    %v2856 = vunpack.c.h.b16 %v2805
    %v2857 = vunpack.c.l.b16 %v2806
    %v2858 = vunpack.c.h.b16 %v2806
    %v2859 = vunpack.c.l.b16 %v2807
    %v2860 = vunpack.c.h.b16 %v2807
    %v2861 = vunpack.c.l.b16 %v2808
    %v2862 = vunpack.c.h.b16 %v2808
    %v2863 = vunpack.c.l.b16 %v2809
    %v2864 = vunpack.c.h.b16 %v2809
    %v2865 = vunpack.c.l.b16 %v2810
    %v2866 = vunpack.c.h.b16 %v2810
    %v2867 = vrot.slane %v2811, 6
    %v2868 = vrot.slane %v2813, 5
    %vm2869 = vcmask 1043459
    %v2870 = vsel %vm2869, %v2868, %v2867
    %v2871 = vrot.slane %v2815, 4
    %vm2872 = vcmask 1044484
    %v2873 = vsel %vm2872, %v2871, %v2870
    %v2874 = vrot.slane %v2817, 3
    %vm2875 = vcmask 1045509
    %v2876 = vsel %vm2875, %v2874, %v2873
    %v2877 = vrot.slane %v2819, 2
    %vm2878 = vcmask 1046534
    %v2879 = vsel %vm2878, %v2877, %v2876
    %v2880 = vrot.slane %v2821, 1
    %vm2881 = vcmask 1047559
    %v2882 = vsel %vm2881, %v2880, %v2879
    %v2883 = vrot.slane %v2812, 6
    %v2884 = vrot.slane %v2814, 5
    %v2885 = vsel %vm2869, %v2884, %v2883
    %v2886 = vrot.slane %v2816, 4
    %v2887 = vsel %vm2872, %v2886, %v2885
    %v2888 = vrot.slane %v2818, 3
    %v2889 = vsel %vm2875, %v2888, %v2887
    %v2890 = vrot.slane %v2820, 2
    %v2891 = vsel %vm2878, %v2890, %v2889
    %v2892 = vrot.slane %v2822, 1
    %v2893 = vsel %vm2881, %v2892, %v2891
    %v2894 = vrot.slane %v2825, 7
    %vm2895 = vcmask 1041409
    %v2896 = vsel %vm2895, %v2894, %v2823
    %v2897 = vrot.slane %v2827, 6
    %vm2898 = vcmask 1042434
    %v2899 = vsel %vm2898, %v2897, %v2896
    %v2900 = vrot.slane %v2829, 5
    %v2901 = vsel %vm2869, %v2900, %v2899
    %v2902 = vrot.slane %v2831, 4
    %v2903 = vsel %vm2872, %v2902, %v2901
    %v2904 = vrot.slane %v2833, 3
    %v2905 = vsel %vm2875, %v2904, %v2903
    %v2906 = vrot.slane %v2835, 2
    %v2907 = vsel %vm2878, %v2906, %v2905
    %v2908 = vrot.slane %v2837, 1
    %v2909 = vsel %vm2881, %v2908, %v2907
    %v2910 = vrot.slane %v2826, 7
    %v2911 = vsel %vm2895, %v2910, %v2824
    %v2912 = vrot.slane %v2828, 6
    %v2913 = vsel %vm2898, %v2912, %v2911
    %v2914 = vrot.slane %v2830, 5
    %v2915 = vsel %vm2869, %v2914, %v2913
    %v2916 = vrot.slane %v2832, 4
    %v2917 = vsel %vm2872, %v2916, %v2915
    %v2918 = vrot.slane %v2834, 3
    %v2919 = vsel %vm2875, %v2918, %v2917
    %v2920 = vrot.slane %v2836, 2
    %v2921 = vsel %vm2878, %v2920, %v2919
    %v2922 = vrot.slane %v2838, 1
    %v2923 = vsel %vm2881, %v2922, %v2921
    %v2924 = vrot.slane %v2839, 6
    %v2925 = vrot.slane %v2841, 5
    %v2926 = vsel %vm2869, %v2925, %v2924
    %v2927 = vrot.slane %v2843, 4
    %v2928 = vsel %vm2872, %v2927, %v2926
    %v2929 = vrot.slane %v2845, 3
    %v2930 = vsel %vm2875, %v2929, %v2928
    %v2931 = vrot.slane %v2847, 2
    %v2932 = vsel %vm2878, %v2931, %v2930
    %v2933 = vrot.slane %v2849, 1
    %v2934 = vsel %vm2881, %v2933, %v2932
    %v2935 = vrot.slane %v2840, 6
    %v2936 = vrot.slane %v2842, 5
    %v2937 = vsel %vm2869, %v2936, %v2935
    %v2938 = vrot.slane %v2844, 4
    %v2939 = vsel %vm2872, %v2938, %v2937
    %v2940 = vrot.slane %v2846, 3
    %v2941 = vsel %vm2875, %v2940, %v2939
    %v2942 = vrot.slane %v2848, 2
    %v2943 = vsel %vm2878, %v2942, %v2941
    %v2944 = vrot.slane %v2850, 1
    %v2945 = vsel %vm2881, %v2944, %v2943
    %v2946 = vrot.slane %v2853, 7
    %v2947 = vsel %vm2895, %v2946, %v2851
    %v2948 = vrot.slane %v2855, 6
    %v2949 = vsel %vm2898, %v2948, %v2947
    %v2950 = vrot.slane %v2857, 5
    %v2951 = vsel %vm2869, %v2950, %v2949
    %v2952 = vrot.slane %v2859, 4
    %v2953 = vsel %vm2872, %v2952, %v2951
    %v2954 = vrot.slane %v2861, 3
    %v2955 = vsel %vm2875, %v2954, %v2953
    %v2956 = vrot.slane %v2863, 2
    %v2957 = vsel %vm2878, %v2956, %v2955
    %v2958 = vrot.slane %v2865, 1
    %v2959 = vsel %vm2881, %v2958, %v2957
    %v2960 = vrot.slane %v2854, 7
    %v2961 = vsel %vm2895, %v2960, %v2852
    %v2962 = vrot.slane %v2856, 6
    %v2963 = vsel %vm2898, %v2962, %v2961
    %v2964 = vrot.slane %v2858, 5
    %v2965 = vsel %vm2869, %v2964, %v2963
    %v2966 = vrot.slane %v2860, 4
    %v2967 = vsel %vm2872, %v2966, %v2965
    %v2968 = vrot.slane %v2862, 3
    %v2969 = vsel %vm2875, %v2968, %v2967
    %v2970 = vrot.slane %v2864, 2
    %v2971 = vsel %vm2878, %v2970, %v2969
    %v2972 = vrot.slane %v2866, 1
    %v2973 = vsel %vm2881, %v2972, %v2971
    %v2974 = vpack.c.b16 %v2893, %v2882
    %v2975 = vpack.c.b16 %v2923, %v2909
    %v2976 = vpack.c.b16 %v2945, %v2934
    %v2977 = vpack.c.b16 %v2973, %v2959
    %vm2982 = vcmask 1043457
    %vm2983 = vcmask 785413
    %vm2984 = vmor %vm2983, %vm2982
    %2985 = vst.msk [vmem:[#allocation3] sm:$0xee] %vm2984, %v2974
    %vm2986 = vcmask 1043456
    %vm2987 = vcmask 785412
    %vm2988 = vmor %vm2987, %vm2986
    %2989 = vst.msk [vmem:[#allocation3 + $0x8] sm:$0xff] %vm2988, %v2975
    %2990 = vst.msk [vmem:[#allocation3 + $0x18] sm:$0xee] %vm2984, %v2976
    %2991 = vst.msk [vmem:[#allocation3 + $0x20] sm:$0xff] %vm2988, %v2977
    %v2992 = vld [vmem:[#allocation3] sm:$0xff]
    %v2993 = vld [vmem:[#allocation3 + $0x8] sm:$0x77]
    %v2994 = vld [vmem:[#allocation3 + $0x18] sm:$0xff]
    %v2995 = vld [vmem:[#allocation3 + $0x20] sm:$0x77]
    %2996 = vst.msk [vmem:[#allocation4] sm:$0xff] %vm2988, %v2992
    %vm2997 = vcmask 1042432
    %vm2998 = vcmask 784388
    %vm2999 = vmor %vm2998, %vm2997
    %3000 = vst.msk [vmem:[#allocation4 + $0x24] sm:$0x77] %vm2999, %v2993
    %3001 = vst.msk [vmem:[#allocation4 + $0x48] sm:$0xff] %vm2988, %v2994
    %3002 = vst.msk [vmem:[#allocation4 + $0x6c] sm:$0x77] %vm2999, %v2995
    %v3003 = vld [vmem:[#allocation3] sm:$0xff]
    %v3004 = vld [vmem:[#allocation3 + $0x8] sm:$0xff]
    %v3005 = vld [vmem:[#allocation3 + $0x18] sm:$0xff]
    %v3006 = vld [vmem:[#allocation3 + $0x20] sm:$0xff]
    %v3008 = vshrl.u32 %v3003, 16
    %v3010 = vrot.slane %v3008, 4
    %v3011 = vshll.u32 %v3003, 16
    %v3013 = vrot.slane %v3011, 5
    %v3014 = vor.u32 %v3010, %v3013
    %v3015 = vrot.slane %v3014, 4
    %v3017 = vshll.u32 %v3004, 16
    %v3019 = vrot.slane %v3017, 5
    %v3020 = vsel %vm74, %v3015, %v3019
    %v3021 = vshrl.u32 %v3004, 16
    %v3023 = vrot.slane %v3021, 4
    %v3024 = vor.u32 %v3023, %v3019
    %v3025 = vrot.slane %v3024, 4
    %v3027 = vshrl.u32 %v3005, 16
    %v3029 = vrot.slane %v3027, 4
    %v3030 = vshll.u32 %v3005, 16
    %v3032 = vrot.slane %v3030, 5
    %v3033 = vor.u32 %v3029, %v3032
    %v3034 = vrot.slane %v3033, 4
    %v3036 = vshll.u32 %v3006, 16
    %v3038 = vrot.slane %v3036, 5
    %v3039 = vsel %vm74, %v3034, %v3038
    %v3040 = vshrl.u32 %v3006, 16
    %v3042 = vrot.slane %v3040, 4
    %v3043 = vor.u32 %v3042, %v3038
    %v3044 = vrot.slane %v3043, 4
    %3045 = vrot.lane.b32.xlu0 %v3020, 96
    %v3046 = vpop.permute.xlu0 %3045
    %3047 = vrot.lane.b32.xlu0 %v3025, 96
    %v3048 = vpop.permute.xlu0 %3047
    %3049 = vrot.lane.b32.xlu0 %v3039, 96
    %v3050 = vpop.permute.xlu0 %3049
    %3051 = vrot.lane.b32.xlu0 %v3044, 96
    %v3052 = vpop.permute.xlu0 %3051
    %v3053 = vrot.slane %v3046, 4
    %v3054 = vrot.slane %v3048, 4
    %v3055 = vrot.slane %v3050, 4
    %v3056 = vrot.slane %v3052, 4
    %vm3057 = vcmask 785408
    %v3058 = vsel %vm3057, %v3053, %v3046
    %v3059 = vsel %vm3057, %v3054, %v3048
    %v3060 = vsel %vm3057, %v3055, %v3050
    %v3061 = vsel %vm3057, %v3056, %v3052
    %vm3070 = vcmask 1044224
    %vm3071 = vcmask 1047556
    %vm3072 = vmor %vm3071, %vm3070
    %3073 = vst.msk [vmem:[#allocation4 + $0x4] sm:$0xff] %vm3072, %v3058
    %vm3074 = vcmask 519168
    %3075 = vst.msk [vmem:[#allocation4 + $0xc] sm:$0xf] %vm3074, %v3053
    %vm3076 = vcmask 1043200
    %vm3077 = vcmask 1046532
    %vm3078 = vmor %vm3077, %vm3076
    %3079 = vst.msk [vmem:[#allocation4 + $0x28] sm:$0x77] %vm3078, %v3059
    %vm3080 = vcmask 518144
    %3081 = vst.msk [vmem:[#allocation4 + $0x30] sm:$0x7] %vm3080, %v3054
    %3082 = vst.msk [vmem:[#allocation4 + $0x4c] sm:$0xff] %vm3072, %v3060
    %3083 = vst.msk [vmem:[#allocation4 + $0x54] sm:$0xf] %vm3074, %v3055
    %3084 = vst.msk [vmem:[#allocation4 + $0x70] sm:$0x77] %vm3078, %v3061
    %3085 = vst.msk [vmem:[#allocation4 + $0x78] sm:$0x7] %vm3080, %v3056
    %v3086 = vld [vmem:[#allocation3] sm:$0xee]
    %v3087 = vld [vmem:[#allocation3 + $0x8] sm:$0xff]
    %v3088 = vld [vmem:[#allocation3 + $0x18] sm:$0xee]
    %v3089 = vld [vmem:[#allocation3 + $0x20] sm:$0xff]
    %v3094 = vrot.slane %v3086, 5
    %v3095 = vrot.slane %v3094, 4
    %v3096 = vrot.slane %v3087, 5
    %v3097 = vsel %vm205, %v3095, %v3096
    %v3098 = vrot.slane %v3096, 4
    %v3099 = vrot.slane %v3088, 5
    %v3100 = vrot.slane %v3099, 4
    %v3101 = vrot.slane %v3089, 5
    %v3102 = vsel %vm205, %v3100, %v3101
    %v3103 = vrot.slane %v3101, 4
    %3104 = vrot.lane.b32.xlu0 %v3097, 64
    %v3105 = vpop.permute.xlu0 %3104
    %3106 = vrot.lane.b32.xlu0 %v3098, 64
    %v3107 = vpop.permute.xlu0 %3106
    %3108 = vrot.lane.b32.xlu0 %v3102, 64
    %v3109 = vpop.permute.xlu0 %3108
    %3110 = vrot.lane.b32.xlu0 %v3103, 64
    %v3111 = vpop.permute.xlu0 %3110
    %v3112 = vrot.slane %v3105, 4
    %v3113 = vrot.slane %v3107, 4
    %v3114 = vrot.slane %v3109, 4
    %v3115 = vrot.slane %v3111, 4
    %vm3116 = vcmask 523264
    %v3117 = vsel %vm3116, %v3112, %v3105
    %v3118 = vsel %vm3116, %v3113, %v3107
    %v3119 = vsel %vm3116, %v3114, %v3109
    %v3120 = vsel %vm3116, %v3115, %v3111
    %vm3129 = vcmask 1043968
    %vm3130 = vmor %vm3071, %vm3129
    %3131 = vst.msk [vmem:[#allocation4 + $0xc] sm:$0xff] %vm3130, %v3117
    %vm3132 = vcmask 257024
    %3133 = vst.msk [vmem:[#allocation4 + $0x14] sm:$0xf] %vm3132, %v3112
    %vm3134 = vcmask 1042944
    %vm3135 = vmor %vm3077, %vm3134
    %3136 = vst.msk [vmem:[#allocation4 + $0x30] sm:$0x77] %vm3135, %v3118
    %vm3137 = vcmask 256000
    %3138 = vst.msk [vmem:[#allocation4 + $0x38] sm:$0x7] %vm3137, %v3113
    %3139 = vst.msk [vmem:[#allocation4 + $0x54] sm:$0xff] %vm3130, %v3119
    %3140 = vst.msk [vmem:[#allocation4 + $0x5c] sm:$0xf] %vm3132, %v3114
    %3141 = vst.msk [vmem:[#allocation4 + $0x78] sm:$0x77] %vm3135, %v3120
    %3142 = vst.msk [vmem:[#allocation4 + $0x80] sm:$0x7] %vm3137, %v3115
    %v3143 = vld [vmem:[#allocation3] sm:$0xee]
    %v3144 = vld [vmem:[#allocation3 + $0x8] sm:$0xff]
    %v3145 = vld [vmem:[#allocation3 + $0x10] sm:$0x11]
    %v3146 = vld [vmem:[#allocation3 + $0x18] sm:$0xee]
    %v3147 = vld [vmem:[#allocation3 + $0x20] sm:$0xff]
    %v3148 = vld [vmem:[#allocation3 + $0x28] sm:$0x11]
    %v3150 = vshrl.u32 %v3143, 16
    %v3152 = vrot.slane %v3150, 5
    %v3153 = vshll.u32 %v3143, 16
    %v3155 = vrot.slane %v3153, 6
    %v3156 = vor.u32 %v3152, %v3155
    %v3157 = vrot.slane %v3156, 4
    %v3159 = vshrl.u32 %v3144, 16
    %v3161 = vrot.slane %v3159, 5
    %v3162 = vshll.u32 %v3144, 16
    %v3164 = vrot.slane %v3162, 6
    %v3165 = vor.u32 %v3161, %v3164
    %v3166 = vsel %vm272, %v3157, %v3165
    %v3167 = vrot.slane %v3165, 4
    %v3169 = vshll.u32 %v3145, 16
    %v3171 = vrot.slane %v3169, 6
    %v3172 = vsel %vm272, %v3167, %v3171
    %v3174 = vshrl.u32 %v3146, 16
    %v3176 = vrot.slane %v3174, 5
    %v3177 = vshll.u32 %v3146, 16
    %v3179 = vrot.slane %v3177, 6
    %v3180 = vor.u32 %v3176, %v3179
    %v3181 = vrot.slane %v3180, 4
    %v3183 = vshrl.u32 %v3147, 16
    %v3185 = vrot.slane %v3183, 5
    %v3186 = vshll.u32 %v3147, 16
    %v3188 = vrot.slane %v3186, 6
    %v3189 = vor.u32 %v3185, %v3188
    %v3190 = vsel %vm272, %v3181, %v3189
    %v3191 = vrot.slane %v3189, 4
    %v3193 = vshll.u32 %v3148, 16
    %v3195 = vrot.slane %v3193, 6
    %v3196 = vsel %vm272, %v3191, %v3195
    %3197 = vrot.lane.b32.xlu0 %v3166, 32
    %v3198 = vpop.permute.xlu0 %3197
    %3199 = vrot.lane.b32.xlu0 %v3172, 32
    %v3200 = vpop.permute.xlu0 %3199
    %3201 = vrot.lane.b32.xlu0 %v3190, 32
    %v3202 = vpop.permute.xlu0 %3201
    %3203 = vrot.lane.b32.xlu0 %v3196, 32
    %v3204 = vpop.permute.xlu0 %3203
    %v3205 = vrot.slane %v3198, 4
    %v3206 = vrot.slane %v3200, 4
    %v3207 = vrot.slane %v3202, 4
    %v3208 = vrot.slane %v3204, 4
    %vm3209 = vcmask 261120
    %v3210 = vsel %vm3209, %v3205, %v3198
    %v3211 = vsel %vm3209, %v3206, %v3200
    %v3212 = vsel %vm3209, %v3207, %v3202
    %v3213 = vsel %vm3209, %v3208, %v3204
    %vm3218 = vcmask 1043712
    %vm3219 = vmor %vm3071, %vm3218
    %3220 = vst.msk [vmem:[#allocation4 + $0x14] sm:$0xff] %vm3219, %v3210
    %vm3221 = vcmask 1042688
    %vm3222 = vmor %vm3077, %vm3221
    %3223 = vst.msk [vmem:[#allocation4 + $0x38] sm:$0x77] %vm3222, %v3211
    %3224 = vst.msk [vmem:[#allocation4 + $0x5c] sm:$0xff] %vm3219, %v3212
    %3225 = vst.msk [vmem:[#allocation4 + $0x80] sm:$0x77] %vm3222, %v3213
    %v3226 = vld [vmem:[#allocation3] sm:$0xcc]
    %v3227 = vld [vmem:[#allocation3 + $0x8] sm:$0xff]
    %v3228 = vld [vmem:[#allocation3 + $0x10] sm:$0x11]
    %v3229 = vld [vmem:[#allocation3 + $0x18] sm:$0xcc]
    %v3230 = vld [vmem:[#allocation3 + $0x20] sm:$0xff]
    %v3231 = vld [vmem:[#allocation3 + $0x28] sm:$0x11]
    %v3238 = vrot.slane %v3226, 6
    %v3239 = vrot.slane %v3238, 4
    %v3240 = vrot.slane %v3227, 6
    %v3241 = vsel %vm403, %v3239, %v3240
    %v3242 = vrot.slane %v3240, 4
    %v3243 = vrot.slane %v3228, 6
    %v3244 = vsel %vm403, %v3242, %v3243
    %v3245 = vrot.slane %v3229, 6
    %v3246 = vrot.slane %v3245, 4
    %v3247 = vrot.slane %v3230, 6
    %v3248 = vsel %vm403, %v3246, %v3247
    %v3249 = vrot.slane %v3247, 4
    %v3250 = vrot.slane %v3231, 6
    %v3251 = vsel %vm403, %v3249, %v3250
    %3256 = vst.msk [vmem:[#allocation4 + $0x1c] sm:$0xff] %vm2988, %v3241
    %3257 = vst.msk [vmem:[#allocation4 + $0x40] sm:$0x77] %vm2999, %v3244
    %3258 = vst.msk [vmem:[#allocation4 + $0x64] sm:$0xff] %vm2988, %v3248
    %3259 = vst.msk [vmem:[#allocation4 + $0x88] sm:$0x77] %vm2999, %v3251
    %v3260 = vld [vmem:[#allocation4] sm:$0xff]
    %v3261 = vld [vmem:[#allocation4 + $0x8] sm:$0xff]
    %v3262 = vld [vmem:[#allocation4 + $0x10] sm:$0xff]
    %v3263 = vld [vmem:[#allocation4 + $0x18] sm:$0xff]
    %v3264 = vld [vmem:[#allocation4 + $0x20] sm:$0xf]
    %v3265 = vld [vmem:[#allocation4 + $0x24] sm:$0x77]
    %v3266 = vld [vmem:[#allocation4 + $0x2c] sm:$0x77]
    %v3267 = vld [vmem:[#allocation4 + $0x34] sm:$0x77]
    %v3268 = vld [vmem:[#allocation4 + $0x3c] sm:$0x77]
    %v3269 = vld [vmem:[#allocation4 + $0x44] sm:$0x7]
    %v3270 = vld [vmem:[#allocation4 + $0x48] sm:$0xff]
    %v3271 = vld [vmem:[#allocation4 + $0x50] sm:$0xff]
    %v3272 = vld [vmem:[#allocation4 + $0x58] sm:$0xff]
    %v3273 = vld [vmem:[#allocation4 + $0x60] sm:$0xff]
    %v3274 = vld [vmem:[#allocation4 + $0x68] sm:$0xf]
    %v3275 = vld [vmem:[#allocation4 + $0x6c] sm:$0x77]
    %v3276 = vld [vmem:[#allocation4 + $0x74] sm:$0x77]
    %v3277 = vld [vmem:[#allocation4 + $0x7c] sm:$0x77]
    %v3278 = vld [vmem:[#allocation4 + $0x84] sm:$0x77]
    %v3279 = vld [vmem:[#allocation4 + $0x8c] sm:$0x7]
    %v3301 = vunpack.c.l.s4 1966171168
    %v3302 = vunpack.c.0.s8 %v3301
    %v3303 = vlaneseq
    %v3304 = vshrl.u32 %v3303, 7
    %v3305 = vsub.s32 %v3302, %v3304
    %v3306 = vrot.slane %v3260, %v3305
    %v3308 = vunpack.c.l.s4 1966171168
    %v3309 = vunpack.c.0.s8 %v3308
    %v3310 = vlaneseq
    %v3311 = vshrl.u32 %v3310, 7
    %v3312 = vsub.s32 %v3309, %v3311
    %v3313 = vrot.slane %v3261, %v3312
    %v3315 = vunpack.c.l.s4 1966171168
    %v3316 = vunpack.c.0.s8 %v3315
    %v3317 = vlaneseq
    %v3318 = vshrl.u32 %v3317, 7
    %v3319 = vsub.s32 %v3316, %v3318
    %v3320 = vrot.slane %v3262, %v3319
    %v3322 = vunpack.c.l.s4 1966171168
    %v3323 = vunpack.c.0.s8 %v3322
    %v3324 = vlaneseq
    %v3325 = vshrl.u32 %v3324, 7
    %v3326 = vsub.s32 %v3323, %v3325
    %v3327 = vrot.slane %v3263, %v3326
    %v3328 = vcombine.low %v3306, %v3313
    %v3329 = vcombine.high %v3306, %v3313
    %v3330 = vcombine.low %v3320, %v3327
    %v3331 = vcombine.high %v3320, %v3327
    %v3333 = vunpack.c.l.s4 1966171168
    %v3334 = vunpack.c.0.s8 %v3333
    %v3335 = vlaneseq
    %v3336 = vshrl.u32 %v3335, 7
    %v3337 = vsub.s32 %v3334, %v3336
    %v3338 = vrot.slane %v3328, %v3337
    %v3340 = vunpack.c.l.s4 1966171168
    %v3341 = vunpack.c.0.s8 %v3340
    %v3342 = vlaneseq
    %v3343 = vshrl.u32 %v3342, 7
    %v3344 = vsub.s32 %v3341, %v3343
    %v3345 = vrot.slane %v3329, %v3344
    %v3347 = vunpack.c.l.s4 1966171168
    %v3348 = vunpack.c.0.s8 %v3347
    %v3349 = vlaneseq
    %v3350 = vshrl.u32 %v3349, 7
    %v3351 = vsub.s32 %v3348, %v3350
    %v3352 = vrot.slane %v3330, %v3351
    %v3354 = vunpack.c.l.s4 1966171168
    %v3355 = vunpack.c.0.s8 %v3354
    %v3356 = vlaneseq
    %v3357 = vshrl.u32 %v3356, 7
    %v3358 = vsub.s32 %v3355, %v3357
    %v3359 = vrot.slane %v3331, %v3358
    %v3360 = vcombine.low %v3338, %v3352
    %v3361 = vcombine.high %v3338, %v3352
    %v3362 = vcombine.low %v3345, %v3359
    %v3363 = vcombine.high %v3345, %v3359
    %v3365 = vunpack.c.l.s4 1966171168
    %v3366 = vunpack.c.0.s8 %v3365
    %v3367 = vlaneseq
    %v3368 = vshrl.u32 %v3367, 7
    %v3369 = vsub.s32 %v3366, %v3368
    %v3370 = vrot.slane %v3264, %v3369
    %v3371 = vcombine.high %v3370, %v3370
    %v3373 = vunpack.c.l.s4 1966171168
    %v3374 = vunpack.c.0.s8 %v3373
    %v3375 = vlaneseq
    %v3376 = vshrl.u32 %v3375, 7
    %v3377 = vsub.s32 %v3374, %v3376
    %v3378 = vrot.slane %v3370, %v3377
    %v3380 = vunpack.c.l.s4 1966171168
    %v3381 = vunpack.c.0.s8 %v3380
    %v3382 = vlaneseq
    %v3383 = vshrl.u32 %v3382, 7
    %v3384 = vsub.s32 %v3381, %v3383
    %v3385 = vrot.slane %v3371, %v3384
    %v3386 = vcombine.high %v3378, %v3378
    %v3387 = vcombine.high %v3385, %v3385
    %v3389 = vunpack.c.l.s4 1966171168
    %v3390 = vunpack.c.0.s8 %v3389
    %v3391 = vlaneseq
    %v3392 = vshrl.u32 %v3391, 7
    %v3393 = vsub.s32 %v3390, %v3392
    %v3394 = vrot.slane %v3265, %v3393
    %v3396 = vunpack.c.l.s4 1966171168
    %v3397 = vunpack.c.0.s8 %v3396
    %v3398 = vlaneseq
    %v3399 = vshrl.u32 %v3398, 7
    %v3400 = vsub.s32 %v3397, %v3399
    %v3401 = vrot.slane %v3266, %v3400
    %v3403 = vunpack.c.l.s4 1966171168
    %v3404 = vunpack.c.0.s8 %v3403
    %v3405 = vlaneseq
    %v3406 = vshrl.u32 %v3405, 7
    %v3407 = vsub.s32 %v3404, %v3406
    %v3408 = vrot.slane %v3267, %v3407
    %v3410 = vunpack.c.l.s4 1966171168
    %v3411 = vunpack.c.0.s8 %v3410
    %v3412 = vlaneseq
    %v3413 = vshrl.u32 %v3412, 7
    %v3414 = vsub.s32 %v3411, %v3413
    %v3415 = vrot.slane %v3268, %v3414
    %v3416 = vcombine.low %v3394, %v3401
    %v3417 = vcombine.high %v3394, %v3401
    %v3418 = vcombine.low %v3408, %v3415
    %v3419 = vcombine.high %v3408, %v3415
    %v3421 = vunpack.c.l.s4 1966171168
    %v3422 = vunpack.c.0.s8 %v3421
    %v3423 = vlaneseq
    %v3424 = vshrl.u32 %v3423, 7
    %v3425 = vsub.s32 %v3422, %v3424
    %v3426 = vrot.slane %v3416, %v3425
    %v3428 = vunpack.c.l.s4 1966171168
    %v3429 = vunpack.c.0.s8 %v3428
    %v3430 = vlaneseq
    %v3431 = vshrl.u32 %v3430, 7
    %v3432 = vsub.s32 %v3429, %v3431
    %v3433 = vrot.slane %v3417, %v3432
    %v3435 = vunpack.c.l.s4 1966171168
    %v3436 = vunpack.c.0.s8 %v3435
    %v3437 = vlaneseq
    %v3438 = vshrl.u32 %v3437, 7
    %v3439 = vsub.s32 %v3436, %v3438
    %v3440 = vrot.slane %v3418, %v3439
    %v3442 = vunpack.c.l.s4 1966171168
    %v3443 = vunpack.c.0.s8 %v3442
    %v3444 = vlaneseq
    %v3445 = vshrl.u32 %v3444, 7
    %v3446 = vsub.s32 %v3443, %v3445
    %v3447 = vrot.slane %v3419, %v3446
    %v3448 = vcombine.low %v3426, %v3440
    %v3449 = vcombine.high %v3426, %v3440
    %v3450 = vcombine.low %v3433, %v3447
    %v3452 = vunpack.c.l.s4 1966171168
    %v3453 = vunpack.c.0.s8 %v3452
    %v3454 = vlaneseq
    %v3455 = vshrl.u32 %v3454, 7
    %v3456 = vsub.s32 %v3453, %v3455
    %v3457 = vrot.slane %v3269, %v3456
    %v3458 = vcombine.high %v3457, %v3457
    %v3460 = vunpack.c.l.s4 1966171168
    %v3461 = vunpack.c.0.s8 %v3460
    %v3462 = vlaneseq
    %v3463 = vshrl.u32 %v3462, 7
    %v3464 = vsub.s32 %v3461, %v3463
    %v3465 = vrot.slane %v3457, %v3464
    %v3467 = vunpack.c.l.s4 1966171168
    %v3468 = vunpack.c.0.s8 %v3467
    %v3469 = vlaneseq
    %v3470 = vshrl.u32 %v3469, 7
    %v3471 = vsub.s32 %v3468, %v3470
    %v3472 = vrot.slane %v3458, %v3471
    %v3473 = vcombine.high %v3465, %v3465
    %v3475 = vunpack.c.l.s4 1966171168
    %v3476 = vunpack.c.0.s8 %v3475
    %v3477 = vlaneseq
    %v3478 = vshrl.u32 %v3477, 7
    %v3479 = vsub.s32 %v3476, %v3478
    %v3480 = vrot.slane %v3270, %v3479
    %v3482 = vunpack.c.l.s4 1966171168
    %v3483 = vunpack.c.0.s8 %v3482
    %v3484 = vlaneseq
    %v3485 = vshrl.u32 %v3484, 7
    %v3486 = vsub.s32 %v3483, %v3485
    %v3487 = vrot.slane %v3271, %v3486
    %v3489 = vunpack.c.l.s4 1966171168
    %v3490 = vunpack.c.0.s8 %v3489
    %v3491 = vlaneseq
    %v3492 = vshrl.u32 %v3491, 7
    %v3493 = vsub.s32 %v3490, %v3492
    %v3494 = vrot.slane %v3272, %v3493
    %v3496 = vunpack.c.l.s4 1966171168
    %v3497 = vunpack.c.0.s8 %v3496
    %v3498 = vlaneseq
    %v3499 = vshrl.u32 %v3498, 7
    %v3500 = vsub.s32 %v3497, %v3499
    %v3501 = vrot.slane %v3273, %v3500
    %v3502 = vcombine.low %v3480, %v3487
    %v3503 = vcombine.high %v3480, %v3487
    %v3504 = vcombine.low %v3494, %v3501
    %v3505 = vcombine.high %v3494, %v3501
    %v3507 = vunpack.c.l.s4 1966171168
    %v3508 = vunpack.c.0.s8 %v3507
    %v3509 = vlaneseq
    %v3510 = vshrl.u32 %v3509, 7
    %v3511 = vsub.s32 %v3508, %v3510
    %v3512 = vrot.slane %v3502, %v3511
    %v3514 = vunpack.c.l.s4 1966171168
    %v3515 = vunpack.c.0.s8 %v3514
    %v3516 = vlaneseq
    %v3517 = vshrl.u32 %v3516, 7
    %v3518 = vsub.s32 %v3515, %v3517
    %v3519 = vrot.slane %v3503, %v3518
    %v3521 = vunpack.c.l.s4 1966171168
    %v3522 = vunpack.c.0.s8 %v3521
    %v3523 = vlaneseq
    %v3524 = vshrl.u32 %v3523, 7
    %v3525 = vsub.s32 %v3522, %v3524
    %v3526 = vrot.slane %v3504, %v3525
    %v3528 = vunpack.c.l.s4 1966171168
    %v3529 = vunpack.c.0.s8 %v3528
    %v3530 = vlaneseq
    %v3531 = vshrl.u32 %v3530, 7
    %v3532 = vsub.s32 %v3529, %v3531
    %v3533 = vrot.slane %v3505, %v3532
    %v3534 = vcombine.low %v3512, %v3526
    %v3535 = vcombine.high %v3512, %v3526
    %v3536 = vcombine.low %v3519, %v3533
    %v3537 = vcombine.high %v3519, %v3533
    %v3539 = vunpack.c.l.s4 1966171168
    %v3540 = vunpack.c.0.s8 %v3539
    %v3541 = vlaneseq
    %v3542 = vshrl.u32 %v3541, 7
    %v3543 = vsub.s32 %v3540, %v3542
    %v3544 = vrot.slane %v3274, %v3543
    %v3545 = vcombine.high %v3544, %v3544
    %v3547 = vunpack.c.l.s4 1966171168
    %v3548 = vunpack.c.0.s8 %v3547
    %v3549 = vlaneseq
    %v3550 = vshrl.u32 %v3549, 7
    %v3551 = vsub.s32 %v3548, %v3550
    %v3552 = vrot.slane %v3544, %v3551
    %v3554 = vunpack.c.l.s4 1966171168
    %v3555 = vunpack.c.0.s8 %v3554
    %v3556 = vlaneseq
    %v3557 = vshrl.u32 %v3556, 7
    %v3558 = vsub.s32 %v3555, %v3557
    %v3559 = vrot.slane %v3545, %v3558
    %v3560 = vcombine.high %v3552, %v3552
    %v3561 = vcombine.high %v3559, %v3559
    %v3563 = vunpack.c.l.s4 1966171168
    %v3564 = vunpack.c.0.s8 %v3563
    %v3565 = vlaneseq
    %v3566 = vshrl.u32 %v3565, 7
    %v3567 = vsub.s32 %v3564, %v3566
    %v3568 = vrot.slane %v3275, %v3567
    %v3570 = vunpack.c.l.s4 1966171168
    %v3571 = vunpack.c.0.s8 %v3570
    %v3572 = vlaneseq
    %v3573 = vshrl.u32 %v3572, 7
    %v3574 = vsub.s32 %v3571, %v3573
    %v3575 = vrot.slane %v3276, %v3574
    %v3577 = vunpack.c.l.s4 1966171168
    %v3578 = vunpack.c.0.s8 %v3577
    %v3579 = vlaneseq
    %v3580 = vshrl.u32 %v3579, 7
    %v3581 = vsub.s32 %v3578, %v3580
    %v3582 = vrot.slane %v3277, %v3581
    %v3584 = vunpack.c.l.s4 1966171168
    %v3585 = vunpack.c.0.s8 %v3584
    %v3586 = vlaneseq
    %v3587 = vshrl.u32 %v3586, 7
    %v3588 = vsub.s32 %v3585, %v3587
    %v3589 = vrot.slane %v3278, %v3588
    %v3590 = vcombine.low %v3568, %v3575
    %v3591 = vcombine.high %v3568, %v3575
    %v3592 = vcombine.low %v3582, %v3589
    %v3593 = vcombine.high %v3582, %v3589
    %v3595 = vunpack.c.l.s4 1966171168
    %v3596 = vunpack.c.0.s8 %v3595
    %v3597 = vlaneseq
    %v3598 = vshrl.u32 %v3597, 7
    %v3599 = vsub.s32 %v3596, %v3598
    %v3600 = vrot.slane %v3590, %v3599
    %v3602 = vunpack.c.l.s4 1966171168
    %v3603 = vunpack.c.0.s8 %v3602
    %v3604 = vlaneseq
    %v3605 = vshrl.u32 %v3604, 7
    %v3606 = vsub.s32 %v3603, %v3605
    %v3607 = vrot.slane %v3591, %v3606
    %v3609 = vunpack.c.l.s4 1966171168
    %v3610 = vunpack.c.0.s8 %v3609
    %v3611 = vlaneseq
    %v3612 = vshrl.u32 %v3611, 7
    %v3613 = vsub.s32 %v3610, %v3612
    %v3614 = vrot.slane %v3592, %v3613
    %v3616 = vunpack.c.l.s4 1966171168
    %v3617 = vunpack.c.0.s8 %v3616
    %v3618 = vlaneseq
    %v3619 = vshrl.u32 %v3618, 7
    %v3620 = vsub.s32 %v3617, %v3619
    %v3621 = vrot.slane %v3593, %v3620
    %v3622 = vcombine.low %v3600, %v3614
    %v3623 = vcombine.high %v3600, %v3614
    %v3624 = vcombine.low %v3607, %v3621
    %v3626 = vunpack.c.l.s4 1966171168
    %v3627 = vunpack.c.0.s8 %v3626
    %v3628 = vlaneseq
    %v3629 = vshrl.u32 %v3628, 7
    %v3630 = vsub.s32 %v3627, %v3629
    %v3631 = vrot.slane %v3279, %v3630
    %v3632 = vcombine.high %v3631, %v3631
    %v3634 = vunpack.c.l.s4 1966171168
    %v3635 = vunpack.c.0.s8 %v3634
    %v3636 = vlaneseq
    %v3637 = vshrl.u32 %v3636, 7
    %v3638 = vsub.s32 %v3635, %v3637
    %v3639 = vrot.slane %v3631, %v3638
    %v3641 = vunpack.c.l.s4 1966171168
    %v3642 = vunpack.c.0.s8 %v3641
    %v3643 = vlaneseq
    %v3644 = vshrl.u32 %v3643, 7
    %v3645 = vsub.s32 %v3642, %v3644
    %v3646 = vrot.slane %v3632, %v3645
    %v3647 = vcombine.high %v3639, %v3639
    %v3648 = vld [vmem:[%s6] sm:$0xff]
    %v3649 = vld [vmem:[%s6 + $0x8] sm:$0xff]
    %v3650 = vld [vmem:[%s6 + $0x10] sm:$0xff]
    %v3651 = vld [vmem:[%s6 + $0x18] sm:$0xff]
    %v3652 = vld [vmem:[%s6 + $0x20] sm:$0xff]
    %v3653 = vld [vmem:[%s6 + $0x28] sm:$0xff]
    %v3654 = vld [vmem:[%s6 + $0x30] sm:$0xff]
    %v3655 = vld [vmem:[%s6 + $0x38] sm:$0xff]
    %v3656 = vld [vmem:[%s6 + $0x40] sm:$0xff]
    %v3657 = vld [vmem:[%s6 + $0x48] sm:$0xff]
    %v3658 = vld [vmem:[%s6 + $0x50] sm:$0xff]
    %v3659 = vld [vmem:[%s6 + $0x58] sm:$0xff]
    %v3660 = vld [vmem:[%s6 + $0x60] sm:$0xff]
    %v3661 = vld [vmem:[%s6 + $0x68] sm:$0xff]
    %v3662 = vld [vmem:[%s6 + $0x70] sm:$0xff]
    %v3663 = vld [vmem:[%s6 + $0x78] sm:$0xff]
    %v3664 = vld [vmem:[%s6 + $0x80] sm:$0xff]
    %v3665 = vld [vmem:[%s6 + $0x88] sm:$0xff]
    %v3666 = vld [vmem:[%s6 + $0x90] sm:$0xff]
    %v3667 = vld [vmem:[%s6 + $0x98] sm:$0xff]
    %v3668 = vld [vmem:[%s6 + $0xa0] sm:$0xff]
    %v3669 = vld [vmem:[%s6 + $0xa8] sm:$0xff]
    %v3670 = vld [vmem:[%s6 + $0xb0] sm:$0xff]
    %v3671 = vld [vmem:[%s6 + $0xb8] sm:$0xff]
    %v3672 = vld [vmem:[%s6 + $0xc0] sm:$0xff]
    %v3673 = vld [vmem:[%s6 + $0xc8] sm:$0xff]
    %v3674 = vld [vmem:[%s6 + $0xd0] sm:$0xff]
    %v3675 = vld [vmem:[%s6 + $0xd8] sm:$0xff]
    %v3676 = vld [vmem:[%s6 + $0xe0] sm:$0xff]
    %v3677 = vld [vmem:[%s6 + $0xe8] sm:$0xff]
    %v3678 = vld [vmem:[%s6 + $0xf0] sm:$0xff]
    %v3679 = vld [vmem:[%s6 + $0xf8] sm:$0xff]
    %v3680 = vld [vmem:[%s6 + $0x100] sm:$0xff]
    %v3681 = vld [vmem:[%s6 + $0x108] sm:$0xff]
    %v3682 = vld [vmem:[%s6 + $0x110] sm:$0xff]
    %v3683 = vld [vmem:[%s6 + $0x118] sm:$0xff]
    %v3684 = vld [vmem:[%s6 + $0x120] sm:$0xff]
    %v3685 = vld [vmem:[%s6 + $0x128] sm:$0xff]
    %v3686 = vld [vmem:[%s6 + $0x130] sm:$0xff]
    %v3687 = vld [vmem:[%s6 + $0x138] sm:$0xff]
    %v3688 = vld [vmem:[%s6 + $0x140] sm:$0xff]
    %v3689 = vld [vmem:[%s6 + $0x148] sm:$0xff]
    %v3690 = vld [vmem:[%s6 + $0x150] sm:$0xff]
    %v3691 = vld [vmem:[%s6 + $0x158] sm:$0xff]
    %v3692 = vld [vmem:[%s6 + $0x160] sm:$0xff]
    %v3693 = vld [vmem:[%s6 + $0x168] sm:$0xff]
    %v3694 = vld [vmem:[%s6 + $0x170] sm:$0xff]
    %v3695 = vld [vmem:[%s6 + $0x178] sm:$0xff]
    %v3696 = vld [vmem:[%s6 + $0x180] sm:$0xff]
    %v3697 = vld [vmem:[%s6 + $0x188] sm:$0xff]
    %v3698 = vld [vmem:[%s6 + $0x190] sm:$0xff]
    %v3699 = vld [vmem:[%s6 + $0x198] sm:$0xff]
    %v3700 = vld [vmem:[%s6 + $0x1a0] sm:$0xff]
    %v3701 = vld [vmem:[%s6 + $0x1a8] sm:$0xff]
    %v3702 = vld [vmem:[%s6 + $0x1b0] sm:$0xff]
    %v3703 = vld [vmem:[%s6 + $0x1b8] sm:$0xff]
    %v3704 = vld [vmem:[%s6 + $0x1c0] sm:$0xff]
    %v3705 = vld [vmem:[%s6 + $0x1c8] sm:$0xff]
    %v3706 = vld [vmem:[%s6 + $0x1d0] sm:$0xff]
    %v3707 = vld [vmem:[%s6 + $0x1d8] sm:$0xff]
    %v3708 = vld [vmem:[%s6 + $0x1e0] sm:$0xff]
    %v3709 = vld [vmem:[%s6 + $0x1e8] sm:$0xff]
    %v3710 = vld [vmem:[%s6 + $0x1f0] sm:$0xff]
    %v3711 = vld [vmem:[%s6 + $0x1f8] sm:$0xff]
    %v3712 = vld [vmem:[%s6 + $0x200] sm:$0xff]
    %v3713 = vld [vmem:[%s6 + $0x208] sm:$0xff]
    %v3714 = vld [vmem:[%s6 + $0x210] sm:$0xff]
    %v3715 = vld [vmem:[%s6 + $0x218] sm:$0xff]
    %v3716 = vld [vmem:[%s6 + $0x220] sm:$0xff]
    %v3717 = vld [vmem:[%s6 + $0x228] sm:$0xff]
    %v3718 = vld [vmem:[%s6 + $0x230] sm:$0xff]
    %v3719 = vld [vmem:[%s6 + $0x238] sm:$0xff]
    %v3720 = vld [vmem:[%s6 + $0x240] sm:$0xff]
    %v3721 = vld [vmem:[%s6 + $0x248] sm:$0xff]
    %v3722 = vld [vmem:[%s6 + $0x250] sm:$0xff]
    %v3723 = vld [vmem:[%s6 + $0x258] sm:$0xff]
    %v3724 = vld [vmem:[%s6 + $0x260] sm:$0xff]
    %v3725 = vld [vmem:[%s6 + $0x268] sm:$0xff]
    %v3726 = vld [vmem:[%s6 + $0x270] sm:$0xff]
    %v3727 = vld [vmem:[%s6 + $0x278] sm:$0xff]
    %v3728 = vld [vmem:[%s6 + $0x280] sm:$0xff]
    %v3729 = vld [vmem:[%s6 + $0x288] sm:$0xff]
    %v3730 = vld [vmem:[%s6 + $0x290] sm:$0xff]
    %v3731 = vld [vmem:[%s6 + $0x298] sm:$0xff]
    %v3732 = vld [vmem:[%s6 + $0x2a0] sm:$0xff]
    %v3733 = vld [vmem:[%s6 + $0x2a8] sm:$0xff]
    %v3734 = vld [vmem:[%s6 + $0x2b0] sm:$0xff]
    %v3735 = vld [vmem:[%s6 + $0x2b8] sm:$0xff]
    %v3736 = vld [vmem:[%s6 + $0x2c0] sm:$0xff]
    %v3737 = vld [vmem:[%s6 + $0x2c8] sm:$0xff]
    %v3738 = vld [vmem:[%s6 + $0x2d0] sm:$0xff]
    %v3739 = vld [vmem:[%s6 + $0x2d8] sm:$0xff]
    %v3740 = vld [vmem:[%s6 + $0x2e0] sm:$0xff]
    %v3741 = vld [vmem:[%s6 + $0x2e8] sm:$0xff]
    %v3742 = vld [vmem:[%s6 + $0x2f0] sm:$0xff]
    %v3743 = vld [vmem:[%s6 + $0x2f8] sm:$0xff]
    %v3744 = vld [vmem:[%s6 + $0x300] sm:$0xff]
    %v3745 = vld [vmem:[%s6 + $0x308] sm:$0xff]
    %v3746 = vld [vmem:[%s6 + $0x310] sm:$0xff]
    %v3747 = vld [vmem:[%s6 + $0x318] sm:$0xff]
    %v3748 = vld [vmem:[%s6 + $0x320] sm:$0xff]
    %v3749 = vld [vmem:[%s6 + $0x328] sm:$0xff]
    %v3750 = vld [vmem:[%s6 + $0x330] sm:$0xff]
    %v3751 = vld [vmem:[%s6 + $0x338] sm:$0xff]
    %v3752 = vld [vmem:[%s6 + $0x340] sm:$0xff]
    %v3753 = vld [vmem:[%s6 + $0x348] sm:$0xff]
    %v3754 = vld [vmem:[%s6 + $0x350] sm:$0xff]
    %v3755 = vld [vmem:[%s6 + $0x358] sm:$0xff]
    %v3756 = vld [vmem:[%s6 + $0x360] sm:$0xff]
    %v3757 = vld [vmem:[%s6 + $0x368] sm:$0xff]
    %v3758 = vld [vmem:[%s6 + $0x370] sm:$0xff]
    %v3759 = vld [vmem:[%s6 + $0x378] sm:$0xff]
    %v3760 = vld [vmem:[%s6 + $0x380] sm:$0xff]
    %v3761 = vld [vmem:[%s6 + $0x388] sm:$0xff]
    %v3762 = vld [vmem:[%s6 + $0x390] sm:$0xff]
    %v3763 = vld [vmem:[%s6 + $0x398] sm:$0xff]
    %v3764 = vld [vmem:[%s6 + $0x3a0] sm:$0xff]
    %v3765 = vld [vmem:[%s6 + $0x3a8] sm:$0xff]
    %v3766 = vld [vmem:[%s6 + $0x3b0] sm:$0xff]
    %v3767 = vld [vmem:[%s6 + $0x3b8] sm:$0xff]
    %v3768 = vld [vmem:[%s6 + $0x3c0] sm:$0xff]
    %v3769 = vld [vmem:[%s6 + $0x3c8] sm:$0xff]
    %v3770 = vld [vmem:[%s6 + $0x3d0] sm:$0xff]
    %v3771 = vld [vmem:[%s6 + $0x3d8] sm:$0xff]
    %v3772 = vld [vmem:[%s6 + $0x3e0] sm:$0xff]
    %v3773 = vld [vmem:[%s6 + $0x3e8] sm:$0xff]
    %v3774 = vld [vmem:[%s6 + $0x3f0] sm:$0xff]
    %v3775 = vld [vmem:[%s6 + $0x3f8] sm:$0xff]
    %v3776 = vld [vmem:[%s6 + $0x400] sm:$0xff]
    %v3777 = vld [vmem:[%s6 + $0x408] sm:$0xff]
    %v3778 = vld [vmem:[%s6 + $0x410] sm:$0xff]
    %v3779 = vld [vmem:[%s6 + $0x418] sm:$0xff]
    %v3780 = vld [vmem:[%s6 + $0x420] sm:$0xff]
    %v3781 = vld [vmem:[%s6 + $0x428] sm:$0xff]
    %v3782 = vld [vmem:[%s6 + $0x430] sm:$0xff]
    %v3783 = vld [vmem:[%s6 + $0x438] sm:$0xff]
    %v3784 = vld [vmem:[%s6 + $0x440] sm:$0xff]
    %v3785 = vld [vmem:[%s6 + $0x448] sm:$0xff]
    %v3786 = vld [vmem:[%s6 + $0x450] sm:$0xff]
    %v3787 = vld [vmem:[%s6 + $0x458] sm:$0xff]
    %v3788 = vld [vmem:[%s6 + $0x460] sm:$0xff]
    %v3789 = vld [vmem:[%s6 + $0x468] sm:$0xff]
    %v3790 = vld [vmem:[%s6 + $0x470] sm:$0xff]
    %v3791 = vld [vmem:[%s6 + $0x478] sm:$0xff]
    %v3792 = vld [vmem:[%s6 + $0x480] sm:$0xff]
    %v3793 = vld [vmem:[%s6 + $0x488] sm:$0xff]
    %v3794 = vld [vmem:[%s6 + $0x490] sm:$0xff]
    %v3795 = vld [vmem:[%s6 + $0x498] sm:$0xff]
    %v3796 = vld [vmem:[%s6 + $0x4a0] sm:$0xff]
    %v3797 = vld [vmem:[%s6 + $0x4a8] sm:$0xff]
    %v3798 = vld [vmem:[%s6 + $0x4b0] sm:$0xff]
    %v3799 = vld [vmem:[%s6 + $0x4b8] sm:$0xff]
    %v3800 = vld [vmem:[%s6 + $0x4c0] sm:$0xff]
    %v3801 = vld [vmem:[%s6 + $0x4c8] sm:$0xff]
    %v3802 = vld [vmem:[%s6 + $0x4d0] sm:$0xff]
    %v3803 = vld [vmem:[%s6 + $0x4d8] sm:$0xff]
    %v3804 = vld [vmem:[%s6 + $0x4e0] sm:$0xff]
    %v3805 = vld [vmem:[%s6 + $0x4e8] sm:$0xff]
    %v3806 = vld [vmem:[%s6 + $0x4f0] sm:$0xff]
    %v3807 = vld [vmem:[%s6 + $0x4f8] sm:$0xff]
    %v3808 = vld [vmem:[%s6 + $0x500] sm:$0xff]
    %v3809 = vld [vmem:[%s6 + $0x508] sm:$0xff]
    %v3810 = vld [vmem:[%s6 + $0x510] sm:$0xff]
    %v3811 = vld [vmem:[%s6 + $0x518] sm:$0xff]
    %v3812 = vld [vmem:[%s6 + $0x520] sm:$0xff]
    %v3813 = vld [vmem:[%s6 + $0x528] sm:$0xff]
    %v3814 = vld [vmem:[%s6 + $0x530] sm:$0xff]
    %v3815 = vld [vmem:[%s6 + $0x538] sm:$0xff]
    %v3816 = vld [vmem:[%s6 + $0x540] sm:$0xff]
    %v3817 = vld [vmem:[%s6 + $0x548] sm:$0xff]
    %v3818 = vld [vmem:[%s6 + $0x550] sm:$0xff]
    %v3819 = vld [vmem:[%s6 + $0x558] sm:$0xff]
    %v3820 = vld [vmem:[%s6 + $0x560] sm:$0xff]
    %v3821 = vld [vmem:[%s6 + $0x568] sm:$0xff]
    %v3822 = vld [vmem:[%s6 + $0x570] sm:$0xff]
    %v3823 = vld [vmem:[%s6 + $0x578] sm:$0xff]
    %v3824 = vld [vmem:[%s6 + $0x580] sm:$0xff]
    %v3825 = vld [vmem:[%s6 + $0x588] sm:$0xff]
    %v3826 = vld [vmem:[%s6 + $0x590] sm:$0xff]
    %v3827 = vld [vmem:[%s6 + $0x598] sm:$0xff]
    %v3828 = vld [vmem:[%s6 + $0x5a0] sm:$0xff]
    %v3829 = vld [vmem:[%s6 + $0x5a8] sm:$0xff]
    %v3830 = vld [vmem:[%s6 + $0x5b0] sm:$0xff]
    %v3831 = vld [vmem:[%s6 + $0x5b8] sm:$0xff]
    %v3832 = vld [vmem:[%s6 + $0x5c0] sm:$0xff]
    %v3833 = vld [vmem:[%s6 + $0x5c8] sm:$0xff]
    %v3834 = vld [vmem:[%s6 + $0x5d0] sm:$0xff]
    %v3835 = vld [vmem:[%s6 + $0x5d8] sm:$0xff]
    %v3836 = vld [vmem:[%s6 + $0x5e0] sm:$0xff]
    %v3837 = vld [vmem:[%s6 + $0x5e8] sm:$0xff]
    %v3838 = vld [vmem:[%s6 + $0x5f0] sm:$0xff]
    %v3839 = vld [vmem:[%s6 + $0x5f8] sm:$0xff]
    %v3840 = vld [vmem:[%s6 + $0x600] sm:$0xff]
    %v3841 = vld [vmem:[%s6 + $0x608] sm:$0xff]
    %v3842 = vld [vmem:[%s6 + $0x610] sm:$0xff]
    %v3843 = vld [vmem:[%s6 + $0x618] sm:$0xff]
    %v3844 = vld [vmem:[%s6 + $0x620] sm:$0xff]
    %v3845 = vld [vmem:[%s6 + $0x628] sm:$0xff]
    %v3846 = vld [vmem:[%s6 + $0x630] sm:$0xff]
    %v3847 = vld [vmem:[%s6 + $0x638] sm:$0xff]
    %v3848 = vld [vmem:[%s6 + $0x640] sm:$0xff]
    %v3849 = vld [vmem:[%s6 + $0x648] sm:$0xff]
    %v3850 = vld [vmem:[%s6 + $0x650] sm:$0xff]
    %v3851 = vld [vmem:[%s6 + $0x658] sm:$0xff]
    %v3852 = vld [vmem:[%s6 + $0x660] sm:$0xff]
    %v3853 = vld [vmem:[%s6 + $0x668] sm:$0xff]
    %v3854 = vld [vmem:[%s6 + $0x670] sm:$0xff]
    %v3855 = vld [vmem:[%s6 + $0x678] sm:$0xff]
    %v3856 = vld [vmem:[%s6 + $0x680] sm:$0xff]
    %v3857 = vld [vmem:[%s6 + $0x688] sm:$0xff]
    %v3858 = vld [vmem:[%s6 + $0x690] sm:$0xff]
    %v3859 = vld [vmem:[%s6 + $0x698] sm:$0xff]
    %v3860 = vld [vmem:[%s6 + $0x6a0] sm:$0xff]
    %v3861 = vld [vmem:[%s6 + $0x6a8] sm:$0xff]
    %v3862 = vld [vmem:[%s6 + $0x6b0] sm:$0xff]
    %v3863 = vld [vmem:[%s6 + $0x6b8] sm:$0xff]
    %v3864 = vld [vmem:[%s6 + $0x6c0] sm:$0xff]
    %v3865 = vld [vmem:[%s6 + $0x6c8] sm:$0xff]
    %v3866 = vld [vmem:[%s6 + $0x6d0] sm:$0xff]
    %v3867 = vld [vmem:[%s6 + $0x6d8] sm:$0xff]
    %v3868 = vld [vmem:[%s6 + $0x6e0] sm:$0xff]
    %v3869 = vld [vmem:[%s6 + $0x6e8] sm:$0xff]
    %v3870 = vld [vmem:[%s6 + $0x6f0] sm:$0xff]
    %v3871 = vld [vmem:[%s6 + $0x6f8] sm:$0xff]
    %v3872 = vld [vmem:[%s6 + $0x700] sm:$0xff]
    %v3873 = vld [vmem:[%s6 + $0x708] sm:$0xff]
    %v3874 = vld [vmem:[%s6 + $0x710] sm:$0xff]
    %v3875 = vld [vmem:[%s6 + $0x718] sm:$0xff]
    %v3876 = vld [vmem:[%s6 + $0x720] sm:$0xff]
    %v3877 = vld [vmem:[%s6 + $0x728] sm:$0xff]
    %v3878 = vld [vmem:[%s6 + $0x730] sm:$0xff]
    %v3879 = vld [vmem:[%s6 + $0x738] sm:$0xff]
    %v3880 = vld [vmem:[%s6 + $0x740] sm:$0xff]
    %v3881 = vld [vmem:[%s6 + $0x748] sm:$0xff]
    %v3882 = vld [vmem:[%s6 + $0x750] sm:$0xff]
    %v3883 = vld [vmem:[%s6 + $0x758] sm:$0xff]
    %v3884 = vld [vmem:[%s6 + $0x760] sm:$0xff]
    %v3885 = vld [vmem:[%s6 + $0x768] sm:$0xff]
    %v3886 = vld [vmem:[%s6 + $0x770] sm:$0xff]
    %v3887 = vld [vmem:[%s6 + $0x778] sm:$0xff]
    %v3888 = vld [vmem:[%s6 + $0x780] sm:$0xff]
    %v3889 = vld [vmem:[%s6 + $0x788] sm:$0xff]
    %v3890 = vld [vmem:[%s6 + $0x790] sm:$0xff]
    %v3891 = vld [vmem:[%s6 + $0x798] sm:$0xff]
    %v3892 = vld [vmem:[%s6 + $0x7a0] sm:$0xff]
    %v3893 = vld [vmem:[%s6 + $0x7a8] sm:$0xff]
    %v3894 = vld [vmem:[%s6 + $0x7b0] sm:$0xff]
    %v3895 = vld [vmem:[%s6 + $0x7b8] sm:$0xff]
    %v3896 = vld [vmem:[%s6 + $0x7c0] sm:$0xff]
    %v3897 = vld [vmem:[%s6 + $0x7c8] sm:$0xff]
    %v3898 = vld [vmem:[%s6 + $0x7d0] sm:$0xff]
    %v3899 = vld [vmem:[%s6 + $0x7d8] sm:$0xff]
    %v3900 = vld [vmem:[%s6 + $0x7e0] sm:$0xff]
    %v3901 = vld [vmem:[%s6 + $0x7e8] sm:$0xff]
    %v3902 = vld [vmem:[%s6 + $0x7f0] sm:$0xff]
    %v3903 = vld [vmem:[%s6 + $0x7f8] sm:$0xff]
    %v3904 = vld [vmem:[%s6 + $0x800] sm:$0xff]
    %v3905 = vld [vmem:[%s6 + $0x808] sm:$0xff]
    %v3906 = vld [vmem:[%s6 + $0x810] sm:$0xff]
    %v3907 = vld [vmem:[%s6 + $0x818] sm:$0xff]
    %v3908 = vld [vmem:[%s6 + $0x820] sm:$0xff]
    %v3909 = vld [vmem:[%s6 + $0x828] sm:$0xff]
    %v3910 = vld [vmem:[%s6 + $0x830] sm:$0xff]
    %v3911 = vld [vmem:[%s6 + $0x838] sm:$0xff]
    %v3912 = vld [vmem:[%s6 + $0x840] sm:$0xff]
    %v3913 = vld [vmem:[%s6 + $0x848] sm:$0xff]
    %v3914 = vld [vmem:[%s6 + $0x850] sm:$0xff]
    %v3915 = vld [vmem:[%s6 + $0x858] sm:$0xff]
    %v3916 = vld [vmem:[%s6 + $0x860] sm:$0xff]
    %v3917 = vld [vmem:[%s6 + $0x868] sm:$0xff]
    %v3918 = vld [vmem:[%s6 + $0x870] sm:$0xff]
    %v3919 = vld [vmem:[%s6 + $0x878] sm:$0xff]
    %v3920 = vld [vmem:[%s6 + $0x880] sm:$0xff]
    %v3921 = vld [vmem:[%s6 + $0x888] sm:$0xff]
    %v3922 = vld [vmem:[%s6 + $0x890] sm:$0xff]
    %v3923 = vld [vmem:[%s6 + $0x898] sm:$0xff]
    %v3924 = vld [vmem:[%s6 + $0x8a0] sm:$0xff]
    %v3925 = vld [vmem:[%s6 + $0x8a8] sm:$0xff]
    %v3926 = vld [vmem:[%s6 + $0x8b0] sm:$0xff]
    %v3927 = vld [vmem:[%s6 + $0x8b8] sm:$0xff]
    %v3928 = vcombine.low %v3360, %v3362
    %v3929 = vcombine.high %v3360, %v3362
    %v3930 = vcombine.low %v3361, %v3363
    %v3931 = vcombine.high %v3361, %v3363
    %v3932 = vcombine.low %v3448, %v3450
    %v3933 = vcombine.high %v3448, %v3450
    %v3934 = vcombine.low %v3449, %v3534
    %v3935 = vcombine.high %v3449, %v3534
    %v3937 = vunpack.c.l.s4 1966171168
    %v3938 = vunpack.c.0.s8 %v3937
    %v3939 = vlaneseq
    %v3940 = vshrl.u32 %v3939, 7
    %v3941 = vsub.s32 %v3938, %v3940
    %v3942 = vrot.slane %v3928, %v3941
    %v3944 = vunpack.c.l.s4 1966171168
    %v3945 = vunpack.c.0.s8 %v3944
    %v3946 = vlaneseq
    %v3947 = vshrl.u32 %v3946, 7
    %v3948 = vsub.s32 %v3945, %v3947
    %v3949 = vrot.slane %v3929, %v3948
    %v3951 = vunpack.c.l.s4 1966171168
    %v3952 = vunpack.c.0.s8 %v3951
    %v3953 = vlaneseq
    %v3954 = vshrl.u32 %v3953, 7
    %v3955 = vsub.s32 %v3952, %v3954
    %v3956 = vrot.slane %v3930, %v3955
    %v3958 = vunpack.c.l.s4 1966171168
    %v3959 = vunpack.c.0.s8 %v3958
    %v3960 = vlaneseq
    %v3961 = vshrl.u32 %v3960, 7
    %v3962 = vsub.s32 %v3959, %v3961
    %v3963 = vrot.slane %v3931, %v3962
    %v3965 = vunpack.c.l.s4 1966171168
    %v3966 = vunpack.c.0.s8 %v3965
    %v3967 = vlaneseq
    %v3968 = vshrl.u32 %v3967, 7
    %v3969 = vsub.s32 %v3966, %v3968
    %v3970 = vrot.slane %v3932, %v3969
    %v3972 = vunpack.c.l.s4 1966171168
    %v3973 = vunpack.c.0.s8 %v3972
    %v3974 = vlaneseq
    %v3975 = vshrl.u32 %v3974, 7
    %v3976 = vsub.s32 %v3973, %v3975
    %v3977 = vrot.slane %v3933, %v3976
    %v3979 = vunpack.c.l.s4 1966171168
    %v3980 = vunpack.c.0.s8 %v3979
    %v3981 = vlaneseq
    %v3982 = vshrl.u32 %v3981, 7
    %v3983 = vsub.s32 %v3980, %v3982
    %v3984 = vrot.slane %v3934, %v3983
    %v3986 = vunpack.c.l.s4 1966171168
    %v3987 = vunpack.c.0.s8 %v3986
    %v3988 = vlaneseq
    %v3989 = vshrl.u32 %v3988, 7
    %v3990 = vsub.s32 %v3987, %v3989
    %v3991 = vrot.slane %v3935, %v3990
    %v3992 = vcombine.low %v3942, %v3956
    %v3993 = vcombine.high %v3942, %v3956
    %v3994 = vcombine.low %v3949, %v3963
    %v3995 = vcombine.high %v3949, %v3963
    %v3996 = vcombine.low %v3970, %v3984
    %v3997 = vcombine.high %v3970, %v3984
    %v3998 = vcombine.low %v3977, %v3991
    %v3999 = vcombine.high %v3977, %v3991
    %v4001 = vunpack.c.l.s4 1966171168
    %v4002 = vunpack.c.0.s8 %v4001
    %v4003 = vlaneseq
    %v4004 = vshrl.u32 %v4003, 7
    %v4005 = vsub.s32 %v4002, %v4004
    %v4006 = vrot.slane %v3992, %v4005
    %v4008 = vunpack.c.l.s4 1966171168
    %v4009 = vunpack.c.0.s8 %v4008
    %v4010 = vlaneseq
    %v4011 = vshrl.u32 %v4010, 7
    %v4012 = vsub.s32 %v4009, %v4011
    %v4013 = vrot.slane %v3994, %v4012
    %v4015 = vunpack.c.l.s4 1966171168
    %v4016 = vunpack.c.0.s8 %v4015
    %v4017 = vlaneseq
    %v4018 = vshrl.u32 %v4017, 7
    %v4019 = vsub.s32 %v4016, %v4018
    %v4020 = vrot.slane %v3993, %v4019
    %v4022 = vunpack.c.l.s4 1966171168
    %v4023 = vunpack.c.0.s8 %v4022
    %v4024 = vlaneseq
    %v4025 = vshrl.u32 %v4024, 7
    %v4026 = vsub.s32 %v4023, %v4025
    %v4027 = vrot.slane %v3995, %v4026
    %v4029 = vunpack.c.l.s4 1966171168
    %v4030 = vunpack.c.0.s8 %v4029
    %v4031 = vlaneseq
    %v4032 = vshrl.u32 %v4031, 7
    %v4033 = vsub.s32 %v4030, %v4032
    %v4034 = vrot.slane %v3996, %v4033
    %v4036 = vunpack.c.l.s4 1966171168
    %v4037 = vunpack.c.0.s8 %v4036
    %v4038 = vlaneseq
    %v4039 = vshrl.u32 %v4038, 7
    %v4040 = vsub.s32 %v4037, %v4039
    %v4041 = vrot.slane %v3998, %v4040
    %v4043 = vunpack.c.l.s4 1966171168
    %v4044 = vunpack.c.0.s8 %v4043
    %v4045 = vlaneseq
    %v4046 = vshrl.u32 %v4045, 7
    %v4047 = vsub.s32 %v4044, %v4046
    %v4048 = vrot.slane %v3997, %v4047
    %v4050 = vunpack.c.l.s4 1966171168
    %v4051 = vunpack.c.0.s8 %v4050
    %v4052 = vlaneseq
    %v4053 = vshrl.u32 %v4052, 7
    %v4054 = vsub.s32 %v4051, %v4053
    %v4055 = vrot.slane %v3999, %v4054
    %v4056 = vcombine.low %v4006, %v4034
    %v4057 = vcombine.high %v4006, %v4034
    %v4058 = vcombine.low %v4013, %v4041
    %v4059 = vcombine.high %v4013, %v4041
    %v4060 = vcombine.low %v4020, %v4048
    %v4061 = vcombine.high %v4020, %v4048
    %v4062 = vcombine.low %v4027, %v4055
    %v4063 = vcombine.high %v4027, %v4055
    %v4064 = vcombine.low %v3378, %v3385
    %v4065 = vcombine.low %v3386, %v3387
    %v4066 = vcombine.low %v3465, %v3472
    %v4067 = vcombine.low %v3473, %v3552
    %v4069 = vunpack.c.l.s4 1966171168
    %v4070 = vunpack.c.0.s8 %v4069
    %v4071 = vlaneseq
    %v4072 = vshrl.u32 %v4071, 7
    %v4073 = vsub.s32 %v4070, %v4072
    %v4074 = vrot.slane %v4064, %v4073
    %v4076 = vunpack.c.l.s4 1966171168
    %v4077 = vunpack.c.0.s8 %v4076
    %v4078 = vlaneseq
    %v4079 = vshrl.u32 %v4078, 7
    %v4080 = vsub.s32 %v4077, %v4079
    %v4081 = vrot.slane %v4065, %v4080
    %v4083 = vunpack.c.l.s4 1966171168
    %v4084 = vunpack.c.0.s8 %v4083
    %v4085 = vlaneseq
    %v4086 = vshrl.u32 %v4085, 7
    %v4087 = vsub.s32 %v4084, %v4086
    %v4088 = vrot.slane %v4066, %v4087
    %v4090 = vunpack.c.l.s4 1966171168
    %v4091 = vunpack.c.0.s8 %v4090
    %v4092 = vlaneseq
    %v4093 = vshrl.u32 %v4092, 7
    %v4094 = vsub.s32 %v4091, %v4093
    %v4095 = vrot.slane %v4067, %v4094
    %v4096 = vcombine.low %v4074, %v4081
    %v4097 = vcombine.low %v4088, %v4095
    %v4099 = vunpack.c.l.s4 1966171168
    %v4100 = vunpack.c.0.s8 %v4099
    %v4101 = vlaneseq
    %v4102 = vshrl.u32 %v4101, 7
    %v4103 = vsub.s32 %v4100, %v4102
    %v4104 = vrot.slane %v4096, %v4103
    %v4106 = vunpack.c.l.s4 1966171168
    %v4107 = vunpack.c.0.s8 %v4106
    %v4108 = vlaneseq
    %v4109 = vshrl.u32 %v4108, 7
    %v4110 = vsub.s32 %v4107, %v4109
    %v4111 = vrot.slane %v4097, %v4110
    %v4112 = vcombine.low %v4104, %v4111
    %v4113 = vcombine.low %v3536, %v3535
    %v4114 = vcombine.high %v3536, %v3535
    %v4115 = vcombine.low %v3537, %v3622
    %v4116 = vcombine.high %v3537, %v3622
    %v4117 = vcombine.low %v3624, %v3623
    %v4118 = vcombine.high %v3624, %v3623
    %v4120 = vunpack.c.l.s4 1966171168
    %v4121 = vunpack.c.0.s8 %v4120
    %v4122 = vlaneseq
    %v4123 = vshrl.u32 %v4122, 7
    %v4124 = vsub.s32 %v4121, %v4123
    %v4125 = vrot.slane %v4113, %v4124
    %v4127 = vunpack.c.l.s4 1966171168
    %v4128 = vunpack.c.0.s8 %v4127
    %v4129 = vlaneseq
    %v4130 = vshrl.u32 %v4129, 7
    %v4131 = vsub.s32 %v4128, %v4130
    %v4132 = vrot.slane %v4114, %v4131
    %v4134 = vunpack.c.l.s4 1966171168
    %v4135 = vunpack.c.0.s8 %v4134
    %v4136 = vlaneseq
    %v4137 = vshrl.u32 %v4136, 7
    %v4138 = vsub.s32 %v4135, %v4137
    %v4139 = vrot.slane %v4115, %v4138
    %v4141 = vunpack.c.l.s4 1966171168
    %v4142 = vunpack.c.0.s8 %v4141
    %v4143 = vlaneseq
    %v4144 = vshrl.u32 %v4143, 7
    %v4145 = vsub.s32 %v4142, %v4144
    %v4146 = vrot.slane %v4116, %v4145
    %v4148 = vunpack.c.l.s4 1966171168
    %v4149 = vunpack.c.0.s8 %v4148
    %v4150 = vlaneseq
    %v4151 = vshrl.u32 %v4150, 7
    %v4152 = vsub.s32 %v4149, %v4151
    %v4153 = vrot.slane %v4117, %v4152
    %v4155 = vunpack.c.l.s4 1966171168
    %v4156 = vunpack.c.0.s8 %v4155
    %v4157 = vlaneseq
    %v4158 = vshrl.u32 %v4157, 7
    %v4159 = vsub.s32 %v4156, %v4158
    %v4160 = vrot.slane %v4118, %v4159
    %v4161 = vcombine.low %v4125, %v4139
    %v4162 = vcombine.high %v4125, %v4139
    %v4163 = vcombine.low %v4132, %v4146
    %v4164 = vcombine.high %v4132, %v4146
    %v4165 = vcombine.high %v4153, %v4153
    %v4166 = vcombine.high %v4160, %v4160
    %v4168 = vunpack.c.l.s4 1966171168
    %v4169 = vunpack.c.0.s8 %v4168
    %v4170 = vlaneseq
    %v4171 = vshrl.u32 %v4170, 7
    %v4172 = vsub.s32 %v4169, %v4171
    %v4173 = vrot.slane %v4161, %v4172
    %v4175 = vunpack.c.l.s4 1966171168
    %v4176 = vunpack.c.0.s8 %v4175
    %v4177 = vlaneseq
    %v4178 = vshrl.u32 %v4177, 7
    %v4179 = vsub.s32 %v4176, %v4178
    %v4180 = vrot.slane %v4163, %v4179
    %v4182 = vunpack.c.l.s4 1966171168
    %v4183 = vunpack.c.0.s8 %v4182
    %v4184 = vlaneseq
    %v4185 = vshrl.u32 %v4184, 7
    %v4186 = vsub.s32 %v4183, %v4185
    %v4187 = vrot.slane %v4162, %v4186
    %v4189 = vunpack.c.l.s4 1966171168
    %v4190 = vunpack.c.0.s8 %v4189
    %v4191 = vlaneseq
    %v4192 = vshrl.u32 %v4191, 7
    %v4193 = vsub.s32 %v4190, %v4192
    %v4194 = vrot.slane %v4164, %v4193
    %v4196 = vunpack.c.l.s4 1966171168
    %v4197 = vunpack.c.0.s8 %v4196
    %v4198 = vlaneseq
    %v4199 = vshrl.u32 %v4198, 7
    %v4200 = vsub.s32 %v4197, %v4199
    %v4201 = vrot.slane %v4153, %v4200
    %v4203 = vunpack.c.l.s4 1966171168
    %v4204 = vunpack.c.0.s8 %v4203
    %v4205 = vlaneseq
    %v4206 = vshrl.u32 %v4205, 7
    %v4207 = vsub.s32 %v4204, %v4206
    %v4208 = vrot.slane %v4160, %v4207
    %v4210 = vunpack.c.l.s4 1966171168
    %v4211 = vunpack.c.0.s8 %v4210
    %v4212 = vlaneseq
    %v4213 = vshrl.u32 %v4212, 7
    %v4214 = vsub.s32 %v4211, %v4213
    %v4215 = vrot.slane %v4165, %v4214
    %v4217 = vunpack.c.l.s4 1966171168
    %v4218 = vunpack.c.0.s8 %v4217
    %v4219 = vlaneseq
    %v4220 = vshrl.u32 %v4219, 7
    %v4221 = vsub.s32 %v4218, %v4220
    %v4222 = vrot.slane %v4166, %v4221
    %v4223 = vcombine.low %v4173, %v4201
    %v4224 = vcombine.high %v4173, %v4201
    %v4225 = vcombine.low %v4180, %v4208
    %v4226 = vcombine.high %v4180, %v4208
    %v4227 = vcombine.low %v4187, %v4215
    %v4228 = vcombine.high %v4187, %v4215
    %v4229 = vcombine.low %v4194, %v4222
    %v4230 = vcombine.high %v4194, %v4222
    %v4231 = vcombine.low %v3559, %v3560
    %v4232 = vcombine.low %v3561, %v3639
    %v4233 = vcombine.low %v3646, %v3647
    %v4235 = vunpack.c.l.s4 1966171168
    %v4236 = vunpack.c.0.s8 %v4235
    %v4237 = vlaneseq
    %v4238 = vshrl.u32 %v4237, 7
    %v4239 = vsub.s32 %v4236, %v4238
    %v4240 = vrot.slane %v4231, %v4239
    %v4242 = vunpack.c.l.s4 1966171168
    %v4243 = vunpack.c.0.s8 %v4242
    %v4244 = vlaneseq
    %v4245 = vshrl.u32 %v4244, 7
    %v4246 = vsub.s32 %v4243, %v4245
    %v4247 = vrot.slane %v4232, %v4246
    %v4249 = vunpack.c.l.s4 1966171168
    %v4250 = vunpack.c.0.s8 %v4249
    %v4251 = vlaneseq
    %v4252 = vshrl.u32 %v4251, 7
    %v4253 = vsub.s32 %v4250, %v4252
    %v4254 = vrot.slane %v4233, %v4253
    %v4255 = vcombine.low %v4240, %v4247
    %v4257 = vunpack.c.l.s4 1966171168
    %v4258 = vunpack.c.0.s8 %v4257
    %v4259 = vlaneseq
    %v4260 = vshrl.u32 %v4259, 7
    %v4261 = vsub.s32 %v4258, %v4260
    %v4262 = vrot.slane %v4255, %v4261
    %v4264 = vunpack.c.l.s4 1966171168
    %v4265 = vunpack.c.0.s8 %v4264
    %v4266 = vlaneseq
    %v4267 = vshrl.u32 %v4266, 7
    %v4268 = vsub.s32 %v4265, %v4267
    %v4269 = vrot.slane %v4254, %v4268
    %v4270 = vcombine.low %v4262, %v4269
    %v4567 = vunpack.c.l.b16 %v3648
    %v4568 = vunpack.c.h.b16 %v3648
    %v4569 = vunpack.c.l.b16 %v3649
    %v4570 = vunpack.c.h.b16 %v3649
    %v4571 = vunpack.c.l.b16 %v3650
    %v4572 = vunpack.c.h.b16 %v3650
    %v4573 = vunpack.c.l.b16 %v3651
    %v4574 = vunpack.c.h.b16 %v3651
    %v4575 = vunpack.c.l.b16 %v3652
    %v4576 = vunpack.c.h.b16 %v3652
    %v4577 = vunpack.c.l.b16 %v3653
    %v4578 = vunpack.c.h.b16 %v3653
    %v4579 = vunpack.c.l.b16 %v3654
    %v4580 = vunpack.c.h.b16 %v3654
    %v4581 = vunpack.c.l.b16 %v3655
    %v4582 = vunpack.c.h.b16 %v3655
    %v4583 = vunpack.c.l.b16 %v3656
    %v4584 = vunpack.c.h.b16 %v3656
    %v4585 = vunpack.c.l.b16 %v3657
    %v4586 = vunpack.c.h.b16 %v3657
    %v4587 = vunpack.c.l.b16 %v3658
    %v4588 = vunpack.c.h.b16 %v3658
    %v4589 = vunpack.c.l.b16 %v3659
    %v4590 = vunpack.c.h.b16 %v3659
    %v4591 = vunpack.c.l.b16 %v3660
    %v4592 = vunpack.c.h.b16 %v3660
    %v4593 = vunpack.c.l.b16 %v3661
    %v4594 = vunpack.c.h.b16 %v3661
    %v4595 = vunpack.c.l.b16 %v3662
    %v4596 = vunpack.c.h.b16 %v3662
    %v4597 = vunpack.c.l.b16 %v3663
    %v4598 = vunpack.c.h.b16 %v3663
    %v4599 = vunpack.c.l.b16 %v3664
    %v4600 = vunpack.c.h.b16 %v3664
    %v4601 = vunpack.c.l.b16 %v3665
    %v4602 = vunpack.c.h.b16 %v3665
    %v4603 = vunpack.c.l.b16 %v3666
    %v4604 = vunpack.c.h.b16 %v3666
    %v4605 = vunpack.c.l.b16 %v3667
    %v4606 = vunpack.c.h.b16 %v3667
    %v4607 = vunpack.c.l.b16 %v3668
    %v4608 = vunpack.c.h.b16 %v3668
    %v4609 = vunpack.c.l.b16 %v3669
    %v4610 = vunpack.c.h.b16 %v3669
    %v4611 = vunpack.c.l.b16 %v3670
    %v4612 = vunpack.c.h.b16 %v3670
    %v4613 = vunpack.c.l.b16 %v3671
    %v4614 = vunpack.c.h.b16 %v3671
    %v4615 = vunpack.c.l.b16 %v3672
    %v4616 = vunpack.c.h.b16 %v3672
    %v4617 = vunpack.c.l.b16 %v3673
    %v4618 = vunpack.c.h.b16 %v3673
    %v4619 = vunpack.c.l.b16 %v3674
    %v4620 = vunpack.c.h.b16 %v3674
    %v4621 = vunpack.c.l.b16 %v3675
    %v4622 = vunpack.c.h.b16 %v3675
    %v4623 = vunpack.c.l.b16 %v3676
    %v4624 = vunpack.c.h.b16 %v3676
    %v4625 = vunpack.c.l.b16 %v3677
    %v4626 = vunpack.c.h.b16 %v3677
    %v4627 = vunpack.c.l.b16 %v3678
    %v4628 = vunpack.c.h.b16 %v3678
    %v4629 = vunpack.c.l.b16 %v3679
    %v4630 = vunpack.c.h.b16 %v3679
    %v4631 = vunpack.c.l.b16 %v3680
    %v4632 = vunpack.c.h.b16 %v3680
    %v4633 = vunpack.c.l.b16 %v3681
    %v4634 = vunpack.c.h.b16 %v3681
    %v4635 = vunpack.c.l.b16 %v3682
    %v4636 = vunpack.c.h.b16 %v3682
    %v4637 = vunpack.c.l.b16 %v3683
    %v4638 = vunpack.c.h.b16 %v3683
    %v4639 = vunpack.c.l.b16 %v3684
    %v4640 = vunpack.c.h.b16 %v3684
    %v4641 = vunpack.c.l.b16 %v3685
    %v4642 = vunpack.c.h.b16 %v3685
    %v4643 = vunpack.c.l.b16 %v3686
    %v4644 = vunpack.c.h.b16 %v3686
    %v4645 = vunpack.c.l.b16 %v3687
    %v4646 = vunpack.c.h.b16 %v3687
    %v4647 = vunpack.c.l.b16 %v3688
    %v4648 = vunpack.c.h.b16 %v3688
    %v4649 = vunpack.c.l.b16 %v3689
    %v4650 = vunpack.c.h.b16 %v3689
    %v4651 = vunpack.c.l.b16 %v3690
    %v4652 = vunpack.c.h.b16 %v3690
    %v4653 = vunpack.c.l.b16 %v3691
    %v4654 = vunpack.c.h.b16 %v3691
    %v4655 = vunpack.c.l.b16 %v3692
    %v4656 = vunpack.c.h.b16 %v3692
    %v4657 = vunpack.c.l.b16 %v3693
    %v4658 = vunpack.c.h.b16 %v3693
    %v4659 = vunpack.c.l.b16 %v3694
    %v4660 = vunpack.c.h.b16 %v3694
    %v4661 = vunpack.c.l.b16 %v3695
    %v4662 = vunpack.c.h.b16 %v3695
    %v4663 = vunpack.c.l.b16 %v3696
    %v4664 = vunpack.c.h.b16 %v3696
    %v4665 = vunpack.c.l.b16 %v3697
    %v4666 = vunpack.c.h.b16 %v3697
    %v4667 = vunpack.c.l.b16 %v3698
    %v4668 = vunpack.c.h.b16 %v3698
    %v4669 = vunpack.c.l.b16 %v3699
    %v4670 = vunpack.c.h.b16 %v3699
    %v4671 = vunpack.c.l.b16 %v3700
    %v4672 = vunpack.c.h.b16 %v3700
    %v4673 = vunpack.c.l.b16 %v3701
    %v4674 = vunpack.c.h.b16 %v3701
    %v4675 = vunpack.c.l.b16 %v3702
    %v4676 = vunpack.c.h.b16 %v3702
    %v4677 = vunpack.c.l.b16 %v3703
    %v4678 = vunpack.c.h.b16 %v3703
    %v4679 = vunpack.c.l.b16 %v3704
    %v4680 = vunpack.c.h.b16 %v3704
    %v4681 = vunpack.c.l.b16 %v3705
    %v4682 = vunpack.c.h.b16 %v3705
    %v4683 = vunpack.c.l.b16 %v3706
    %v4684 = vunpack.c.h.b16 %v3706
    %v4685 = vunpack.c.l.b16 %v3707
    %v4686 = vunpack.c.h.b16 %v3707
    %v4687 = vunpack.c.l.b16 %v3708
    %v4688 = vunpack.c.h.b16 %v3708
    %v4689 = vunpack.c.l.b16 %v3709
    %v4690 = vunpack.c.h.b16 %v3709
    %v4691 = vunpack.c.l.b16 %v3710
    %v4692 = vunpack.c.h.b16 %v3710
    %v4693 = vunpack.c.l.b16 %v3711
    %v4694 = vunpack.c.h.b16 %v3711
    %v4695 = vunpack.c.l.b16 %v3712
    %v4696 = vunpack.c.h.b16 %v3712
    %v4697 = vunpack.c.l.b16 %v3713
    %v4698 = vunpack.c.h.b16 %v3713
    %v4699 = vunpack.c.l.b16 %v3714
    %v4700 = vunpack.c.h.b16 %v3714
    %v4701 = vunpack.c.l.b16 %v3715
    %v4702 = vunpack.c.h.b16 %v3715
    %v4703 = vunpack.c.l.b16 %v3716
    %v4704 = vunpack.c.h.b16 %v3716
    %v4705 = vunpack.c.l.b16 %v3717
    %v4706 = vunpack.c.h.b16 %v3717
    %v4707 = vunpack.c.l.b16 %v3718
    %v4708 = vunpack.c.h.b16 %v3718
    %v4709 = vunpack.c.l.b16 %v3719
    %v4710 = vunpack.c.h.b16 %v3719
    %v4711 = vunpack.c.l.b16 %v3720
    %v4712 = vunpack.c.h.b16 %v3720
    %v4713 = vunpack.c.l.b16 %v3721
    %v4714 = vunpack.c.h.b16 %v3721
    %v4715 = vunpack.c.l.b16 %v3722
    %v4716 = vunpack.c.h.b16 %v3722
    %v4717 = vunpack.c.l.b16 %v3723
    %v4718 = vunpack.c.h.b16 %v3723
    %v4719 = vunpack.c.l.b16 %v3724
    %v4720 = vunpack.c.h.b16 %v3724
    %v4721 = vunpack.c.l.b16 %v3725
    %v4722 = vunpack.c.h.b16 %v3725
    %v4723 = vunpack.c.l.b16 %v3726
    %v4724 = vunpack.c.h.b16 %v3726
    %v4725 = vunpack.c.l.b16 %v3727
    %v4726 = vunpack.c.h.b16 %v3727
    %v4727 = vunpack.c.l.b16 %v3728
    %v4728 = vunpack.c.h.b16 %v3728
    %v4729 = vunpack.c.l.b16 %v3729
    %v4730 = vunpack.c.h.b16 %v3729
    %v4731 = vunpack.c.l.b16 %v3730
    %v4732 = vunpack.c.h.b16 %v3730
    %v4733 = vunpack.c.l.b16 %v3731
    %v4734 = vunpack.c.h.b16 %v3731
    %v4735 = vunpack.c.l.b16 %v3732
    %v4736 = vunpack.c.h.b16 %v3732
    %v4737 = vunpack.c.l.b16 %v3733
    %v4738 = vunpack.c.h.b16 %v3733
    %v4739 = vunpack.c.l.b16 %v3734
    %v4740 = vunpack.c.h.b16 %v3734
    %v4741 = vunpack.c.l.b16 %v3735
    %v4742 = vunpack.c.h.b16 %v3735
    %v4743 = vunpack.c.l.b16 %v3736
    %v4744 = vunpack.c.h.b16 %v3736
    %v4745 = vunpack.c.l.b16 %v3737
    %v4746 = vunpack.c.h.b16 %v3737
    %v4747 = vunpack.c.l.b16 %v3738
    %v4748 = vunpack.c.h.b16 %v3738
    %v4749 = vunpack.c.l.b16 %v3739
    %v4750 = vunpack.c.h.b16 %v3739
    %v4751 = vunpack.c.l.b16 %v3740
    %v4752 = vunpack.c.h.b16 %v3740
    %v4753 = vunpack.c.l.b16 %v3741
    %v4754 = vunpack.c.h.b16 %v3741
    %v4755 = vunpack.c.l.b16 %v3742
    %v4756 = vunpack.c.h.b16 %v3742
    %v4757 = vunpack.c.l.b16 %v3743
    %v4758 = vunpack.c.h.b16 %v3743
    %v4759 = vunpack.c.l.b16 %v3744
    %v4760 = vunpack.c.h.b16 %v3744
    %v4761 = vunpack.c.l.b16 %v3745
    %v4762 = vunpack.c.h.b16 %v3745
    %v4763 = vunpack.c.l.b16 %v3746
    %v4764 = vunpack.c.h.b16 %v3746
    %v4765 = vunpack.c.l.b16 %v3747
    %v4766 = vunpack.c.h.b16 %v3747
    %v4767 = vunpack.c.l.b16 %v3748
    %v4768 = vunpack.c.h.b16 %v3748
    %v4769 = vunpack.c.l.b16 %v3749
    %v4770 = vunpack.c.h.b16 %v3749
    %v4771 = vunpack.c.l.b16 %v3750
    %v4772 = vunpack.c.h.b16 %v3750
    %v4773 = vunpack.c.l.b16 %v3751
    %v4774 = vunpack.c.h.b16 %v3751
    %v4775 = vunpack.c.l.b16 %v3752
    %v4776 = vunpack.c.h.b16 %v3752
    %v4777 = vunpack.c.l.b16 %v3753
    %v4778 = vunpack.c.h.b16 %v3753
    %v4779 = vunpack.c.l.b16 %v3754
    %v4780 = vunpack.c.h.b16 %v3754
    %v4781 = vunpack.c.l.b16 %v3755
    %v4782 = vunpack.c.h.b16 %v3755
    %v4783 = vunpack.c.l.b16 %v3756
    %v4784 = vunpack.c.h.b16 %v3756
    %v4785 = vunpack.c.l.b16 %v3757
    %v4786 = vunpack.c.h.b16 %v3757
    %v4787 = vunpack.c.l.b16 %v3758
    %v4788 = vunpack.c.h.b16 %v3758
    %v4789 = vunpack.c.l.b16 %v3759
    %v4790 = vunpack.c.h.b16 %v3759
    %v4791 = vunpack.c.l.b16 %v3760
    %v4792 = vunpack.c.h.b16 %v3760
    %v4793 = vunpack.c.l.b16 %v3761
    %v4794 = vunpack.c.h.b16 %v3761
    %v4795 = vunpack.c.l.b16 %v3762
    %v4796 = vunpack.c.h.b16 %v3762
    %v4797 = vunpack.c.l.b16 %v3763
    %v4798 = vunpack.c.h.b16 %v3763
    %v4799 = vunpack.c.l.b16 %v3764
    %v4800 = vunpack.c.h.b16 %v3764
    %v4801 = vunpack.c.l.b16 %v3765
    %v4802 = vunpack.c.h.b16 %v3765
    %v4803 = vunpack.c.l.b16 %v3766
    %v4804 = vunpack.c.h.b16 %v3766
    %v4805 = vunpack.c.l.b16 %v3767
    %v4806 = vunpack.c.h.b16 %v3767
    %v4807 = vunpack.c.l.b16 %v3768
    %v4808 = vunpack.c.h.b16 %v3768
    %v4809 = vunpack.c.l.b16 %v3769
    %v4810 = vunpack.c.h.b16 %v3769
    %v4811 = vunpack.c.l.b16 %v3770
    %v4812 = vunpack.c.h.b16 %v3770
    %v4813 = vunpack.c.l.b16 %v3771
    %v4814 = vunpack.c.h.b16 %v3771
    %v4815 = vunpack.c.l.b16 %v3772
    %v4816 = vunpack.c.h.b16 %v3772
    %v4817 = vunpack.c.l.b16 %v3773
    %v4818 = vunpack.c.h.b16 %v3773
    %v4819 = vunpack.c.l.b16 %v3774
    %v4820 = vunpack.c.h.b16 %v3774
    %v4821 = vunpack.c.l.b16 %v3775
    %v4822 = vunpack.c.h.b16 %v3775
    %v4823 = vunpack.c.l.b16 %v3776
    %v4824 = vunpack.c.h.b16 %v3776
    %v4825 = vunpack.c.l.b16 %v3777
    %v4826 = vunpack.c.h.b16 %v3777
    %v4827 = vunpack.c.l.b16 %v3778
    %v4828 = vunpack.c.h.b16 %v3778
    %v4829 = vunpack.c.l.b16 %v3779
    %v4830 = vunpack.c.h.b16 %v3779
    %v4831 = vunpack.c.l.b16 %v3780
    %v4832 = vunpack.c.h.b16 %v3780
    %v4833 = vunpack.c.l.b16 %v3781
    %v4834 = vunpack.c.h.b16 %v3781
    %v4835 = vunpack.c.l.b16 %v3782
    %v4836 = vunpack.c.h.b16 %v3782
    %v4837 = vunpack.c.l.b16 %v3783
    %v4838 = vunpack.c.h.b16 %v3783
    %v4839 = vunpack.c.l.b16 %v3784
    %v4840 = vunpack.c.h.b16 %v3784
    %v4841 = vunpack.c.l.b16 %v3785
    %v4842 = vunpack.c.h.b16 %v3785
    %v4843 = vunpack.c.l.b16 %v3786
    %v4844 = vunpack.c.h.b16 %v3786
    %v4845 = vunpack.c.l.b16 %v3787
    %v4846 = vunpack.c.h.b16 %v3787
    %v4847 = vunpack.c.l.b16 %v3788
    %v4848 = vunpack.c.h.b16 %v3788
    %v4849 = vunpack.c.l.b16 %v3789
    %v4850 = vunpack.c.h.b16 %v3789
    %v4851 = vunpack.c.l.b16 %v3790
    %v4852 = vunpack.c.h.b16 %v3790
    %v4853 = vunpack.c.l.b16 %v3791
    %v4854 = vunpack.c.h.b16 %v3791
    %v4855 = vunpack.c.l.b16 %v3792
    %v4856 = vunpack.c.h.b16 %v3792
    %v4857 = vunpack.c.l.b16 %v3793
    %v4858 = vunpack.c.h.b16 %v3793
    %v4859 = vunpack.c.l.b16 %v3794
    %v4860 = vunpack.c.h.b16 %v3794
    %v4861 = vunpack.c.l.b16 %v3795
    %v4862 = vunpack.c.h.b16 %v3795
    %v4863 = vunpack.c.l.b16 %v3796
    %v4864 = vunpack.c.h.b16 %v3796
    %v4865 = vunpack.c.l.b16 %v3797
    %v4866 = vunpack.c.h.b16 %v3797
    %v4867 = vunpack.c.l.b16 %v3798
    %v4868 = vunpack.c.h.b16 %v3798
    %v4869 = vunpack.c.l.b16 %v3799
    %v4870 = vunpack.c.h.b16 %v3799
    %v4871 = vunpack.c.l.b16 %v3800
    %v4872 = vunpack.c.h.b16 %v3800
    %v4873 = vunpack.c.l.b16 %v3801
    %v4874 = vunpack.c.h.b16 %v3801
    %v4875 = vunpack.c.l.b16 %v3802
    %v4876 = vunpack.c.h.b16 %v3802
    %v4877 = vunpack.c.l.b16 %v3803
    %v4878 = vunpack.c.h.b16 %v3803
    %v4879 = vunpack.c.l.b16 %v3804
    %v4880 = vunpack.c.h.b16 %v3804
    %v4881 = vunpack.c.l.b16 %v3805
    %v4882 = vunpack.c.h.b16 %v3805
    %v4883 = vunpack.c.l.b16 %v3806
    %v4884 = vunpack.c.h.b16 %v3806
    %v4885 = vunpack.c.l.b16 %v3807
    %v4886 = vunpack.c.h.b16 %v3807
    %v4887 = vunpack.c.l.b16 %v3808
    %v4888 = vunpack.c.h.b16 %v3808
    %v4889 = vunpack.c.l.b16 %v3809
    %v4890 = vunpack.c.h.b16 %v3809
    %v4891 = vunpack.c.l.b16 %v3810
    %v4892 = vunpack.c.h.b16 %v3810
    %v4893 = vunpack.c.l.b16 %v3811
    %v4894 = vunpack.c.h.b16 %v3811
    %v4895 = vunpack.c.l.b16 %v3812
    %v4896 = vunpack.c.h.b16 %v3812
    %v4897 = vunpack.c.l.b16 %v3813
    %v4898 = vunpack.c.h.b16 %v3813
    %v4899 = vunpack.c.l.b16 %v3814
    %v4900 = vunpack.c.h.b16 %v3814
    %v4901 = vunpack.c.l.b16 %v3815
    %v4902 = vunpack.c.h.b16 %v3815
    %v4903 = vunpack.c.l.b16 %v3816
    %v4904 = vunpack.c.h.b16 %v3816
    %v4905 = vunpack.c.l.b16 %v3817
    %v4906 = vunpack.c.h.b16 %v3817
    %v4907 = vunpack.c.l.b16 %v3818
    %v4908 = vunpack.c.h.b16 %v3818
    %v4909 = vunpack.c.l.b16 %v3819
    %v4910 = vunpack.c.h.b16 %v3819
    %v4911 = vunpack.c.l.b16 %v3820
    %v4912 = vunpack.c.h.b16 %v3820
    %v4913 = vunpack.c.l.b16 %v3821
    %v4914 = vunpack.c.h.b16 %v3821
    %v4915 = vunpack.c.l.b16 %v3822
    %v4916 = vunpack.c.h.b16 %v3822
    %v4917 = vunpack.c.l.b16 %v3823
    %v4918 = vunpack.c.h.b16 %v3823
    %v4919 = vunpack.c.l.b16 %v3824
    %v4920 = vunpack.c.h.b16 %v3824
    %v4921 = vunpack.c.l.b16 %v3825
    %v4922 = vunpack.c.h.b16 %v3825
    %v4923 = vunpack.c.l.b16 %v3826
    %v4924 = vunpack.c.h.b16 %v3826
    %v4925 = vunpack.c.l.b16 %v3827
    %v4926 = vunpack.c.h.b16 %v3827
    %v4927 = vunpack.c.l.b16 %v3828
    %v4928 = vunpack.c.h.b16 %v3828
    %v4929 = vunpack.c.l.b16 %v3829
    %v4930 = vunpack.c.h.b16 %v3829
    %v4931 = vunpack.c.l.b16 %v3830
    %v4932 = vunpack.c.h.b16 %v3830
    %v4933 = vunpack.c.l.b16 %v3831
    %v4934 = vunpack.c.h.b16 %v3831
    %v4935 = vunpack.c.l.b16 %v3832
    %v4936 = vunpack.c.h.b16 %v3832
    %v4937 = vunpack.c.l.b16 %v3833
    %v4938 = vunpack.c.h.b16 %v3833
    %v4939 = vunpack.c.l.b16 %v3834
    %v4940 = vunpack.c.h.b16 %v3834
    %v4941 = vunpack.c.l.b16 %v3835
    %v4942 = vunpack.c.h.b16 %v3835
    %v4943 = vunpack.c.l.b16 %v3836
    %v4944 = vunpack.c.h.b16 %v3836
    %v4945 = vunpack.c.l.b16 %v3837
    %v4946 = vunpack.c.h.b16 %v3837
    %v4947 = vunpack.c.l.b16 %v3838
    %v4948 = vunpack.c.h.b16 %v3838
    %v4949 = vunpack.c.l.b16 %v3839
    %v4950 = vunpack.c.h.b16 %v3839
    %v4951 = vunpack.c.l.b16 %v3840
    %v4952 = vunpack.c.h.b16 %v3840
    %v4953 = vunpack.c.l.b16 %v3841
    %v4954 = vunpack.c.h.b16 %v3841
    %v4955 = vunpack.c.l.b16 %v3842
    %v4956 = vunpack.c.h.b16 %v3842
    %v4957 = vunpack.c.l.b16 %v3843
    %v4958 = vunpack.c.h.b16 %v3843
    %v4959 = vunpack.c.l.b16 %v3844
    %v4960 = vunpack.c.h.b16 %v3844
    %v4961 = vunpack.c.l.b16 %v3845
    %v4962 = vunpack.c.h.b16 %v3845
    %v4963 = vunpack.c.l.b16 %v3846
    %v4964 = vunpack.c.h.b16 %v3846
    %v4965 = vunpack.c.l.b16 %v3847
    %v4966 = vunpack.c.h.b16 %v3847
    %v4967 = vunpack.c.l.b16 %v3848
    %v4968 = vunpack.c.h.b16 %v3848
    %v4969 = vunpack.c.l.b16 %v3849
    %v4970 = vunpack.c.h.b16 %v3849
    %v4971 = vunpack.c.l.b16 %v3850
    %v4972 = vunpack.c.h.b16 %v3850
    %v4973 = vunpack.c.l.b16 %v3851
    %v4974 = vunpack.c.h.b16 %v3851
    %v4975 = vunpack.c.l.b16 %v3852
    %v4976 = vunpack.c.h.b16 %v3852
    %v4977 = vunpack.c.l.b16 %v3853
    %v4978 = vunpack.c.h.b16 %v3853
    %v4979 = vunpack.c.l.b16 %v3854
    %v4980 = vunpack.c.h.b16 %v3854
    %v4981 = vunpack.c.l.b16 %v3855
    %v4982 = vunpack.c.h.b16 %v3855
    %v4983 = vunpack.c.l.b16 %v3856
    %v4984 = vunpack.c.h.b16 %v3856
    %v4985 = vunpack.c.l.b16 %v3857
    %v4986 = vunpack.c.h.b16 %v3857
    %v4987 = vunpack.c.l.b16 %v3858
    %v4988 = vunpack.c.h.b16 %v3858
    %v4989 = vunpack.c.l.b16 %v3859
    %v4990 = vunpack.c.h.b16 %v3859
    %v4991 = vunpack.c.l.b16 %v3860
    %v4992 = vunpack.c.h.b16 %v3860
    %v4993 = vunpack.c.l.b16 %v3861
    %v4994 = vunpack.c.h.b16 %v3861
    %v4995 = vunpack.c.l.b16 %v3862
    %v4996 = vunpack.c.h.b16 %v3862
    %v4997 = vunpack.c.l.b16 %v3863
    %v4998 = vunpack.c.h.b16 %v3863
    %v4999 = vunpack.c.l.b16 %v3864
    %v5000 = vunpack.c.h.b16 %v3864
    %v5001 = vunpack.c.l.b16 %v3865
    %v5002 = vunpack.c.h.b16 %v3865
    %v5003 = vunpack.c.l.b16 %v3866
    %v5004 = vunpack.c.h.b16 %v3866
    %v5005 = vunpack.c.l.b16 %v3867
    %v5006 = vunpack.c.h.b16 %v3867
    %v5007 = vunpack.c.l.b16 %v3868
    %v5008 = vunpack.c.h.b16 %v3868
    %v5009 = vunpack.c.l.b16 %v3869
    %v5010 = vunpack.c.h.b16 %v3869
    %v5011 = vunpack.c.l.b16 %v3870
    %v5012 = vunpack.c.h.b16 %v3870
    %v5013 = vunpack.c.l.b16 %v3871
    %v5014 = vunpack.c.h.b16 %v3871
    %v5015 = vunpack.c.l.b16 %v3872
    %v5016 = vunpack.c.h.b16 %v3872
    %v5017 = vunpack.c.l.b16 %v3873
    %v5018 = vunpack.c.h.b16 %v3873
    %v5019 = vunpack.c.l.b16 %v3874
    %v5020 = vunpack.c.h.b16 %v3874
    %v5021 = vunpack.c.l.b16 %v3875
    %v5022 = vunpack.c.h.b16 %v3875
    %v5023 = vunpack.c.l.b16 %v3876
    %v5024 = vunpack.c.h.b16 %v3876
    %v5025 = vunpack.c.l.b16 %v3877
    %v5026 = vunpack.c.h.b16 %v3877
    %v5027 = vunpack.c.l.b16 %v3878
    %v5028 = vunpack.c.h.b16 %v3878
    %v5029 = vunpack.c.l.b16 %v3879
    %v5030 = vunpack.c.h.b16 %v3879
    %v5031 = vunpack.c.l.b16 %v3880
    %v5032 = vunpack.c.h.b16 %v3880
    %v5033 = vunpack.c.l.b16 %v3881
    %v5034 = vunpack.c.h.b16 %v3881
    %v5035 = vunpack.c.l.b16 %v3882
    %v5036 = vunpack.c.h.b16 %v3882
    %v5037 = vunpack.c.l.b16 %v3883
    %v5038 = vunpack.c.h.b16 %v3883
    %v5039 = vunpack.c.l.b16 %v3884
    %v5040 = vunpack.c.h.b16 %v3884
    %v5041 = vunpack.c.l.b16 %v3885
    %v5042 = vunpack.c.h.b16 %v3885
    %v5043 = vunpack.c.l.b16 %v3886
    %v5044 = vunpack.c.h.b16 %v3886
    %v5045 = vunpack.c.l.b16 %v3887
    %v5046 = vunpack.c.h.b16 %v3887
    %v5047 = vunpack.c.l.b16 %v3888
    %v5048 = vunpack.c.h.b16 %v3888
    %v5049 = vunpack.c.l.b16 %v3889
    %v5050 = vunpack.c.h.b16 %v3889
    %v5051 = vunpack.c.l.b16 %v3890
    %v5052 = vunpack.c.h.b16 %v3890
    %v5053 = vunpack.c.l.b16 %v3891
    %v5054 = vunpack.c.h.b16 %v3891
    %v5055 = vunpack.c.l.b16 %v3892
    %v5056 = vunpack.c.h.b16 %v3892
    %v5057 = vunpack.c.l.b16 %v3893
    %v5058 = vunpack.c.h.b16 %v3893
    %v5059 = vunpack.c.l.b16 %v3894
    %v5060 = vunpack.c.h.b16 %v3894
    %v5061 = vunpack.c.l.b16 %v3895
    %v5062 = vunpack.c.h.b16 %v3895
    %v5063 = vunpack.c.l.b16 %v3896
    %v5064 = vunpack.c.h.b16 %v3896
    %v5065 = vunpack.c.l.b16 %v3897
    %v5066 = vunpack.c.h.b16 %v3897
    %v5067 = vunpack.c.l.b16 %v3898
    %v5068 = vunpack.c.h.b16 %v3898
    %v5069 = vunpack.c.l.b16 %v3899
    %v5070 = vunpack.c.h.b16 %v3899
    %v5071 = vunpack.c.l.b16 %v3900
    %v5072 = vunpack.c.h.b16 %v3900
    %v5073 = vunpack.c.l.b16 %v3901
    %v5074 = vunpack.c.h.b16 %v3901
    %v5075 = vunpack.c.l.b16 %v3902
    %v5076 = vunpack.c.h.b16 %v3902
    %v5077 = vunpack.c.l.b16 %v3903
    %v5078 = vunpack.c.h.b16 %v3903
    %v5079 = vunpack.c.l.b16 %v3904
    %v5080 = vunpack.c.h.b16 %v3904
    %v5081 = vunpack.c.l.b16 %v3905
    %v5082 = vunpack.c.h.b16 %v3905
    %v5083 = vunpack.c.l.b16 %v3906
    %v5084 = vunpack.c.h.b16 %v3906
    %v5085 = vunpack.c.l.b16 %v3907
    %v5086 = vunpack.c.h.b16 %v3907
    %v5087 = vunpack.c.l.b16 %v3908
    %v5088 = vunpack.c.h.b16 %v3908
    %v5089 = vunpack.c.l.b16 %v3909
    %v5090 = vunpack.c.h.b16 %v3909
    %v5091 = vunpack.c.l.b16 %v3910
    %v5092 = vunpack.c.h.b16 %v3910
    %v5093 = vunpack.c.l.b16 %v3911
    %v5094 = vunpack.c.h.b16 %v3911
    %v5095 = vunpack.c.l.b16 %v3912
    %v5096 = vunpack.c.h.b16 %v3912
    %v5097 = vunpack.c.l.b16 %v3913
    %v5098 = vunpack.c.h.b16 %v3913
    %v5099 = vunpack.c.l.b16 %v3914
    %v5100 = vunpack.c.h.b16 %v3914
    %v5101 = vunpack.c.l.b16 %v3915
    %v5102 = vunpack.c.h.b16 %v3915
    %v5103 = vunpack.c.l.b16 %v3916
    %v5104 = vunpack.c.h.b16 %v3916
    %v5105 = vunpack.c.l.b16 %v3917
    %v5106 = vunpack.c.h.b16 %v3917
    %v5107 = vunpack.c.l.b16 %v3918
    %v5108 = vunpack.c.h.b16 %v3918
    %v5109 = vunpack.c.l.b16 %v3919
    %v5110 = vunpack.c.h.b16 %v3919
    %v5111 = vunpack.c.l.b16 %v3920
    %v5112 = vunpack.c.h.b16 %v3920
    %v5113 = vunpack.c.l.b16 %v3921
    %v5114 = vunpack.c.h.b16 %v3921
    %v5115 = vunpack.c.l.b16 %v3922
    %v5116 = vunpack.c.h.b16 %v3922
    %v5117 = vunpack.c.l.b16 %v3923
    %v5118 = vunpack.c.h.b16 %v3923
    %v5119 = vunpack.c.l.b16 %v3924
    %v5120 = vunpack.c.h.b16 %v3924
    %v5121 = vunpack.c.l.b16 %v3925
    %v5122 = vunpack.c.h.b16 %v3925
    %v5123 = vunpack.c.l.b16 %v3926
    %v5124 = vunpack.c.h.b16 %v3926
    %v5125 = vunpack.c.l.b16 %v3927
    %v5126 = vunpack.c.h.b16 %v3927
    %v5127 = vpack.c.b16 %v4571, %v4567
    %v5128 = vpack.c.b16 %v4572, %v4568
    %v5129 = vpack.c.b16 %v4573, %v4569
    %v5130 = vpack.c.b16 %v4574, %v4570
    %v5131 = vpack.c.b16 %v4579, %v4575
    %v5132 = vpack.c.b16 %v4580, %v4576
    %v5133 = vpack.c.b16 %v4581, %v4577
    %v5134 = vpack.c.b16 %v4582, %v4578
    %v5135 = vpack.c.b16 %v4587, %v4583
    %v5136 = vpack.c.b16 %v4588, %v4584
    %v5137 = vpack.c.b16 %v4589, %v4585
    %v5138 = vpack.c.b16 %v4590, %v4586
    %v5139 = vpack.c.b16 %v4595, %v4591
    %v5140 = vpack.c.b16 %v4596, %v4592
    %v5141 = vpack.c.b16 %v4597, %v4593
    %v5142 = vpack.c.b16 %v4598, %v4594
    %v5143 = vpack.c.b16 %v4603, %v4599
    %v5144 = vpack.c.b16 %v4604, %v4600
    %v5145 = vpack.c.b16 %v4605, %v4601
    %v5146 = vpack.c.b16 %v4606, %v4602
    %v5147 = vpack.c.b16 %v4611, %v4607
    %v5148 = vpack.c.b16 %v4612, %v4608
    %v5149 = vpack.c.b16 %v4613, %v4609
    %v5150 = vpack.c.b16 %v4614, %v4610
    %v5151 = vpack.c.b16 %v4619, %v4615
    %v5152 = vpack.c.b16 %v4620, %v4616
    %v5153 = vpack.c.b16 %v4621, %v4617
    %v5154 = vpack.c.b16 %v4622, %v4618
    %v5155 = vpack.c.b16 %v4627, %v4623
    %v5156 = vpack.c.b16 %v4628, %v4624
    %v5157 = vpack.c.b16 %v4629, %v4625
    %v5158 = vpack.c.b16 %v4630, %v4626
    %v5159 = vpack.c.b16 %v4635, %v4631
    %v5160 = vpack.c.b16 %v4636, %v4632
    %v5161 = vpack.c.b16 %v4637, %v4633
    %v5162 = vpack.c.b16 %v4638, %v4634
    %v5163 = vpack.c.b16 %v4643, %v4639
    %v5164 = vpack.c.b16 %v4644, %v4640
    %v5165 = vpack.c.b16 %v4645, %v4641
    %v5166 = vpack.c.b16 %v4646, %v4642
    %v5167 = vpack.c.b16 %v4651, %v4647
    %v5168 = vpack.c.b16 %v4652, %v4648
    %v5169 = vpack.c.b16 %v4653, %v4649
    %v5170 = vpack.c.b16 %v4654, %v4650
    %v5171 = vpack.c.b16 %v4659, %v4655
    %v5172 = vpack.c.b16 %v4660, %v4656
    %v5173 = vpack.c.b16 %v4661, %v4657
    %v5174 = vpack.c.b16 %v4662, %v4658
    %v5175 = vpack.c.b16 %v4667, %v4663
    %v5176 = vpack.c.b16 %v4668, %v4664
    %v5177 = vpack.c.b16 %v4669, %v4665
    %v5178 = vpack.c.b16 %v4670, %v4666
    %v5179 = vpack.c.b16 %v4675, %v4671
    %v5180 = vpack.c.b16 %v4676, %v4672
    %v5181 = vpack.c.b16 %v4677, %v4673
    %v5182 = vpack.c.b16 %v4678, %v4674
    %v5183 = vpack.c.b16 %v4683, %v4679
    %v5184 = vpack.c.b16 %v4684, %v4680
    %v5185 = vpack.c.b16 %v4685, %v4681
    %v5186 = vpack.c.b16 %v4686, %v4682
    %v5187 = vpack.c.b16 %v4691, %v4687
    %v5188 = vpack.c.b16 %v4692, %v4688
    %v5189 = vpack.c.b16 %v4693, %v4689
    %v5190 = vpack.c.b16 %v4694, %v4690
    %v5191 = vpack.c.b16 %v4699, %v4695
    %v5192 = vpack.c.b16 %v4700, %v4696
    %v5193 = vpack.c.b16 %v4701, %v4697
    %v5194 = vpack.c.b16 %v4702, %v4698
    %v5195 = vpack.c.b16 %v4707, %v4703
    %v5196 = vpack.c.b16 %v4708, %v4704
    %v5197 = vpack.c.b16 %v4709, %v4705
    %v5198 = vpack.c.b16 %v4710, %v4706
    %v5199 = vpack.c.b16 %v4715, %v4711
    %v5200 = vpack.c.b16 %v4716, %v4712
    %v5201 = vpack.c.b16 %v4717, %v4713
    %v5202 = vpack.c.b16 %v4718, %v4714
    %v5203 = vpack.c.b16 %v4723, %v4719
    %v5204 = vpack.c.b16 %v4724, %v4720
    %v5205 = vpack.c.b16 %v4725, %v4721
    %v5206 = vpack.c.b16 %v4726, %v4722
    %v5207 = vpack.c.b16 %v4731, %v4727
    %v5208 = vpack.c.b16 %v4732, %v4728
    %v5209 = vpack.c.b16 %v4733, %v4729
    %v5210 = vpack.c.b16 %v4734, %v4730
    %v5211 = vpack.c.b16 %v4739, %v4735
    %v5212 = vpack.c.b16 %v4740, %v4736
    %v5213 = vpack.c.b16 %v4741, %v4737
    %v5214 = vpack.c.b16 %v4742, %v4738
    %v5215 = vpack.c.b16 %v4747, %v4743
    %v5216 = vpack.c.b16 %v4748, %v4744
    %v5217 = vpack.c.b16 %v4749, %v4745
    %v5218 = vpack.c.b16 %v4750, %v4746
    %v5219 = vpack.c.b16 %v4755, %v4751
    %v5220 = vpack.c.b16 %v4756, %v4752
    %v5221 = vpack.c.b16 %v4757, %v4753
    %v5222 = vpack.c.b16 %v4758, %v4754
    %v5223 = vpack.c.b16 %v4763, %v4759
    %v5224 = vpack.c.b16 %v4764, %v4760
    %v5225 = vpack.c.b16 %v4765, %v4761
    %v5226 = vpack.c.b16 %v4766, %v4762
    %v5227 = vpack.c.b16 %v4771, %v4767
    %v5228 = vpack.c.b16 %v4772, %v4768
    %v5229 = vpack.c.b16 %v4773, %v4769
    %v5230 = vpack.c.b16 %v4774, %v4770
    %v5231 = vpack.c.b16 %v4779, %v4775
    %v5232 = vpack.c.b16 %v4780, %v4776
    %v5233 = vpack.c.b16 %v4781, %v4777
    %v5234 = vpack.c.b16 %v4782, %v4778
    %v5235 = vpack.c.b16 %v4787, %v4783
    %v5236 = vpack.c.b16 %v4788, %v4784
    %v5237 = vpack.c.b16 %v4789, %v4785
    %v5238 = vpack.c.b16 %v4790, %v4786
    %v5239 = vpack.c.b16 %v4795, %v4791
    %v5240 = vpack.c.b16 %v4796, %v4792
    %v5241 = vpack.c.b16 %v4797, %v4793
    %v5242 = vpack.c.b16 %v4798, %v4794
    %v5243 = vpack.c.b16 %v4803, %v4799
    %v5244 = vpack.c.b16 %v4804, %v4800
    %v5245 = vpack.c.b16 %v4805, %v4801
    %v5246 = vpack.c.b16 %v4806, %v4802
    %v5247 = vpack.c.b16 %v4811, %v4807
    %v5248 = vpack.c.b16 %v4812, %v4808
    %v5249 = vpack.c.b16 %v4813, %v4809
    %v5250 = vpack.c.b16 %v4814, %v4810
    %v5251 = vpack.c.b16 %v4819, %v4815
    %v5252 = vpack.c.b16 %v4820, %v4816
    %v5253 = vpack.c.b16 %v4821, %v4817
    %v5254 = vpack.c.b16 %v4822, %v4818
    %v5255 = vpack.c.b16 %v4827, %v4823
    %v5256 = vpack.c.b16 %v4828, %v4824
    %v5257 = vpack.c.b16 %v4829, %v4825
    %v5258 = vpack.c.b16 %v4830, %v4826
    %v5259 = vpack.c.b16 %v4835, %v4831
    %v5260 = vpack.c.b16 %v4836, %v4832
    %v5261 = vpack.c.b16 %v4837, %v4833
    %v5262 = vpack.c.b16 %v4838, %v4834
    %v5263 = vpack.c.b16 %v4843, %v4839
    %v5264 = vpack.c.b16 %v4844, %v4840
    %v5265 = vpack.c.b16 %v4845, %v4841
    %v5266 = vpack.c.b16 %v4846, %v4842
    %v5267 = vpack.c.b16 %v4851, %v4847
    %v5268 = vpack.c.b16 %v4852, %v4848
    %v5269 = vpack.c.b16 %v4853, %v4849
    %v5270 = vpack.c.b16 %v4854, %v4850
    %v5271 = vpack.c.b16 %v4859, %v4855
    %v5272 = vpack.c.b16 %v4860, %v4856
    %v5273 = vpack.c.b16 %v4861, %v4857
    %v5274 = vpack.c.b16 %v4862, %v4858
    %v5275 = vpack.c.b16 %v4867, %v4863
    %v5276 = vpack.c.b16 %v4868, %v4864
    %v5277 = vpack.c.b16 %v4869, %v4865
    %v5278 = vpack.c.b16 %v4870, %v4866
    %v5279 = vpack.c.b16 %v4875, %v4871
    %v5280 = vpack.c.b16 %v4876, %v4872
    %v5281 = vpack.c.b16 %v4877, %v4873
    %v5282 = vpack.c.b16 %v4878, %v4874
    %v5283 = vpack.c.b16 %v4883, %v4879
    %v5284 = vpack.c.b16 %v4884, %v4880
    %v5285 = vpack.c.b16 %v4885, %v4881
    %v5286 = vpack.c.b16 %v4886, %v4882
    %v5287 = vpack.c.b16 %v4891, %v4887
    %v5288 = vpack.c.b16 %v4892, %v4888
    %v5289 = vpack.c.b16 %v4893, %v4889
    %v5290 = vpack.c.b16 %v4894, %v4890
    %v5291 = vpack.c.b16 %v4899, %v4895
    %v5292 = vpack.c.b16 %v4900, %v4896
    %v5293 = vpack.c.b16 %v4901, %v4897
    %v5294 = vpack.c.b16 %v4902, %v4898
    %v5295 = vpack.c.b16 %v4907, %v4903
    %v5296 = vpack.c.b16 %v4908, %v4904
    %v5297 = vpack.c.b16 %v4909, %v4905
    %v5298 = vpack.c.b16 %v4910, %v4906
    %v5299 = vpack.c.b16 %v4915, %v4911
    %v5300 = vpack.c.b16 %v4916, %v4912
    %v5301 = vpack.c.b16 %v4917, %v4913
    %v5302 = vpack.c.b16 %v4918, %v4914
    %v5303 = vpack.c.b16 %v4923, %v4919
    %v5304 = vpack.c.b16 %v4924, %v4920
    %v5305 = vpack.c.b16 %v4925, %v4921
    %v5306 = vpack.c.b16 %v4926, %v4922
    %v5307 = vpack.c.b16 %v4931, %v4927
    %v5308 = vpack.c.b16 %v4932, %v4928
    %v5309 = vpack.c.b16 %v4933, %v4929
    %v5310 = vpack.c.b16 %v4934, %v4930
    %v5311 = vpack.c.b16 %v4939, %v4935
    %v5312 = vpack.c.b16 %v4940, %v4936
    %v5313 = vpack.c.b16 %v4941, %v4937
    %v5314 = vpack.c.b16 %v4942, %v4938
    %v5315 = vpack.c.b16 %v4947, %v4943
    %v5316 = vpack.c.b16 %v4948, %v4944
    %v5317 = vpack.c.b16 %v4949, %v4945
    %v5318 = vpack.c.b16 %v4950, %v4946
    %v5319 = vpack.c.b16 %v4955, %v4951
    %v5320 = vpack.c.b16 %v4956, %v4952
    %v5321 = vpack.c.b16 %v4957, %v4953
    %v5322 = vpack.c.b16 %v4958, %v4954
    %v5323 = vpack.c.b16 %v4963, %v4959
    %v5324 = vpack.c.b16 %v4964, %v4960
    %v5325 = vpack.c.b16 %v4965, %v4961
    %v5326 = vpack.c.b16 %v4966, %v4962
    %v5327 = vpack.c.b16 %v4971, %v4967
    %v5328 = vpack.c.b16 %v4972, %v4968
    %v5329 = vpack.c.b16 %v4973, %v4969
    %v5330 = vpack.c.b16 %v4974, %v4970
    %v5331 = vpack.c.b16 %v4979, %v4975
    %v5332 = vpack.c.b16 %v4980, %v4976
    %v5333 = vpack.c.b16 %v4981, %v4977
    %v5334 = vpack.c.b16 %v4982, %v4978
    %v5335 = vpack.c.b16 %v4987, %v4983
    %v5336 = vpack.c.b16 %v4988, %v4984
    %v5337 = vpack.c.b16 %v4989, %v4985
    %v5338 = vpack.c.b16 %v4990, %v4986
    %v5339 = vpack.c.b16 %v4995, %v4991
    %v5340 = vpack.c.b16 %v4996, %v4992
    %v5341 = vpack.c.b16 %v4997, %v4993
    %v5342 = vpack.c.b16 %v4998, %v4994
    %v5343 = vpack.c.b16 %v5003, %v4999
    %v5344 = vpack.c.b16 %v5004, %v5000
    %v5345 = vpack.c.b16 %v5005, %v5001
    %v5346 = vpack.c.b16 %v5006, %v5002
    %v5347 = vpack.c.b16 %v5011, %v5007
    %v5348 = vpack.c.b16 %v5012, %v5008
    %v5349 = vpack.c.b16 %v5013, %v5009
    %v5350 = vpack.c.b16 %v5014, %v5010
    %v5351 = vpack.c.b16 %v5019, %v5015
    %v5352 = vpack.c.b16 %v5020, %v5016
    %v5353 = vpack.c.b16 %v5021, %v5017
    %v5354 = vpack.c.b16 %v5022, %v5018
    %v5355 = vpack.c.b16 %v5027, %v5023
    %v5356 = vpack.c.b16 %v5028, %v5024
    %v5357 = vpack.c.b16 %v5029, %v5025
    %v5358 = vpack.c.b16 %v5030, %v5026
    %v5359 = vpack.c.b16 %v5035, %v5031
    %v5360 = vpack.c.b16 %v5036, %v5032
    %v5361 = vpack.c.b16 %v5037, %v5033
    %v5362 = vpack.c.b16 %v5038, %v5034
    %v5363 = vpack.c.b16 %v5043, %v5039
    %v5364 = vpack.c.b16 %v5044, %v5040
    %v5365 = vpack.c.b16 %v5045, %v5041
    %v5366 = vpack.c.b16 %v5046, %v5042
    %v5367 = vpack.c.b16 %v5051, %v5047
    %v5368 = vpack.c.b16 %v5052, %v5048
    %v5369 = vpack.c.b16 %v5053, %v5049
    %v5370 = vpack.c.b16 %v5054, %v5050
    %v5371 = vpack.c.b16 %v5059, %v5055
    %v5372 = vpack.c.b16 %v5060, %v5056
    %v5373 = vpack.c.b16 %v5061, %v5057
    %v5374 = vpack.c.b16 %v5062, %v5058
    %v5375 = vpack.c.b16 %v5067, %v5063
    %v5376 = vpack.c.b16 %v5068, %v5064
    %v5377 = vpack.c.b16 %v5069, %v5065
    %v5378 = vpack.c.b16 %v5070, %v5066
    %v5379 = vpack.c.b16 %v5075, %v5071
    %v5380 = vpack.c.b16 %v5076, %v5072
    %v5381 = vpack.c.b16 %v5077, %v5073
    %v5382 = vpack.c.b16 %v5078, %v5074
    %v5383 = vpack.c.b16 %v5083, %v5079
    %v5384 = vpack.c.b16 %v5084, %v5080
    %v5385 = vpack.c.b16 %v5085, %v5081
    %v5386 = vpack.c.b16 %v5086, %v5082
    %v5387 = vpack.c.b16 %v5091, %v5087
    %v5388 = vpack.c.b16 %v5092, %v5088
    %v5389 = vpack.c.b16 %v5093, %v5089
    %v5390 = vpack.c.b16 %v5094, %v5090
    %v5391 = vpack.c.b16 %v5099, %v5095
    %v5392 = vpack.c.b16 %v5100, %v5096
    %v5393 = vpack.c.b16 %v5101, %v5097
    %v5394 = vpack.c.b16 %v5102, %v5098
    %v5395 = vpack.c.b16 %v5107, %v5103
    %v5396 = vpack.c.b16 %v5108, %v5104
    %v5397 = vpack.c.b16 %v5109, %v5105
    %v5398 = vpack.c.b16 %v5110, %v5106
    %v5399 = vpack.c.b16 %v5115, %v5111
    %v5400 = vpack.c.b16 %v5116, %v5112
    %v5401 = vpack.c.b16 %v5117, %v5113
    %v5402 = vpack.c.b16 %v5118, %v5114
    %v5403 = vpack.c.b16 %v5123, %v5119
    %v5404 = vpack.c.b16 %v5124, %v5120
    %v5405 = vpack.c.b16 %v5125, %v5121
    %v5406 = vpack.c.b16 %v5126, %v5122
    %vm5687 = vcmask 785408
    %v5689 = vsel %vm5687, %v4112, 0
    %v5692 = vsel %vm5687, %v4270, 0
    %5694 = vmatprep.subr.bf16.mxu0 %v5128
    %5695 = vmatpush1.bf16.msra.mxu0 %v5127
    %5696 = vmatprep.subr.bf16.mxu0 %v5132
    %5697 = vmatpush1.bf16.msra.mxu0 %v5131
    %5698 = vmatprep.subr.bf16.mxu0 %v5136
    %5699 = vmatpush1.bf16.msra.mxu0 %v5135
    %5700 = vmatprep.subr.bf16.mxu0 %v5140
    %5701 = vmatpush1.bf16.msra.mxu0 %v5139
    %5702 = vmatprep.subr.bf16.mxu0 %v5144
    %5703 = vmatpush1.bf16.msra.mxu0 %v5143
    %5704 = vmatprep.subr.bf16.mxu0 %v5148
    %5705 = vmatpush1.bf16.msra.mxu0 %v5147
    %5706 = vmatprep.subr.bf16.mxu0 %v5152
    %5707 = vmatpush1.bf16.msra.mxu0 %v5151
    %5708 = vmatprep.subr.bf16.mxu0 %v5156
    %5709 = vmatpush1.bf16.msra.mxu0 %v5155
    %5710 = vmatprep.subr.bf16.mxu0 %v5160
    %5711 = vmatpush1.bf16.msra.mxu0 %v5159
    %5712 = vmatprep.subr.bf16.mxu0 %v5164
    %5713 = vmatpush1.bf16.msra.mxu0 %v5163
    %5714 = vmatprep.subr.bf16.mxu0 %v5168
    %5715 = vmatpush1.bf16.msra.mxu0 %v5167
    %5716 = vmatprep.subr.bf16.mxu0 %v5172
    %5717 = vmatpush1.bf16.msra.mxu0 %v5171
    %5718 = vmatprep.subr.bf16.mxu0 %v5176
    %5719 = vmatpush1.bf16.msra.mxu0 %v5175
    %5720 = vmatprep.subr.bf16.mxu0 %v5180
    %5721 = vmatpush1.bf16.msra.mxu0 %v5179
    %5722 = vmatprep.subr.bf16.mxu0 %v5184
    %5723 = vmatpush1.bf16.msra.mxu0 %v5183
    %5724 = vmatprep.subr.bf16.mxu0 %v5188
    %5725 = vmatpush1.bf16.msra.mxu0 %v5187
    %5726 = vmatprep.mubr.bf16.mxu0 %v4060
    %5727 = vmatmul.mubr.bf16.gmra.mrb[0].mxu0 %v4056
    %v5728 = vpop.f32.mrb[0].mxu0
    %v5729 = vadd.f32 0.0, %v5728
    %v5730 = vpop.f32.mrb[0].mxu0
    %v5731 = vadd.f32 0.0, %v5730
    %v5732 = vpop.f32.mrb[0].mxu0
    %v5733 = vadd.f32 0.0, %v5732
    %v5734 = vpop.f32.mrb[0].mxu0
    %v5735 = vadd.f32 0.0, %v5734
    %5736 = vmatprep.mubr.bf16.mxu0 %v4227
    %5737 = vmatmul.mubr.bf16.gmra.mrb[0].mxu0 %v4223
    %v5738 = vpop.f32.mrb[0].mxu0
    %v5739 = vadd.f32 0.0, %v5738
    %v5740 = vpop.f32.mrb[0].mxu0
    %v5741 = vadd.f32 0.0, %v5740
    %v5742 = vpop.f32.mrb[0].mxu0
    %v5743 = vadd.f32 0.0, %v5742
    %v5744 = vpop.f32.mrb[0].mxu0
    %v5745 = vadd.f32 0.0, %v5744
    %5746 = vdwg.mxu0
    %5747 = vmatprep.subr.bf16.mxu0 %v5192
    %5748 = vmatpush1.bf16.msra.mxu0 %v5191
    %5749 = vmatprep.subr.bf16.mxu0 %v5196
    %5750 = vmatpush1.bf16.msra.mxu0 %v5195
    %5751 = vmatprep.subr.bf16.mxu0 %v5200
    %5752 = vmatpush1.bf16.msra.mxu0 %v5199
    %5753 = vmatprep.subr.bf16.mxu0 %v5204
    %5754 = vmatpush1.bf16.msra.mxu0 %v5203
    %5755 = vmatprep.subr.bf16.mxu0 %v5208
    %5756 = vmatpush1.bf16.msra.mxu0 %v5207
    %5757 = vmatprep.subr.bf16.mxu0 %v5212
    %5758 = vmatpush1.bf16.msra.mxu0 %v5211
    %5759 = vmatprep.subr.bf16.mxu0 %v5216
    %5760 = vmatpush1.bf16.msra.mxu0 %v5215
    %5761 = vmatprep.subr.bf16.mxu0 %v5220
    %5762 = vmatpush1.bf16.msra.mxu0 %v5219
    %5763 = vmatprep.subr.bf16.mxu0 %v5224
    %5764 = vmatpush1.bf16.msra.mxu0 %v5223
    %5765 = vmatprep.subr.bf16.mxu0 %v5228
    %5766 = vmatpush1.bf16.msra.mxu0 %v5227
    %5767 = vmatprep.subr.bf16.mxu0 %v5232
    %5768 = vmatpush1.bf16.msra.mxu0 %v5231
    %5769 = vmatprep.subr.bf16.mxu0 %v5236
    %5770 = vmatpush1.bf16.msra.mxu0 %v5235
    %5771 = vmatprep.subr.bf16.mxu0 %v5240
    %5772 = vmatpush1.bf16.msra.mxu0 %v5239
    %5773 = vmatprep.subr.bf16.mxu0 %v5244
    %5774 = vmatpush1.bf16.msra.mxu0 %v5243
    %5775 = vmatprep.subr.bf16.mxu0 %v5248
    %5776 = vmatpush1.bf16.msra.mxu0 %v5247
    %5777 = vmatprep.subr.bf16.mxu0 %v5252
    %5778 = vmatpush1.bf16.msra.mxu0 %v5251
    %5779 = vmatprep.mubr.bf16.mxu0 %v4061
    %5780 = vmatmul.mubr.bf16.gmra.mrb[0].mxu0 %v4057
    %v5781 = vpop.f32.mrb[0].mxu0
    %v5782 = vadd.f32 %v5729, %v5781
    %v5783 = vpop.f32.mrb[0].mxu0
    %v5784 = vadd.f32 %v5731, %v5783
    %v5785 = vpop.f32.mrb[0].mxu0
    %v5786 = vadd.f32 %v5733, %v5785
    %v5787 = vpop.f32.mrb[0].mxu0
    %v5788 = vadd.f32 %v5735, %v5787
    %5789 = vmatprep.mubr.bf16.mxu0 %v4228
    %5790 = vmatmul.mubr.bf16.gmra.mrb[0].mxu0 %v4224
    %v5791 = vpop.f32.mrb[0].mxu0
    %v5792 = vadd.f32 %v5739, %v5791
    %v5793 = vpop.f32.mrb[0].mxu0
    %v5794 = vadd.f32 %v5741, %v5793
    %v5795 = vpop.f32.mrb[0].mxu0
    %v5796 = vadd.f32 %v5743, %v5795
    %v5797 = vpop.f32.mrb[0].mxu0
    %v5798 = vadd.f32 %v5745, %v5797
    %5799 = vdwg.mxu0
    %5800 = vmatprep.subr.bf16.mxu0 %v5256
    %5801 = vmatpush1.bf16.msra.mxu0 %v5255
    %5802 = vmatprep.subr.bf16.mxu0 %v5260
    %5803 = vmatpush1.bf16.msra.mxu0 %v5259
    %5804 = vmatprep.subr.bf16.mxu0 %v5264
    %5805 = vmatpush1.bf16.msra.mxu0 %v5263
    %5806 = vmatprep.subr.bf16.mxu0 %v5268
    %5807 = vmatpush1.bf16.msra.mxu0 %v5267
    %5808 = vmatprep.subr.bf16.mxu0 %v5272
    %5809 = vmatpush1.bf16.msra.mxu0 %v5271
    %5810 = vmatprep.subr.bf16.mxu0 %v5276
    %5811 = vmatpush1.bf16.msra.mxu0 %v5275
    %5812 = vmatprep.subr.bf16.mxu0 %v5280
    %5813 = vmatpush1.bf16.msra.mxu0 %v5279
    %5814 = vmatprep.subr.bf16.mxu0 %v5284
    %5815 = vmatpush1.bf16.msra.mxu0 %v5283
    %5816 = vmatprep.subr.bf16.mxu0 %v5288
    %5817 = vmatpush1.bf16.msra.mxu0 %v5287
    %5818 = vmatprep.subr.bf16.mxu0 %v5292
    %5819 = vmatpush1.bf16.msra.mxu0 %v5291
    %5820 = vmatprep.subr.bf16.mxu0 %v5296
    %5821 = vmatpush1.bf16.msra.mxu0 %v5295
    %5822 = vmatprep.subr.bf16.mxu0 %v5300
    %5823 = vmatpush1.bf16.msra.mxu0 %v5299
    %5824 = vmatprep.subr.bf16.mxu0 %v5304
    %5825 = vmatpush1.bf16.msra.mxu0 %v5303
    %5826 = vmatprep.subr.bf16.mxu0 %v5308
    %5827 = vmatpush1.bf16.msra.mxu0 %v5307
    %5828 = vmatprep.subr.bf16.mxu0 %v5312
    %5829 = vmatpush1.bf16.msra.mxu0 %v5311
    %5830 = vmatprep.subr.bf16.mxu0 %v5316
    %5831 = vmatpush1.bf16.msra.mxu0 %v5315
    %5832 = vmatprep.mubr.bf16.mxu0 %v4062
    %5833 = vmatmul.mubr.bf16.gmra.mrb[0].mxu0 %v4058
    %v5834 = vpop.f32.mrb[0].mxu0
    %v5835 = vadd.f32 %v5782, %v5834
    %v5836 = vpop.f32.mrb[0].mxu0
    %v5837 = vadd.f32 %v5784, %v5836
    %v5838 = vpop.f32.mrb[0].mxu0
    %v5839 = vadd.f32 %v5786, %v5838
    %v5840 = vpop.f32.mrb[0].mxu0
    %v5841 = vadd.f32 %v5788, %v5840
    %5842 = vmatprep.mubr.bf16.mxu0 %v4229
    %5843 = vmatmul.mubr.bf16.gmra.mrb[0].mxu0 %v4225
    %v5844 = vpop.f32.mrb[0].mxu0
    %v5845 = vadd.f32 %v5792, %v5844
    %v5846 = vpop.f32.mrb[0].mxu0
    %v5847 = vadd.f32 %v5794, %v5846
    %v5848 = vpop.f32.mrb[0].mxu0
    %v5849 = vadd.f32 %v5796, %v5848
    %v5850 = vpop.f32.mrb[0].mxu0
    %v5851 = vadd.f32 %v5798, %v5850
    %5852 = vdwg.mxu0
    %5853 = vmatprep.subr.bf16.mxu0 %v5320
    %5854 = vmatpush1.bf16.msra.mxu0 %v5319
    %5855 = vmatprep.subr.bf16.mxu0 %v5324
    %5856 = vmatpush1.bf16.msra.mxu0 %v5323
    %5857 = vmatprep.subr.bf16.mxu0 %v5328
    %5858 = vmatpush1.bf16.msra.mxu0 %v5327
    %5859 = vmatprep.subr.bf16.mxu0 %v5332
    %5860 = vmatpush1.bf16.msra.mxu0 %v5331
    %5861 = vmatprep.subr.bf16.mxu0 %v5336
    %5862 = vmatpush1.bf16.msra.mxu0 %v5335
    %5863 = vmatprep.subr.bf16.mxu0 %v5340
    %5864 = vmatpush1.bf16.msra.mxu0 %v5339
    %5865 = vmatprep.subr.bf16.mxu0 %v5344
    %5866 = vmatpush1.bf16.msra.mxu0 %v5343
    %5867 = vmatprep.subr.bf16.mxu0 %v5348
    %5868 = vmatpush1.bf16.msra.mxu0 %v5347
    %5869 = vmatprep.subr.bf16.mxu0 %v5352
    %5870 = vmatpush1.bf16.msra.mxu0 %v5351
    %5871 = vmatprep.subr.bf16.mxu0 %v5356
    %5872 = vmatpush1.bf16.msra.mxu0 %v5355
    %5873 = vmatprep.subr.bf16.mxu0 %v5360
    %5874 = vmatpush1.bf16.msra.mxu0 %v5359
    %5875 = vmatprep.subr.bf16.mxu0 %v5364
    %5876 = vmatpush1.bf16.msra.mxu0 %v5363
    %5877 = vmatprep.subr.bf16.mxu0 %v5368
    %5878 = vmatpush1.bf16.msra.mxu0 %v5367
    %5879 = vmatprep.subr.bf16.mxu0 %v5372
    %5880 = vmatpush1.bf16.msra.mxu0 %v5371
    %5881 = vmatprep.subr.bf16.mxu0 %v5376
    %5882 = vmatpush1.bf16.msra.mxu0 %v5375
    %5883 = vmatprep.subr.bf16.mxu0 %v5380
    %5884 = vmatpush1.bf16.msra.mxu0 %v5379
    %5885 = vmatprep.mubr.bf16.mxu0 %v4063
    %5886 = vmatmul.mubr.bf16.gmra.mrb[0].mxu0 %v4059
    %v5887 = vpop.f32.mrb[0].mxu0
    %v5888 = vadd.f32 %v5835, %v5887
    %v5889 = vpop.f32.mrb[0].mxu0
    %v5890 = vadd.f32 %v5837, %v5889
    %v5891 = vpop.f32.mrb[0].mxu0
    %v5892 = vadd.f32 %v5839, %v5891
    %v5893 = vpop.f32.mrb[0].mxu0
    %v5894 = vadd.f32 %v5841, %v5893
    %5895 = vmatprep.mubr.bf16.mxu0 %v4230
    %5896 = vmatmul.mubr.bf16.gmra.mrb[0].mxu0 %v4226
    %v5897 = vpop.f32.mrb[0].mxu0
    %v5898 = vadd.f32 %v5845, %v5897
    %v5899 = vpop.f32.mrb[0].mxu0
    %v5900 = vadd.f32 %v5847, %v5899
    %v5901 = vpop.f32.mrb[0].mxu0
    %v5902 = vadd.f32 %v5849, %v5901
    %v5903 = vpop.f32.mrb[0].mxu0
    %v5904 = vadd.f32 %v5851, %v5903
    %5905 = vdwg.mxu0
    %5906 = vmatprep.subr.bf16.mxu0 %v5384
    %5907 = vmatpush1.bf16.msra.mxu0 %v5383
    %5908 = vmatprep.subr.bf16.mxu0 %v5388
    %5909 = vmatpush1.bf16.msra.mxu0 %v5387
    %5910 = vmatprep.subr.bf16.mxu0 %v5392
    %5911 = vmatpush1.bf16.msra.mxu0 %v5391
    %5912 = vmatprep.subr.bf16.mxu0 %v5396
    %5913 = vmatpush1.bf16.msra.mxu0 %v5395
    %5914 = vmatprep.subr.bf16.mxu0 %v5400
    %5915 = vmatpush1.bf16.msra.mxu0 %v5399
    %5916 = vmatprep.subr.bf16.mxu0 %v5404
    %5917 = vmatpush1.bf16.msra.mxu0 %v5403
    %5918 = vmatprep.subr.bf16.mxu0 0
    %5919 = vmatpush1.bf16.msra.mxu0 0
    %5920 = vmatprep.subr.bf16.mxu0 0
    %5921 = vmatpush1.bf16.msra.mxu0 0
    %5922 = vmatprep.subr.bf16.mxu0 0
    %5923 = vmatpush1.bf16.msra.mxu0 0
    %5924 = vmatprep.subr.bf16.mxu0 0
    %5925 = vmatpush1.bf16.msra.mxu0 0
    %5926 = vmatprep.subr.bf16.mxu0 0
    %5927 = vmatpush1.bf16.msra.mxu0 0
    %5928 = vmatprep.subr.bf16.mxu0 0
    %5929 = vmatpush1.bf16.msra.mxu0 0
    %5930 = vmatprep.subr.bf16.mxu0 0
    %5931 = vmatpush1.bf16.msra.mxu0 0
    %5932 = vmatprep.subr.bf16.mxu0 0
    %5933 = vmatpush1.bf16.msra.mxu0 0
    %5934 = vmatprep.subr.bf16.mxu0 0
    %5935 = vmatpush1.bf16.msra.mxu0 0
    %5936 = vmatprep.subr.bf16.mxu0 0
    %5937 = vmatpush1.bf16.msra.mxu0 0
    %5938 = vmatprep.mubr.bf16.mxu0 0
    %5939 = vmatmul.mubr.bf16.gmra.mrb[0].mxu0 %v5689
    %v5940 = vpop.f32.mrb[0].mxu0
    %v5941 = vadd.f32 %v5888, %v5940
    %v5942 = vpop.f32.mrb[0].mxu0
    %v5943 = vadd.f32 %v5890, %v5942
    %v5944 = vpop.f32.mrb[0].mxu0
    %v5945 = vadd.f32 %v5892, %v5944
    %v5946 = vpop.f32.mrb[0].mxu0
    %v5947 = vadd.f32 %v5894, %v5946
    %5948 = vmatprep.mubr.bf16.mxu0 0
    %5949 = vmatmul.mubr.bf16.gmra.mrb[0].mxu0 %v5692
    %v5950 = vpop.f32.mrb[0].mxu0
    %v5951 = vadd.f32 %v5898, %v5950
    %v5952 = vpop.f32.mrb[0].mxu0
    %v5953 = vadd.f32 %v5900, %v5952
    %v5954 = vpop.f32.mrb[0].mxu0
    %v5955 = vadd.f32 %v5902, %v5954
    %v5956 = vpop.f32.mrb[0].mxu0
    %v5957 = vadd.f32 %v5904, %v5956
    %5958 = vdwg.mxu0
    %5959 = vmatprep.subr.bf16.mxu0 %v5130
    %5960 = vmatpush1.bf16.msra.mxu0 %v5129
    %5961 = vmatprep.subr.bf16.mxu0 %v5134
    %5962 = vmatpush1.bf16.msra.mxu0 %v5133
    %5963 = vmatprep.subr.bf16.mxu0 %v5138
    %5964 = vmatpush1.bf16.msra.mxu0 %v5137
    %5965 = vmatprep.subr.bf16.mxu0 %v5142
    %5966 = vmatpush1.bf16.msra.mxu0 %v5141
    %5967 = vmatprep.subr.bf16.mxu0 %v5146
    %5968 = vmatpush1.bf16.msra.mxu0 %v5145
    %5969 = vmatprep.subr.bf16.mxu0 %v5150
    %5970 = vmatpush1.bf16.msra.mxu0 %v5149
    %5971 = vmatprep.subr.bf16.mxu0 %v5154
    %5972 = vmatpush1.bf16.msra.mxu0 %v5153
    %5973 = vmatprep.subr.bf16.mxu0 %v5158
    %5974 = vmatpush1.bf16.msra.mxu0 %v5157
    %5975 = vmatprep.subr.bf16.mxu0 %v5162
    %5976 = vmatpush1.bf16.msra.mxu0 %v5161
    %5977 = vmatprep.subr.bf16.mxu0 %v5166
    %5978 = vmatpush1.bf16.msra.mxu0 %v5165
    %5979 = vmatprep.subr.bf16.mxu0 %v5170
    %5980 = vmatpush1.bf16.msra.mxu0 %v5169
    %5981 = vmatprep.subr.bf16.mxu0 %v5174
    %5982 = vmatpush1.bf16.msra.mxu0 %v5173
    %5983 = vmatprep.subr.bf16.mxu0 %v5178
    %5984 = vmatpush1.bf16.msra.mxu0 %v5177
    %5985 = vmatprep.subr.bf16.mxu0 %v5182
    %5986 = vmatpush1.bf16.msra.mxu0 %v5181
    %5987 = vmatprep.subr.bf16.mxu0 %v5186
    %5988 = vmatpush1.bf16.msra.mxu0 %v5185
    %5989 = vmatprep.subr.bf16.mxu0 %v5190
    %5990 = vmatpush1.bf16.msra.mxu0 %v5189
    %5991 = vmatprep.mubr.bf16.mxu0 %v4060
    %5992 = vmatmul.mubr.bf16.gmra.mrb[0].mxu0 %v4056
    %v5993 = vpop.f32.mrb[0].mxu0
    %v5994 = vadd.f32 0.0, %v5993
    %v5995 = vpop.f32.mrb[0].mxu0
    %v5996 = vadd.f32 0.0, %v5995
    %v5997 = vpop.f32.mrb[0].mxu0
    %v5998 = vadd.f32 0.0, %v5997
    %v5999 = vpop.f32.mrb[0].mxu0
    %v6000 = vadd.f32 0.0, %v5999
    %6001 = vmatprep.mubr.bf16.mxu0 %v4227
    %6002 = vmatmul.mubr.bf16.gmra.mrb[0].mxu0 %v4223
    %v6003 = vpop.f32.mrb[0].mxu0
    %v6004 = vadd.f32 0.0, %v6003
    %v6005 = vpop.f32.mrb[0].mxu0
    %v6006 = vadd.f32 0.0, %v6005
    %v6007 = vpop.f32.mrb[0].mxu0
    %v6008 = vadd.f32 0.0, %v6007
    %v6009 = vpop.f32.mrb[0].mxu0
    %v6010 = vadd.f32 0.0, %v6009
    %6011 = vdwg.mxu0
    %6012 = vmatprep.subr.bf16.mxu0 %v5194
    %6013 = vmatpush1.bf16.msra.mxu0 %v5193
    %6014 = vmatprep.subr.bf16.mxu0 %v5198
    %6015 = vmatpush1.bf16.msra.mxu0 %v5197
    %6016 = vmatprep.subr.bf16.mxu0 %v5202
    %6017 = vmatpush1.bf16.msra.mxu0 %v5201
    %6018 = vmatprep.subr.bf16.mxu0 %v5206
    %6019 = vmatpush1.bf16.msra.mxu0 %v5205
    %6020 = vmatprep.subr.bf16.mxu0 %v5210
    %6021 = vmatpush1.bf16.msra.mxu0 %v5209
    %6022 = vmatprep.subr.bf16.mxu0 %v5214
    %6023 = vmatpush1.bf16.msra.mxu0 %v5213
    %6024 = vmatprep.subr.bf16.mxu0 %v5218
    %6025 = vmatpush1.bf16.msra.mxu0 %v5217
    %6026 = vmatprep.subr.bf16.mxu0 %v5222
    %6027 = vmatpush1.bf16.msra.mxu0 %v5221
    %6028 = vmatprep.subr.bf16.mxu0 %v5226
    %6029 = vmatpush1.bf16.msra.mxu0 %v5225
    %6030 = vmatprep.subr.bf16.mxu0 %v5230
    %6031 = vmatpush1.bf16.msra.mxu0 %v5229
    %6032 = vmatprep.subr.bf16.mxu0 %v5234
    %6033 = vmatpush1.bf16.msra.mxu0 %v5233
    %6034 = vmatprep.subr.bf16.mxu0 %v5238
    %6035 = vmatpush1.bf16.msra.mxu0 %v5237
    %6036 = vmatprep.subr.bf16.mxu0 %v5242
    %6037 = vmatpush1.bf16.msra.mxu0 %v5241
    %6038 = vmatprep.subr.bf16.mxu0 %v5246
    %6039 = vmatpush1.bf16.msra.mxu0 %v5245
    %6040 = vmatprep.subr.bf16.mxu0 %v5250
    %6041 = vmatpush1.bf16.msra.mxu0 %v5249
    %6042 = vmatprep.subr.bf16.mxu0 %v5254
    %6043 = vmatpush1.bf16.msra.mxu0 %v5253
    %6044 = vmatprep.mubr.bf16.mxu0 %v4061
    %6045 = vmatmul.mubr.bf16.gmra.mrb[0].mxu0 %v4057
    %v6046 = vpop.f32.mrb[0].mxu0
    %v6047 = vadd.f32 %v5994, %v6046
    %v6048 = vpop.f32.mrb[0].mxu0
    %v6049 = vadd.f32 %v5996, %v6048
    %v6050 = vpop.f32.mrb[0].mxu0
    %v6051 = vadd.f32 %v5998, %v6050
    %v6052 = vpop.f32.mrb[0].mxu0
    %v6053 = vadd.f32 %v6000, %v6052
    %6054 = vmatprep.mubr.bf16.mxu0 %v4228
    %6055 = vmatmul.mubr.bf16.gmra.mrb[0].mxu0 %v4224
    %v6056 = vpop.f32.mrb[0].mxu0
    %v6057 = vadd.f32 %v6004, %v6056
    %v6058 = vpop.f32.mrb[0].mxu0
    %v6059 = vadd.f32 %v6006, %v6058
    %v6060 = vpop.f32.mrb[0].mxu0
    %v6061 = vadd.f32 %v6008, %v6060
    %v6062 = vpop.f32.mrb[0].mxu0
    %v6063 = vadd.f32 %v6010, %v6062
    %6064 = vdwg.mxu0
    %6065 = vmatprep.subr.bf16.mxu0 %v5258
    %6066 = vmatpush1.bf16.msra.mxu0 %v5257
    %6067 = vmatprep.subr.bf16.mxu0 %v5262
    %6068 = vmatpush1.bf16.msra.mxu0 %v5261
    %6069 = vmatprep.subr.bf16.mxu0 %v5266
    %6070 = vmatpush1.bf16.msra.mxu0 %v5265
    %6071 = vmatprep.subr.bf16.mxu0 %v5270
    %6072 = vmatpush1.bf16.msra.mxu0 %v5269
    %6073 = vmatprep.subr.bf16.mxu0 %v5274
    %6074 = vmatpush1.bf16.msra.mxu0 %v5273
    %6075 = vmatprep.subr.bf16.mxu0 %v5278
    %6076 = vmatpush1.bf16.msra.mxu0 %v5277
    %6077 = vmatprep.subr.bf16.mxu0 %v5282
    %6078 = vmatpush1.bf16.msra.mxu0 %v5281
    %6079 = vmatprep.subr.bf16.mxu0 %v5286
    %6080 = vmatpush1.bf16.msra.mxu0 %v5285
    %6081 = vmatprep.subr.bf16.mxu0 %v5290
    %6082 = vmatpush1.bf16.msra.mxu0 %v5289
    %6083 = vmatprep.subr.bf16.mxu0 %v5294
    %6084 = vmatpush1.bf16.msra.mxu0 %v5293
    %6085 = vmatprep.subr.bf16.mxu0 %v5298
    %6086 = vmatpush1.bf16.msra.mxu0 %v5297
    %6087 = vmatprep.subr.bf16.mxu0 %v5302
    %6088 = vmatpush1.bf16.msra.mxu0 %v5301
    %6089 = vmatprep.subr.bf16.mxu0 %v5306
    %6090 = vmatpush1.bf16.msra.mxu0 %v5305
    %6091 = vmatprep.subr.bf16.mxu0 %v5310
    %6092 = vmatpush1.bf16.msra.mxu0 %v5309
    %6093 = vmatprep.subr.bf16.mxu0 %v5314
    %6094 = vmatpush1.bf16.msra.mxu0 %v5313
    %6095 = vmatprep.subr.bf16.mxu0 %v5318
    %6096 = vmatpush1.bf16.msra.mxu0 %v5317
    %6097 = vmatprep.mubr.bf16.mxu0 %v4062
    %6098 = vmatmul.mubr.bf16.gmra.mrb[0].mxu0 %v4058
    %v6099 = vpop.f32.mrb[0].mxu0
    %v6100 = vadd.f32 %v6047, %v6099
    %v6101 = vpop.f32.mrb[0].mxu0
    %v6102 = vadd.f32 %v6049, %v6101
    %v6103 = vpop.f32.mrb[0].mxu0
    %v6104 = vadd.f32 %v6051, %v6103
    %v6105 = vpop.f32.mrb[0].mxu0
    %v6106 = vadd.f32 %v6053, %v6105
    %6107 = vmatprep.mubr.bf16.mxu0 %v4229
    %6108 = vmatmul.mubr.bf16.gmra.mrb[0].mxu0 %v4225
    %v6109 = vpop.f32.mrb[0].mxu0
    %v6110 = vadd.f32 %v6057, %v6109
    %v6111 = vpop.f32.mrb[0].mxu0
    %v6112 = vadd.f32 %v6059, %v6111
    %v6113 = vpop.f32.mrb[0].mxu0
    %v6114 = vadd.f32 %v6061, %v6113
    %v6115 = vpop.f32.mrb[0].mxu0
    %v6116 = vadd.f32 %v6063, %v6115
    %6117 = vdwg.mxu0
    %6118 = vmatprep.subr.bf16.mxu0 %v5322
    %6119 = vmatpush1.bf16.msra.mxu0 %v5321
    %6120 = vmatprep.subr.bf16.mxu0 %v5326
    %6121 = vmatpush1.bf16.msra.mxu0 %v5325
    %6122 = vmatprep.subr.bf16.mxu0 %v5330
    %6123 = vmatpush1.bf16.msra.mxu0 %v5329
    %6124 = vmatprep.subr.bf16.mxu0 %v5334
    %6125 = vmatpush1.bf16.msra.mxu0 %v5333
    %6126 = vmatprep.subr.bf16.mxu0 %v5338
    %6127 = vmatpush1.bf16.msra.mxu0 %v5337
    %6128 = vmatprep.subr.bf16.mxu0 %v5342
    %6129 = vmatpush1.bf16.msra.mxu0 %v5341
    %6130 = vmatprep.subr.bf16.mxu0 %v5346
    %6131 = vmatpush1.bf16.msra.mxu0 %v5345
    %6132 = vmatprep.subr.bf16.mxu0 %v5350
    %6133 = vmatpush1.bf16.msra.mxu0 %v5349
    %6134 = vmatprep.subr.bf16.mxu0 %v5354
    %6135 = vmatpush1.bf16.msra.mxu0 %v5353
    %6136 = vmatprep.subr.bf16.mxu0 %v5358
    %6137 = vmatpush1.bf16.msra.mxu0 %v5357
    %6138 = vmatprep.subr.bf16.mxu0 %v5362
    %6139 = vmatpush1.bf16.msra.mxu0 %v5361
    %6140 = vmatprep.subr.bf16.mxu0 %v5366
    %6141 = vmatpush1.bf16.msra.mxu0 %v5365
    %6142 = vmatprep.subr.bf16.mxu0 %v5370
    %6143 = vmatpush1.bf16.msra.mxu0 %v5369
    %6144 = vmatprep.subr.bf16.mxu0 %v5374
    %6145 = vmatpush1.bf16.msra.mxu0 %v5373
    %6146 = vmatprep.subr.bf16.mxu0 %v5378
    %6147 = vmatpush1.bf16.msra.mxu0 %v5377
    %6148 = vmatprep.subr.bf16.mxu0 %v5382
    %6149 = vmatpush1.bf16.msra.mxu0 %v5381
    %6150 = vmatprep.mubr.bf16.mxu0 %v4063
    %6151 = vmatmul.mubr.bf16.gmra.mrb[0].mxu0 %v4059
    %v6152 = vpop.f32.mrb[0].mxu0
    %v6153 = vadd.f32 %v6100, %v6152
    %v6154 = vpop.f32.mrb[0].mxu0
    %v6155 = vadd.f32 %v6102, %v6154
    %v6156 = vpop.f32.mrb[0].mxu0
    %v6157 = vadd.f32 %v6104, %v6156
    %v6158 = vpop.f32.mrb[0].mxu0
    %v6159 = vadd.f32 %v6106, %v6158
    %6160 = vmatprep.mubr.bf16.mxu0 %v4230
    %6161 = vmatmul.mubr.bf16.gmra.mrb[0].mxu0 %v4226
    %v6162 = vpop.f32.mrb[0].mxu0
    %v6163 = vadd.f32 %v6110, %v6162
    %v6164 = vpop.f32.mrb[0].mxu0
    %v6165 = vadd.f32 %v6112, %v6164
    %v6166 = vpop.f32.mrb[0].mxu0
    %v6167 = vadd.f32 %v6114, %v6166
    %v6168 = vpop.f32.mrb[0].mxu0
    %v6169 = vadd.f32 %v6116, %v6168
    %6170 = vdwg.mxu0
    %6171 = vmatprep.subr.bf16.mxu0 %v5386
    %6172 = vmatpush1.bf16.msra.mxu0 %v5385
    %6173 = vmatprep.subr.bf16.mxu0 %v5390
    %6174 = vmatpush1.bf16.msra.mxu0 %v5389
    %6175 = vmatprep.subr.bf16.mxu0 %v5394
    %6176 = vmatpush1.bf16.msra.mxu0 %v5393
    %6177 = vmatprep.subr.bf16.mxu0 %v5398
    %6178 = vmatpush1.bf16.msra.mxu0 %v5397
    %6179 = vmatprep.subr.bf16.mxu0 %v5402
    %6180 = vmatpush1.bf16.msra.mxu0 %v5401
    %6181 = vmatprep.subr.bf16.mxu0 %v5406
    %6182 = vmatpush1.bf16.msra.mxu0 %v5405
    %6183 = vmatprep.subr.bf16.mxu0 0
    %6184 = vmatpush1.bf16.msra.mxu0 0
    %6185 = vmatprep.subr.bf16.mxu0 0
    %6186 = vmatpush1.bf16.msra.mxu0 0
    %6187 = vmatprep.subr.bf16.mxu0 0
    %6188 = vmatpush1.bf16.msra.mxu0 0
    %6189 = vmatprep.subr.bf16.mxu0 0
    %6190 = vmatpush1.bf16.msra.mxu0 0
    %6191 = vmatprep.subr.bf16.mxu0 0
    %6192 = vmatpush1.bf16.msra.mxu0 0
    %6193 = vmatprep.subr.bf16.mxu0 0
    %6194 = vmatpush1.bf16.msra.mxu0 0
    %6195 = vmatprep.subr.bf16.mxu0 0
    %6196 = vmatpush1.bf16.msra.mxu0 0
    %6197 = vmatprep.subr.bf16.mxu0 0
    %6198 = vmatpush1.bf16.msra.mxu0 0
    %6199 = vmatprep.subr.bf16.mxu0 0
    %6200 = vmatpush1.bf16.msra.mxu0 0
    %6201 = vmatprep.subr.bf16.mxu0 0
    %6202 = vmatpush1.bf16.msra.mxu0 0
    %6203 = vmatprep.mubr.bf16.mxu0 0
    %6204 = vmatmul.mubr.bf16.gmra.mrb[0].mxu0 %v5689
    %v6205 = vpop.f32.mrb[0].mxu0
    %v6206 = vadd.f32 %v6153, %v6205
    %v6207 = vpop.f32.mrb[0].mxu0
    %v6208 = vadd.f32 %v6155, %v6207
    %v6209 = vpop.f32.mrb[0].mxu0
    %v6210 = vadd.f32 %v6157, %v6209
    %v6211 = vpop.f32.mrb[0].mxu0
    %v6212 = vadd.f32 %v6159, %v6211
    %6213 = vmatprep.mubr.bf16.mxu0 0
    %6214 = vmatmul.mubr.bf16.gmra.mrb[0].mxu0 %v5692
    %v6215 = vpop.f32.mrb[0].mxu0
    %v6216 = vadd.f32 %v6163, %v6215
    %v6217 = vpop.f32.mrb[0].mxu0
    %v6218 = vadd.f32 %v6165, %v6217
    %v6219 = vpop.f32.mrb[0].mxu0
    %v6220 = vadd.f32 %v6167, %v6219
    %v6221 = vpop.f32.mrb[0].mxu0
    %v6222 = vadd.f32 %v6169, %v6221
    %6223 = vdwg.mxu0
    %v6224 = vld [vmem:[%s9] sm:$0xff]
    %v6225 = vld [vmem:[%s9 + $0x8] sm:$0xff]
    %v6226 = vld [vmem:[%s9 + $0x10] sm:$0xff]
    %v6227 = vld [vmem:[%s9 + $0x18] sm:$0xff]
    %v6228 = vld [vmem:[%s9 + $0x20] sm:$0xff]
    %v6229 = vld [vmem:[%s9 + $0x28] sm:$0xff]
    %v6230 = vld [vmem:[%s9 + $0x30] sm:$0xff]
    %v6231 = vld [vmem:[%s9 + $0x38] sm:$0xff]
    %v6232 = vld [vmem:[%s9 + $0x40] sm:$0xff]
    %v6233 = vld [vmem:[%s9 + $0x48] sm:$0xff]
    %v6234 = vld [vmem:[%s9 + $0x50] sm:$0xff]
    %v6235 = vld [vmem:[%s9 + $0x58] sm:$0xff]
    %v6236 = vld [vmem:[%s9 + $0x60] sm:$0xff]
    %v6237 = vld [vmem:[%s9 + $0x68] sm:$0xff]
    %v6238 = vld [vmem:[%s9 + $0x70] sm:$0xff]
    %v6239 = vld [vmem:[%s9 + $0x78] sm:$0xff]
    %v6240 = vld [vmem:[%s9 + $0x80] sm:$0xff]
    %v6241 = vld [vmem:[%s9 + $0x88] sm:$0xff]
    %v6242 = vld [vmem:[%s9 + $0x90] sm:$0xff]
    %v6243 = vld [vmem:[%s9 + $0x98] sm:$0xff]
    %v6244 = vld [vmem:[%s9 + $0xa0] sm:$0xff]
    %v6245 = vld [vmem:[%s9 + $0xa8] sm:$0xff]
    %v6246 = vld [vmem:[%s9 + $0xb0] sm:$0xff]
    %v6247 = vld [vmem:[%s9 + $0xb8] sm:$0xff]
    %v6248 = vld [vmem:[%s9 + $0xc0] sm:$0xff]
    %v6249 = vld [vmem:[%s9 + $0xc8] sm:$0xff]
    %v6250 = vld [vmem:[%s9 + $0xd0] sm:$0xff]
    %v6251 = vld [vmem:[%s9 + $0xd8] sm:$0xff]
    %v6252 = vld [vmem:[%s9 + $0xe0] sm:$0xff]
    %v6253 = vld [vmem:[%s9 + $0xe8] sm:$0xff]
    %v6254 = vld [vmem:[%s9 + $0xf0] sm:$0xff]
    %v6255 = vld [vmem:[%s9 + $0xf8] sm:$0xff]
    %v6256 = vld [vmem:[%s9 + $0x100] sm:$0xff]
    %v6257 = vld [vmem:[%s9 + $0x108] sm:$0xff]
    %v6258 = vld [vmem:[%s9 + $0x110] sm:$0xff]
    %v6259 = vld [vmem:[%s9 + $0x118] sm:$0xff]
    %v6260 = vld [vmem:[%s9 + $0x120] sm:$0xff]
    %v6261 = vld [vmem:[%s9 + $0x128] sm:$0xff]
    %v6262 = vld [vmem:[%s9 + $0x130] sm:$0xff]
    %v6263 = vld [vmem:[%s9 + $0x138] sm:$0xff]
    %v6264 = vld [vmem:[%s9 + $0x140] sm:$0xff]
    %v6265 = vld [vmem:[%s9 + $0x148] sm:$0xff]
    %v6266 = vld [vmem:[%s9 + $0x150] sm:$0xff]
    %v6267 = vld [vmem:[%s9 + $0x158] sm:$0xff]
    %v6268 = vld [vmem:[%s9 + $0x160] sm:$0xff]
    %v6269 = vld [vmem:[%s9 + $0x168] sm:$0xff]
    %v6270 = vld [vmem:[%s9 + $0x170] sm:$0xff]
    %v6271 = vld [vmem:[%s9 + $0x178] sm:$0xff]
    %v6272 = vld [vmem:[%s9 + $0x180] sm:$0xff]
    %v6273 = vld [vmem:[%s9 + $0x188] sm:$0xff]
    %v6274 = vld [vmem:[%s9 + $0x190] sm:$0xff]
    %v6275 = vld [vmem:[%s9 + $0x198] sm:$0xff]
    %v6276 = vld [vmem:[%s9 + $0x1a0] sm:$0xff]
    %v6277 = vld [vmem:[%s9 + $0x1a8] sm:$0xff]
    %v6278 = vld [vmem:[%s9 + $0x1b0] sm:$0xff]
    %v6279 = vld [vmem:[%s9 + $0x1b8] sm:$0xff]
    %v6280 = vld [vmem:[%s10] sm:$0xff]
    %v6281 = vld [vmem:[%s10 + $0x8] sm:$0xff]
    %v6282 = vld [vmem:[%s10 + $0x10] sm:$0xff]
    %v6283 = vld [vmem:[%s10 + $0x18] sm:$0xff]
    %v6284 = vld [vmem:[%s10 + $0x20] sm:$0xff]
    %v6285 = vld [vmem:[%s10 + $0x28] sm:$0xff]
    %v6286 = vld [vmem:[%s10 + $0x30] sm:$0xff]
    %v6287 = vld [vmem:[%s10 + $0x38] sm:$0xff]
    %v6288 = vld [vmem:[%s10 + $0x40] sm:$0xff]
    %v6289 = vld [vmem:[%s10 + $0x48] sm:$0xff]
    %v6290 = vld [vmem:[%s10 + $0x50] sm:$0xff]
    %v6291 = vld [vmem:[%s10 + $0x58] sm:$0xff]
    %v6292 = vld [vmem:[%s10 + $0x60] sm:$0xff]
    %v6293 = vld [vmem:[%s10 + $0x68] sm:$0xff]
    %v6294 = vld [vmem:[%s10 + $0x70] sm:$0xff]
    %v6295 = vld [vmem:[%s10 + $0x78] sm:$0xff]
    %v6296 = vld [vmem:[%s7] sm:$0x1]
    %v6297 = vld [vmem:[%s8] sm:$0x1]
    %v6298 = vadd.f32 %v5941, %v5945
    %v6299 = vadd.f32 %v6298, %v5951
    %v6300 = vsel %vm2986, %v5955, 0.0
    %v6301 = vadd.f32 %v6299, %v6300
    %v6302 = vrot.slane %v6301, 4
    %v6303 = vadd.f32 %v6301, %v6302
    %v6304 = vrot.slane %v6303, 2
    %v6305 = vadd.f32 %v6303, %v6304
    %v6306 = vrot.slane %v6305, 1
    %v6307 = vadd.f32 %v6305, %v6306
    %v6308 = vadd.f32 %v5943, %v5947
    %v6309 = vadd.f32 %v6308, %v5953
    %v6310 = vsel %vm2986, %v5957, 0.0
    %v6311 = vadd.f32 %v6309, %v6310
    %v6312 = vrot.slane %v6311, 4
    %v6313 = vadd.f32 %v6311, %v6312
    %v6314 = vrot.slane %v6313, 2
    %v6315 = vadd.f32 %v6313, %v6314
    %v6316 = vrot.slane %v6315, 1
    %v6317 = vadd.f32 %v6315, %v6316
    %v6318 = vadd.f32 %v6206, %v6210
    %v6319 = vadd.f32 %v6318, %v6216
    %v6320 = vsel %vm2986, %v6220, 0.0
    %v6321 = vadd.f32 %v6319, %v6320
    %v6322 = vrot.slane %v6321, 4
    %v6323 = vadd.f32 %v6321, %v6322
    %v6324 = vrot.slane %v6323, 2
    %v6325 = vadd.f32 %v6323, %v6324
    %v6326 = vrot.slane %v6325, 1
    %v6327 = vadd.f32 %v6325, %v6326
    %v6328 = vsel %vm1108, %v6208, 0.0
    %v6329 = vsel %vm1108, %v6212, 0.0
    %v6330 = vadd.f32 %v6328, %v6329
    %v6331 = vsel %vm1108, %v6218, 0.0
    %v6332 = vadd.f32 %v6330, %v6331
    %v6333 = vsel %vm3074, %v6222, 0.0
    %v6334 = vadd.f32 %v6332, %v6333
    %v6335 = vrot.slane %v6334, 4
    %v6336 = vadd.f32 %v6334, %v6335
    %v6337 = vrot.slane %v6336, 2
    %v6338 = vadd.f32 %v6336, %v6337
    %v6339 = vrot.slane %v6338, 1
    %v6340 = vadd.f32 %v6338, %v6339
    %v6341 = vmul.f32 %v5941, %v5941
    %v6342 = vmul.f32 %v5943, %v5943
    %v6343 = vmul.f32 %v6206, %v6206
    %v6344 = vmul.f32 %v6208, %v6208
    %v6345 = vmul.f32 %v5945, %v5945
    %v6346 = vmul.f32 %v5947, %v5947
    %v6347 = vmul.f32 %v6210, %v6210
    %v6348 = vmul.f32 %v6212, %v6212
    %v6349 = vmul.f32 %v5951, %v5951
    %v6350 = vmul.f32 %v5953, %v5953
    %v6351 = vmul.f32 %v6216, %v6216
    %v6352 = vmul.f32 %v6218, %v6218
    %v6353 = vmul.f32 %v5955, %v5955
    %v6354 = vmul.f32 %v5957, %v5957
    %v6355 = vmul.f32 %v6220, %v6220
    %v6356 = vmul.f32 %v6222, %v6222
    %v6357 = vadd.f32 %v6341, %v6345
    %v6358 = vadd.f32 %v6357, %v6349
    %v6359 = vsel %vm2986, %v6353, 0.0
    %v6360 = vadd.f32 %v6358, %v6359
    %v6361 = vrot.slane %v6360, 4
    %v6362 = vadd.f32 %v6360, %v6361
    %v6363 = vrot.slane %v6362, 2
    %v6364 = vadd.f32 %v6362, %v6363
    %v6365 = vrot.slane %v6364, 1
    %v6366 = vadd.f32 %v6364, %v6365
    %v6367 = vadd.f32 %v6342, %v6346
    %v6368 = vadd.f32 %v6367, %v6350
    %v6369 = vsel %vm2986, %v6354, 0.0
    %v6370 = vadd.f32 %v6368, %v6369
    %v6371 = vrot.slane %v6370, 4
    %v6372 = vadd.f32 %v6370, %v6371
    %v6373 = vrot.slane %v6372, 2
    %v6374 = vadd.f32 %v6372, %v6373
    %v6375 = vrot.slane %v6374, 1
    %v6376 = vadd.f32 %v6374, %v6375
    %v6377 = vadd.f32 %v6343, %v6347
    %v6378 = vadd.f32 %v6377, %v6351
    %v6379 = vsel %vm2986, %v6355, 0.0
    %v6380 = vadd.f32 %v6378, %v6379
    %v6381 = vrot.slane %v6380, 4
    %v6382 = vadd.f32 %v6380, %v6381
    %v6383 = vrot.slane %v6382, 2
    %v6384 = vadd.f32 %v6382, %v6383
    %v6385 = vrot.slane %v6384, 1
    %v6386 = vadd.f32 %v6384, %v6385
    %v6387 = vsel %vm1108, %v6344, 0.0
    %v6388 = vsel %vm1108, %v6348, 0.0
    %v6389 = vadd.f32 %v6387, %v6388
    %v6390 = vsel %vm1108, %v6352, 0.0
    %v6391 = vadd.f32 %v6389, %v6390
    %v6392 = vsel %vm3074, %v6356, 0.0
    %v6393 = vadd.f32 %v6391, %v6392
    %v6394 = vrot.slane %v6393, 4
    %v6395 = vadd.f32 %v6393, %v6394
    %v6396 = vrot.slane %v6395, 2
    %v6397 = vadd.f32 %v6395, %v6396
    %v6398 = vrot.slane %v6397, 1
    %v6399 = vadd.f32 %v6397, %v6398
    %v6401 = vsel %vm1108, %v6340, 0
    %6403 = vmatprep.subr.mxu0 0.0
    %6404 = vmatpush1.msra.mxu0 %v6224
    %6405 = vmatprep.subr.mxu0 0.0
    %6406 = vmatpush1.msra.mxu0 %v6225
    %6407 = vmatprep.subr.mxu0 0.0
    %6408 = vmatpush1.msra.mxu0 %v6226
    %6409 = vmatprep.subr.mxu0 0.0
    %6410 = vmatpush1.msra.mxu0 %v6227
    %6411 = vmatprep.subr.mxu0 0.0
    %6412 = vmatpush1.msra.mxu0 %v6228
    %6413 = vmatprep.subr.mxu0 0.0
    %6414 = vmatpush1.msra.mxu0 %v6229
    %6415 = vmatprep.subr.mxu0 0.0
    %6416 = vmatpush1.msra.mxu0 %v6230
    %6417 = vmatprep.subr.mxu0 0.0
    %6418 = vmatpush1.msra.mxu0 %v6231
    %6419 = vmatprep.subr.mxu0 0.0
    %6420 = vmatpush1.msra.mxu0 %v6232
    %6421 = vmatprep.subr.mxu0 0.0
    %6422 = vmatpush1.msra.mxu0 %v6233
    %6423 = vmatprep.subr.mxu0 0.0
    %6424 = vmatpush1.msra.mxu0 %v6234
    %6425 = vmatprep.subr.mxu0 0.0
    %6426 = vmatpush1.msra.mxu0 %v6235
    %6427 = vmatprep.subr.mxu0 0.0
    %6428 = vmatpush1.msra.mxu0 %v6236
    %6429 = vmatprep.subr.mxu0 0.0
    %6430 = vmatpush1.msra.mxu0 %v6237
    %6431 = vmatprep.subr.mxu0 0.0
    %6432 = vmatpush1.msra.mxu0 %v6238
    %6433 = vmatprep.subr.mxu0 0.0
    %6434 = vmatpush1.msra.mxu0 %v6239
    %6435 = vmatprep.subr.mxu0 0.0
    %6436 = vmatpush1.msra.mxu0 %v6240
    %6437 = vmatprep.subr.mxu0 0.0
    %6438 = vmatpush1.msra.mxu0 %v6241
    %6439 = vmatprep.subr.mxu0 0.0
    %6440 = vmatpush1.msra.mxu0 %v6242
    %6441 = vmatprep.subr.mxu0 0.0
    %6442 = vmatpush1.msra.mxu0 %v6243
    %6443 = vmatprep.subr.mxu0 0.0
    %6444 = vmatpush1.msra.mxu0 %v6244
    %6445 = vmatprep.subr.mxu0 0.0
    %6446 = vmatpush1.msra.mxu0 %v6245
    %6447 = vmatprep.subr.mxu0 0.0
    %6448 = vmatpush1.msra.mxu0 %v6246
    %6449 = vmatprep.subr.mxu0 0.0
    %6450 = vmatpush1.msra.mxu0 %v6247
    %6451 = vmatprep.subr.mxu0 0.0
    %6452 = vmatpush1.msra.mxu0 %v6248
    %6453 = vmatprep.subr.mxu0 0.0
    %6454 = vmatpush1.msra.mxu0 %v6249
    %6455 = vmatprep.subr.mxu0 0.0
    %6456 = vmatpush1.msra.mxu0 %v6250
    %6457 = vmatprep.subr.mxu0 0.0
    %6458 = vmatpush1.msra.mxu0 %v6251
    %6459 = vmatprep.subr.mxu0 0.0
    %6460 = vmatpush1.msra.mxu0 %v6252
    %6461 = vmatprep.subr.mxu0 0.0
    %6462 = vmatpush1.msra.mxu0 %v6253
    %6463 = vmatprep.subr.mxu0 0.0
    %6464 = vmatpush1.msra.mxu0 %v6254
    %6465 = vmatprep.subr.mxu0 0.0
    %6466 = vmatpush1.msra.mxu0 %v6255
    %6467 = vmatprep.mubr.f32.mxu0 %v6317
    %6468 = vmatmul.mubr.f32.gmra.mrb[0].mxu0 %v6307
    %v6469 = vpop.f32.mrb[0].mxu0
    %v6470 = vadd.f32 0.0, %v6469
    %v6471 = vpop.f32.mrb[0].mxu0
    %6472 = vdwg.mxu0
    %6473 = vmatprep.subr.mxu0 0.0
    %6474 = vmatpush1.msra.mxu0 %v6256
    %6475 = vmatprep.subr.mxu0 0.0
    %6476 = vmatpush1.msra.mxu0 %v6257
    %6477 = vmatprep.subr.mxu0 0.0
    %6478 = vmatpush1.msra.mxu0 %v6258
    %6479 = vmatprep.subr.mxu0 0.0
    %6480 = vmatpush1.msra.mxu0 %v6259
    %6481 = vmatprep.subr.mxu0 0.0
    %6482 = vmatpush1.msra.mxu0 %v6260
    %6483 = vmatprep.subr.mxu0 0.0
    %6484 = vmatpush1.msra.mxu0 %v6261
    %6485 = vmatprep.subr.mxu0 0.0
    %6486 = vmatpush1.msra.mxu0 %v6262
    %6487 = vmatprep.subr.mxu0 0.0
    %6488 = vmatpush1.msra.mxu0 %v6263
    %6489 = vmatprep.subr.mxu0 0.0
    %6490 = vmatpush1.msra.mxu0 %v6264
    %6491 = vmatprep.subr.mxu0 0.0
    %6492 = vmatpush1.msra.mxu0 %v6265
    %6493 = vmatprep.subr.mxu0 0.0
    %6494 = vmatpush1.msra.mxu0 %v6266
    %6495 = vmatprep.subr.mxu0 0.0
    %6496 = vmatpush1.msra.mxu0 %v6267
    %6497 = vmatprep.subr.mxu0 0.0
    %6498 = vmatpush1.msra.mxu0 %v6268
    %6499 = vmatprep.subr.mxu0 0.0
    %6500 = vmatpush1.msra.mxu0 %v6269
    %6501 = vmatprep.subr.mxu0 0.0
    %6502 = vmatpush1.msra.mxu0 %v6270
    %6503 = vmatprep.subr.mxu0 0.0
    %6504 = vmatpush1.msra.mxu0 %v6271
    %6505 = vmatprep.subr.mxu0 0.0
    %6506 = vmatpush1.msra.mxu0 %v6272
    %6507 = vmatprep.subr.mxu0 0.0
    %6508 = vmatpush1.msra.mxu0 %v6273
    %6509 = vmatprep.subr.mxu0 0.0
    %6510 = vmatpush1.msra.mxu0 %v6274
    %6511 = vmatprep.subr.mxu0 0.0
    %6512 = vmatpush1.msra.mxu0 %v6275
    %6513 = vmatprep.subr.mxu0 0.0
    %6514 = vmatpush1.msra.mxu0 %v6276
    %6515 = vmatprep.subr.mxu0 0.0
    %6516 = vmatpush1.msra.mxu0 %v6277
    %6517 = vmatprep.subr.mxu0 0.0
    %6518 = vmatpush1.msra.mxu0 %v6278
    %6519 = vmatprep.subr.mxu0 0.0
    %6520 = vmatpush1.msra.mxu0 %v6279
    %6521 = vmatprep.subr.mxu0 0.0
    %6522 = vmatpush1.msra.mxu0 0.0
    %6523 = vmatprep.subr.mxu0 0.0
    %6524 = vmatpush1.msra.mxu0 0.0
    %6525 = vmatprep.subr.mxu0 0.0
    %6526 = vmatpush1.msra.mxu0 0.0
    %6527 = vmatprep.subr.mxu0 0.0
    %6528 = vmatpush1.msra.mxu0 0.0
    %6529 = vmatprep.subr.mxu0 0.0
    %6530 = vmatpush1.msra.mxu0 0.0
    %6531 = vmatprep.subr.mxu0 0.0
    %6532 = vmatpush1.msra.mxu0 0.0
    %6533 = vmatprep.subr.mxu0 0.0
    %6534 = vmatpush1.msra.mxu0 0.0
    %6535 = vmatprep.subr.mxu0 0.0
    %6536 = vmatpush1.msra.mxu0 0.0
    %6537 = vmatprep.mubr.f32.mxu0 %v6401
    %6538 = vmatmul.mubr.f32.gmra.mrb[0].mxu0 %v6327
    %v6539 = vpop.f32.mrb[0].mxu0
    %v6540 = vadd.f32 %v6470, %v6539
    %v6541 = vpop.f32.mrb[0].mxu0
    %6542 = vdwg.mxu0
    %v6544 = vsel %vm1108, %v6399, 0
    %6546 = vmatprep.subr.mxu0 0.0
    %6547 = vmatpush1.msra.mxu0 %v6224
    %6548 = vmatprep.subr.mxu0 0.0
    %6549 = vmatpush1.msra.mxu0 %v6225
    %6550 = vmatprep.subr.mxu0 0.0
    %6551 = vmatpush1.msra.mxu0 %v6226
    %6552 = vmatprep.subr.mxu0 0.0
    %6553 = vmatpush1.msra.mxu0 %v6227
    %6554 = vmatprep.subr.mxu0 0.0
    %6555 = vmatpush1.msra.mxu0 %v6228
    %6556 = vmatprep.subr.mxu0 0.0
    %6557 = vmatpush1.msra.mxu0 %v6229
    %6558 = vmatprep.subr.mxu0 0.0
    %6559 = vmatpush1.msra.mxu0 %v6230
    %6560 = vmatprep.subr.mxu0 0.0
    %6561 = vmatpush1.msra.mxu0 %v6231
    %6562 = vmatprep.subr.mxu0 0.0
    %6563 = vmatpush1.msra.mxu0 %v6232
    %6564 = vmatprep.subr.mxu0 0.0
    %6565 = vmatpush1.msra.mxu0 %v6233
    %6566 = vmatprep.subr.mxu0 0.0
    %6567 = vmatpush1.msra.mxu0 %v6234
    %6568 = vmatprep.subr.mxu0 0.0
    %6569 = vmatpush1.msra.mxu0 %v6235
    %6570 = vmatprep.subr.mxu0 0.0
    %6571 = vmatpush1.msra.mxu0 %v6236
    %6572 = vmatprep.subr.mxu0 0.0
    %6573 = vmatpush1.msra.mxu0 %v6237
    %6574 = vmatprep.subr.mxu0 0.0
    %6575 = vmatpush1.msra.mxu0 %v6238
    %6576 = vmatprep.subr.mxu0 0.0
    %6577 = vmatpush1.msra.mxu0 %v6239
    %6578 = vmatprep.subr.mxu0 0.0
    %6579 = vmatpush1.msra.mxu0 %v6240
    %6580 = vmatprep.subr.mxu0 0.0
    %6581 = vmatpush1.msra.mxu0 %v6241
    %6582 = vmatprep.subr.mxu0 0.0
    %6583 = vmatpush1.msra.mxu0 %v6242
    %6584 = vmatprep.subr.mxu0 0.0
    %6585 = vmatpush1.msra.mxu0 %v6243
    %6586 = vmatprep.subr.mxu0 0.0
    %6587 = vmatpush1.msra.mxu0 %v6244
    %6588 = vmatprep.subr.mxu0 0.0
    %6589 = vmatpush1.msra.mxu0 %v6245
    %6590 = vmatprep.subr.mxu0 0.0
    %6591 = vmatpush1.msra.mxu0 %v6246
    %6592 = vmatprep.subr.mxu0 0.0
    %6593 = vmatpush1.msra.mxu0 %v6247
    %6594 = vmatprep.subr.mxu0 0.0
    %6595 = vmatpush1.msra.mxu0 %v6248
    %6596 = vmatprep.subr.mxu0 0.0
    %6597 = vmatpush1.msra.mxu0 %v6249
    %6598 = vmatprep.subr.mxu0 0.0
    %6599 = vmatpush1.msra.mxu0 %v6250
    %6600 = vmatprep.subr.mxu0 0.0
    %6601 = vmatpush1.msra.mxu0 %v6251
    %6602 = vmatprep.subr.mxu0 0.0
    %6603 = vmatpush1.msra.mxu0 %v6252
    %6604 = vmatprep.subr.mxu0 0.0
    %6605 = vmatpush1.msra.mxu0 %v6253
    %6606 = vmatprep.subr.mxu0 0.0
    %6607 = vmatpush1.msra.mxu0 %v6254
    %6608 = vmatprep.subr.mxu0 0.0
    %6609 = vmatpush1.msra.mxu0 %v6255
    %6610 = vmatprep.mubr.f32.mxu0 %v6376
    %6611 = vmatmul.mubr.f32.gmra.mrb[0].mxu0 %v6366
    %v6612 = vpop.f32.mrb[0].mxu0
    %v6613 = vadd.f32 0.0, %v6612
    %v6614 = vpop.f32.mrb[0].mxu0
    %6615 = vdwg.mxu0
    %6616 = vmatprep.subr.mxu0 0.0
    %6617 = vmatpush1.msra.mxu0 %v6256
    %6618 = vmatprep.subr.mxu0 0.0
    %6619 = vmatpush1.msra.mxu0 %v6257
    %6620 = vmatprep.subr.mxu0 0.0
    %6621 = vmatpush1.msra.mxu0 %v6258
    %6622 = vmatprep.subr.mxu0 0.0
    %6623 = vmatpush1.msra.mxu0 %v6259
    %6624 = vmatprep.subr.mxu0 0.0
    %6625 = vmatpush1.msra.mxu0 %v6260
    %6626 = vmatprep.subr.mxu0 0.0
    %6627 = vmatpush1.msra.mxu0 %v6261
    %6628 = vmatprep.subr.mxu0 0.0
    %6629 = vmatpush1.msra.mxu0 %v6262
    %6630 = vmatprep.subr.mxu0 0.0
    %6631 = vmatpush1.msra.mxu0 %v6263
    %6632 = vmatprep.subr.mxu0 0.0
    %6633 = vmatpush1.msra.mxu0 %v6264
    %6634 = vmatprep.subr.mxu0 0.0
    %6635 = vmatpush1.msra.mxu0 %v6265
    %6636 = vmatprep.subr.mxu0 0.0
    %6637 = vmatpush1.msra.mxu0 %v6266
    %6638 = vmatprep.subr.mxu0 0.0
    %6639 = vmatpush1.msra.mxu0 %v6267
    %6640 = vmatprep.subr.mxu0 0.0
    %6641 = vmatpush1.msra.mxu0 %v6268
    %6642 = vmatprep.subr.mxu0 0.0
    %6643 = vmatpush1.msra.mxu0 %v6269
    %6644 = vmatprep.subr.mxu0 0.0
    %6645 = vmatpush1.msra.mxu0 %v6270
    %6646 = vmatprep.subr.mxu0 0.0
    %6647 = vmatpush1.msra.mxu0 %v6271
    %6648 = vmatprep.subr.mxu0 0.0
    %6649 = vmatpush1.msra.mxu0 %v6272
    %6650 = vmatprep.subr.mxu0 0.0
    %6651 = vmatpush1.msra.mxu0 %v6273
    %6652 = vmatprep.subr.mxu0 0.0
    %6653 = vmatpush1.msra.mxu0 %v6274
    %6654 = vmatprep.subr.mxu0 0.0
    %6655 = vmatpush1.msra.mxu0 %v6275
    %6656 = vmatprep.subr.mxu0 0.0
    %6657 = vmatpush1.msra.mxu0 %v6276
    %6658 = vmatprep.subr.mxu0 0.0
    %6659 = vmatpush1.msra.mxu0 %v6277
    %6660 = vmatprep.subr.mxu0 0.0
    %6661 = vmatpush1.msra.mxu0 %v6278
    %6662 = vmatprep.subr.mxu0 0.0
    %6663 = vmatpush1.msra.mxu0 %v6279
    %6664 = vmatprep.subr.mxu0 0.0
    %6665 = vmatpush1.msra.mxu0 0.0
    %6666 = vmatprep.subr.mxu0 0.0
    %6667 = vmatpush1.msra.mxu0 0.0
    %6668 = vmatprep.subr.mxu0 0.0
    %6669 = vmatpush1.msra.mxu0 0.0
    %6670 = vmatprep.subr.mxu0 0.0
    %6671 = vmatpush1.msra.mxu0 0.0
    %6672 = vmatprep.subr.mxu0 0.0
    %6673 = vmatpush1.msra.mxu0 0.0
    %6674 = vmatprep.subr.mxu0 0.0
    %6675 = vmatpush1.msra.mxu0 0.0
    %6676 = vmatprep.subr.mxu0 0.0
    %6677 = vmatpush1.msra.mxu0 0.0
    %6678 = vmatprep.subr.mxu0 0.0
    %6679 = vmatpush1.msra.mxu0 0.0
    %6680 = vmatprep.mubr.f32.mxu0 %v6544
    %6681 = vmatmul.mubr.f32.gmra.mrb[0].mxu0 %v6386
    %v6682 = vpop.f32.mrb[0].mxu0
    %v6683 = vadd.f32 %v6613, %v6682
    %v6684 = vpop.f32.mrb[0].mxu0
    %6685 = vdwg.mxu0
    %v6686 = vmul.f32 %v6540, 0.0025510204
    %v6687 = vmul.f32 %v6683, 0.0025510204
    %v6688 = vmul.f32 %v6686, %v6686
    %v6689 = vsub.f32 %v6687, %v6688
    %v6690 = vmax.f32 %v6689, 0.0
    %v6691 = vadd.f32 %v6690, 1e-05
    %v6692 = vrsqrt.pop %v6691
    %v6693 = vmul.f32 %v6296, %v6692
    %v6694 = vmul.f32 %v6686, %v6693
    %v6695 = vsub.f32 %v6297, %v6694
    %v6697 = vsel %vm1977, %v6693, 0
    %6699 = vmatprep.subr.mxu0 %v6281
    %6700 = vmatpush1.msra.mxu0 %v6280
    %6701 = vmatprep.subr.mxu0 %v6285
    %6702 = vmatpush1.msra.mxu0 %v6284
    %6703 = vmatprep.subr.mxu0 %v6289
    %6704 = vmatpush1.msra.mxu0 %v6288
    %6705 = vmatprep.subr.mxu0 %v6293
    %6706 = vmatpush1.msra.mxu0 %v6292
    %6707 = vmatprep.subr.mxu0 0.0
    %6708 = vmatpush1.msra.mxu0 0.0
    %6709 = vmatprep.subr.mxu0 0.0
    %6710 = vmatpush1.msra.mxu0 0.0
    %6711 = vmatprep.subr.mxu0 0.0
    %6712 = vmatpush1.msra.mxu0 0.0
    %6713 = vmatprep.subr.mxu0 0.0
    %6714 = vmatpush1.msra.mxu0 0.0
    %6715 = vmatprep.subr.mxu0 0.0
    %6716 = vmatpush1.msra.mxu0 0.0
    %6717 = vmatprep.subr.mxu0 0.0
    %6718 = vmatpush1.msra.mxu0 0.0
    %6719 = vmatprep.subr.mxu0 0.0
    %6720 = vmatpush1.msra.mxu0 0.0
    %6721 = vmatprep.subr.mxu0 0.0
    %6722 = vmatpush1.msra.mxu0 0.0
    %6723 = vmatprep.subr.mxu0 0.0
    %6724 = vmatpush1.msra.mxu0 0.0
    %6725 = vmatprep.subr.mxu0 0.0
    %6726 = vmatpush1.msra.mxu0 0.0
    %6727 = vmatprep.subr.mxu0 0.0
    %6728 = vmatpush1.msra.mxu0 0.0
    %6729 = vmatprep.subr.mxu0 0.0
    %6730 = vmatpush1.msra.mxu0 0.0
    %6731 = vmatprep.subr.mxu0 0.0
    %6732 = vmatpush1.msra.mxu0 0.0
    %6733 = vmatprep.subr.mxu0 0.0
    %6734 = vmatpush1.msra.mxu0 0.0
    %6735 = vmatprep.subr.mxu0 0.0
    %6736 = vmatpush1.msra.mxu0 0.0
    %6737 = vmatprep.subr.mxu0 0.0
    %6738 = vmatpush1.msra.mxu0 0.0
    %6739 = vmatprep.subr.mxu0 0.0
    %6740 = vmatpush1.msra.mxu0 0.0
    %6741 = vmatprep.subr.mxu0 0.0
    %6742 = vmatpush1.msra.mxu0 0.0
    %6743 = vmatprep.subr.mxu0 0.0
    %6744 = vmatpush1.msra.mxu0 0.0
    %6745 = vmatprep.subr.mxu0 0.0
    %6746 = vmatpush1.msra.mxu0 0.0
    %6747 = vmatprep.subr.mxu0 0.0
    %6748 = vmatpush1.msra.mxu0 0.0
    %6749 = vmatprep.subr.mxu0 0.0
    %6750 = vmatpush1.msra.mxu0 0.0
    %6751 = vmatprep.subr.mxu0 0.0
    %6752 = vmatpush1.msra.mxu0 0.0
    %6753 = vmatprep.subr.mxu0 0.0
    %6754 = vmatpush1.msra.mxu0 0.0
    %6755 = vmatprep.subr.mxu0 0.0
    %6756 = vmatpush1.msra.mxu0 0.0
    %6757 = vmatprep.subr.mxu0 0.0
    %6758 = vmatpush1.msra.mxu0 0.0
    %6759 = vmatprep.subr.mxu0 0.0
    %6760 = vmatpush1.msra.mxu0 0.0
    %6761 = vmatprep.subr.mxu0 0.0
    %6762 = vmatpush1.msra.mxu0 0.0
    %6763 = vmatprep.mubr.f32.mxu0 0.0
    %6764 = vmatmul.mubr.f32.gmra.mrb[0].mxu0 %v6697
    %v6765 = vpop.f32.mrb[0].mxu0
    %v6766 = vadd.f32 0.0, %v6765
    %v6767 = vpop.f32.mrb[0].mxu0
    %v6768 = vadd.f32 0.0, %v6767
    %6769 = vdwg.mxu0
    %6770 = vmatprep.subr.mxu0 %v6283
    %6771 = vmatpush1.msra.mxu0 %v6282
    %6772 = vmatprep.subr.mxu0 %v6287
    %6773 = vmatpush1.msra.mxu0 %v6286
    %6774 = vmatprep.subr.mxu0 %v6291
    %6775 = vmatpush1.msra.mxu0 %v6290
    %6776 = vmatprep.subr.mxu0 %v6295
    %6777 = vmatpush1.msra.mxu0 %v6294
    %6778 = vmatprep.subr.mxu0 0.0
    %6779 = vmatpush1.msra.mxu0 0.0
    %6780 = vmatprep.subr.mxu0 0.0
    %6781 = vmatpush1.msra.mxu0 0.0
    %6782 = vmatprep.subr.mxu0 0.0
    %6783 = vmatpush1.msra.mxu0 0.0
    %6784 = vmatprep.subr.mxu0 0.0
    %6785 = vmatpush1.msra.mxu0 0.0
    %6786 = vmatprep.subr.mxu0 0.0
    %6787 = vmatpush1.msra.mxu0 0.0
    %6788 = vmatprep.subr.mxu0 0.0
    %6789 = vmatpush1.msra.mxu0 0.0
    %6790 = vmatprep.subr.mxu0 0.0
    %6791 = vmatpush1.msra.mxu0 0.0
    %6792 = vmatprep.subr.mxu0 0.0
    %6793 = vmatpush1.msra.mxu0 0.0
    %6794 = vmatprep.subr.mxu0 0.0
    %6795 = vmatpush1.msra.mxu0 0.0
    %6796 = vmatprep.subr.mxu0 0.0
    %6797 = vmatpush1.msra.mxu0 0.0
    %6798 = vmatprep.subr.mxu0 0.0
    %6799 = vmatpush1.msra.mxu0 0.0
    %6800 = vmatprep.subr.mxu0 0.0
    %6801 = vmatpush1.msra.mxu0 0.0
    %6802 = vmatprep.subr.mxu0 0.0
    %6803 = vmatpush1.msra.mxu0 0.0
    %6804 = vmatprep.subr.mxu0 0.0
    %6805 = vmatpush1.msra.mxu0 0.0
    %6806 = vmatprep.subr.mxu0 0.0
    %6807 = vmatpush1.msra.mxu0 0.0
    %6808 = vmatprep.subr.mxu0 0.0
    %6809 = vmatpush1.msra.mxu0 0.0
    %6810 = vmatprep.subr.mxu0 0.0
    %6811 = vmatpush1.msra.mxu0 0.0
    %6812 = vmatprep.subr.mxu0 0.0
    %6813 = vmatpush1.msra.mxu0 0.0
    %6814 = vmatprep.subr.mxu0 0.0
    %6815 = vmatpush1.msra.mxu0 0.0
    %6816 = vmatprep.subr.mxu0 0.0
    %6817 = vmatpush1.msra.mxu0 0.0
    %6818 = vmatprep.subr.mxu0 0.0
    %6819 = vmatpush1.msra.mxu0 0.0
    %6820 = vmatprep.subr.mxu0 0.0
    %6821 = vmatpush1.msra.mxu0 0.0
    %6822 = vmatprep.subr.mxu0 0.0
    %6823 = vmatpush1.msra.mxu0 0.0
    %6824 = vmatprep.subr.mxu0 0.0
    %6825 = vmatpush1.msra.mxu0 0.0
    %6826 = vmatprep.subr.mxu0 0.0
    %6827 = vmatpush1.msra.mxu0 0.0
    %6828 = vmatprep.subr.mxu0 0.0
    %6829 = vmatpush1.msra.mxu0 0.0
    %6830 = vmatprep.subr.mxu0 0.0
    %6831 = vmatpush1.msra.mxu0 0.0
    %6832 = vmatprep.subr.mxu0 0.0
    %6833 = vmatpush1.msra.mxu0 0.0
    %6834 = vmatprep.mubr.f32.mxu0 0.0
    %6835 = vmatmul.mubr.f32.gmra.mrb[0].mxu0 %v6697
    %v6836 = vpop.f32.mrb[0].mxu0
    %v6837 = vadd.f32 0.0, %v6836
    %v6838 = vpop.f32.mrb[0].mxu0
    %v6839 = vadd.f32 0.0, %v6838
    %6840 = vdwg.mxu0
    %v6842 = vsel %vm1977, %v6695, 0
    %6844 = vmatprep.subr.mxu0 %v6281
    %6845 = vmatpush1.msra.mxu0 %v6280
    %6846 = vmatprep.subr.mxu0 %v6285
    %6847 = vmatpush1.msra.mxu0 %v6284
    %6848 = vmatprep.subr.mxu0 %v6289
    %6849 = vmatpush1.msra.mxu0 %v6288
    %6850 = vmatprep.subr.mxu0 %v6293
    %6851 = vmatpush1.msra.mxu0 %v6292
    %6852 = vmatprep.subr.mxu0 0.0
    %6853 = vmatpush1.msra.mxu0 0.0
    %6854 = vmatprep.subr.mxu0 0.0
    %6855 = vmatpush1.msra.mxu0 0.0
    %6856 = vmatprep.subr.mxu0 0.0
    %6857 = vmatpush1.msra.mxu0 0.0
    %6858 = vmatprep.subr.mxu0 0.0
    %6859 = vmatpush1.msra.mxu0 0.0
    %6860 = vmatprep.subr.mxu0 0.0
    %6861 = vmatpush1.msra.mxu0 0.0
    %6862 = vmatprep.subr.mxu0 0.0
    %6863 = vmatpush1.msra.mxu0 0.0
    %6864 = vmatprep.subr.mxu0 0.0
    %6865 = vmatpush1.msra.mxu0 0.0
    %6866 = vmatprep.subr.mxu0 0.0
    %6867 = vmatpush1.msra.mxu0 0.0
    %6868 = vmatprep.subr.mxu0 0.0
    %6869 = vmatpush1.msra.mxu0 0.0
    %6870 = vmatprep.subr.mxu0 0.0
    %6871 = vmatpush1.msra.mxu0 0.0
    %6872 = vmatprep.subr.mxu0 0.0
    %6873 = vmatpush1.msra.mxu0 0.0
    %6874 = vmatprep.subr.mxu0 0.0
    %6875 = vmatpush1.msra.mxu0 0.0
    %6876 = vmatprep.subr.mxu0 0.0
    %6877 = vmatpush1.msra.mxu0 0.0
    %6878 = vmatprep.subr.mxu0 0.0
    %6879 = vmatpush1.msra.mxu0 0.0
    %6880 = vmatprep.subr.mxu0 0.0
    %6881 = vmatpush1.msra.mxu0 0.0
    %6882 = vmatprep.subr.mxu0 0.0
    %6883 = vmatpush1.msra.mxu0 0.0
    %6884 = vmatprep.subr.mxu0 0.0
    %6885 = vmatpush1.msra.mxu0 0.0
    %6886 = vmatprep.subr.mxu0 0.0
    %6887 = vmatpush1.msra.mxu0 0.0
    %6888 = vmatprep.subr.mxu0 0.0
    %6889 = vmatpush1.msra.mxu0 0.0
    %6890 = vmatprep.subr.mxu0 0.0
    %6891 = vmatpush1.msra.mxu0 0.0
    %6892 = vmatprep.subr.mxu0 0.0
    %6893 = vmatpush1.msra.mxu0 0.0
    %6894 = vmatprep.subr.mxu0 0.0
    %6895 = vmatpush1.msra.mxu0 0.0
    %6896 = vmatprep.subr.mxu0 0.0
    %6897 = vmatpush1.msra.mxu0 0.0
    %6898 = vmatprep.subr.mxu0 0.0
    %6899 = vmatpush1.msra.mxu0 0.0
    %6900 = vmatprep.subr.mxu0 0.0
    %6901 = vmatpush1.msra.mxu0 0.0
    %6902 = vmatprep.subr.mxu0 0.0
    %6903 = vmatpush1.msra.mxu0 0.0
    %6904 = vmatprep.subr.mxu0 0.0
    %6905 = vmatpush1.msra.mxu0 0.0
    %6906 = vmatprep.subr.mxu0 0.0
    %6907 = vmatpush1.msra.mxu0 0.0
    %6908 = vmatprep.mubr.f32.mxu0 0.0
    %6909 = vmatmul.mubr.f32.gmra.mrb[0].mxu0 %v6842
    %v6910 = vpop.f32.mrb[0].mxu0
    %v6911 = vadd.f32 0.0, %v6910
    %v6912 = vpop.f32.mrb[0].mxu0
    %v6913 = vadd.f32 0.0, %v6912
    %6914 = vdwg.mxu0
    %6915 = vmatprep.subr.mxu0 %v6283
    %6916 = vmatpush1.msra.mxu0 %v6282
    %6917 = vmatprep.subr.mxu0 %v6287
    %6918 = vmatpush1.msra.mxu0 %v6286
    %6919 = vmatprep.subr.mxu0 %v6291
    %6920 = vmatpush1.msra.mxu0 %v6290
    %6921 = vmatprep.subr.mxu0 %v6295
    %6922 = vmatpush1.msra.mxu0 %v6294
    %6923 = vmatprep.subr.mxu0 0.0
    %6924 = vmatpush1.msra.mxu0 0.0
    %6925 = vmatprep.subr.mxu0 0.0
    %6926 = vmatpush1.msra.mxu0 0.0
    %6927 = vmatprep.subr.mxu0 0.0
    %6928 = vmatpush1.msra.mxu0 0.0
    %6929 = vmatprep.subr.mxu0 0.0
    %6930 = vmatpush1.msra.mxu0 0.0
    %6931 = vmatprep.subr.mxu0 0.0
    %6932 = vmatpush1.msra.mxu0 0.0
    %6933 = vmatprep.subr.mxu0 0.0
    %6934 = vmatpush1.msra.mxu0 0.0
    %6935 = vmatprep.subr.mxu0 0.0
    %6936 = vmatpush1.msra.mxu0 0.0
    %6937 = vmatprep.subr.mxu0 0.0
    %6938 = vmatpush1.msra.mxu0 0.0
    %6939 = vmatprep.subr.mxu0 0.0
    %6940 = vmatpush1.msra.mxu0 0.0
    %6941 = vmatprep.subr.mxu0 0.0
    %6942 = vmatpush1.msra.mxu0 0.0
    %6943 = vmatprep.subr.mxu0 0.0
    %6944 = vmatpush1.msra.mxu0 0.0
    %6945 = vmatprep.subr.mxu0 0.0
    %6946 = vmatpush1.msra.mxu0 0.0
    %6947 = vmatprep.subr.mxu0 0.0
    %6948 = vmatpush1.msra.mxu0 0.0
    %6949 = vmatprep.subr.mxu0 0.0
    %6950 = vmatpush1.msra.mxu0 0.0
    %6951 = vmatprep.subr.mxu0 0.0
    %6952 = vmatpush1.msra.mxu0 0.0
    %6953 = vmatprep.subr.mxu0 0.0
    %6954 = vmatpush1.msra.mxu0 0.0
    %6955 = vmatprep.subr.mxu0 0.0
    %6956 = vmatpush1.msra.mxu0 0.0
    %6957 = vmatprep.subr.mxu0 0.0
    %6958 = vmatpush1.msra.mxu0 0.0
    %6959 = vmatprep.subr.mxu0 0.0
    %6960 = vmatpush1.msra.mxu0 0.0
    %6961 = vmatprep.subr.mxu0 0.0
    %6962 = vmatpush1.msra.mxu0 0.0
    %6963 = vmatprep.subr.mxu0 0.0
    %6964 = vmatpush1.msra.mxu0 0.0
    %6965 = vmatprep.subr.mxu0 0.0
    %6966 = vmatpush1.msra.mxu0 0.0
    %6967 = vmatprep.subr.mxu0 0.0
    %6968 = vmatpush1.msra.mxu0 0.0
    %6969 = vmatprep.subr.mxu0 0.0
    %6970 = vmatpush1.msra.mxu0 0.0
    %6971 = vmatprep.subr.mxu0 0.0
    %6972 = vmatpush1.msra.mxu0 0.0
    %6973 = vmatprep.subr.mxu0 0.0
    %6974 = vmatpush1.msra.mxu0 0.0
    %6975 = vmatprep.subr.mxu0 0.0
    %6976 = vmatpush1.msra.mxu0 0.0
    %6977 = vmatprep.subr.mxu0 0.0
    %6978 = vmatpush1.msra.mxu0 0.0
    %6979 = vmatprep.mubr.f32.mxu0 0.0
    %6980 = vmatmul.mubr.f32.gmra.mrb[0].mxu0 %v6842
    %v6981 = vpop.f32.mrb[0].mxu0
    %v6982 = vadd.f32 0.0, %v6981
    %v6983 = vpop.f32.mrb[0].mxu0
    %v6984 = vadd.f32 0.0, %v6983
    %6985 = vdwg.mxu0
    %v6986 = vlaneseq
    %v6987 = vshrl.u32 %v6986, 7
    %v6988 = vsub.s32 0, %v6987
    %v6989 = vrot.slane %v6766, %v6988
    %v6990 = vlaneseq
    %v6991 = vshrl.u32 %v6990, 7
    %v6992 = vsub.s32 0, %v6991
    %v6993 = vrot.slane %v6768, %v6992
    %v6994 = vlaneseq
    %v6995 = vshrl.u32 %v6994, 7
    %v6996 = vsub.s32 0, %v6995
    %v6997 = vrot.slane %v6837, %v6996
    %v6998 = vlaneseq
    %v6999 = vshrl.u32 %v6998, 7
    %v7000 = vsub.s32 0, %v6999
    %v7001 = vrot.slane %v6839, %v7000
    %v7002 = vmul.f32 %v5941, %v6989
    %v7003 = vmul.f32 %v5943, %v6993
    %v7004 = vmul.f32 %v6206, %v6997
    %v7005 = vmul.f32 %v6208, %v7001
    %v7006 = vmul.f32 %v5945, %v6989
    %v7007 = vmul.f32 %v5947, %v6993
    %v7008 = vmul.f32 %v6210, %v6997
    %v7009 = vmul.f32 %v6212, %v7001
    %v7010 = vmul.f32 %v5951, %v6989
    %v7011 = vmul.f32 %v5953, %v6993
    %v7012 = vmul.f32 %v6216, %v6997
    %v7013 = vmul.f32 %v6218, %v7001
    %v7014 = vmul.f32 %v5955, %v6989
    %v7015 = vmul.f32 %v5957, %v6993
    %v7016 = vmul.f32 %v6220, %v6997
    %v7017 = vmul.f32 %v6222, %v7001
    %v7018 = vlaneseq
    %v7019 = vshrl.u32 %v7018, 7
    %v7020 = vsub.s32 0, %v7019
    %v7021 = vrot.slane %v6911, %v7020
    %v7022 = vlaneseq
    %v7023 = vshrl.u32 %v7022, 7
    %v7024 = vsub.s32 0, %v7023
    %v7025 = vrot.slane %v6913, %v7024
    %v7026 = vlaneseq
    %v7027 = vshrl.u32 %v7026, 7
    %v7028 = vsub.s32 0, %v7027
    %v7029 = vrot.slane %v6982, %v7028
    %v7030 = vlaneseq
    %v7031 = vshrl.u32 %v7030, 7
    %v7032 = vsub.s32 0, %v7031
    %v7033 = vrot.slane %v6984, %v7032
    %v7034 = vadd.f32 %v7002, %v7021
    %v7035 = vadd.f32 %v7003, %v7025
    %v7036 = vadd.f32 %v7004, %v7029
    %v7037 = vadd.f32 %v7005, %v7033
    %v7038 = vadd.f32 %v7006, %v7021
    %v7039 = vadd.f32 %v7007, %v7025
    %v7040 = vadd.f32 %v7008, %v7029
    %v7041 = vadd.f32 %v7009, %v7033
    %v7042 = vadd.f32 %v7010, %v7021
    %v7043 = vadd.f32 %v7011, %v7025
    %v7044 = vadd.f32 %v7012, %v7029
    %v7045 = vadd.f32 %v7013, %v7033
    %v7046 = vadd.f32 %v7014, %v7021
    %v7047 = vadd.f32 %v7015, %v7025
    %v7048 = vadd.f32 %v7016, %v7029
    %v7049 = vadd.f32 %v7017, %v7033
    %v7050 = vmax.f32 %v7034, 0.0
    %v7051 = vmax.f32 %v7035, 0.0
    %v7052 = vmax.f32 %v7036, 0.0
    %v7053 = vmax.f32 %v7037, 0.0
    %v7054 = vmax.f32 %v7038, 0.0
    %v7055 = vmax.f32 %v7039, 0.0
    %v7056 = vmax.f32 %v7040, 0.0
    %v7057 = vmax.f32 %v7041, 0.0
    %v7058 = vmax.f32 %v7042, 0.0
    %v7059 = vmax.f32 %v7043, 0.0
    %v7060 = vmax.f32 %v7044, 0.0
    %v7061 = vmax.f32 %v7045, 0.0
    %v7062 = vmax.f32 %v7046, 0.0
    %v7063 = vmax.f32 %v7047, 0.0
    %v7064 = vmax.f32 %v7048, 0.0
    %v7065 = vmax.f32 %v7049, 0.0
    %7078 = vrot.lane.b32.xlu0 %v7051, 32
    %v7079 = vpop.permute.xlu0 %7078
    %7080 = vrot.lane.b32.xlu0 %v7052, 32
    %v7081 = vpop.permute.xlu0 %7080
    %7082 = vrot.lane.b32.xlu0 %v7053, 32
    %v7083 = vpop.permute.xlu0 %7082
    %7084 = vrot.lane.b32.xlu0 %v7055, 32
    %v7085 = vpop.permute.xlu0 %7084
    %7086 = vrot.lane.b32.xlu0 %v7056, 32
    %v7087 = vpop.permute.xlu0 %7086
    %7088 = vrot.lane.b32.xlu0 %v7057, 32
    %v7089 = vpop.permute.xlu0 %7088
    %7090 = vrot.lane.b32.xlu0 %v7059, 32
    %v7091 = vpop.permute.xlu0 %7090
    %7092 = vrot.lane.b32.xlu0 %v7060, 32
    %v7093 = vpop.permute.xlu0 %7092
    %7094 = vrot.lane.b32.xlu0 %v7061, 32
    %v7095 = vpop.permute.xlu0 %7094
    %7096 = vrot.lane.b32.xlu0 %v7063, 32
    %v7097 = vpop.permute.xlu0 %7096
    %7098 = vrot.lane.b32.xlu0 %v7064, 32
    %v7099 = vpop.permute.xlu0 %7098
    %7100 = vrot.lane.b32.xlu0 %v7065, 32
    %v7101 = vpop.permute.xlu0 %7100
    %v7102 = vsel %vm1977, %v7079, %v7081
    %v7103 = vsel %vm1977, %v7081, %v7083
    %v7104 = vsel %vm1977, %v7085, %v7087
    %v7105 = vsel %vm1977, %v7087, %v7089
    %v7106 = vsel %vm1977, %v7091, %v7093
    %v7107 = vsel %vm1977, %v7093, %v7095
    %v7108 = vsel %vm1977, %v7097, %v7099
    %v7109 = vsel %vm1977, %v7099, %v7101
    %v7118 = vmax.f32 %v7050, %v7102
    %v7119 = vmax.f32 %v7051, %v7103
    %v7120 = vmax.f32 %v7054, %v7104
    %v7121 = vmax.f32 %v7055, %v7105
    %v7122 = vmax.f32 %v7058, %v7106
    %v7123 = vmax.f32 %v7059, %v7107
    %v7124 = vmax.f32 %v7062, %v7108
    %v7125 = vmax.f32 %v7063, %v7109
    %v7134 = vcombine.low %v7118, %v7119
    %v7135 = vcombine.high %v7118, %v7119
    %v7137 = vunpack.c.l.s4 1983009808
    %v7138 = vunpack.c.0.s8 %v7137
    %v7139 = vlaneseq
    %v7140 = vshrl.u32 %v7139, 7
    %v7141 = vsub.s32 %v7138, %v7140
    %v7142 = vrot.slane %v7134, %v7141
    %v7144 = vunpack.c.l.s4 1983009808
    %v7145 = vunpack.c.0.s8 %v7144
    %v7146 = vlaneseq
    %v7147 = vshrl.u32 %v7146, 7
    %v7148 = vsub.s32 %v7145, %v7147
    %v7149 = vrot.slane %v7135, %v7148
    %v7150 = vcombine.high %v7142, %v7142
    %v7151 = vcombine.high %v7149, %v7149
    %v7152 = vcombine.low %v7120, %v7121
    %v7153 = vcombine.high %v7120, %v7121
    %v7155 = vunpack.c.l.s4 1983009808
    %v7156 = vunpack.c.0.s8 %v7155
    %v7157 = vlaneseq
    %v7158 = vshrl.u32 %v7157, 7
    %v7159 = vsub.s32 %v7156, %v7158
    %v7160 = vrot.slane %v7152, %v7159
    %v7162 = vunpack.c.l.s4 1983009808
    %v7163 = vunpack.c.0.s8 %v7162
    %v7164 = vlaneseq
    %v7165 = vshrl.u32 %v7164, 7
    %v7166 = vsub.s32 %v7163, %v7165
    %v7167 = vrot.slane %v7153, %v7166
    %v7168 = vcombine.high %v7160, %v7160
    %v7169 = vcombine.high %v7167, %v7167
    %v7170 = vcombine.low %v7122, %v7123
    %v7171 = vcombine.high %v7122, %v7123
    %v7173 = vunpack.c.l.s4 1983009808
    %v7174 = vunpack.c.0.s8 %v7173
    %v7175 = vlaneseq
    %v7176 = vshrl.u32 %v7175, 7
    %v7177 = vsub.s32 %v7174, %v7176
    %v7178 = vrot.slane %v7170, %v7177
    %v7180 = vunpack.c.l.s4 1983009808
    %v7181 = vunpack.c.0.s8 %v7180
    %v7182 = vlaneseq
    %v7183 = vshrl.u32 %v7182, 7
    %v7184 = vsub.s32 %v7181, %v7183
    %v7185 = vrot.slane %v7171, %v7184
    %v7186 = vcombine.high %v7178, %v7178
    %v7187 = vcombine.high %v7185, %v7185
    %v7188 = vcombine.low %v7124, %v7125
    %v7190 = vunpack.c.l.s4 1983009808
    %v7191 = vunpack.c.0.s8 %v7190
    %v7192 = vlaneseq
    %v7193 = vshrl.u32 %v7192, 7
    %v7194 = vsub.s32 %v7191, %v7193
    %v7195 = vrot.slane %v7188, %v7194
    %v7196 = vcombine.high %v7195, %v7195
    %v7211 = vrot.slane %v7142, 7
    %v7212 = vrot.slane %v7211, 2
    %v7213 = vrot.slane %v7150, 7
    %v7214 = vrot.slane %v7213, 2
    %v7215 = vrot.slane %v7149, 7
    %v7216 = vrot.slane %v7215, 2
    %v7217 = vrot.slane %v7151, 7
    %v7218 = vrot.slane %v7217, 2
    %v7219 = vrot.slane %v7160, 7
    %v7220 = vrot.slane %v7219, 2
    %v7221 = vrot.slane %v7168, 7
    %v7222 = vrot.slane %v7221, 2
    %v7223 = vrot.slane %v7167, 7
    %v7224 = vrot.slane %v7223, 2
    %v7225 = vrot.slane %v7169, 7
    %v7226 = vrot.slane %v7225, 2
    %v7227 = vrot.slane %v7178, 7
    %v7228 = vrot.slane %v7227, 2
    %v7229 = vrot.slane %v7186, 7
    %v7230 = vrot.slane %v7229, 2
    %v7231 = vrot.slane %v7185, 7
    %v7232 = vrot.slane %v7231, 2
    %v7233 = vrot.slane %v7187, 7
    %v7234 = vrot.slane %v7233, 2
    %v7235 = vrot.slane %v7195, 7
    %v7236 = vrot.slane %v7235, 2
    %v7237 = vrot.slane %v7196, 7
    %v7238 = vrot.slane %v7237, 2
    %v7253 = vmax.f32 %v7142, %v7212
    %v7254 = vmax.f32 %v7150, %v7214
    %v7255 = vmax.f32 %v7149, %v7216
    %v7256 = vmax.f32 %v7151, %v7218
    %v7257 = vmax.f32 %v7160, %v7220
    %v7258 = vmax.f32 %v7168, %v7222
    %v7259 = vmax.f32 %v7167, %v7224
    %v7260 = vmax.f32 %v7169, %v7226
    %v7261 = vmax.f32 %v7178, %v7228
    %v7262 = vmax.f32 %v7186, %v7230
    %v7263 = vmax.f32 %v7185, %v7232
    %v7264 = vmax.f32 %v7187, %v7234
    %v7265 = vmax.f32 %v7195, %v7236
    %v7266 = vmax.f32 %v7196, %v7238
    %v7281 = vlaneseq
    %v7282 = vshrl.u32 %v7281, 7
    %v7283 = vsub.s32 0, %v7282
    %v7284 = vrot.slane %v7253, %v7283
    %v7285 = vlaneseq
    %v7286 = vshrl.u32 %v7285, 7
    %v7287 = vsub.s32 2, %v7286
    %v7288 = vrot.slane %v7253, %v7287
    %v7289 = vlaneseq
    %v7290 = vshrl.u32 %v7289, 7
    %v7291 = vsub.s32 0, %v7290
    %v7292 = vrot.slane %v7254, %v7291
    %v7293 = vlaneseq
    %v7294 = vshrl.u32 %v7293, 7
    %v7295 = vsub.s32 2, %v7294
    %v7296 = vrot.slane %v7254, %v7295
    %v7297 = vlaneseq
    %v7298 = vshrl.u32 %v7297, 7
    %v7299 = vsub.s32 0, %v7298
    %v7300 = vrot.slane %v7255, %v7299
    %v7301 = vlaneseq
    %v7302 = vshrl.u32 %v7301, 7
    %v7303 = vsub.s32 2, %v7302
    %v7304 = vrot.slane %v7255, %v7303
    %v7305 = vlaneseq
    %v7306 = vshrl.u32 %v7305, 7
    %v7307 = vsub.s32 0, %v7306
    %v7308 = vrot.slane %v7256, %v7307
    %v7309 = vlaneseq
    %v7310 = vshrl.u32 %v7309, 7
    %v7311 = vsub.s32 2, %v7310
    %v7312 = vrot.slane %v7256, %v7311
    %v7313 = vlaneseq
    %v7314 = vshrl.u32 %v7313, 7
    %v7315 = vsub.s32 0, %v7314
    %v7316 = vrot.slane %v7257, %v7315
    %v7317 = vlaneseq
    %v7318 = vshrl.u32 %v7317, 7
    %v7319 = vsub.s32 2, %v7318
    %v7320 = vrot.slane %v7257, %v7319
    %v7321 = vlaneseq
    %v7322 = vshrl.u32 %v7321, 7
    %v7323 = vsub.s32 0, %v7322
    %v7324 = vrot.slane %v7258, %v7323
    %v7325 = vlaneseq
    %v7326 = vshrl.u32 %v7325, 7
    %v7327 = vsub.s32 2, %v7326
    %v7328 = vrot.slane %v7258, %v7327
    %v7329 = vlaneseq
    %v7330 = vshrl.u32 %v7329, 7
    %v7331 = vsub.s32 0, %v7330
    %v7332 = vrot.slane %v7259, %v7331
    %v7333 = vlaneseq
    %v7334 = vshrl.u32 %v7333, 7
    %v7335 = vsub.s32 2, %v7334
    %v7336 = vrot.slane %v7259, %v7335
    %v7337 = vlaneseq
    %v7338 = vshrl.u32 %v7337, 7
    %v7339 = vsub.s32 0, %v7338
    %v7340 = vrot.slane %v7260, %v7339
    %v7341 = vlaneseq
    %v7342 = vshrl.u32 %v7341, 7
    %v7343 = vsub.s32 2, %v7342
    %v7344 = vrot.slane %v7260, %v7343
    %v7345 = vlaneseq
    %v7346 = vshrl.u32 %v7345, 7
    %v7347 = vsub.s32 0, %v7346
    %v7348 = vrot.slane %v7261, %v7347
    %v7349 = vlaneseq
    %v7350 = vshrl.u32 %v7349, 7
    %v7351 = vsub.s32 2, %v7350
    %v7352 = vrot.slane %v7261, %v7351
    %v7353 = vlaneseq
    %v7354 = vshrl.u32 %v7353, 7
    %v7355 = vsub.s32 0, %v7354
    %v7356 = vrot.slane %v7262, %v7355
    %v7357 = vlaneseq
    %v7358 = vshrl.u32 %v7357, 7
    %v7359 = vsub.s32 2, %v7358
    %v7360 = vrot.slane %v7262, %v7359
    %v7361 = vlaneseq
    %v7362 = vshrl.u32 %v7361, 7
    %v7363 = vsub.s32 0, %v7362
    %v7364 = vrot.slane %v7263, %v7363
    %v7365 = vlaneseq
    %v7366 = vshrl.u32 %v7365, 7
    %v7367 = vsub.s32 2, %v7366
    %v7368 = vrot.slane %v7263, %v7367
    %v7369 = vlaneseq
    %v7370 = vshrl.u32 %v7369, 7
    %v7371 = vsub.s32 0, %v7370
    %v7372 = vrot.slane %v7264, %v7371
    %v7373 = vlaneseq
    %v7374 = vshrl.u32 %v7373, 7
    %v7375 = vsub.s32 2, %v7374
    %v7376 = vrot.slane %v7264, %v7375
    %v7377 = vlaneseq
    %v7378 = vshrl.u32 %v7377, 7
    %v7379 = vsub.s32 0, %v7378
    %v7380 = vrot.slane %v7265, %v7379
    %v7381 = vlaneseq
    %v7382 = vshrl.u32 %v7381, 7
    %v7383 = vsub.s32 2, %v7382
    %v7384 = vrot.slane %v7265, %v7383
    %v7385 = vlaneseq
    %v7386 = vshrl.u32 %v7385, 7
    %v7387 = vsub.s32 0, %v7386
    %v7388 = vrot.slane %v7266, %v7387
    %v7389 = vlaneseq
    %v7390 = vshrl.u32 %v7389, 7
    %v7391 = vsub.s32 2, %v7390
    %v7392 = vrot.slane %v7266, %v7391
    %v7421 = vpack.c.bf16 %v7284, %v7284
    %v7422 = vpack.c.bf16 %v7288, %v7288
    %v7423 = vpack.c.bf16 %v7292, %v7292
    %v7424 = vpack.c.bf16 %v7296, %v7296
    %v7425 = vpack.c.bf16 %v7300, %v7300
    %v7426 = vpack.c.bf16 %v7304, %v7304
    %v7427 = vpack.c.bf16 %v7308, %v7308
    %v7428 = vpack.c.bf16 %v7312, %v7312
    %v7429 = vpack.c.bf16 %v7316, %v7316
    %v7430 = vpack.c.bf16 %v7320, %v7320
    %v7431 = vpack.c.bf16 %v7324, %v7324
    %v7432 = vpack.c.bf16 %v7328, %v7328
    %v7433 = vpack.c.bf16 %v7332, %v7332
    %v7434 = vpack.c.bf16 %v7336, %v7336
    %v7435 = vpack.c.bf16 %v7340, %v7340
    %v7436 = vpack.c.bf16 %v7344, %v7344
    %v7437 = vpack.c.bf16 %v7348, %v7348
    %v7438 = vpack.c.bf16 %v7352, %v7352
    %v7439 = vpack.c.bf16 %v7356, %v7356
    %v7440 = vpack.c.bf16 %v7360, %v7360
    %v7441 = vpack.c.bf16 %v7364, %v7364
    %v7442 = vpack.c.bf16 %v7368, %v7368
    %v7443 = vpack.c.bf16 %v7372, %v7372
    %v7444 = vpack.c.bf16 %v7376, %v7376
    %v7445 = vpack.c.bf16 %v7380, %v7380
    %v7446 = vpack.c.bf16 %v7384, %v7384
    %v7447 = vpack.c.bf16 %v7388, %v7388
    %v7448 = vpack.c.bf16 %v7392, %v7392
    %v7453 = vcombine.low %v7421, %v7422
    %v7455 = vunpack.c.l.s4 1966171168
    %v7456 = vunpack.c.0.s8 %v7455
    %v7457 = vlaneseq
    %v7458 = vshrl.u32 %v7457, 7
    %v7459 = vsub.s32 %v7456, %v7458
    %v7460 = vrot.slane %v7453, %v7459
    %v7462 = vunpack.c.l.s4 1966171168
    %v7463 = vunpack.c.0.s8 %v7462
    %v7464 = vlaneseq
    %v7465 = vshrl.u32 %v7464, 7
    %v7466 = vsub.s32 %v7463, %v7465
    %v7467 = vrot.slane %v7460, %v7466
    %v7468 = vcombine.low %v7435, %v7436
    %v7470 = vunpack.c.l.s4 1966171168
    %v7471 = vunpack.c.0.s8 %v7470
    %v7472 = vlaneseq
    %v7473 = vshrl.u32 %v7472, 7
    %v7474 = vsub.s32 %v7471, %v7473
    %v7475 = vrot.slane %v7468, %v7474
    %v7477 = vunpack.c.l.s4 1966171168
    %v7478 = vunpack.c.0.s8 %v7477
    %v7479 = vlaneseq
    %v7480 = vshrl.u32 %v7479, 7
    %v7481 = vsub.s32 %v7478, %v7480
    %v7482 = vrot.slane %v7475, %v7481
    %v7484 = vunpack.c.l.s4 1935823168
    %v7485 = vunpack.c.0.s8 %v7484
    %v7486 = vlaneseq
    %v7487 = vshrl.u32 %v7486, 7
    %v7488 = vsub.s32 %v7485, %v7487
    %v7489 = vrot.slane %v7467, %v7488
    %v7491 = vunpack.c.l.s4 1935823168
    %v7492 = vunpack.c.0.s8 %v7491
    %v7493 = vlaneseq
    %v7494 = vshrl.u32 %v7493, 7
    %v7495 = vsub.s32 %v7492, %v7494
    %v7496 = vrot.slane %v7489, %v7495
    %v7498 = vunpack.c.l.s4 1935823168
    %v7499 = vunpack.c.0.s8 %v7498
    %v7500 = vlaneseq
    %v7501 = vshrl.u32 %v7500, 7
    %v7502 = vsub.s32 %v7499, %v7501
    %v7503 = vrot.slane %v7482, %v7502
    %v7505 = vunpack.c.l.s4 1935823168
    %v7506 = vunpack.c.0.s8 %v7505
    %v7507 = vlaneseq
    %v7508 = vshrl.u32 %v7507, 7
    %v7509 = vsub.s32 %v7506, %v7508
    %v7510 = vrot.slane %v7503, %v7509
    %v7511 = vunpack.c.l.b16 %v7496
    %v7512 = vunpack.c.h.b16 %v7496
    %v7513 = vunpack.c.l.b16 %v7510
    %v7514 = vunpack.c.h.b16 %v7510
    %v7515 = vrot.slane %v7513, 7
    %v7516 = vsel %vm2895, %v7515, %v7511
    %v7517 = vrot.slane %v7514, 7
    %v7518 = vsel %vm2895, %v7517, %v7512
    %v7519 = vpack.c.b16 %v7518, %v7516
    %v7521 = vunpack.c.l.s4 1966171168
    %v7522 = vunpack.c.0.s8 %v7521
    %v7523 = vlaneseq
    %v7524 = vshrl.u32 %v7523, 7
    %v7525 = vsub.s32 %v7522, %v7524
    %v7526 = vrot.slane %v7519, %v7525
    %v7528 = vunpack.c.l.s4 1966171168
    %v7529 = vunpack.c.0.s8 %v7528
    %v7530 = vlaneseq
    %v7531 = vshrl.u32 %v7530, 7
    %v7532 = vsub.s32 %v7529, %v7531
    %v7533 = vrot.slane %v7526, %v7532
    %vm7535 = vcmask 779265
    %vm7536 = vmor %vm7535, %vm2300
    %7537 = vst.msk [vmem:[#allocation5] sm:$0x3] %vm7536, %v7533
    %v7542 = vcombine.low %v7423, %v7424
    %v7544 = vunpack.c.l.s4 1966171168
    %v7545 = vunpack.c.0.s8 %v7544
    %v7546 = vlaneseq
    %v7547 = vshrl.u32 %v7546, 7
    %v7548 = vsub.s32 %v7545, %v7547
    %v7549 = vrot.slane %v7542, %v7548
    %v7551 = vunpack.c.l.s4 1966171168
    %v7552 = vunpack.c.0.s8 %v7551
    %v7553 = vlaneseq
    %v7554 = vshrl.u32 %v7553, 7
    %v7555 = vsub.s32 %v7552, %v7554
    %v7556 = vrot.slane %v7549, %v7555
    %v7557 = vcombine.low %v7437, %v7438
    %v7559 = vunpack.c.l.s4 1966171168
    %v7560 = vunpack.c.0.s8 %v7559
    %v7561 = vlaneseq
    %v7562 = vshrl.u32 %v7561, 7
    %v7563 = vsub.s32 %v7560, %v7562
    %v7564 = vrot.slane %v7557, %v7563
    %v7566 = vunpack.c.l.s4 1966171168
    %v7567 = vunpack.c.0.s8 %v7566
    %v7568 = vlaneseq
    %v7569 = vshrl.u32 %v7568, 7
    %v7570 = vsub.s32 %v7567, %v7569
    %v7571 = vrot.slane %v7564, %v7570
    %v7573 = vunpack.c.l.s4 1935823168
    %v7574 = vunpack.c.0.s8 %v7573
    %v7575 = vlaneseq
    %v7576 = vshrl.u32 %v7575, 7
    %v7577 = vsub.s32 %v7574, %v7576
    %v7578 = vrot.slane %v7556, %v7577
    %v7580 = vunpack.c.l.s4 1935823168
    %v7581 = vunpack.c.0.s8 %v7580
    %v7582 = vlaneseq
    %v7583 = vshrl.u32 %v7582, 7
    %v7584 = vsub.s32 %v7581, %v7583
    %v7585 = vrot.slane %v7578, %v7584
    %v7587 = vunpack.c.l.s4 1935823168
    %v7588 = vunpack.c.0.s8 %v7587
    %v7589 = vlaneseq
    %v7590 = vshrl.u32 %v7589, 7
    %v7591 = vsub.s32 %v7588, %v7590
    %v7592 = vrot.slane %v7571, %v7591
    %v7594 = vunpack.c.l.s4 1935823168
    %v7595 = vunpack.c.0.s8 %v7594
    %v7596 = vlaneseq
    %v7597 = vshrl.u32 %v7596, 7
    %v7598 = vsub.s32 %v7595, %v7597
    %v7599 = vrot.slane %v7592, %v7598
    %v7600 = vunpack.c.l.b16 %v7585
    %v7601 = vunpack.c.h.b16 %v7585
    %v7602 = vunpack.c.l.b16 %v7599
    %v7603 = vunpack.c.h.b16 %v7599
    %v7604 = vrot.slane %v7602, 7
    %v7605 = vsel %vm2895, %v7604, %v7600
    %v7606 = vrot.slane %v7603, 7
    %v7607 = vsel %vm2895, %v7606, %v7601
    %v7608 = vpack.c.b16 %v7607, %v7605
    %v7610 = vunpack.c.l.s4 1966171168
    %v7611 = vunpack.c.0.s8 %v7610
    %v7612 = vlaneseq
    %v7613 = vshrl.u32 %v7612, 7
    %v7614 = vsub.s32 %v7611, %v7613
    %v7615 = vrot.slane %v7608, %v7614
    %v7617 = vunpack.c.l.s4 1966171168
    %v7618 = vunpack.c.0.s8 %v7617
    %v7619 = vlaneseq
    %v7620 = vshrl.u32 %v7619, 7
    %v7621 = vsub.s32 %v7618, %v7620
    %v7622 = vrot.slane %v7615, %v7621
    %7623 = vrot.lane.b32.xlu0 %v7622, 96
    %v7624 = vpop.permute.xlu0 %7623
    %v7625 = vrot.slane %v7624, 7
    %v7626 = vsel %vm3057, %v7625, %v7624
    %vm7628 = vcmask 1041152
    %vm7629 = vmor %vm2895, %vm7628
    %vm7630 = vcmask 518146
    %vm7631 = vmor %vm7630, %vm7629
    %7632 = vst.msk [vmem:[#allocation5 + $0x1] sm:$0x7] %vm7631, %v7626
    %v7637 = vcombine.low %v7425, %v7426
    %v7639 = vunpack.c.l.s4 1966171168
    %v7640 = vunpack.c.0.s8 %v7639
    %v7641 = vlaneseq
    %v7642 = vshrl.u32 %v7641, 7
    %v7643 = vsub.s32 %v7640, %v7642
    %v7644 = vrot.slane %v7637, %v7643
    %v7646 = vunpack.c.l.s4 1966171168
    %v7647 = vunpack.c.0.s8 %v7646
    %v7648 = vlaneseq
    %v7649 = vshrl.u32 %v7648, 7
    %v7650 = vsub.s32 %v7647, %v7649
    %v7651 = vrot.slane %v7644, %v7650
    %v7652 = vcombine.low %v7439, %v7440
    %v7654 = vunpack.c.l.s4 1966171168
    %v7655 = vunpack.c.0.s8 %v7654
    %v7656 = vlaneseq
    %v7657 = vshrl.u32 %v7656, 7
    %v7658 = vsub.s32 %v7655, %v7657
    %v7659 = vrot.slane %v7652, %v7658
    %v7661 = vunpack.c.l.s4 1966171168
    %v7662 = vunpack.c.0.s8 %v7661
    %v7663 = vlaneseq
    %v7664 = vshrl.u32 %v7663, 7
    %v7665 = vsub.s32 %v7662, %v7664
    %v7666 = vrot.slane %v7659, %v7665
    %v7668 = vunpack.c.l.s4 1935823168
    %v7669 = vunpack.c.0.s8 %v7668
    %v7670 = vlaneseq
    %v7671 = vshrl.u32 %v7670, 7
    %v7672 = vsub.s32 %v7669, %v7671
    %v7673 = vrot.slane %v7651, %v7672
    %v7675 = vunpack.c.l.s4 1935823168
    %v7676 = vunpack.c.0.s8 %v7675
    %v7677 = vlaneseq
    %v7678 = vshrl.u32 %v7677, 7
    %v7679 = vsub.s32 %v7676, %v7678
    %v7680 = vrot.slane %v7673, %v7679
    %v7682 = vunpack.c.l.s4 1935823168
    %v7683 = vunpack.c.0.s8 %v7682
    %v7684 = vlaneseq
    %v7685 = vshrl.u32 %v7684, 7
    %v7686 = vsub.s32 %v7683, %v7685
    %v7687 = vrot.slane %v7666, %v7686
    %v7689 = vunpack.c.l.s4 1935823168
    %v7690 = vunpack.c.0.s8 %v7689
    %v7691 = vlaneseq
    %v7692 = vshrl.u32 %v7691, 7
    %v7693 = vsub.s32 %v7690, %v7692
    %v7694 = vrot.slane %v7687, %v7693
    %v7695 = vunpack.c.l.b16 %v7680
    %v7696 = vunpack.c.h.b16 %v7680
    %v7697 = vunpack.c.l.b16 %v7694
    %v7698 = vunpack.c.h.b16 %v7694
    %v7699 = vrot.slane %v7697, 7
    %v7700 = vsel %vm2895, %v7699, %v7695
    %v7701 = vrot.slane %v7698, 7
    %v7702 = vsel %vm2895, %v7701, %v7696
    %v7703 = vpack.c.b16 %v7702, %v7700
    %v7705 = vunpack.c.l.s4 1966171168
    %v7706 = vunpack.c.0.s8 %v7705
    %v7707 = vlaneseq
    %v7708 = vshrl.u32 %v7707, 7
    %v7709 = vsub.s32 %v7706, %v7708
    %v7710 = vrot.slane %v7703, %v7709
    %v7712 = vunpack.c.l.s4 1966171168
    %v7713 = vunpack.c.0.s8 %v7712
    %v7714 = vlaneseq
    %v7715 = vshrl.u32 %v7714, 7
    %v7716 = vsub.s32 %v7713, %v7715
    %v7717 = vrot.slane %v7710, %v7716
    %7718 = vrot.lane.b32.xlu0 %v7717, 64
    %v7719 = vpop.permute.xlu0 %7718
    %v7720 = vrot.slane %v7719, 7
    %v7721 = vsel %vm3116, %v7720, %v7719
    %vm7723 = vcmask 1040896
    %vm7724 = vmor %vm2895, %vm7723
    %vm7725 = vcmask 256002
    %vm7726 = vmor %vm7725, %vm7724
    %7727 = vst.msk [vmem:[#allocation5 + $0x3] sm:$0x7] %vm7726, %v7721
    %v7732 = vcombine.low %v7427, %v7428
    %v7734 = vunpack.c.l.s4 1966171168
    %v7735 = vunpack.c.0.s8 %v7734
    %v7736 = vlaneseq
    %v7737 = vshrl.u32 %v7736, 7
    %v7738 = vsub.s32 %v7735, %v7737
    %v7739 = vrot.slane %v7732, %v7738
    %v7741 = vunpack.c.l.s4 1966171168
    %v7742 = vunpack.c.0.s8 %v7741
    %v7743 = vlaneseq
    %v7744 = vshrl.u32 %v7743, 7
    %v7745 = vsub.s32 %v7742, %v7744
    %v7746 = vrot.slane %v7739, %v7745
    %v7747 = vcombine.low %v7441, %v7442
    %v7749 = vunpack.c.l.s4 1966171168
    %v7750 = vunpack.c.0.s8 %v7749
    %v7751 = vlaneseq
    %v7752 = vshrl.u32 %v7751, 7
    %v7753 = vsub.s32 %v7750, %v7752
    %v7754 = vrot.slane %v7747, %v7753
    %v7756 = vunpack.c.l.s4 1966171168
    %v7757 = vunpack.c.0.s8 %v7756
    %v7758 = vlaneseq
    %v7759 = vshrl.u32 %v7758, 7
    %v7760 = vsub.s32 %v7757, %v7759
    %v7761 = vrot.slane %v7754, %v7760
    %v7763 = vunpack.c.l.s4 1935823168
    %v7764 = vunpack.c.0.s8 %v7763
    %v7765 = vlaneseq
    %v7766 = vshrl.u32 %v7765, 7
    %v7767 = vsub.s32 %v7764, %v7766
    %v7768 = vrot.slane %v7746, %v7767
    %v7770 = vunpack.c.l.s4 1935823168
    %v7771 = vunpack.c.0.s8 %v7770
    %v7772 = vlaneseq
    %v7773 = vshrl.u32 %v7772, 7
    %v7774 = vsub.s32 %v7771, %v7773
    %v7775 = vrot.slane %v7768, %v7774
    %v7777 = vunpack.c.l.s4 1935823168
    %v7778 = vunpack.c.0.s8 %v7777
    %v7779 = vlaneseq
    %v7780 = vshrl.u32 %v7779, 7
    %v7781 = vsub.s32 %v7778, %v7780
    %v7782 = vrot.slane %v7761, %v7781
    %v7784 = vunpack.c.l.s4 1935823168
    %v7785 = vunpack.c.0.s8 %v7784
    %v7786 = vlaneseq
    %v7787 = vshrl.u32 %v7786, 7
    %v7788 = vsub.s32 %v7785, %v7787
    %v7789 = vrot.slane %v7782, %v7788
    %v7790 = vunpack.c.l.b16 %v7775
    %v7791 = vunpack.c.h.b16 %v7775
    %v7792 = vunpack.c.l.b16 %v7789
    %v7793 = vunpack.c.h.b16 %v7789
    %v7794 = vrot.slane %v7792, 7
    %v7795 = vsel %vm2895, %v7794, %v7790
    %v7796 = vrot.slane %v7793, 7
    %v7797 = vsel %vm2895, %v7796, %v7791
    %v7798 = vpack.c.b16 %v7797, %v7795
    %v7800 = vunpack.c.l.s4 1966171168
    %v7801 = vunpack.c.0.s8 %v7800
    %v7802 = vlaneseq
    %v7803 = vshrl.u32 %v7802, 7
    %v7804 = vsub.s32 %v7801, %v7803
    %v7805 = vrot.slane %v7798, %v7804
    %v7807 = vunpack.c.l.s4 1966171168
    %v7808 = vunpack.c.0.s8 %v7807
    %v7809 = vlaneseq
    %v7810 = vshrl.u32 %v7809, 7
    %v7811 = vsub.s32 %v7808, %v7810
    %v7812 = vrot.slane %v7805, %v7811
    %7813 = vrot.lane.b32.xlu0 %v7812, 32
    %v7814 = vpop.permute.xlu0 %7813
    %v7815 = vrot.slane %v7814, 7
    %v7816 = vsel %vm3209, %v7815, %v7814
    %vm7818 = vcmask 1040640
    %vm7819 = vmor %vm2895, %vm7818
    %7820 = vst.msk [vmem:[#allocation5 + $0x5] sm:$0x3] %vm7819, %v7816
    %v7825 = vcombine.low %v7429, %v7430
    %v7827 = vunpack.c.l.s4 1966171168
    %v7828 = vunpack.c.0.s8 %v7827
    %v7829 = vlaneseq
    %v7830 = vshrl.u32 %v7829, 7
    %v7831 = vsub.s32 %v7828, %v7830
    %v7832 = vrot.slane %v7825, %v7831
    %v7834 = vunpack.c.l.s4 1966171168
    %v7835 = vunpack.c.0.s8 %v7834
    %v7836 = vlaneseq
    %v7837 = vshrl.u32 %v7836, 7
    %v7838 = vsub.s32 %v7835, %v7837
    %v7839 = vrot.slane %v7832, %v7838
    %v7840 = vcombine.low %v7443, %v7444
    %v7842 = vunpack.c.l.s4 1966171168
    %v7843 = vunpack.c.0.s8 %v7842
    %v7844 = vlaneseq
    %v7845 = vshrl.u32 %v7844, 7
    %v7846 = vsub.s32 %v7843, %v7845
    %v7847 = vrot.slane %v7840, %v7846
    %v7849 = vunpack.c.l.s4 1966171168
    %v7850 = vunpack.c.0.s8 %v7849
    %v7851 = vlaneseq
    %v7852 = vshrl.u32 %v7851, 7
    %v7853 = vsub.s32 %v7850, %v7852
    %v7854 = vrot.slane %v7847, %v7853
    %v7856 = vunpack.c.l.s4 1935823168
    %v7857 = vunpack.c.0.s8 %v7856
    %v7858 = vlaneseq
    %v7859 = vshrl.u32 %v7858, 7
    %v7860 = vsub.s32 %v7857, %v7859
    %v7861 = vrot.slane %v7839, %v7860
    %v7863 = vunpack.c.l.s4 1935823168
    %v7864 = vunpack.c.0.s8 %v7863
    %v7865 = vlaneseq
    %v7866 = vshrl.u32 %v7865, 7
    %v7867 = vsub.s32 %v7864, %v7866
    %v7868 = vrot.slane %v7861, %v7867
    %v7870 = vunpack.c.l.s4 1935823168
    %v7871 = vunpack.c.0.s8 %v7870
    %v7872 = vlaneseq
    %v7873 = vshrl.u32 %v7872, 7
    %v7874 = vsub.s32 %v7871, %v7873
    %v7875 = vrot.slane %v7854, %v7874
    %v7877 = vunpack.c.l.s4 1935823168
    %v7878 = vunpack.c.0.s8 %v7877
    %v7879 = vlaneseq
    %v7880 = vshrl.u32 %v7879, 7
    %v7881 = vsub.s32 %v7878, %v7880
    %v7882 = vrot.slane %v7875, %v7881
    %v7883 = vunpack.c.l.b16 %v7868
    %v7884 = vunpack.c.h.b16 %v7868
    %v7885 = vunpack.c.l.b16 %v7882
    %v7886 = vunpack.c.h.b16 %v7882
    %v7887 = vrot.slane %v7885, 7
    %v7888 = vsel %vm2895, %v7887, %v7883
    %v7889 = vrot.slane %v7886, 7
    %v7890 = vsel %vm2895, %v7889, %v7884
    %v7891 = vpack.c.b16 %v7890, %v7888
    %v7893 = vunpack.c.l.s4 1966171168
    %v7894 = vunpack.c.0.s8 %v7893
    %v7895 = vlaneseq
    %v7896 = vshrl.u32 %v7895, 7
    %v7897 = vsub.s32 %v7894, %v7896
    %v7898 = vrot.slane %v7891, %v7897
    %v7900 = vunpack.c.l.s4 1966171168
    %v7901 = vunpack.c.0.s8 %v7900
    %v7902 = vlaneseq
    %v7903 = vshrl.u32 %v7902, 7
    %v7904 = vsub.s32 %v7901, %v7903
    %v7905 = vrot.slane %v7898, %v7904
    %7907 = vst.msk [vmem:[#allocation5 + $0x7] sm:$0x3] %vm7536, %v7905
    %v7912 = vcombine.low %v7431, %v7432
    %v7914 = vunpack.c.l.s4 1966171168
    %v7915 = vunpack.c.0.s8 %v7914
    %v7916 = vlaneseq
    %v7917 = vshrl.u32 %v7916, 7
    %v7918 = vsub.s32 %v7915, %v7917
    %v7919 = vrot.slane %v7912, %v7918
    %v7921 = vunpack.c.l.s4 1966171168
    %v7922 = vunpack.c.0.s8 %v7921
    %v7923 = vlaneseq
    %v7924 = vshrl.u32 %v7923, 7
    %v7925 = vsub.s32 %v7922, %v7924
    %v7926 = vrot.slane %v7919, %v7925
    %v7927 = vcombine.low %v7445, %v7446
    %v7929 = vunpack.c.l.s4 1966171168
    %v7930 = vunpack.c.0.s8 %v7929
    %v7931 = vlaneseq
    %v7932 = vshrl.u32 %v7931, 7
    %v7933 = vsub.s32 %v7930, %v7932
    %v7934 = vrot.slane %v7927, %v7933
    %v7936 = vunpack.c.l.s4 1966171168
    %v7937 = vunpack.c.0.s8 %v7936
    %v7938 = vlaneseq
    %v7939 = vshrl.u32 %v7938, 7
    %v7940 = vsub.s32 %v7937, %v7939
    %v7941 = vrot.slane %v7934, %v7940
    %v7943 = vunpack.c.l.s4 1935823168
    %v7944 = vunpack.c.0.s8 %v7943
    %v7945 = vlaneseq
    %v7946 = vshrl.u32 %v7945, 7
    %v7947 = vsub.s32 %v7944, %v7946
    %v7948 = vrot.slane %v7926, %v7947
    %v7950 = vunpack.c.l.s4 1935823168
    %v7951 = vunpack.c.0.s8 %v7950
    %v7952 = vlaneseq
    %v7953 = vshrl.u32 %v7952, 7
    %v7954 = vsub.s32 %v7951, %v7953
    %v7955 = vrot.slane %v7948, %v7954
    %v7957 = vunpack.c.l.s4 1935823168
    %v7958 = vunpack.c.0.s8 %v7957
    %v7959 = vlaneseq
    %v7960 = vshrl.u32 %v7959, 7
    %v7961 = vsub.s32 %v7958, %v7960
    %v7962 = vrot.slane %v7941, %v7961
    %v7964 = vunpack.c.l.s4 1935823168
    %v7965 = vunpack.c.0.s8 %v7964
    %v7966 = vlaneseq
    %v7967 = vshrl.u32 %v7966, 7
    %v7968 = vsub.s32 %v7965, %v7967
    %v7969 = vrot.slane %v7962, %v7968
    %v7970 = vunpack.c.l.b16 %v7955
    %v7971 = vunpack.c.h.b16 %v7955
    %v7972 = vunpack.c.l.b16 %v7969
    %v7973 = vunpack.c.h.b16 %v7969
    %v7974 = vrot.slane %v7972, 7
    %v7975 = vsel %vm2895, %v7974, %v7970
    %v7976 = vrot.slane %v7973, 7
    %v7977 = vsel %vm2895, %v7976, %v7971
    %v7978 = vpack.c.b16 %v7977, %v7975
    %v7980 = vunpack.c.l.s4 1966171168
    %v7981 = vunpack.c.0.s8 %v7980
    %v7982 = vlaneseq
    %v7983 = vshrl.u32 %v7982, 7
    %v7984 = vsub.s32 %v7981, %v7983
    %v7985 = vrot.slane %v7978, %v7984
    %v7987 = vunpack.c.l.s4 1966171168
    %v7988 = vunpack.c.0.s8 %v7987
    %v7989 = vlaneseq
    %v7990 = vshrl.u32 %v7989, 7
    %v7991 = vsub.s32 %v7988, %v7990
    %v7992 = vrot.slane %v7985, %v7991
    %7993 = vrot.lane.b32.xlu0 %v7992, 96
    %v7994 = vpop.permute.xlu0 %7993
    %v7995 = vrot.slane %v7994, 7
    %v7996 = vsel %vm3057, %v7995, %v7994
    %7998 = vst.msk [vmem:[#allocation5 + $0x8] sm:$0x7] %vm7631, %v7996
    %v8003 = vcombine.low %v7433, %v7434
    %v8005 = vunpack.c.l.s4 1966171168
    %v8006 = vunpack.c.0.s8 %v8005
    %v8007 = vlaneseq
    %v8008 = vshrl.u32 %v8007, 7
    %v8009 = vsub.s32 %v8006, %v8008
    %v8010 = vrot.slane %v8003, %v8009
    %v8012 = vunpack.c.l.s4 1966171168
    %v8013 = vunpack.c.0.s8 %v8012
    %v8014 = vlaneseq
    %v8015 = vshrl.u32 %v8014, 7
    %v8016 = vsub.s32 %v8013, %v8015
    %v8017 = vrot.slane %v8010, %v8016
    %v8018 = vcombine.low %v7447, %v7448
    %v8020 = vunpack.c.l.s4 1966171168
    %v8021 = vunpack.c.0.s8 %v8020
    %v8022 = vlaneseq
    %v8023 = vshrl.u32 %v8022, 7
    %v8024 = vsub.s32 %v8021, %v8023
    %v8025 = vrot.slane %v8018, %v8024
    %v8027 = vunpack.c.l.s4 1966171168
    %v8028 = vunpack.c.0.s8 %v8027
    %v8029 = vlaneseq
    %v8030 = vshrl.u32 %v8029, 7
    %v8031 = vsub.s32 %v8028, %v8030
    %v8032 = vrot.slane %v8025, %v8031
    %v8034 = vunpack.c.l.s4 1935823168
    %v8035 = vunpack.c.0.s8 %v8034
    %v8036 = vlaneseq
    %v8037 = vshrl.u32 %v8036, 7
    %v8038 = vsub.s32 %v8035, %v8037
    %v8039 = vrot.slane %v8017, %v8038
    %v8041 = vunpack.c.l.s4 1935823168
    %v8042 = vunpack.c.0.s8 %v8041
    %v8043 = vlaneseq
    %v8044 = vshrl.u32 %v8043, 7
    %v8045 = vsub.s32 %v8042, %v8044
    %v8046 = vrot.slane %v8039, %v8045
    %v8048 = vunpack.c.l.s4 1935823168
    %v8049 = vunpack.c.0.s8 %v8048
    %v8050 = vlaneseq
    %v8051 = vshrl.u32 %v8050, 7
    %v8052 = vsub.s32 %v8049, %v8051
    %v8053 = vrot.slane %v8032, %v8052
    %v8055 = vunpack.c.l.s4 1935823168
    %v8056 = vunpack.c.0.s8 %v8055
    %v8057 = vlaneseq
    %v8058 = vshrl.u32 %v8057, 7
    %v8059 = vsub.s32 %v8056, %v8058
    %v8060 = vrot.slane %v8053, %v8059
    %v8061 = vunpack.c.l.b16 %v8046
    %v8062 = vunpack.c.h.b16 %v8046
    %v8063 = vunpack.c.l.b16 %v8060
    %v8064 = vunpack.c.h.b16 %v8060
    %v8065 = vrot.slane %v8063, 7
    %v8066 = vsel %vm2895, %v8065, %v8061
    %v8067 = vrot.slane %v8064, 7
    %v8068 = vsel %vm2895, %v8067, %v8062
    %v8069 = vpack.c.b16 %v8068, %v8066
    %v8071 = vunpack.c.l.s4 1966171168
    %v8072 = vunpack.c.0.s8 %v8071
    %v8073 = vlaneseq
    %v8074 = vshrl.u32 %v8073, 7
    %v8075 = vsub.s32 %v8072, %v8074
    %v8076 = vrot.slane %v8069, %v8075
    %v8078 = vunpack.c.l.s4 1966171168
    %v8079 = vunpack.c.0.s8 %v8078
    %v8080 = vlaneseq
    %v8081 = vshrl.u32 %v8080, 7
    %v8082 = vsub.s32 %v8079, %v8081
    %v8083 = vrot.slane %v8076, %v8082
    %8084 = vrot.lane.b32.xlu0 %v8083, 64
    %v8085 = vpop.permute.xlu0 %8084
    %v8086 = vrot.slane %v8085, 7
    %v8087 = vsel %vm3116, %v8086, %v8085
    %8089 = vst.msk [vmem:[#allocation5 + $0xa] sm:$0x7] %vm7726, %v8087
    %v8090 = vld [vmem:[#allocation5] sm:$0xff]
    %v8091 = vld [vmem:[#allocation5 + $0x8] sm:$0x1f]
    %v8092 = vld [vmem:[%s11] sm:$0xf]
    %v8093 = vld [vmem:[%s11 + $0x4] sm:$0xf]
    %v8094 = vld [vmem:[%s11 + $0x8] sm:$0xf]
    %v8095 = vld [vmem:[%s11 + $0xc] sm:$0xf]
    %v8096 = vld [vmem:[%s11 + $0x10] sm:$0xf]
    %v8097 = vld [vmem:[%s11 + $0x14] sm:$0xf]
    %v8098 = vld [vmem:[%s11 + $0x18] sm:$0xf]
    %v8099 = vld [vmem:[%s11 + $0x1c] sm:$0xf]
    %v8100 = vld [vmem:[%s11 + $0x20] sm:$0xf]
    %v8101 = vld [vmem:[%s11 + $0x24] sm:$0xf]
    %v8102 = vld [vmem:[%s11 + $0x28] sm:$0xf]
    %v8103 = vld [vmem:[%s11 + $0x2c] sm:$0xf]
    %v8104 = vld [vmem:[%s11 + $0x30] sm:$0xf]
    %v8105 = vld [vmem:[%s11 + $0x34] sm:$0xf]
    %v8106 = vld [vmem:[%s11 + $0x38] sm:$0xf]
    %v8107 = vld [vmem:[%s11 + $0x3c] sm:$0xf]
    %v8108 = vld [vmem:[%s11 + $0x40] sm:$0xf]
    %v8109 = vld [vmem:[%s11 + $0x44] sm:$0xf]
    %v8110 = vld [vmem:[%s11 + $0x48] sm:$0xf]
    %v8111 = vld [vmem:[%s11 + $0x4c] sm:$0xf]
    %v8112 = vld [vmem:[%s11 + $0x50] sm:$0xf]
    %v8113 = vld [vmem:[%s11 + $0x54] sm:$0xf]
    %v8114 = vld [vmem:[%s11 + $0x58] sm:$0xf]
    %v8115 = vld [vmem:[%s11 + $0x5c] sm:$0xf]
    %v8116 = vld [vmem:[%s11 + $0x60] sm:$0xf]
    %v8117 = vld [vmem:[%s11 + $0x64] sm:$0xf]
    %v8118 = vld [vmem:[%s11 + $0x68] sm:$0xf]
    %v8119 = vld [vmem:[%s11 + $0x6c] sm:$0xf]
    %v8120 = vld [vmem:[%s11 + $0x70] sm:$0xf]
    %v8121 = vld [vmem:[%s11 + $0x74] sm:$0xf]
    %v8122 = vld [vmem:[%s11 + $0x78] sm:$0xf]
    %v8123 = vld [vmem:[%s11 + $0x7c] sm:$0xf]
    %v8124 = vld [vmem:[%s11 + $0x80] sm:$0xf]
    %v8125 = vld [vmem:[%s11 + $0x84] sm:$0xf]
    %v8126 = vld [vmem:[%s11 + $0x88] sm:$0xf]
    %v8127 = vld [vmem:[%s11 + $0x8c] sm:$0xf]
    %v8128 = vld [vmem:[%s11 + $0x90] sm:$0xf]
    %v8129 = vld [vmem:[%s11 + $0x94] sm:$0xf]
    %v8130 = vld [vmem:[%s11 + $0x98] sm:$0xf]
    %v8131 = vld [vmem:[%s11 + $0x9c] sm:$0xf]
    %v8132 = vld [vmem:[%s11 + $0xa0] sm:$0xf]
    %v8133 = vld [vmem:[%s11 + $0xa4] sm:$0xf]
    %v8134 = vld [vmem:[%s11 + $0xa8] sm:$0xf]
    %v8135 = vld [vmem:[%s11 + $0xac] sm:$0xf]
    %v8136 = vld [vmem:[%s11 + $0xb0] sm:$0xf]
    %v8137 = vld [vmem:[%s11 + $0xb4] sm:$0xf]
    %v8138 = vld [vmem:[%s11 + $0xb8] sm:$0xf]
    %v8139 = vld [vmem:[%s11 + $0xbc] sm:$0xf]
    %v8140 = vld [vmem:[%s11 + $0xc0] sm:$0xf]
    %v8141 = vld [vmem:[%s11 + $0xc4] sm:$0xf]
    %v8142 = vld [vmem:[%s11 + $0xc8] sm:$0xf]
    %v8143 = vld [vmem:[%s11 + $0xcc] sm:$0xf]
    %v8144 = vld [vmem:[%s11 + $0xd0] sm:$0xf]
    %v8145 = vld [vmem:[%s11 + $0xd4] sm:$0xf]
    %v8146 = vld [vmem:[%s11 + $0xd8] sm:$0xf]
    %v8147 = vld [vmem:[%s11 + $0xdc] sm:$0xf]
    %v8148 = vld [vmem:[%s11 + $0xe0] sm:$0xf]
    %v8149 = vld [vmem:[%s11 + $0xe4] sm:$0xf]
    %v8150 = vld [vmem:[%s11 + $0xe8] sm:$0xf]
    %v8151 = vld [vmem:[%s11 + $0xec] sm:$0xf]
    %v8152 = vld [vmem:[%s11 + $0xf0] sm:$0xf]
    %v8153 = vld [vmem:[%s11 + $0xf4] sm:$0xf]
    %v8154 = vld [vmem:[%s11 + $0xf8] sm:$0xf]
    %v8155 = vld [vmem:[%s11 + $0xfc] sm:$0xf]
    %v8156 = vld [vmem:[%s11 + $0x100] sm:$0xf]
    %v8157 = vld [vmem:[%s11 + $0x104] sm:$0xf]
    %v8158 = vld [vmem:[%s11 + $0x108] sm:$0xf]
    %v8159 = vld [vmem:[%s11 + $0x10c] sm:$0xf]
    %v8160 = vld [vmem:[%s11 + $0x110] sm:$0xf]
    %v8161 = vld [vmem:[%s11 + $0x114] sm:$0xf]
    %v8162 = vld [vmem:[%s11 + $0x118] sm:$0xf]
    %v8163 = vld [vmem:[%s11 + $0x11c] sm:$0xf]
    %v8164 = vld [vmem:[%s11 + $0x120] sm:$0xf]
    %v8165 = vld [vmem:[%s11 + $0x124] sm:$0xf]
    %v8166 = vld [vmem:[%s11 + $0x128] sm:$0xf]
    %v8167 = vld [vmem:[%s11 + $0x12c] sm:$0xf]
    %v8168 = vld [vmem:[%s11 + $0x130] sm:$0xf]
    %v8169 = vld [vmem:[%s11 + $0x134] sm:$0xf]
    %v8170 = vld [vmem:[%s11 + $0x138] sm:$0xf]
    %v8171 = vld [vmem:[%s11 + $0x13c] sm:$0xf]
    %v8172 = vld [vmem:[%s11 + $0x140] sm:$0xf]
    %v8173 = vld [vmem:[%s11 + $0x144] sm:$0xf]
    %v8174 = vld [vmem:[%s11 + $0x148] sm:$0xf]
    %v8175 = vld [vmem:[%s11 + $0x14c] sm:$0xf]
    %v8176 = vld [vmem:[%s11 + $0x150] sm:$0xf]
    %v8177 = vld [vmem:[%s11 + $0x154] sm:$0xf]
    %v8178 = vld [vmem:[%s11 + $0x158] sm:$0xf]
    %v8179 = vld [vmem:[%s11 + $0x15c] sm:$0xf]
    %v8180 = vld [vmem:[%s11 + $0x160] sm:$0xf]
    %v8181 = vld [vmem:[%s11 + $0x164] sm:$0xf]
    %v8182 = vld [vmem:[%s11 + $0x168] sm:$0xf]
    %v8183 = vld [vmem:[%s11 + $0x16c] sm:$0xf]
    %v8184 = vld [vmem:[%s11 + $0x170] sm:$0xf]
    %v8185 = vld [vmem:[%s11 + $0x174] sm:$0xf]
    %v8186 = vld [vmem:[%s11 + $0x178] sm:$0xf]
    %v8187 = vld [vmem:[%s11 + $0x17c] sm:$0xf]
    %v8188 = vld [vmem:[%s11 + $0x180] sm:$0xf]
    %v8189 = vld [vmem:[%s11 + $0x184] sm:$0xf]
    %v8190 = vld [vmem:[%s11 + $0x188] sm:$0xf]
    %v8191 = vld [vmem:[%s11 + $0x18c] sm:$0xf]
    %v8192 = vld [vmem:[%s11 + $0x190] sm:$0xf]
    %v8193 = vld [vmem:[%s11 + $0x194] sm:$0xf]
    %v8194 = vld [vmem:[%s11 + $0x198] sm:$0xf]
    %v8195 = vld [vmem:[%s11 + $0x19c] sm:$0xf]
    %v8196 = vld [vmem:[%s11 + $0x1a0] sm:$0xf]
    %v8197 = vld [vmem:[%s11 + $0x1a4] sm:$0xf]
    %v8198 = vld [vmem:[%s11 + $0x1a8] sm:$0xf]
    %v8199 = vld [vmem:[%s11 + $0x1ac] sm:$0xf]
    %v8200 = vld [vmem:[%s11 + $0x1b0] sm:$0xf]
    %v8201 = vld [vmem:[%s11 + $0x1b4] sm:$0xf]
    %v8202 = vld [vmem:[%s11 + $0x1b8] sm:$0xf]
    %v8203 = vld [vmem:[%s11 + $0x1bc] sm:$0xf]
    %v8204 = vld [vmem:[%s11 + $0x1c0] sm:$0xf]
    %v8205 = vld [vmem:[%s11 + $0x1c4] sm:$0xf]
    %v8206 = vld [vmem:[%s11 + $0x1c8] sm:$0xf]
    %v8207 = vld [vmem:[%s11 + $0x1cc] sm:$0xf]
    %v8208 = vld [vmem:[%s11 + $0x1d0] sm:$0xf]
    %v8209 = vld [vmem:[%s11 + $0x1d4] sm:$0xf]
    %v8210 = vld [vmem:[%s11 + $0x1d8] sm:$0xf]
    %v8211 = vld [vmem:[%s11 + $0x1dc] sm:$0xf]
    %v8212 = vld [vmem:[%s11 + $0x1e0] sm:$0xf]
    %v8213 = vld [vmem:[%s11 + $0x1e4] sm:$0xf]
    %v8214 = vld [vmem:[%s11 + $0x1e8] sm:$0xf]
    %v8215 = vld [vmem:[%s11 + $0x1ec] sm:$0xf]
    %v8216 = vld [vmem:[%s11 + $0x1f0] sm:$0xf]
    %v8217 = vld [vmem:[%s11 + $0x1f4] sm:$0xf]
    %v8218 = vld [vmem:[%s11 + $0x1f8] sm:$0xf]
    %v8219 = vld [vmem:[%s11 + $0x1fc] sm:$0xf]
    %v8220 = vld [vmem:[%s11 + $0x200] sm:$0xf]
    %v8221 = vld [vmem:[%s11 + $0x204] sm:$0xf]
    %v8222 = vld [vmem:[%s11 + $0x208] sm:$0xf]
    %v8223 = vld [vmem:[%s11 + $0x20c] sm:$0xf]
    %v8224 = vld [vmem:[%s11 + $0x210] sm:$0xf]
    %v8225 = vld [vmem:[%s11 + $0x214] sm:$0xf]
    %v8226 = vld [vmem:[%s11 + $0x218] sm:$0xf]
    %v8227 = vld [vmem:[%s11 + $0x21c] sm:$0xf]
    %v8228 = vld [vmem:[%s11 + $0x220] sm:$0xf]
    %v8229 = vld [vmem:[%s11 + $0x224] sm:$0xf]
    %v8230 = vld [vmem:[%s11 + $0x228] sm:$0xf]
    %v8231 = vld [vmem:[%s11 + $0x22c] sm:$0xf]
    %v8232 = vld [vmem:[%s11 + $0x230] sm:$0xf]
    %v8233 = vld [vmem:[%s11 + $0x234] sm:$0xf]
    %v8234 = vld [vmem:[%s11 + $0x238] sm:$0xf]
    %v8235 = vld [vmem:[%s11 + $0x23c] sm:$0xf]
    %v8236 = vld [vmem:[%s11 + $0x240] sm:$0xf]
    %v8237 = vld [vmem:[%s11 + $0x244] sm:$0xf]
    %v8238 = vld [vmem:[%s11 + $0x248] sm:$0xf]
    %v8239 = vld [vmem:[%s11 + $0x24c] sm:$0xf]
    %v8240 = vld [vmem:[%s11 + $0x250] sm:$0xf]
    %v8241 = vld [vmem:[%s11 + $0x254] sm:$0xf]
    %v8242 = vld [vmem:[%s11 + $0x258] sm:$0xf]
    %v8243 = vld [vmem:[%s11 + $0x25c] sm:$0xf]
    %v8244 = vld [vmem:[%s11 + $0x260] sm:$0xf]
    %v8245 = vld [vmem:[%s11 + $0x264] sm:$0xf]
    %v8246 = vld [vmem:[%s11 + $0x268] sm:$0xf]
    %v8247 = vld [vmem:[%s11 + $0x26c] sm:$0xf]
    %v8248 = vld [vmem:[%s11 + $0x270] sm:$0xf]
    %v8249 = vld [vmem:[%s11 + $0x274] sm:$0xf]
    %v8250 = vld [vmem:[%s11 + $0x278] sm:$0xf]
    %v8251 = vld [vmem:[%s11 + $0x27c] sm:$0xf]
    %v8252 = vld [vmem:[%s11 + $0x280] sm:$0xf]
    %v8253 = vld [vmem:[%s11 + $0x284] sm:$0xf]
    %v8254 = vld [vmem:[%s11 + $0x288] sm:$0xf]
    %v8255 = vld [vmem:[%s11 + $0x28c] sm:$0xf]
    %v8256 = vld [vmem:[%s11 + $0x290] sm:$0xf]
    %v8257 = vld [vmem:[%s11 + $0x294] sm:$0xf]
    %v8258 = vld [vmem:[%s11 + $0x298] sm:$0xf]
    %v8259 = vld [vmem:[%s11 + $0x29c] sm:$0xf]
    %v8260 = vld [vmem:[%s11 + $0x2a0] sm:$0xf]
    %v8261 = vld [vmem:[%s11 + $0x2a4] sm:$0xf]
    %v8262 = vld [vmem:[%s11 + $0x2a8] sm:$0xf]
    %v8263 = vld [vmem:[%s11 + $0x2ac] sm:$0xf]
    %v8264 = vld [vmem:[%s11 + $0x2b0] sm:$0xf]
    %v8265 = vld [vmem:[%s11 + $0x2b4] sm:$0xf]
    %v8266 = vld [vmem:[%s11 + $0x2b8] sm:$0xf]
    %v8267 = vld [vmem:[%s11 + $0x2bc] sm:$0xf]
    %v8268 = vld [vmem:[%s11 + $0x2c0] sm:$0xf]
    %v8269 = vld [vmem:[%s11 + $0x2c4] sm:$0xf]
    %v8270 = vld [vmem:[%s11 + $0x2c8] sm:$0xf]
    %v8271 = vld [vmem:[%s11 + $0x2cc] sm:$0xf]
    %v8272 = vld [vmem:[%s11 + $0x2d0] sm:$0xf]
    %v8273 = vld [vmem:[%s11 + $0x2d4] sm:$0xf]
    %v8274 = vld [vmem:[%s11 + $0x2d8] sm:$0xf]
    %v8275 = vld [vmem:[%s11 + $0x2dc] sm:$0xf]
    %v8276 = vld [vmem:[%s11 + $0x2e0] sm:$0xf]
    %v8277 = vld [vmem:[%s11 + $0x2e4] sm:$0xf]
    %v8278 = vld [vmem:[%s11 + $0x2e8] sm:$0xf]
    %v8279 = vld [vmem:[%s11 + $0x2ec] sm:$0xf]
    %v8280 = vld [vmem:[%s11 + $0x2f0] sm:$0xf]
    %v8281 = vld [vmem:[%s11 + $0x2f4] sm:$0xf]
    %v8282 = vld [vmem:[%s11 + $0x2f8] sm:$0xf]
    %v8283 = vld [vmem:[%s11 + $0x2fc] sm:$0xf]
    %v8284 = vld [vmem:[%s11 + $0x300] sm:$0xf]
    %v8285 = vld [vmem:[%s11 + $0x304] sm:$0xf]
    %v8286 = vld [vmem:[%s11 + $0x308] sm:$0xf]
    %v8287 = vld [vmem:[%s11 + $0x30c] sm:$0xf]
    %v8288 = vld [vmem:[%s12] sm:$0x1]
    %v8290 = vlaneseq
    %v8291 = vshrl.u32 %v8290, 7
    %v8292 = vsub.s32 0, %v8291
    %v8293 = vrot.slane %v8288, %v8292
    %v8297 = vcombine.high %v8090, %v8090
    %v8299 = vunpack.c.l.s4 1966171168
    %v8300 = vunpack.c.0.s8 %v8299
    %v8301 = vlaneseq
    %v8302 = vshrl.u32 %v8301, 7
    %v8303 = vsub.s32 %v8300, %v8302
    %v8304 = vrot.slane %v8090, %v8303
    %v8306 = vunpack.c.l.s4 1966171168
    %v8307 = vunpack.c.0.s8 %v8306
    %v8308 = vlaneseq
    %v8309 = vshrl.u32 %v8308, 7
    %v8310 = vsub.s32 %v8307, %v8309
    %v8311 = vrot.slane %v8297, %v8310
    %v8312 = vcombine.high %v8304, %v8304
    %v8313 = vcombine.high %v8311, %v8311
    %v8315 = vunpack.c.l.s4 1966171168
    %v8316 = vunpack.c.0.s8 %v8315
    %v8317 = vlaneseq
    %v8318 = vshrl.u32 %v8317, 7
    %v8319 = vsub.s32 %v8316, %v8318
    %v8320 = vrot.slane %v8304, %v8319
    %v8322 = vunpack.c.l.s4 1966171168
    %v8323 = vunpack.c.0.s8 %v8322
    %v8324 = vlaneseq
    %v8325 = vshrl.u32 %v8324, 7
    %v8326 = vsub.s32 %v8323, %v8325
    %v8327 = vrot.slane %v8311, %v8326
    %v8329 = vunpack.c.l.s4 1966171168
    %v8330 = vunpack.c.0.s8 %v8329
    %v8331 = vlaneseq
    %v8332 = vshrl.u32 %v8331, 7
    %v8333 = vsub.s32 %v8330, %v8332
    %v8334 = vrot.slane %v8312, %v8333
    %v8336 = vunpack.c.l.s4 1966171168
    %v8337 = vunpack.c.0.s8 %v8336
    %v8338 = vlaneseq
    %v8339 = vshrl.u32 %v8338, 7
    %v8340 = vsub.s32 %v8337, %v8339
    %v8341 = vrot.slane %v8313, %v8340
    %v8342 = vcombine.high %v8320, %v8320
    %v8343 = vcombine.high %v8327, %v8327
    %v8344 = vcombine.high %v8334, %v8334
    %v8345 = vcombine.high %v8341, %v8341
    %v8346 = vcombine.high %v8091, %v8091
    %v8348 = vunpack.c.l.s4 1966171168
    %v8349 = vunpack.c.0.s8 %v8348
    %v8350 = vlaneseq
    %v8351 = vshrl.u32 %v8350, 7
    %v8352 = vsub.s32 %v8349, %v8351
    %v8353 = vrot.slane %v8091, %v8352
    %v8355 = vunpack.c.l.s4 1966171168
    %v8356 = vunpack.c.0.s8 %v8355
    %v8357 = vlaneseq
    %v8358 = vshrl.u32 %v8357, 7
    %v8359 = vsub.s32 %v8356, %v8358
    %v8360 = vrot.slane %v8346, %v8359
    %v8361 = vcombine.high %v8353, %v8353
    %v8363 = vunpack.c.l.s4 1966171168
    %v8364 = vunpack.c.0.s8 %v8363
    %v8365 = vlaneseq
    %v8366 = vshrl.u32 %v8365, 7
    %v8367 = vsub.s32 %v8364, %v8366
    %v8368 = vrot.slane %v8353, %v8367
    %v8370 = vunpack.c.l.s4 1966171168
    %v8371 = vunpack.c.0.s8 %v8370
    %v8372 = vlaneseq
    %v8373 = vshrl.u32 %v8372, 7
    %v8374 = vsub.s32 %v8371, %v8373
    %v8375 = vrot.slane %v8360, %v8374
    %v8377 = vunpack.c.l.s4 1966171168
    %v8378 = vunpack.c.0.s8 %v8377
    %v8379 = vlaneseq
    %v8380 = vshrl.u32 %v8379, 7
    %v8381 = vsub.s32 %v8378, %v8380
    %v8382 = vrot.slane %v8361, %v8381
    %v8383 = vcombine.high %v8368, %v8368
    %v8384 = vcombine.high %v8382, %v8382
    %v8593 = vunpack.c.l.b16 %v8092
    %v8594 = vunpack.c.l.b16 %v8093
    %v8595 = vunpack.c.l.b16 %v8094
    %v8596 = vunpack.c.l.b16 %v8095
    %v8597 = vunpack.c.l.b16 %v8096
    %v8598 = vunpack.c.l.b16 %v8097
    %v8599 = vunpack.c.l.b16 %v8098
    %v8600 = vunpack.c.l.b16 %v8099
    %v8601 = vunpack.c.l.b16 %v8100
    %v8602 = vunpack.c.l.b16 %v8101
    %v8603 = vunpack.c.l.b16 %v8102
    %v8604 = vunpack.c.l.b16 %v8103
    %v8605 = vunpack.c.l.b16 %v8104
    %v8606 = vunpack.c.l.b16 %v8105
    %v8607 = vunpack.c.l.b16 %v8106
    %v8608 = vunpack.c.l.b16 %v8107
    %v8609 = vunpack.c.l.b16 %v8108
    %v8610 = vunpack.c.l.b16 %v8109
    %v8611 = vunpack.c.l.b16 %v8110
    %v8612 = vunpack.c.l.b16 %v8111
    %v8613 = vunpack.c.l.b16 %v8112
    %v8614 = vunpack.c.l.b16 %v8113
    %v8615 = vunpack.c.l.b16 %v8114
    %v8616 = vunpack.c.l.b16 %v8115
    %v8617 = vunpack.c.l.b16 %v8116
    %v8618 = vunpack.c.l.b16 %v8117
    %v8619 = vunpack.c.l.b16 %v8118
    %v8620 = vunpack.c.l.b16 %v8119
    %v8621 = vunpack.c.l.b16 %v8120
    %v8622 = vunpack.c.l.b16 %v8121
    %v8623 = vunpack.c.l.b16 %v8122
    %v8624 = vunpack.c.l.b16 %v8123
    %v8625 = vunpack.c.l.b16 %v8124
    %v8626 = vunpack.c.l.b16 %v8125
    %v8627 = vunpack.c.l.b16 %v8126
    %v8628 = vunpack.c.l.b16 %v8127
    %v8629 = vunpack.c.l.b16 %v8128
    %v8630 = vunpack.c.l.b16 %v8129
    %v8631 = vunpack.c.l.b16 %v8130
    %v8632 = vunpack.c.l.b16 %v8131
    %v8633 = vunpack.c.l.b16 %v8132
    %v8634 = vunpack.c.l.b16 %v8133
    %v8635 = vunpack.c.l.b16 %v8134
    %v8636 = vunpack.c.l.b16 %v8135
    %v8637 = vunpack.c.l.b16 %v8136
    %v8638 = vunpack.c.l.b16 %v8137
    %v8639 = vunpack.c.l.b16 %v8138
    %v8640 = vunpack.c.l.b16 %v8139
    %v8641 = vunpack.c.l.b16 %v8140
    %v8642 = vunpack.c.l.b16 %v8141
    %v8643 = vunpack.c.l.b16 %v8142
    %v8644 = vunpack.c.l.b16 %v8143
    %v8645 = vunpack.c.l.b16 %v8144
    %v8646 = vunpack.c.l.b16 %v8145
    %v8647 = vunpack.c.l.b16 %v8146
    %v8648 = vunpack.c.l.b16 %v8147
    %v8649 = vunpack.c.l.b16 %v8148
    %v8650 = vunpack.c.l.b16 %v8149
    %v8651 = vunpack.c.l.b16 %v8150
    %v8652 = vunpack.c.l.b16 %v8151
    %v8653 = vunpack.c.l.b16 %v8152
    %v8654 = vunpack.c.l.b16 %v8153
    %v8655 = vunpack.c.l.b16 %v8154
    %v8656 = vunpack.c.l.b16 %v8155
    %v8657 = vunpack.c.l.b16 %v8156
    %v8658 = vunpack.c.l.b16 %v8157
    %v8659 = vunpack.c.l.b16 %v8158
    %v8660 = vunpack.c.l.b16 %v8159
    %v8661 = vunpack.c.l.b16 %v8160
    %v8662 = vunpack.c.l.b16 %v8161
    %v8663 = vunpack.c.l.b16 %v8162
    %v8664 = vunpack.c.l.b16 %v8163
    %v8665 = vunpack.c.l.b16 %v8164
    %v8666 = vunpack.c.l.b16 %v8165
    %v8667 = vunpack.c.l.b16 %v8166
    %v8668 = vunpack.c.l.b16 %v8167
    %v8669 = vunpack.c.l.b16 %v8168
    %v8670 = vunpack.c.l.b16 %v8169
    %v8671 = vunpack.c.l.b16 %v8170
    %v8672 = vunpack.c.l.b16 %v8171
    %v8673 = vunpack.c.l.b16 %v8172
    %v8674 = vunpack.c.l.b16 %v8173
    %v8675 = vunpack.c.l.b16 %v8174
    %v8676 = vunpack.c.l.b16 %v8175
    %v8677 = vunpack.c.l.b16 %v8176
    %v8678 = vunpack.c.l.b16 %v8177
    %v8679 = vunpack.c.l.b16 %v8178
    %v8680 = vunpack.c.l.b16 %v8179
    %v8681 = vunpack.c.l.b16 %v8180
    %v8682 = vunpack.c.l.b16 %v8181
    %v8683 = vunpack.c.l.b16 %v8182
    %v8684 = vunpack.c.l.b16 %v8183
    %v8685 = vunpack.c.l.b16 %v8184
    %v8686 = vunpack.c.l.b16 %v8185
    %v8687 = vunpack.c.l.b16 %v8186
    %v8688 = vunpack.c.l.b16 %v8187
    %v8689 = vunpack.c.l.b16 %v8188
    %v8690 = vunpack.c.l.b16 %v8189
    %v8691 = vunpack.c.l.b16 %v8190
    %v8692 = vunpack.c.l.b16 %v8191
    %v8693 = vunpack.c.l.b16 %v8192
    %v8694 = vunpack.c.l.b16 %v8193
    %v8695 = vunpack.c.l.b16 %v8194
    %v8696 = vunpack.c.l.b16 %v8195
    %v8697 = vunpack.c.l.b16 %v8196
    %v8698 = vunpack.c.l.b16 %v8197
    %v8699 = vunpack.c.l.b16 %v8198
    %v8700 = vunpack.c.l.b16 %v8199
    %v8701 = vunpack.c.l.b16 %v8200
    %v8702 = vunpack.c.l.b16 %v8201
    %v8703 = vunpack.c.l.b16 %v8202
    %v8704 = vunpack.c.l.b16 %v8203
    %v8705 = vunpack.c.l.b16 %v8204
    %v8706 = vunpack.c.l.b16 %v8205
    %v8707 = vunpack.c.l.b16 %v8206
    %v8708 = vunpack.c.l.b16 %v8207
    %v8709 = vunpack.c.l.b16 %v8208
    %v8710 = vunpack.c.l.b16 %v8209
    %v8711 = vunpack.c.l.b16 %v8210
    %v8712 = vunpack.c.l.b16 %v8211
    %v8713 = vunpack.c.l.b16 %v8212
    %v8714 = vunpack.c.l.b16 %v8213
    %v8715 = vunpack.c.l.b16 %v8214
    %v8716 = vunpack.c.l.b16 %v8215
    %v8717 = vunpack.c.l.b16 %v8216
    %v8718 = vunpack.c.l.b16 %v8217
    %v8719 = vunpack.c.l.b16 %v8218
    %v8720 = vunpack.c.l.b16 %v8219
    %v8721 = vunpack.c.l.b16 %v8220
    %v8722 = vunpack.c.l.b16 %v8221
    %v8723 = vunpack.c.l.b16 %v8222
    %v8724 = vunpack.c.l.b16 %v8223
    %v8725 = vunpack.c.l.b16 %v8224
    %v8726 = vunpack.c.l.b16 %v8225
    %v8727 = vunpack.c.l.b16 %v8226
    %v8728 = vunpack.c.l.b16 %v8227
    %v8729 = vunpack.c.l.b16 %v8228
    %v8730 = vunpack.c.l.b16 %v8229
    %v8731 = vunpack.c.l.b16 %v8230
    %v8732 = vunpack.c.l.b16 %v8231
    %v8733 = vunpack.c.l.b16 %v8232
    %v8734 = vunpack.c.l.b16 %v8233
    %v8735 = vunpack.c.l.b16 %v8234
    %v8736 = vunpack.c.l.b16 %v8235
    %v8737 = vunpack.c.l.b16 %v8236
    %v8738 = vunpack.c.l.b16 %v8237
    %v8739 = vunpack.c.l.b16 %v8238
    %v8740 = vunpack.c.l.b16 %v8239
    %v8741 = vunpack.c.l.b16 %v8240
    %v8742 = vunpack.c.l.b16 %v8241
    %v8743 = vunpack.c.l.b16 %v8242
    %v8744 = vunpack.c.l.b16 %v8243
    %v8745 = vunpack.c.l.b16 %v8244
    %v8746 = vunpack.c.l.b16 %v8245
    %v8747 = vunpack.c.l.b16 %v8246
    %v8748 = vunpack.c.l.b16 %v8247
    %v8749 = vunpack.c.l.b16 %v8248
    %v8750 = vunpack.c.l.b16 %v8249
    %v8751 = vunpack.c.l.b16 %v8250
    %v8752 = vunpack.c.l.b16 %v8251
    %v8753 = vunpack.c.l.b16 %v8252
    %v8754 = vunpack.c.l.b16 %v8253
    %v8755 = vunpack.c.l.b16 %v8254
    %v8756 = vunpack.c.l.b16 %v8255
    %v8757 = vunpack.c.l.b16 %v8256
    %v8758 = vunpack.c.l.b16 %v8257
    %v8759 = vunpack.c.l.b16 %v8258
    %v8760 = vunpack.c.l.b16 %v8259
    %v8761 = vunpack.c.l.b16 %v8260
    %v8762 = vunpack.c.l.b16 %v8261
    %v8763 = vunpack.c.l.b16 %v8262
    %v8764 = vunpack.c.l.b16 %v8263
    %v8765 = vunpack.c.l.b16 %v8264
    %v8766 = vunpack.c.l.b16 %v8265
    %v8767 = vunpack.c.l.b16 %v8266
    %v8768 = vunpack.c.l.b16 %v8267
    %v8769 = vunpack.c.l.b16 %v8268
    %v8770 = vunpack.c.l.b16 %v8269
    %v8771 = vunpack.c.l.b16 %v8270
    %v8772 = vunpack.c.l.b16 %v8271
    %v8773 = vunpack.c.l.b16 %v8272
    %v8774 = vunpack.c.l.b16 %v8273
    %v8775 = vunpack.c.l.b16 %v8274
    %v8776 = vunpack.c.l.b16 %v8275
    %v8777 = vunpack.c.l.b16 %v8276
    %v8778 = vunpack.c.l.b16 %v8277
    %v8779 = vunpack.c.l.b16 %v8278
    %v8780 = vunpack.c.l.b16 %v8279
    %v8781 = vunpack.c.l.b16 %v8280
    %v8782 = vunpack.c.l.b16 %v8281
    %v8783 = vunpack.c.l.b16 %v8282
    %v8784 = vunpack.c.l.b16 %v8283
    %v8785 = vunpack.c.l.b16 %v8284
    %v8786 = vunpack.c.l.b16 %v8285
    %v8787 = vunpack.c.l.b16 %v8286
    %v8788 = vunpack.c.l.b16 %v8287
    %v8789 = vpack.c.b16 %v8594, %v8593
    %v8790 = vpack.c.b16 %v8596, %v8595
    %v8791 = vpack.c.b16 %v8598, %v8597
    %v8792 = vpack.c.b16 %v8600, %v8599
    %v8793 = vpack.c.b16 %v8602, %v8601
    %v8794 = vpack.c.b16 %v8604, %v8603
    %v8795 = vpack.c.b16 %v8606, %v8605
    %v8796 = vpack.c.b16 %v8608, %v8607
    %v8797 = vpack.c.b16 %v8610, %v8609
    %v8798 = vpack.c.b16 %v8612, %v8611
    %v8799 = vpack.c.b16 %v8614, %v8613
    %v8800 = vpack.c.b16 %v8616, %v8615
    %v8801 = vpack.c.b16 %v8618, %v8617
    %v8802 = vpack.c.b16 %v8620, %v8619
    %v8803 = vpack.c.b16 %v8622, %v8621
    %v8804 = vpack.c.b16 %v8624, %v8623
    %v8805 = vpack.c.b16 %v8626, %v8625
    %v8806 = vpack.c.b16 %v8628, %v8627
    %v8807 = vpack.c.b16 %v8630, %v8629
    %v8808 = vpack.c.b16 %v8632, %v8631
    %v8809 = vpack.c.b16 %v8634, %v8633
    %v8810 = vpack.c.b16 %v8636, %v8635
    %v8811 = vpack.c.b16 %v8638, %v8637
    %v8812 = vpack.c.b16 %v8640, %v8639
    %v8813 = vpack.c.b16 %v8642, %v8641
    %v8814 = vpack.c.b16 %v8644, %v8643
    %v8815 = vpack.c.b16 %v8646, %v8645
    %v8816 = vpack.c.b16 %v8648, %v8647
    %v8817 = vpack.c.b16 %v8650, %v8649
    %v8818 = vpack.c.b16 %v8652, %v8651
    %v8819 = vpack.c.b16 %v8654, %v8653
    %v8820 = vpack.c.b16 %v8656, %v8655
    %v8821 = vpack.c.b16 %v8658, %v8657
    %v8822 = vpack.c.b16 %v8660, %v8659
    %v8823 = vpack.c.b16 %v8662, %v8661
    %v8824 = vpack.c.b16 %v8664, %v8663
    %v8825 = vpack.c.b16 %v8666, %v8665
    %v8826 = vpack.c.b16 %v8668, %v8667
    %v8827 = vpack.c.b16 %v8670, %v8669
    %v8828 = vpack.c.b16 %v8672, %v8671
    %v8829 = vpack.c.b16 %v8674, %v8673
    %v8830 = vpack.c.b16 %v8676, %v8675
    %v8831 = vpack.c.b16 %v8678, %v8677
    %v8832 = vpack.c.b16 %v8680, %v8679
    %v8833 = vpack.c.b16 %v8682, %v8681
    %v8834 = vpack.c.b16 %v8684, %v8683
    %v8835 = vpack.c.b16 %v8686, %v8685
    %v8836 = vpack.c.b16 %v8688, %v8687
    %v8837 = vpack.c.b16 %v8690, %v8689
    %v8838 = vpack.c.b16 %v8692, %v8691
    %v8839 = vpack.c.b16 %v8694, %v8693
    %v8840 = vpack.c.b16 %v8696, %v8695
    %v8841 = vpack.c.b16 %v8698, %v8697
    %v8842 = vpack.c.b16 %v8700, %v8699
    %v8843 = vpack.c.b16 %v8702, %v8701
    %v8844 = vpack.c.b16 %v8704, %v8703
    %v8845 = vpack.c.b16 %v8706, %v8705
    %v8846 = vpack.c.b16 %v8708, %v8707
    %v8847 = vpack.c.b16 %v8710, %v8709
    %v8848 = vpack.c.b16 %v8712, %v8711
    %v8849 = vpack.c.b16 %v8714, %v8713
    %v8850 = vpack.c.b16 %v8716, %v8715
    %v8851 = vpack.c.b16 %v8718, %v8717
    %v8852 = vpack.c.b16 %v8720, %v8719
    %v8853 = vpack.c.b16 %v8722, %v8721
    %v8854 = vpack.c.b16 %v8724, %v8723
    %v8855 = vpack.c.b16 %v8726, %v8725
    %v8856 = vpack.c.b16 %v8728, %v8727
    %v8857 = vpack.c.b16 %v8730, %v8729
    %v8858 = vpack.c.b16 %v8732, %v8731
    %v8859 = vpack.c.b16 %v8734, %v8733
    %v8860 = vpack.c.b16 %v8736, %v8735
    %v8861 = vpack.c.b16 %v8738, %v8737
    %v8862 = vpack.c.b16 %v8740, %v8739
    %v8863 = vpack.c.b16 %v8742, %v8741
    %v8864 = vpack.c.b16 %v8744, %v8743
    %v8865 = vpack.c.b16 %v8746, %v8745
    %v8866 = vpack.c.b16 %v8748, %v8747
    %v8867 = vpack.c.b16 %v8750, %v8749
    %v8868 = vpack.c.b16 %v8752, %v8751
    %v8869 = vpack.c.b16 %v8754, %v8753
    %v8870 = vpack.c.b16 %v8756, %v8755
    %v8871 = vpack.c.b16 %v8758, %v8757
    %v8872 = vpack.c.b16 %v8760, %v8759
    %v8873 = vpack.c.b16 %v8762, %v8761
    %v8874 = vpack.c.b16 %v8764, %v8763
    %v8875 = vpack.c.b16 %v8766, %v8765
    %v8876 = vpack.c.b16 %v8768, %v8767
    %v8877 = vpack.c.b16 %v8770, %v8769
    %v8878 = vpack.c.b16 %v8772, %v8771
    %v8879 = vpack.c.b16 %v8774, %v8773
    %v8880 = vpack.c.b16 %v8776, %v8775
    %v8881 = vpack.c.b16 %v8778, %v8777
    %v8882 = vpack.c.b16 %v8780, %v8779
    %v8883 = vpack.c.b16 %v8782, %v8781
    %v8884 = vpack.c.b16 %v8784, %v8783
    %v8885 = vpack.c.b16 %v8786, %v8785
    %v8886 = vpack.c.b16 %v8788, %v8787
    %v8986 = vsel %vm1977, %v8375, 0
    %8988 = vmatprep.subr.bf16.mxu0 0
    %8989 = vmatpush1.bf16.msra.mxu0 %v8789
    %8990 = vmatprep.subr.bf16.mxu0 0
    %8991 = vmatpush1.bf16.msra.mxu0 %v8790
    %8992 = vmatprep.subr.bf16.mxu0 0
    %8993 = vmatpush1.bf16.msra.mxu0 %v8791
    %8994 = vmatprep.subr.bf16.mxu0 0
    %8995 = vmatpush1.bf16.msra.mxu0 %v8792
    %8996 = vmatprep.subr.bf16.mxu0 0
    %8997 = vmatpush1.bf16.msra.mxu0 %v8793
    %8998 = vmatprep.subr.bf16.mxu0 0
    %8999 = vmatpush1.bf16.msra.mxu0 %v8794
    %9000 = vmatprep.subr.bf16.mxu0 0
    %9001 = vmatpush1.bf16.msra.mxu0 %v8795
    %9002 = vmatprep.subr.bf16.mxu0 0
    %9003 = vmatpush1.bf16.msra.mxu0 %v8796
    %9004 = vmatprep.subr.bf16.mxu0 0
    %9005 = vmatpush1.bf16.msra.mxu0 %v8797
    %9006 = vmatprep.subr.bf16.mxu0 0
    %9007 = vmatpush1.bf16.msra.mxu0 %v8798
    %9008 = vmatprep.subr.bf16.mxu0 0
    %9009 = vmatpush1.bf16.msra.mxu0 %v8799
    %9010 = vmatprep.subr.bf16.mxu0 0
    %9011 = vmatpush1.bf16.msra.mxu0 %v8800
    %9012 = vmatprep.subr.bf16.mxu0 0
    %9013 = vmatpush1.bf16.msra.mxu0 %v8801
    %9014 = vmatprep.subr.bf16.mxu0 0
    %9015 = vmatpush1.bf16.msra.mxu0 %v8802
    %9016 = vmatprep.subr.bf16.mxu0 0
    %9017 = vmatpush1.bf16.msra.mxu0 %v8803
    %9018 = vmatprep.subr.bf16.mxu0 0
    %9019 = vmatpush1.bf16.msra.mxu0 %v8804
    %9020 = vmatprep.mubr.bf16.mxu0 %v8334
    %9021 = vmatmul.mubr.bf16.gmra.mrb[0].mxu0 %v8320
    %v9022 = vpop.f32.mrb[0].mxu0
    %v9023 = vadd.f32 %v8293, %v9022
    %v9024 = vpop.f32.mrb[0].mxu0
    %v9025 = vpop.f32.mrb[0].mxu0
    %v9026 = vpop.f32.mrb[0].mxu0
    %9027 = vdwg.mxu0
    %9028 = vmatprep.subr.bf16.mxu0 0
    %9029 = vmatpush1.bf16.msra.mxu0 %v8805
    %9030 = vmatprep.subr.bf16.mxu0 0
    %9031 = vmatpush1.bf16.msra.mxu0 %v8806
    %9032 = vmatprep.subr.bf16.mxu0 0
    %9033 = vmatpush1.bf16.msra.mxu0 %v8807
    %9034 = vmatprep.subr.bf16.mxu0 0
    %9035 = vmatpush1.bf16.msra.mxu0 %v8808
    %9036 = vmatprep.subr.bf16.mxu0 0
    %9037 = vmatpush1.bf16.msra.mxu0 %v8809
    %9038 = vmatprep.subr.bf16.mxu0 0
    %9039 = vmatpush1.bf16.msra.mxu0 %v8810
    %9040 = vmatprep.subr.bf16.mxu0 0
    %9041 = vmatpush1.bf16.msra.mxu0 %v8811
    %9042 = vmatprep.subr.bf16.mxu0 0
    %9043 = vmatpush1.bf16.msra.mxu0 %v8812
    %9044 = vmatprep.subr.bf16.mxu0 0
    %9045 = vmatpush1.bf16.msra.mxu0 %v8813
    %9046 = vmatprep.subr.bf16.mxu0 0
    %9047 = vmatpush1.bf16.msra.mxu0 %v8814
    %9048 = vmatprep.subr.bf16.mxu0 0
    %9049 = vmatpush1.bf16.msra.mxu0 %v8815
    %9050 = vmatprep.subr.bf16.mxu0 0
    %9051 = vmatpush1.bf16.msra.mxu0 %v8816
    %9052 = vmatprep.subr.bf16.mxu0 0
    %9053 = vmatpush1.bf16.msra.mxu0 %v8817
    %9054 = vmatprep.subr.bf16.mxu0 0
    %9055 = vmatpush1.bf16.msra.mxu0 %v8818
    %9056 = vmatprep.subr.bf16.mxu0 0
    %9057 = vmatpush1.bf16.msra.mxu0 %v8819
    %9058 = vmatprep.subr.bf16.mxu0 0
    %9059 = vmatpush1.bf16.msra.mxu0 %v8820
    %9060 = vmatprep.mubr.bf16.mxu0 %v8344
    %9061 = vmatmul.mubr.bf16.gmra.mrb[0].mxu0 %v8342
    %v9062 = vpop.f32.mrb[0].mxu0
    %v9063 = vadd.f32 %v9023, %v9062
    %v9064 = vpop.f32.mrb[0].mxu0
    %v9065 = vpop.f32.mrb[0].mxu0
    %v9066 = vpop.f32.mrb[0].mxu0
    %9067 = vdwg.mxu0
    %9068 = vmatprep.subr.bf16.mxu0 0
    %9069 = vmatpush1.bf16.msra.mxu0 %v8821
    %9070 = vmatprep.subr.bf16.mxu0 0
    %9071 = vmatpush1.bf16.msra.mxu0 %v8822
    %9072 = vmatprep.subr.bf16.mxu0 0
    %9073 = vmatpush1.bf16.msra.mxu0 %v8823
    %9074 = vmatprep.subr.bf16.mxu0 0
    %9075 = vmatpush1.bf16.msra.mxu0 %v8824
    %9076 = vmatprep.subr.bf16.mxu0 0
    %9077 = vmatpush1.bf16.msra.mxu0 %v8825
    %9078 = vmatprep.subr.bf16.mxu0 0
    %9079 = vmatpush1.bf16.msra.mxu0 %v8826
    %9080 = vmatprep.subr.bf16.mxu0 0
    %9081 = vmatpush1.bf16.msra.mxu0 %v8827
    %9082 = vmatprep.subr.bf16.mxu0 0
    %9083 = vmatpush1.bf16.msra.mxu0 %v8828
    %9084 = vmatprep.subr.bf16.mxu0 0
    %9085 = vmatpush1.bf16.msra.mxu0 %v8829
    %9086 = vmatprep.subr.bf16.mxu0 0
    %9087 = vmatpush1.bf16.msra.mxu0 %v8830
    %9088 = vmatprep.subr.bf16.mxu0 0
    %9089 = vmatpush1.bf16.msra.mxu0 %v8831
    %9090 = vmatprep.subr.bf16.mxu0 0
    %9091 = vmatpush1.bf16.msra.mxu0 %v8832
    %9092 = vmatprep.subr.bf16.mxu0 0
    %9093 = vmatpush1.bf16.msra.mxu0 %v8833
    %9094 = vmatprep.subr.bf16.mxu0 0
    %9095 = vmatpush1.bf16.msra.mxu0 %v8834
    %9096 = vmatprep.subr.bf16.mxu0 0
    %9097 = vmatpush1.bf16.msra.mxu0 %v8835
    %9098 = vmatprep.subr.bf16.mxu0 0
    %9099 = vmatpush1.bf16.msra.mxu0 %v8836
    %9100 = vmatprep.mubr.bf16.mxu0 %v8341
    %9101 = vmatmul.mubr.bf16.gmra.mrb[0].mxu0 %v8327
    %v9102 = vpop.f32.mrb[0].mxu0
    %v9103 = vadd.f32 %v9063, %v9102
    %v9104 = vpop.f32.mrb[0].mxu0
    %v9105 = vpop.f32.mrb[0].mxu0
    %v9106 = vpop.f32.mrb[0].mxu0
    %9107 = vdwg.mxu0
    %9108 = vmatprep.subr.bf16.mxu0 0
    %9109 = vmatpush1.bf16.msra.mxu0 %v8837
    %9110 = vmatprep.subr.bf16.mxu0 0
    %9111 = vmatpush1.bf16.msra.mxu0 %v8838
    %9112 = vmatprep.subr.bf16.mxu0 0
    %9113 = vmatpush1.bf16.msra.mxu0 %v8839
    %9114 = vmatprep.subr.bf16.mxu0 0
    %9115 = vmatpush1.bf16.msra.mxu0 %v8840
    %9116 = vmatprep.subr.bf16.mxu0 0
    %9117 = vmatpush1.bf16.msra.mxu0 %v8841
    %9118 = vmatprep.subr.bf16.mxu0 0
    %9119 = vmatpush1.bf16.msra.mxu0 %v8842
    %9120 = vmatprep.subr.bf16.mxu0 0
    %9121 = vmatpush1.bf16.msra.mxu0 %v8843
    %9122 = vmatprep.subr.bf16.mxu0 0
    %9123 = vmatpush1.bf16.msra.mxu0 %v8844
    %9124 = vmatprep.subr.bf16.mxu0 0
    %9125 = vmatpush1.bf16.msra.mxu0 %v8845
    %9126 = vmatprep.subr.bf16.mxu0 0
    %9127 = vmatpush1.bf16.msra.mxu0 %v8846
    %9128 = vmatprep.subr.bf16.mxu0 0
    %9129 = vmatpush1.bf16.msra.mxu0 %v8847
    %9130 = vmatprep.subr.bf16.mxu0 0
    %9131 = vmatpush1.bf16.msra.mxu0 %v8848
    %9132 = vmatprep.subr.bf16.mxu0 0
    %9133 = vmatpush1.bf16.msra.mxu0 %v8849
    %9134 = vmatprep.subr.bf16.mxu0 0
    %9135 = vmatpush1.bf16.msra.mxu0 %v8850
    %9136 = vmatprep.subr.bf16.mxu0 0
    %9137 = vmatpush1.bf16.msra.mxu0 %v8851
    %9138 = vmatprep.subr.bf16.mxu0 0
    %9139 = vmatpush1.bf16.msra.mxu0 %v8852
    %9140 = vmatprep.mubr.bf16.mxu0 %v8345
    %9141 = vmatmul.mubr.bf16.gmra.mrb[0].mxu0 %v8343
    %v9142 = vpop.f32.mrb[0].mxu0
    %v9143 = vadd.f32 %v9103, %v9142
    %v9144 = vpop.f32.mrb[0].mxu0
    %v9145 = vpop.f32.mrb[0].mxu0
    %v9146 = vpop.f32.mrb[0].mxu0
    %9147 = vdwg.mxu0
    %9148 = vmatprep.subr.bf16.mxu0 0
    %9149 = vmatpush1.bf16.msra.mxu0 %v8853
    %9150 = vmatprep.subr.bf16.mxu0 0
    %9151 = vmatpush1.bf16.msra.mxu0 %v8854
    %9152 = vmatprep.subr.bf16.mxu0 0
    %9153 = vmatpush1.bf16.msra.mxu0 %v8855
    %9154 = vmatprep.subr.bf16.mxu0 0
    %9155 = vmatpush1.bf16.msra.mxu0 %v8856
    %9156 = vmatprep.subr.bf16.mxu0 0
    %9157 = vmatpush1.bf16.msra.mxu0 %v8857
    %9158 = vmatprep.subr.bf16.mxu0 0
    %9159 = vmatpush1.bf16.msra.mxu0 %v8858
    %9160 = vmatprep.subr.bf16.mxu0 0
    %9161 = vmatpush1.bf16.msra.mxu0 %v8859
    %9162 = vmatprep.subr.bf16.mxu0 0
    %9163 = vmatpush1.bf16.msra.mxu0 %v8860
    %9164 = vmatprep.subr.bf16.mxu0 0
    %9165 = vmatpush1.bf16.msra.mxu0 %v8861
    %9166 = vmatprep.subr.bf16.mxu0 0
    %9167 = vmatpush1.bf16.msra.mxu0 %v8862
    %9168 = vmatprep.subr.bf16.mxu0 0
    %9169 = vmatpush1.bf16.msra.mxu0 %v8863
    %9170 = vmatprep.subr.bf16.mxu0 0
    %9171 = vmatpush1.bf16.msra.mxu0 %v8864
    %9172 = vmatprep.subr.bf16.mxu0 0
    %9173 = vmatpush1.bf16.msra.mxu0 %v8865
    %9174 = vmatprep.subr.bf16.mxu0 0
    %9175 = vmatpush1.bf16.msra.mxu0 %v8866
    %9176 = vmatprep.subr.bf16.mxu0 0
    %9177 = vmatpush1.bf16.msra.mxu0 %v8867
    %9178 = vmatprep.subr.bf16.mxu0 0
    %9179 = vmatpush1.bf16.msra.mxu0 %v8868
    %9180 = vmatprep.mubr.bf16.mxu0 %v8382
    %9181 = vmatmul.mubr.bf16.gmra.mrb[0].mxu0 %v8368
    %v9182 = vpop.f32.mrb[0].mxu0
    %v9183 = vadd.f32 %v9143, %v9182
    %v9184 = vpop.f32.mrb[0].mxu0
    %v9185 = vpop.f32.mrb[0].mxu0
    %v9186 = vpop.f32.mrb[0].mxu0
    %9187 = vdwg.mxu0
    %9188 = vmatprep.subr.bf16.mxu0 0
    %9189 = vmatpush1.bf16.msra.mxu0 %v8869
    %9190 = vmatprep.subr.bf16.mxu0 0
    %9191 = vmatpush1.bf16.msra.mxu0 %v8870
    %9192 = vmatprep.subr.bf16.mxu0 0
    %9193 = vmatpush1.bf16.msra.mxu0 %v8871
    %9194 = vmatprep.subr.bf16.mxu0 0
    %9195 = vmatpush1.bf16.msra.mxu0 %v8872
    %9196 = vmatprep.subr.bf16.mxu0 0
    %9197 = vmatpush1.bf16.msra.mxu0 %v8873
    %9198 = vmatprep.subr.bf16.mxu0 0
    %9199 = vmatpush1.bf16.msra.mxu0 %v8874
    %9200 = vmatprep.subr.bf16.mxu0 0
    %9201 = vmatpush1.bf16.msra.mxu0 %v8875
    %9202 = vmatprep.subr.bf16.mxu0 0
    %9203 = vmatpush1.bf16.msra.mxu0 %v8876
    %9204 = vmatprep.subr.bf16.mxu0 0
    %9205 = vmatpush1.bf16.msra.mxu0 %v8877
    %9206 = vmatprep.subr.bf16.mxu0 0
    %9207 = vmatpush1.bf16.msra.mxu0 %v8878
    %9208 = vmatprep.subr.bf16.mxu0 0
    %9209 = vmatpush1.bf16.msra.mxu0 %v8879
    %9210 = vmatprep.subr.bf16.mxu0 0
    %9211 = vmatpush1.bf16.msra.mxu0 %v8880
    %9212 = vmatprep.subr.bf16.mxu0 0
    %9213 = vmatpush1.bf16.msra.mxu0 %v8881
    %9214 = vmatprep.subr.bf16.mxu0 0
    %9215 = vmatpush1.bf16.msra.mxu0 %v8882
    %9216 = vmatprep.subr.bf16.mxu0 0
    %9217 = vmatpush1.bf16.msra.mxu0 %v8883
    %9218 = vmatprep.subr.bf16.mxu0 0
    %9219 = vmatpush1.bf16.msra.mxu0 %v8884
    %9220 = vmatprep.mubr.bf16.mxu0 %v8384
    %9221 = vmatmul.mubr.bf16.gmra.mrb[0].mxu0 %v8383
    %v9222 = vpop.f32.mrb[0].mxu0
    %v9223 = vadd.f32 %v9183, %v9222
    %v9224 = vpop.f32.mrb[0].mxu0
    %v9225 = vpop.f32.mrb[0].mxu0
    %v9226 = vpop.f32.mrb[0].mxu0
    %9227 = vdwg.mxu0
    %9228 = vmatprep.subr.bf16.mxu0 0
    %9229 = vmatpush1.bf16.msra.mxu0 %v8885
    %9230 = vmatprep.subr.bf16.mxu0 0
    %9231 = vmatpush1.bf16.msra.mxu0 %v8886
    %9232 = vmatprep.subr.bf16.mxu0 0
    %9233 = vmatpush1.bf16.msra.mxu0 0
    %9234 = vmatprep.subr.bf16.mxu0 0
    %9235 = vmatpush1.bf16.msra.mxu0 0
    %9236 = vmatprep.subr.bf16.mxu0 0
    %9237 = vmatpush1.bf16.msra.mxu0 0
    %9238 = vmatprep.subr.bf16.mxu0 0
    %9239 = vmatpush1.bf16.msra.mxu0 0
    %9240 = vmatprep.subr.bf16.mxu0 0
    %9241 = vmatpush1.bf16.msra.mxu0 0
    %9242 = vmatprep.subr.bf16.mxu0 0
    %9243 = vmatpush1.bf16.msra.mxu0 0
    %9244 = vmatprep.subr.bf16.mxu0 0
    %9245 = vmatpush1.bf16.msra.mxu0 0
    %9246 = vmatprep.subr.bf16.mxu0 0
    %9247 = vmatpush1.bf16.msra.mxu0 0
    %9248 = vmatprep.subr.bf16.mxu0 0
    %9249 = vmatpush1.bf16.msra.mxu0 0
    %9250 = vmatprep.subr.bf16.mxu0 0
    %9251 = vmatpush1.bf16.msra.mxu0 0
    %9252 = vmatprep.subr.bf16.mxu0 0
    %9253 = vmatpush1.bf16.msra.mxu0 0
    %9254 = vmatprep.subr.bf16.mxu0 0
    %9255 = vmatpush1.bf16.msra.mxu0 0
    %9256 = vmatprep.subr.bf16.mxu0 0
    %9257 = vmatpush1.bf16.msra.mxu0 0
    %9258 = vmatprep.subr.bf16.mxu0 0
    %9259 = vmatpush1.bf16.msra.mxu0 0
    %9260 = vmatprep.mubr.bf16.mxu0 0
    %9261 = vmatmul.mubr.bf16.gmra.mrb[0].mxu0 %v8986
    %v9262 = vpop.f32.mrb[0].mxu0
    %v9263 = vadd.f32 %v9223, %v9262
    %v9264 = vpop.f32.mrb[0].mxu0
    %v9265 = vpop.f32.mrb[0].mxu0
    %v9266 = vpop.f32.mrb[0].mxu0
    %9267 = vdwg.mxu0
    %9268 = vst [vmem:[#allocation6] sm:$0x3] %v9263
    // Predicated region
    $region54: #{cnn_mnist_forward.1} parent=1 // pred_check
      _
    $region55: #{cnn_mnist_forward.1} parent=1 // pred_check_branch
      %9270 = sbr.rel (0) target = $region57
    $region56: #{cnn_mnist_forward.1} parent=1 // pred_region
      %s9272 = ssub.s32 32, 32
      %9273 = vsyncadd [#allocation7], %s9272
      %s9275 = sshll.u32 [#allocation6], 4
      %s9276 = int_to_ptr.vmem [resolvable:$true] %s9275
      %9278 = dma.vmem_to_hbm [thread:$0]  %s9276, 32, %s13, [#allocation7]
    $region57: #{cnn_mnist_forward.1} parent=1 // pred_fallthru
      _
    // Predicated region
    $region58: #{cnn_mnist_forward.1} parent=1 // pred_check
      _
    $region59: #{cnn_mnist_forward.1} parent=1 // pred_check_branch
      %9280 = sbr.rel (0) target = $region61
    $region60: #{cnn_mnist_forward.1} parent=1 // pred_region
      %9281 = dma.done [#allocation7], 32
    $region61: #{cnn_mnist_forward.1} parent=1 // pred_fallthru
      _
    %9282 = vsyncpa [#allocation7], 1

</llo_original>
